<compile_context>
chip_gen: v6e
topology: v6e:2x2x1
jax: 0.10.0
libtpu: 0.0.40
codegen_flags: <defaults>
</compile_context>

<pallas_src>
import functools

import jax
import jax.numpy as jnp
import numpy as np
from jax.experimental import pallas as pl
from jax.experimental.pallas import tpu as pltpu


def _round_up(x, m):
    return (x + m - 1) // m * m


def _quant_params(lb, ub, levels):
    """[lb, ub, s, 1/s] as an f32[4] array (1/s guarded against s == 0)."""
    lb = jnp.asarray(lb, jnp.float32)
    ub = jnp.asarray(ub, jnp.float32)
    s = (ub - lb) / jnp.float32(levels)
    safe = jnp.where(s != 0, s, jnp.float32(1.0))
    inv_s = jnp.where(s != 0, jnp.float32(1.0) / safe, jnp.float32(0.0))
    return jnp.stack([lb, ub, s, inv_s])


# ----------------------------------------------------------------------------
# Pallas kernels
# ----------------------------------------------------------------------------
def _weight_code_kernel(qp_ref, w_ref, k_ref):
    # qp_ref (SMEM f32[4]) = [lb, ub, s, inv_s].  Emits integer weight codes
    # k_w = round((clip(w) - lb) * inv_s) as bf16 (codes <= 2^bit - 1, exact).
    lb = qp_ref[0]
    ub = qp_ref[1]
    inv_s = qp_ref[3]
    c = jnp.clip(w_ref[...], lb, ub)
    k_ref[...] = jnp.round((c - lb) * inv_s).astype(jnp.bfloat16)


def _quant_conv_kernel(qp_ref, a0_ref, a1_ref, m0_ref, m1_ref, kw_ref, wc_ref,
                       b_ref, o_ref, *, tm, offsets):
    """One (tm x tn) output tile of the quantized conv as a bf16 codes-GEMM.

    qp_ref (SMEM f32[5]) = [lb_a, ub_a, inv_s_a, s_a*s_w, s_a*lb_w].
    Decomposition (exact, padding handled by the mask column):
      conv = s_a*s_w * <k_a, k_w>  +  s_a*lb_w * rowsum(k_a)
             + sum_p mask_p * [lb_a*(s_w*sum_c k_w[p,c,:] + Cin*lb_w)]  + bias
    """
    lb = qp_ref[0]
    ub = qp_ref[1]
    inv_s = qp_ref[2]
    s_a_s_w = qp_ref[3]
    s_a_lb_w = qp_ref[4]

    # Main rows + a small halo block: every shifted KH*KW window of this output
    # tile is a static slice of the concatenated pair (VMEM resident).
    a = jnp.concatenate([a0_ref[...], a1_ref[...]], axis=0)    # (tm+halo, Cin)
    m = jnp.concatenate([m0_ref[...], m1_ref[...]], axis=0)    # (tm+halo, 1)

    # Fused activation fake-quant -> integer codes; the mask forces the codes
    # of the conv's zero padding (and slab tail rows) to exactly 0.
    k = jnp.round((jnp.clip(a, lb, ub) - lb) * inv_s) * m      # f32 integer codes
    krow = jnp.sum(k, axis=-1, keepdims=True)                  # per-row code sums

    # im2col in VMEM (static window slices concatenated along the channel axis)
    # -> one big-K bf16 MXU matmul.  Codes are exact in bf16.
    kb = k.astype(jnp.bfloat16)
    im2col = jnp.concatenate([kb[off:off + tm, :] for off in offsets], axis=1)
    mim = jnp.concatenate([m[off:off + tm, :] for off in offsets], axis=1)

    srow = krow[offsets[0]:offsets[0] + tm, :]
    for off in offsets[1:]:
        srow = srow + krow[off:off + tm, :]                    # (tm, 1)

    acc = jnp.dot(im2col, kw_ref[...], preferred_element_type=jnp.float32)
    corr = jnp.dot(mim, wc_ref[...], preferred_element_type=jnp.float32)

    # Single lane-dense store; bias added exactly once, no accumulator scratch.
    o_ref[...] = s_a_s_w * acc + s_a_lb_w * srow + corr + b_ref[...]


# ----------------------------------------------------------------------------
# Forward pass
# ----------------------------------------------------------------------------
@functools.partial(jax.jit,
                   static_argnames=("n_bit", "stride", "padding", "dilation",
                                    "groups"))
def quant_conv2d_forward(x, weight, bias, act_lb, act_ub, w_lb, w_ub,
                         n_bit=4.0, stride=(1, 1), padding=(1, 1),
                         dilation=(1, 1), groups=1):
    """QuantConv2d.forward with quant=True and calibrated quantizers.

    x: (N, Cin, H, W) f32, weight: (Cout, Cin, KH, KW) f32, bias: (Cout,) f32.
    Returns (N, Cout, OH, OW) f32, matching F.conv2d semantics.
    """
    assert groups == 1  # TODO(synk): grouped conv not implemented in this path.
    N, Cin, H, W = x.shape
    Cout, _, KH, KW = weight.shape
    sh, sw = stride
    ph, pw = padding
    dh, dw = dilation

    n_bits = float(np.round(n_bit))           # int_quant=True -> round(n_bit)
    levels = 2.0 ** n_bits - 1.0
    qp_act = _quant_params(act_lb, act_ub, levels)
    qp_w = _quant_params(w_lb, w_ub, levels)

    Hp = H + 2 * ph
    Wp = W + 2 * pw
    Wp8 = _round_up(Wp, 8)                    # 8-aligned row pitch (sublane-aligned kh shifts)
    OH = (H + 2 * ph - dh * (KH - 1) - 1) // sh + 1
    OW = (W + 2 * pw - dw * (KW - 1) - 1) // sw + 1
    KHKW = KH * KW

    cout_pad = _round_up(Cout, 128)           # lane-dense GEMM output
    if cout_pad <= 512:
        tn = cout_pad                         # single resident Cout tile (typical SR layers)
    else:
        tn = 256 if cout_pad % 256 == 0 else 128
    num_n_tiles = cout_pad // tn

    # ---- weight fake-quant -> bf16 codes (tiny blocked Pallas kernel) ---------
    w2 = jnp.transpose(weight.astype(jnp.float32), (2, 3, 1, 0)).reshape(KHKW * Cin, Cout)
    w2 = jnp.pad(w2, ((0, 0), (0, cout_pad - Cout)))
    kw_codes = pl.pallas_call(
        _weight_code_kernel,
        out_shape=jax.ShapeDtypeStruct((KHKW * Cin, cout_pad), jnp.bfloat16),
        grid_spec=pltpu.PrefetchScalarGridSpec(
            num_scalar_prefetch=0,
            grid=(cout_pad // 128,),
            in_specs=[pl.BlockSpec(memory_space=pltpu.MemorySpace.SMEM),
                      pl.BlockSpec((KHKW * Cin, 128), lambda j: (0, j))],
            out_specs=pl.BlockSpec((KHKW * Cin, 128), lambda j: (0, j)),
        ),
        compiler_params=pltpu.CompilerParams(dimension_semantics=("parallel",)),
    )(qp_w, w2)

    # f32 correction weight for the affine part of the codes decomposition.
    kwsum = kw_codes.astype(jnp.float32).reshape(KHKW, Cin, cout_pad).sum(axis=1)
    wc = qp_act[0] * (qp_w[2] * kwsum + jnp.float32(Cin) * qp_w[0])   # (KHKW, cout_pad)

    if bias is None:
        bias = jnp.zeros((Cout,), jnp.float32)
    bias_row = jnp.pad(bias.astype(jnp.float32),
                       (0, cout_pad - Cout)).reshape(1, cout_pad)

    # ---- activation layout: NCHW -> padded NHWC -> flat (rows, Cin) slab ------
    m_total = N * Hp * Wp8
    max_off = (KH - 1) * dh * Wp8 + (KW - 1) * dw      # largest window shift
    halo = _round_up(max(max_off, 8), 8)

    tm_target = 1024                                   # large tiles amortize step overhead
    if 2 * halo < m_total <= 2 * tm_target:
        # Keep >= 2 M tiles so the "parallel" M axis can shard across 2 cores.
        tm_target = max(halo, _round_up((m_total + 1) // 2, 8))
    tm = _round_up(tm_target, halo)                    # halo block index stays integral
    bpt = tm // halo                                   # halo blocks per main tile
    num_m_tiles = (m_total + tm - 1) // tm
    a_rows = num_m_tiles * tm + halo                   # + trailing halo block

    x_nhwc = jnp.transpose(x.astype(jnp.float32), (0, 2, 3, 1))
    xp = jnp.pad(x_nhwc, ((0, 0), (ph, ph), (pw, pw + (Wp8 - Wp)), (0, 0)))
    a = jnp.pad(xp.reshape(m_total, Cin), ((0, a_rows - m_total), (0, 0)))

    # {0,1} interior mask column: real pixels -> 1, zero padding / tail -> 0.
    rows = jnp.arange(a_rows, dtype=jnp.int32)
    rem = rows % (Hp * Wp8)
    hh = rem // Wp8
    ww = rem % Wp8
    interior = ((rows < m_total) & (hh >= ph) & (hh < ph + H)
                & (ww >= pw) & (ww < pw + W))
    mask = interior.astype(jnp.float32).reshape(a_rows, 1)

    offsets = tuple(kh * dh * Wp8 + kw * dw
                    for kh in range(KH) for kw in range(KW))

    qp_conv = jnp.stack([qp_act[0], qp_act[1], qp_act[3],
                         qp_act[2] * qp_w[2], qp_act[2] * qp_w[0]])

    kernel = functools.partial(_quant_conv_kernel, tm=tm, offsets=offsets)

    conv_out = pl.pallas_call(
        kernel,
        out_shape=jax.ShapeDtypeStruct((num_m_tiles * tm, cout_pad), jnp.float32),
        grid_spec=pltpu.PrefetchScalarGridSpec(
            num_scalar_prefetch=0,
            grid=(num_n_tiles, num_m_tiles),   # M innermost -> weight block stays resident
            in_specs=[
                pl.BlockSpec(memory_space=pltpu.MemorySpace.SMEM),            # act/epilogue scalars
                pl.BlockSpec((tm, Cin), lambda j, i: (i, 0)),                 # act main rows
                pl.BlockSpec((halo, Cin), lambda j, i: ((i + 1) * bpt, 0)),   # act halo rows
                pl.BlockSpec((tm, 1), lambda j, i: (i, 0)),                   # mask main rows
                pl.BlockSpec((halo, 1), lambda j, i: ((i + 1) * bpt, 0)),     # mask halo rows
                pl.BlockSpec((KHKW * Cin, tn), lambda j, i: (0, j)),          # weight codes (resident)
                pl.BlockSpec((KHKW, tn), lambda j, i: (0, j)),                # corr weights
                pl.BlockSpec((1, tn), lambda j, i: (0, j)),                   # bias
            ],
            out_specs=pl.BlockSpec((tm, tn), lambda j, i: (i, j)),
        ),
        compiler_params=pltpu.CompilerParams(
            dimension_semantics=("parallel", "parallel"),
            vmem_limit_bytes=48 * 1024 * 1024,   # < v7x 64 MiB VMEM; ample on v5e/v6e
        ),
    )(qp_conv, a, a, mask, mask, kw_codes, wc, bias_row)

    # Full-padded-domain result -> pick the strided valid anchors, drop padded
    # Cout columns, and return NCHW to match F.conv2d.
    # TODO(synk): for stride > 1, map the grid to N*OH*OW anchors instead.
    y = conv_out[:m_total].reshape(N, Hp, Wp8, cout_pad)
    y = y[:, : (OH - 1) * sh + 1 : sh, : (OW - 1) * sw + 1 : sw, :Cout]
    return jnp.transpose(y, (0, 3, 1, 2))


# ----------------------------------------------------------------------------
# Calibration (DOBI, host-side glue) and pure-JAX reference
# ----------------------------------------------------------------------------
def _fake_quant_np(x, lb, ub, bit):
    s = (ub - lb) / (2.0 ** bit - 1.0)
    c = np.clip(x, lb, ub)
    return np.round((c - lb) / s) * s + lb


def dobi_bounds(x_np, bit, num=100):
    """Same two-direction search as DOBI, on host, deterministic."""
    mn = float(x_np.min())
    mx = float(x_np.max())
    diff = (mx - mn) / (2 * num)
    best_lb, best_ub, best_mse = mn, mx, float("inf")
    for i in range(num):
        lb = mn + diff * i
        ub = mx - diff * i
        q = _fake_quant_np(x_np, lb, ub, bit)
        mse = float(np.linalg.norm(x_np - q))
        if mse < best_mse:
            best_lb, best_ub, best_mse = lb, ub, mse
    return best_lb, best_ub


def _reference_forward(x, weight, bias, act_lb, act_ub, w_lb, w_ub, n_bit,
                       stride, padding, dilation):
    # Mirrors the kernels' multiply-by-reciprocal formulation (<= 1 ulp from the
    # torch divide before rounding) so the comparison is rounding-stable.
    n_bits = float(np.round(n_bit))
    levels = 2.0 ** n_bits - 1.0

    def fq(t, lb, ub):
        qp = _quant_params(lb, ub, levels)
        return qp[2] * jnp.round((jnp.clip(t, qp[0], qp[1]) - qp[0]) * qp[3]) + qp[0]

    xq = fq(x, act_lb, act_ub)
    wq = fq(weight, w_lb, w_ub)
    out = jax.lax.conv_general_dilated(
        xq, wq, window_strides=stride,
        padding=[(padding[0], padding[0]), (padding[1], padding[1])],
        rhs_dilation=dilation,
        dimension_numbers=("NCHW", "OIHW", "NCHW"))
    return out + bias.reshape(1, -1, 1, 1)


# ----------------------------------------------------------------------------
if __name__ == "__main__":
    key = jax.random.PRNGKey(0)
    k_x, k_w, k_b = jax.random.split(key, 3)

    N, Cin, H, W = 2, 4, 16, 16
    Cout, KH, KW = 8, 3, 3
    bit = 4
    stride, padding, dilation, groups = (1, 1), (1, 1), (1, 1), 1

    x = jax.random.normal(k_x, (N, Cin, H, W), dtype=jnp.float32)
    weight = jax.random.normal(k_w, (Cout, Cin, KH, KW), dtype=jnp.float32) * 0.1
    bias = jax.random.normal(k_b, (Cout,), dtype=jnp.float32) * 0.05

    # DOBI calibration (what the module does on its first forward pass).
    act_lb, act_ub = dobi_bounds(np.asarray(x), bit)
    w_lb, w_ub = dobi_bounds(np.asarray(weight), bit)

    out = quant_conv2d_forward(x, weight, bias, act_lb, act_ub, w_lb, w_ub,
                               n_bit=float(bit), stride=stride, padding=padding,
                               dilation=dilation, groups=groups)
    out = jax.block_until_ready(out)

    ref = jax.block_until_ready(
        _reference_forward(x, weight, bias, act_lb, act_ub, w_lb, w_ub,
                           float(bit), stride, padding, dilation))

    assert out.shape == (N, Cout, H, W), out.shape
    np.testing.assert_allclose(np.asarray(out), np.asarray(ref),
                               rtol=1e-4, atol=1e-4)
    print("KERNEL_OK")
</pallas_src>

<mosaic_0001>
module attributes {stable_mosaic.version = 11 : i64} {
  func.func @_weight_code_kernel(%arg0: i32, %arg1: memref<4xf32, #tpu.memory_space<smem>>, %arg2: memref<36x128xf32, #tpu.memory_space<vmem>>, %arg3: memref<36x128xbf16, #tpu.memory_space<vmem>>) attributes {dimension_semantics = [#tpu.dimension_semantics<parallel>], iteration_bounds = array<i64: 1>, scalar_prefetch = 0 : i64, scratch_operands = 0 : i64, tpu.core_type = #tpu.core_type<tc>, window_params = [{transform_indices = @transform_0, window_bounds = array<i64: 4>}, {transform_indices = @transform_1, window_bounds = array<i64: 36, 128>}, {transform_indices = @transform_2, window_bounds = array<i64: 36, 128>}]} {
    %c0 = arith.constant 0 : index
    %0 = memref.load %arg1[%c0] : memref<4xf32, #tpu.memory_space<smem>>
    %c1 = arith.constant 1 : index
    %1 = memref.load %arg1[%c1] : memref<4xf32, #tpu.memory_space<smem>>
    %c3 = arith.constant 3 : index
    %2 = memref.load %arg1[%c3] : memref<4xf32, #tpu.memory_space<smem>>
    %c0_0 = arith.constant 0 : index
    %c0_1 = arith.constant 0 : index
    %3 = vector.load %arg2[%c0_0, %c0_1] : memref<36x128xf32, #tpu.memory_space<vmem>>, vector<36x128xf32>
    %4 = vector.broadcast %0 : f32 to vector<36x128xf32>
    %5 = arith.maximumf %4, %3 : vector<36x128xf32>
    %6 = vector.broadcast %1 : f32 to vector<36x128xf32>
    %7 = arith.minimumf %6, %5 : vector<36x128xf32>
    %8 = vector.broadcast %0 : f32 to vector<36x128xf32>
    %9 = arith.subf %7, %8 : vector<36x128xf32>
    %10 = vector.broadcast %2 : f32 to vector<36x128xf32>
    %11 = arith.mulf %9, %10 : vector<36x128xf32>
    %12 = math.roundeven %11 : vector<36x128xf32>
    %13 = arith.truncf %12 : vector<36x128xf32> to vector<36x128xbf16>
    %c0_2 = arith.constant 0 : index
    %c0_3 = arith.constant 0 : index
    %14 = vector.load %arg3[%c0_2, %c0_3] : memref<36x128xbf16, #tpu.memory_space<vmem>>, vector<36x128xbf16>
    tpu.vector_store %arg3[%c0_2, %c0_3], %13 {strides = array<i32>} : memref<36x128xbf16, #tpu.memory_space<vmem>>, vector<36x128xbf16>,
    return
  }
  func.func @transform_0(%arg0: i32) -> i32 {
    %c0_i32 = arith.constant 0 : i32
    %c0_i32_0 = arith.constant 0 : i32
    return %c0_i32 : i32
  }
  func.func @transform_1(%arg0: i32) -> (i32, i32) {
    %c0_i32 = arith.constant 0 : i32
    %c0_i32_0 = arith.constant 0 : i32
    return %c0_i32, %arg0 : i32, i32
  }
  func.func @transform_2(%arg0: i32) -> (i32, i32) {
    %c0_i32 = arith.constant 0 : i32
    %c0_i32_0 = arith.constant 0 : i32
    return %c0_i32, %arg0 : i32, i32
  }
}

module attributes {stable_mosaic.version = 11 : i64} {
  func.func @_quant_conv_kernel(%arg0: i32, %arg1: i32, %arg2: memref<5xf32, #tpu.memory_space<smem>>, %arg3: memref<448x4xf32, #tpu.memory_space<vmem>>, %arg4: memref<56x4xf32, #tpu.memory_space<vmem>>, %arg5: memref<448x1xf32, #tpu.memory_space<vmem>>, %arg6: memref<56x1xf32, #tpu.memory_space<vmem>>, %arg7: memref<36x128xbf16, #tpu.memory_space<vmem>>, %arg8: memref<9x128xf32, #tpu.memory_space<vmem>>, %arg9: memref<1x128xf32, #tpu.memory_space<vmem>>, %arg10: memref<448x128xf32, #tpu.memory_space<vmem>>) attributes {dimension_semantics = [#tpu.dimension_semantics<parallel>, #tpu.dimension_semantics<parallel>], iteration_bounds = array<i64: 1, 2>, scalar_prefetch = 0 : i64, scratch_operands = 0 : i64, tpu.core_type = #tpu.core_type<tc>, window_params = [{transform_indices = @transform_0, window_bounds = array<i64: 5>}, {transform_indices = @transform_1, window_bounds = array<i64: 448, 4>}, {transform_indices = @transform_2, window_bounds = array<i64: 56, 4>}, {transform_indices = @transform_3, window_bounds = array<i64: 448, 1>}, {transform_indices = @transform_4, window_bounds = array<i64: 56, 1>}, {transform_indices = @transform_5, window_bounds = array<i64: 36, 128>}, {transform_indices = @transform_6, window_bounds = array<i64: 9, 128>}, {transform_indices = @transform_7, window_bounds = array<i64: 1, 128>}, {transform_indices = @transform_8, window_bounds = array<i64: 448, 128>}]} {
    %c0 = arith.constant 0 : index
    %0 = memref.load %arg2[%c0] : memref<5xf32, #tpu.memory_space<smem>>
    %c1 = arith.constant 1 : index
    %1 = memref.load %arg2[%c1] : memref<5xf32, #tpu.memory_space<smem>>
    %c2 = arith.constant 2 : index
    %2 = memref.load %arg2[%c2] : memref<5xf32, #tpu.memory_space<smem>>
    %c3 = arith.constant 3 : index
    %3 = memref.load %arg2[%c3] : memref<5xf32, #tpu.memory_space<smem>>
    %c4 = arith.constant 4 : index
    %4 = memref.load %arg2[%c4] : memref<5xf32, #tpu.memory_space<smem>>
    %c0_0 = arith.constant 0 : index
    %c0_1 = arith.constant 0 : index
    %5 = vector.load %arg3[%c0_0, %c0_1] : memref<448x4xf32, #tpu.memory_space<vmem>>, vector<448x4xf32>
    %c0_2 = arith.constant 0 : index
    %c0_3 = arith.constant 0 : index
    %6 = vector.load %arg4[%c0_2, %c0_3] : memref<56x4xf32, #tpu.memory_space<vmem>>, vector<56x4xf32>
    %7 = tpu.concatenate %5, %6 in 0 : vector<448x4xf32>, vector<56x4xf32> -> vector<504x4xf32>
    %c0_4 = arith.constant 0 : index
    %c0_5 = arith.constant 0 : index
    %8 = vector.load %arg5[%c0_4, %c0_5] : memref<448x1xf32, #tpu.memory_space<vmem>>, vector<448x1xf32>
    %c0_6 = arith.constant 0 : index
    %c0_7 = arith.constant 0 : index
    %9 = vector.load %arg6[%c0_6, %c0_7] : memref<56x1xf32, #tpu.memory_space<vmem>>, vector<56x1xf32>
    %10 = tpu.concatenate %8, %9 in 0 : vector<448x1xf32>, vector<56x1xf32> -> vector<504x1xf32>
    %11 = vector.broadcast %0 : f32 to vector<504x4xf32>
    %12 = arith.maximumf %11, %7 : vector<504x4xf32>
    %13 = vector.broadcast %1 : f32 to vector<504x4xf32>
    %14 = arith.minimumf %13, %12 : vector<504x4xf32>
    %15 = vector.broadcast %0 : f32 to vector<504x4xf32>
    %16 = arith.subf %14, %15 : vector<504x4xf32>
    %17 = vector.broadcast %2 : f32 to vector<504x4xf32>
    %18 = arith.mulf %16, %17 : vector<504x4xf32>
    %19 = math.roundeven %18 : vector<504x4xf32>
    %20 = vector.broadcast %10 : vector<504x1xf32> to vector<504x4xf32>
    %21 = arith.mulf %19, %20 : vector<504x4xf32>
    %cst = arith.constant dense<0.000000e+00> : vector<504xf32>
    %22 = vector.multi_reduction <add>, %21, %cst [1] : vector<504x4xf32> to vector<504xf32>
    %23 = vector.shape_cast %22 : vector<504xf32> to vector<504x1xf32>
    %24 = arith.truncf %21 : vector<504x4xf32> to vector<504x4xbf16>
    %25 = vector.extract_strided_slice %24 {offsets = [0, 0], sizes = [448, 4], strides = [1, 1]} : vector<504x4xbf16> to vector<448x4xbf16>
    %26 = vector.extract_strided_slice %24 {offsets = [1, 0], sizes = [448, 4], strides = [1, 1]} : vector<504x4xbf16> to vector<448x4xbf16>
    %27 = vector.extract_strided_slice %24 {offsets = [2, 0], sizes = [448, 4], strides = [1, 1]} : vector<504x4xbf16> to vector<448x4xbf16>
    %28 = vector.extract_strided_slice %24 {offsets = [24, 0], sizes = [448, 4], strides = [1, 1]} : vector<504x4xbf16> to vector<448x4xbf16>
    %29 = vector.extract_strided_slice %24 {offsets = [25, 0], sizes = [448, 4], strides = [1, 1]} : vector<504x4xbf16> to vector<448x4xbf16>
    %30 = vector.extract_strided_slice %24 {offsets = [26, 0], sizes = [448, 4], strides = [1, 1]} : vector<504x4xbf16> to vector<448x4xbf16>
    %31 = vector.extract_strided_slice %24 {offsets = [48, 0], sizes = [448, 4], strides = [1, 1]} : vector<504x4xbf16> to vector<448x4xbf16>
    %32 = vector.extract_strided_slice %24 {offsets = [49, 0], sizes = [448, 4], strides = [1, 1]} : vector<504x4xbf16> to vector<448x4xbf16>
    %33 = vector.extract_strided_slice %24 {offsets = [50, 0], sizes = [448, 4], strides = [1, 1]} : vector<504x4xbf16> to vector<448x4xbf16>
    %34 = tpu.concatenate %25, %26, %27, %28, %29, %30, %31, %32, %33 in 1 : vector<448x4xbf16>, vector<448x4xbf16>, vector<448x4xbf16>, vector<448x4xbf16>, vector<448x4xbf16>, vector<448x4xbf16>, vector<448x4xbf16>, vector<448x4xbf16>, vector<448x4xbf16> -> vector<448x36xbf16>
    %35 = vector.extract_strided_slice %10 {offsets = [0, 0], sizes = [448, 1], strides = [1, 1]} : vector<504x1xf32> to vector<448x1xf32>
    %36 = vector.extract_strided_slice %10 {offsets = [1, 0], sizes = [448, 1], strides = [1, 1]} : vector<504x1xf32> to vector<448x1xf32>
    %37 = vector.extract_strided_slice %10 {offsets = [2, 0], sizes = [448, 1], strides = [1, 1]} : vector<504x1xf32> to vector<448x1xf32>
    %38 = vector.extract_strided_slice %10 {offsets = [24, 0], sizes = [448, 1], strides = [1, 1]} : vector<504x1xf32> to vector<448x1xf32>
    %39 = vector.extract_strided_slice %10 {offsets = [25, 0], sizes = [448, 1], strides = [1, 1]} : vector<504x1xf32> to vector<448x1xf32>
    %40 = vector.extract_strided_slice %10 {offsets = [26, 0], sizes = [448, 1], strides = [1, 1]} : vector<504x1xf32> to vector<448x1xf32>
    %41 = vector.extract_strided_slice %10 {offsets = [48, 0], sizes = [448, 1], strides = [1, 1]} : vector<504x1xf32> to vector<448x1xf32>
    %42 = vector.extract_strided_slice %10 {offsets = [49, 0], sizes = [448, 1], strides = [1, 1]} : vector<504x1xf32> to vector<448x1xf32>
    %43 = vector.extract_strided_slice %10 {offsets = [50, 0], sizes = [448, 1], strides = [1, 1]} : vector<504x1xf32> to vector<448x1xf32>
    %44 = tpu.concatenate %35, %36, %37, %38, %39, %40, %41, %42, %43 in 1 : vector<448x1xf32>, vector<448x1xf32>, vector<448x1xf32>, vector<448x1xf32>, vector<448x1xf32>, vector<448x1xf32>, vector<448x1xf32>, vector<448x1xf32>, vector<448x1xf32> -> vector<448x9xf32>
    %45 = vector.extract_strided_slice %23 {offsets = [0, 0], sizes = [448, 1], strides = [1, 1]} : vector<504x1xf32> to vector<448x1xf32>
    %46 = vector.extract_strided_slice %23 {offsets = [1, 0], sizes = [448, 1], strides = [1, 1]} : vector<504x1xf32> to vector<448x1xf32>
    %47 = arith.addf %45, %46 : vector<448x1xf32>
    %48 = vector.extract_strided_slice %23 {offsets = [2, 0], sizes = [448, 1], strides = [1, 1]} : vector<504x1xf32> to vector<448x1xf32>
    %49 = arith.addf %47, %48 : vector<448x1xf32>
    %50 = vector.extract_strided_slice %23 {offsets = [24, 0], sizes = [448, 1], strides = [1, 1]} : vector<504x1xf32> to vector<448x1xf32>
    %51 = arith.addf %49, %50 : vector<448x1xf32>
    %52 = vector.extract_strided_slice %23 {offsets = [25, 0], sizes = [448, 1], strides = [1, 1]} : vector<504x1xf32> to vector<448x1xf32>
    %53 = arith.addf %51, %52 : vector<448x1xf32>
    %54 = vector.extract_strided_slice %23 {offsets = [26, 0], sizes = [448, 1], strides = [1, 1]} : vector<504x1xf32> to vector<448x1xf32>
    %55 = arith.addf %53, %54 : vector<448x1xf32>
    %56 = vector.extract_strided_slice %23 {offsets = [48, 0], sizes = [448, 1], strides = [1, 1]} : vector<504x1xf32> to vector<448x1xf32>
    %57 = arith.addf %55, %56 : vector<448x1xf32>
    %58 = vector.extract_strided_slice %23 {offsets = [49, 0], sizes = [448, 1], strides = [1, 1]} : vector<504x1xf32> to vector<448x1xf32>
    %59 = arith.addf %57, %58 : vector<448x1xf32>
    %60 = vector.extract_strided_slice %23 {offsets = [50, 0], sizes = [448, 1], strides = [1, 1]} : vector<504x1xf32> to vector<448x1xf32>
    %61 = arith.addf %59, %60 : vector<448x1xf32>
    %c0_8 = arith.constant 0 : index
    %c0_9 = arith.constant 0 : index
    %62 = vector.load %arg7[%c0_8, %c0_9] : memref<36x128xbf16, #tpu.memory_space<vmem>>, vector<36x128xbf16>
    %cst_10 = arith.constant dense<0.000000e+00> : vector<448x128xf32>
    %63 = tpu.matmul %34, %62, %cst_10 {dimension_numbers = #tpu.dot_dimension_numbers<[1], [0], [0], [1], [0, 0, 1, 1], [], []>} : vector<448x36xbf16>, vector<36x128xbf16>, vector<448x128xf32> -> vector<448x128xf32>
    %c0_11 = arith.constant 0 : index
    %c0_12 = arith.constant 0 : index
    %64 = vector.load %arg8[%c0_11, %c0_12] : memref<9x128xf32, #tpu.memory_space<vmem>>, vector<9x128xf32>
    %cst_13 = arith.constant dense<0.000000e+00> : vector<448x128xf32>
    %65 = tpu.matmul %44, %64, %cst_13 {dimension_numbers = #tpu.dot_dimension_numbers<[1], [0], [0], [1], [0, 0, 1, 1], [], []>} : vector<448x9xf32>, vector<9x128xf32>, vector<448x128xf32> -> vector<448x128xf32>
    %66 = vector.broadcast %3 : f32 to vector<448x128xf32>
    %67 = arith.mulf %66, %63 : vector<448x128xf32>
    %68 = vector.broadcast %4 : f32 to vector<448x1xf32>
    %69 = arith.mulf %68, %61 : vector<448x1xf32>
    %70 = vector.broadcast %69 : vector<448x1xf32> to vector<448x128xf32>
    %71 = arith.addf %67, %70 : vector<448x128xf32>
    %72 = arith.addf %71, %65 : vector<448x128xf32>
    %c0_14 = arith.constant 0 : index
    %c0_15 = arith.constant 0 : index
    %73 = vector.load %arg9[%c0_14, %c0_15] : memref<1x128xf32, #tpu.memory_space<vmem>>, vector<1x128xf32>
    %74 = vector.broadcast %73 : vector<1x128xf32> to vector<448x128xf32>
    %75 = arith.addf %72, %74 : vector<448x128xf32>
    %c0_16 = arith.constant 0 : index
    %c0_17 = arith.constant 0 : index
    %76 = vector.load %arg10[%c0_16, %c0_17] : memref<448x128xf32, #tpu.memory_space<vmem>>, vector<448x128xf32>
    tpu.vector_store %arg10[%c0_16, %c0_17], %75 {strides = array<i32>} : memref<448x128xf32, #tpu.memory_space<vmem>>, vector<448x128xf32>,
    return
  }
  func.func @transform_0(%arg0: i32, %arg1: i32) -> i32 {
    %c0_i32 = arith.constant 0 : i32
    %c0_i32_0 = arith.constant 0 : i32
    return %c0_i32 : i32
  }
  func.func @transform_1(%arg0: i32, %arg1: i32) -> (i32, i32) {
    %c0_i32 = arith.constant 0 : i32
    %c0_i32_0 = arith.constant 0 : i32
    return %arg1, %c0_i32 : i32, i32
  }
  func.func @transform_2(%arg0: i32, %arg1: i32) -> (i32, i32) {
    %c1_i32 = arith.constant 1 : i32
    %0 = arith.addi %arg1, %c1_i32 : i32
    %c8_i32 = arith.constant 8 : i32
    %1 = arith.muli %0, %c8_i32 : i32
    %c0_i32 = arith.constant 0 : i32
    %c0_i32_0 = arith.constant 0 : i32
    return %1, %c0_i32 : i32, i32
  }
  func.func @transform_3(%arg0: i32, %arg1: i32) -> (i32, i32) {
    %c0_i32 = arith.constant 0 : i32
    %c0_i32_0 = arith.constant 0 : i32
    return %arg1, %c0_i32 : i32, i32
  }
  func.func @transform_4(%arg0: i32, %arg1: i32) -> (i32, i32) {
    %c1_i32 = arith.constant 1 : i32
    %0 = arith.addi %arg1, %c1_i32 : i32
    %c8_i32 = arith.constant 8 : i32
    %1 = arith.muli %0, %c8_i32 : i32
    %c0_i32 = arith.constant 0 : i32
    %c0_i32_0 = arith.constant 0 : i32
    return %1, %c0_i32 : i32, i32
  }
  func.func @transform_5(%arg0: i32, %arg1: i32) -> (i32, i32) {
    %c0_i32 = arith.constant 0 : i32
    %c0_i32_0 = arith.constant 0 : i32
    return %c0_i32, %arg0 : i32, i32
  }
  func.func @transform_6(%arg0: i32, %arg1: i32) -> (i32, i32) {
    %c0_i32 = arith.constant 0 : i32
    %c0_i32_0 = arith.constant 0 : i32
    return %c0_i32, %arg0 : i32, i32
  }
  func.func @transform_7(%arg0: i32, %arg1: i32) -> (i32, i32) {
    %c0_i32 = arith.constant 0 : i32
    %c0_i32_0 = arith.constant 0 : i32
    return %c0_i32, %arg0 : i32, i32
  }
  func.func @transform_8(%arg0: i32, %arg1: i32) -> (i32, i32) {
    %c0_i32 = arith.constant 0 : i32
    return %arg1, %arg0 : i32, i32
  }
}

</mosaic_0001>

<llo_original>
// kernel: quant_conv2d_forward.2
$region0: #{quant_conv2d_forward.2}
  #allocation0 [shape = 'u32[]', space=smem, size = 0x4, offset = 0x4, fixed_abs, tag = 'smem constant byte address 0x4 - core index']
  #allocation1 [shape = 'u32[144,128]{1,0:T(1,128)}', space=vmem, size = 0x12000, scoped, tag = 'internal scratch']
  %s0 = inlined_call_operand.vmem [shape: f32[4], index: 0, kind: input, shape index: {}]
  %s1 = inlined_call_operand.vmem [shape: f32[36,128], index: 1, kind: input, shape index: {}]
  %s2 = inlined_call_operand.vmem [shape: bf16[36,128], index: 2, kind: output, shape index: {}]
  %s3 = sld [smem:[#allocation0]]
  $region22: #{quant_conv2d_forward.2} parent=0
    _
  %s5 = ssub.s32 1, %s3
  %s6 = scalar_select 0, %s5, %s3
  $region1: #{quant_conv2d_forward.2} parent=0
    #allocation2 [shape = 'u8[512]{0}', space=smem, size = 0x200, scoped, tag = 'input window, operand 0, single buffered']
    #allocation3 [shape = 's32[1]{0}', space=sflag, size = 0x4, scoped, tag = 'scoped memory for quant_conv2d_forward.2']
    %7 = vsyncpa [#allocation3], 0
    // Predicated region
    $region2: #{quant_conv2d_forward.2} parent=1 // pred_check
      _
    $region3: #{quant_conv2d_forward.2} parent=1 // pred_check_branch
      %9 = sbr.rel (0) target = $region5
    $region4: #{quant_conv2d_forward.2} parent=1 // pred_region
      %s11 = ssub.s32 16, 16
      %12 = vsyncadd [#allocation3], %s11
      %s14 = sshll.u32 %s0, 4
      %s15 = int_to_ptr.vmem [resolvable:$true] %s14
      %17 = dma.vmem_to_smem %s15, 16, [#allocation2], [#allocation3]
    $region5: #{quant_conv2d_forward.2} parent=1 // pred_fallthru
      _
    // Predicated region
    $region6: #{quant_conv2d_forward.2} parent=1 // pred_check
      _
    $region7: #{quant_conv2d_forward.2} parent=1 // pred_check_branch
      %19 = sbr.rel (0) target = $region9
    $region8: #{quant_conv2d_forward.2} parent=1 // pred_region
      _
    $region9: #{quant_conv2d_forward.2} parent=1 // pred_fallthru
      _
    // Predicated region
    $region10: #{quant_conv2d_forward.2} parent=1 // pred_check
      _
    $region11: #{quant_conv2d_forward.2} parent=1 // pred_check_branch
      %21 = sbr.rel (0) target = $region13
    $region12: #{quant_conv2d_forward.2} parent=1 // pred_region
      %22 = dma.done [#allocation3], 16
    $region13: #{quant_conv2d_forward.2} parent=1 // pred_fallthru
      _
    %23 = sfence
    %s24 = sld [smem:[#allocation2]]
    %s25 = sld [smem:[#allocation2 + $0x1]]
    %s26 = sld [smem:[#allocation2 + $0x3]]
    %v27 = vld [vmem:[%s1] sm:$0xff]
    %v28 = vld [vmem:[%s1 + $0x8] sm:$0xff]
    %v29 = vld [vmem:[%s1 + $0x10] sm:$0xff]
    %v30 = vld [vmem:[%s1 + $0x18] sm:$0xff]
    %v31 = vld [vmem:[%s1 + $0x20] sm:$0xf]
    %v32 = vstv %s24
    %v33 = vmax.f32 %v32, %v27
    %v34 = vmax.f32 %v32, %v28
    %v35 = vmax.f32 %v32, %v29
    %v36 = vmax.f32 %v32, %v30
    %v37 = vmax.f32 %v32, %v31
    %v38 = vstv %s25
    %v39 = vmin.f32 %v38, %v33
    %v40 = vmin.f32 %v38, %v34
    %v41 = vmin.f32 %v38, %v35
    %v42 = vmin.f32 %v38, %v36
    %v43 = vmin.f32 %v38, %v37
    %v44 = vsub.f32 %v39, %v32
    %v45 = vsub.f32 %v40, %v32
    %v46 = vsub.f32 %v41, %v32
    %v47 = vsub.f32 %v42, %v32
    %v48 = vsub.f32 %v43, %v32
    %v49 = vstv %s26
    %v50 = vmul.f32 %v44, %v49
    %v51 = vmul.f32 %v45, %v49
    %v52 = vmul.f32 %v46, %v49
    %v53 = vmul.f32 %v47, %v49
    %v54 = vmul.f32 %v48, %v49
    %v55 = vround.ne.pseudo %v50
    %v56 = vround.ne.pseudo %v51
    %v57 = vround.ne.pseudo %v52
    %v58 = vround.ne.pseudo %v53
    %v59 = vround.ne.pseudo %v54
    %v60 = vpack.c.bf16 %v56, %v55
    %v61 = vpack.c.bf16 %v58, %v57
    %v62 = vpack.c.bf16 %v59, %v59
    %v66 = vunpack.c.l.b16 %v60
    %v67 = vunpack.c.h.b16 %v60
    %v68 = vunpack.c.l.b16 %v61
    %v69 = vunpack.c.h.b16 %v61
    %v70 = vunpack.c.l.b16 %v62
    %v71 = vpack.c.b16 %v66, %v66
    %v72 = vpack.c.b16 %v67, %v67
    %v73 = vpack.c.b16 %v68, %v68
    %v74 = vpack.c.b16 %v69, %v69
    %v75 = vpack.c.b16 %v70, %v70
    %81 = vst [vmem:[%s2] sm:$0xf] %v71
    %82 = vst [vmem:[%s2 + $0x4] sm:$0xf] %v72
    %83 = vst [vmem:[%s2 + $0x8] sm:$0xf] %v73
    %84 = vst [vmem:[%s2 + $0xc] sm:$0xf] %v74
    %85 = vst [vmem:[%s2 + $0x10] sm:$0x3] %v75
    // Predicated region
    $region14: #{quant_conv2d_forward.2} parent=1 // pred_check
      _
    $region15: #{quant_conv2d_forward.2} parent=1 // pred_check_branch
      %87 = sbr.rel (0) target = $region17
    $region16: #{quant_conv2d_forward.2} parent=1 // pred_region
      _
    $region17: #{quant_conv2d_forward.2} parent=1 // pred_fallthru
      _
    // Predicated region
    $region18: #{quant_conv2d_forward.2} parent=1 // pred_check
      _
    $region19: #{quant_conv2d_forward.2} parent=1 // pred_check_branch
      %89 = sbr.rel (0) target = $region21
    $region20: #{quant_conv2d_forward.2} parent=1 // pred_region
      _
    $region21: #{quant_conv2d_forward.2} parent=1 // pred_fallthru
      _
    %90 = vsyncpa [#allocation3], 1

// kernel: quant_conv2d_forward.3
$region0: #{quant_conv2d_forward.3}
  #allocation0 [shape = 'u32[]', space=smem, size = 0x4, offset = 0x4, fixed_abs, tag = 'smem constant byte address 0x4 - core index']
  #allocation1 [shape = 'u32[144,128]{1,0:T(1,128)}', space=vmem, size = 0x12000, scoped, tag = 'internal scratch']
  %s0 = inlined_call_operand.vmem [shape: f32[5], index: 0, kind: input, shape index: {}]
  %s1 = inlined_call_operand.vmem [shape: f32[952,4], index: 1, kind: input, shape index: {}, may-alias: {1,2}]
  %s2 = inlined_call_operand.vmem [shape: f32[952,4], index: 2, kind: input, shape index: {}, may-alias: {1,2}]
  %s3 = inlined_call_operand.vmem [shape: f32[952,1], index: 3, kind: input, shape index: {}, may-alias: {3,4}]
  %s4 = inlined_call_operand.vmem [shape: f32[952,1], index: 4, kind: input, shape index: {}, may-alias: {3,4}]
  %s5 = inlined_call_operand.vmem [shape: bf16[36,128], index: 5, kind: input, shape index: {}]
  %s6 = inlined_call_operand.vmem [shape: f32[9,128], index: 6, kind: input, shape index: {}]
  %s7 = inlined_call_operand.vmem [shape: f32[1,128], index: 7, kind: input, shape index: {}]
  %s8 = inlined_call_operand.vmem [shape: f32[896,128], index: 8, kind: output, shape index: {}]
  %s9 = sld [smem:[#allocation0]]
  $region69: #{quant_conv2d_forward.3} parent=0
    _
  %s11 = ssub.s32 1, %s9
  %s12 = scalar_select 0, %s11, %s9
  $region1: #{quant_conv2d_forward.3} parent=0
    #allocation2 [shape = 'u8[512]{0}', space=smem, size = 0x200, scoped, tag = 'input window, operand 0, single buffered']
    #allocation3 [shape = 's32[2]{0}', space=sflag, size = 0x8, scoped, tag = 'scoped memory for quant_conv2d_forward.3']
    %13 = vsyncpa [#allocation3], 0
    loop: start=0, step=1, limit=4
    $region2: #{quant_conv2d_forward.3} parent=1 // loop_pre_header
      _
    $region3: #{quant_conv2d_forward.3} parent=1 // loop_header
      %s15 = sphi 0, %s19
      %p16 = scmp.ge.s32.totalorder %s15, 4
      %s22 = sphi 0, %s34
      %s23 = sphi 0, %s30
      %s24 = sphi 0, %s22
      %s25 = sphi 0, %s23
      %s26 = sphi 0, %s24
      %s27 = sphi 0, %s25
      %s35 = sphi 0, %s35
      %s37 = sphi 0, %s35
      %s38 = sphi 0, %s37
      %s52 = sphi 0, %s38
      %s58 = sphi 0, %s60
      %s61 = sphi 0, %s58
      %s62 = sphi 0, %s61
      %s78 = sphi 0, %s62
      %s88 = sphi 0, %s90
      %s91 = sphi 0, %s88
      %s92 = sphi 0, %s91
      %s108 = sphi 0, %s92
      %s114 = sphi 0, %s116
      %s117 = sphi 0, %s114
      %s118 = sphi 0, %s117
      %s134 = sphi 0, %s118
      %s144 = sphi 0, %s146
      %s147 = sphi 0, %s144
      %s148 = sphi 0, %s147
      %s164 = sphi 0, %s148
      %s170 = sphi 0, %s172
      %s173 = sphi 0, %s170
      %s174 = sphi 0, %s173
      %s190 = sphi 0, %s174
      %s196 = sphi 0, %s198
      %s199 = sphi 0, %s196
      %s200 = sphi 0, %s199
      %s216 = sphi 0, %s200
      %s222 = sphi 0, %s224
      %s225 = sphi 0, %s222
      %s226 = sphi 0, %s225
      %s242 = sphi 0, %s226
      %s250 = sphi 0, %s252
      %s253 = sphi 0, %s250
      %s254 = sphi 0, %s253
      %s270 = sphi 0, %s254
    $region4: #{quant_conv2d_forward.3} parent=1 // loop_header_branch
      %18 = sbr.rel (%p16) target = $region8
    $region5: #{quant_conv2d_forward.3} parent=1 // loop_body
      %s20 = ssub.s32 %s15, 1
      %s21 = ssub.s32 %s15, 2
      %s28 = sadd.s32 1, %s23
      %p29 = scmp.ge.s32.totalorder %s28, 2
      %s30 = scalar_select %p29, 0, %s28
      %s31 = sadd.s32 1, %s22
      %s32 = scalar_select %p29, %s31, %s22
      %p33 = scmp.ge.s32.totalorder %s32, 1
      %s34 = scalar_select %p33, 0, %s32
      %s36 = sadd.s32 %s35, 1
      %p39 = scmp.eq.s32.totalorder %s15, 1
      %p40 = scmp.ne.s32.totalorder %s35, %s37
      %p41 = scmp.eq.s32.totalorder %s15, 0
      %p42 = por %p40, %p41
      %p43 = scmp.ne.s32.totalorder %s35, %s37
      %p44 = scmp.eq.s32.totalorder %s20, 1
      %p45 = por %p43, %p44
      %p46 = scmp.ne.s32.totalorder %s37, %s38
      %p47 = scmp.eq.s32.totalorder %s20, 0
      %p48 = por %p46, %p47
      %p49 = scmp.ne.s32.totalorder %s37, %s38
      %p50 = scmp.eq.s32.totalorder %s21, 1
      %p51 = por %p49, %p50
      %p53 = scmp.ne.s32.totalorder %s38, %s52
      %p54 = scmp.eq.s32.totalorder %s21, 0
      %p55 = por %p53, %p54
      %s56 = ssub.s32 %s23, %s30
      %p57 = scmp.eq.s32.totalorder %s56, 0
      %s59 = sadd.s32 %s58, 1
      %s60 = scalar_select %p57, %s58, %s59
      %p63 = pneg %p57
      %p64 = scmp.eq.s32.totalorder %s15, 1
      %p65 = por %p63, %p64
      %p66 = scmp.ne.s32.totalorder %s58, %s61
      %p67 = scmp.eq.s32.totalorder %s15, 0
      %p68 = por %p66, %p67
      %p69 = scmp.ne.s32.totalorder %s58, %s61
      %p70 = scmp.eq.s32.totalorder %s20, 1
      %p71 = por %p69, %p70
      %p72 = scmp.ne.s32.totalorder %s61, %s62
      %p73 = scmp.eq.s32.totalorder %s20, 0
      %p74 = por %p72, %p73
      %p75 = scmp.ne.s32.totalorder %s61, %s62
      %p76 = scmp.eq.s32.totalorder %s21, 1
      %p77 = por %p75, %p76
      %p79 = scmp.ne.s32.totalorder %s62, %s78
      %p80 = scmp.eq.s32.totalorder %s21, 0
      %p81 = por %p79, %p80
      %s82 = sadd.s32 %s23, 1
      %s83 = smul.u32 %s82, 8
      %s84 = sadd.s32 %s30, 1
      %s85 = smul.u32 %s84, 8
      %s86 = ssub.s32 %s83, %s85
      %p87 = scmp.eq.s32.totalorder %s86, 0
      %s89 = sadd.s32 %s88, 1
      %s90 = scalar_select %p87, %s88, %s89
      %p93 = pneg %p87
      %p94 = scmp.eq.s32.totalorder %s15, 1
      %p95 = por %p93, %p94
      %p96 = scmp.ne.s32.totalorder %s88, %s91
      %p97 = scmp.eq.s32.totalorder %s15, 0
      %p98 = por %p96, %p97
      %p99 = scmp.ne.s32.totalorder %s88, %s91
      %p100 = scmp.eq.s32.totalorder %s20, 1
      %p101 = por %p99, %p100
      %p102 = scmp.ne.s32.totalorder %s91, %s92
      %p103 = scmp.eq.s32.totalorder %s20, 0
      %p104 = por %p102, %p103
      %p105 = scmp.ne.s32.totalorder %s91, %s92
      %p106 = scmp.eq.s32.totalorder %s21, 1
      %p107 = por %p105, %p106
      %p109 = scmp.ne.s32.totalorder %s92, %s108
      %p110 = scmp.eq.s32.totalorder %s21, 0
      %p111 = por %p109, %p110
      %s112 = ssub.s32 %s23, %s30
      %p113 = scmp.eq.s32.totalorder %s112, 0
      %s115 = sadd.s32 %s114, 1
      %s116 = scalar_select %p113, %s114, %s115
      %p119 = pneg %p113
      %p120 = scmp.eq.s32.totalorder %s15, 1
      %p121 = por %p119, %p120
      %p122 = scmp.ne.s32.totalorder %s114, %s117
      %p123 = scmp.eq.s32.totalorder %s15, 0
      %p124 = por %p122, %p123
      %p125 = scmp.ne.s32.totalorder %s114, %s117
      %p126 = scmp.eq.s32.totalorder %s20, 1
      %p127 = por %p125, %p126
      %p128 = scmp.ne.s32.totalorder %s117, %s118
      %p129 = scmp.eq.s32.totalorder %s20, 0
      %p130 = por %p128, %p129
      %p131 = scmp.ne.s32.totalorder %s117, %s118
      %p132 = scmp.eq.s32.totalorder %s21, 1
      %p133 = por %p131, %p132
      %p135 = scmp.ne.s32.totalorder %s118, %s134
      %p136 = scmp.eq.s32.totalorder %s21, 0
      %p137 = por %p135, %p136
      %s138 = sadd.s32 %s23, 1
      %s139 = smul.u32 %s138, 8
      %s140 = sadd.s32 %s30, 1
      %s141 = smul.u32 %s140, 8
      %s142 = ssub.s32 %s139, %s141
      %p143 = scmp.eq.s32.totalorder %s142, 0
      %s145 = sadd.s32 %s144, 1
      %s146 = scalar_select %p143, %s144, %s145
      %p149 = pneg %p143
      %p150 = scmp.eq.s32.totalorder %s15, 1
      %p151 = por %p149, %p150
      %p152 = scmp.ne.s32.totalorder %s144, %s147
      %p153 = scmp.eq.s32.totalorder %s15, 0
      %p154 = por %p152, %p153
      %p155 = scmp.ne.s32.totalorder %s144, %s147
      %p156 = scmp.eq.s32.totalorder %s20, 1
      %p157 = por %p155, %p156
      %p158 = scmp.ne.s32.totalorder %s147, %s148
      %p159 = scmp.eq.s32.totalorder %s20, 0
      %p160 = por %p158, %p159
      %p161 = scmp.ne.s32.totalorder %s147, %s148
      %p162 = scmp.eq.s32.totalorder %s21, 1
      %p163 = por %p161, %p162
      %p165 = scmp.ne.s32.totalorder %s148, %s164
      %p166 = scmp.eq.s32.totalorder %s21, 0
      %p167 = por %p165, %p166
      %s168 = ssub.s32 %s22, %s34
      %p169 = scmp.eq.s32.totalorder %s168, 0
      %s171 = sadd.s32 %s170, 1
      %s172 = scalar_select %p169, %s170, %s171
      %p175 = pneg %p169
      %p176 = scmp.eq.s32.totalorder %s15, 1
      %p177 = por %p175, %p176
      %p178 = scmp.ne.s32.totalorder %s170, %s173
      %p179 = scmp.eq.s32.totalorder %s15, 0
      %p180 = por %p178, %p179
      %p181 = scmp.ne.s32.totalorder %s170, %s173
      %p182 = scmp.eq.s32.totalorder %s20, 1
      %p183 = por %p181, %p182
      %p184 = scmp.ne.s32.totalorder %s173, %s174
      %p185 = scmp.eq.s32.totalorder %s20, 0
      %p186 = por %p184, %p185
      %p187 = scmp.ne.s32.totalorder %s173, %s174
      %p188 = scmp.eq.s32.totalorder %s21, 1
      %p189 = por %p187, %p188
      %p191 = scmp.ne.s32.totalorder %s174, %s190
      %p192 = scmp.eq.s32.totalorder %s21, 0
      %p193 = por %p191, %p192
      %s194 = ssub.s32 %s22, %s34
      %p195 = scmp.eq.s32.totalorder %s194, 0
      %s197 = sadd.s32 %s196, 1
      %s198 = scalar_select %p195, %s196, %s197
      %p201 = pneg %p195
      %p202 = scmp.eq.s32.totalorder %s15, 1
      %p203 = por %p201, %p202
      %p204 = scmp.ne.s32.totalorder %s196, %s199
      %p205 = scmp.eq.s32.totalorder %s15, 0
      %p206 = por %p204, %p205
      %p207 = scmp.ne.s32.totalorder %s196, %s199
      %p208 = scmp.eq.s32.totalorder %s20, 1
      %p209 = por %p207, %p208
      %p210 = scmp.ne.s32.totalorder %s199, %s200
      %p211 = scmp.eq.s32.totalorder %s20, 0
      %p212 = por %p210, %p211
      %p213 = scmp.ne.s32.totalorder %s199, %s200
      %p214 = scmp.eq.s32.totalorder %s21, 1
      %p215 = por %p213, %p214
      %p217 = scmp.ne.s32.totalorder %s200, %s216
      %p218 = scmp.eq.s32.totalorder %s21, 0
      %p219 = por %p217, %p218
      %s220 = ssub.s32 %s22, %s34
      %p221 = scmp.eq.s32.totalorder %s220, 0
      %s223 = sadd.s32 %s222, 1
      %s224 = scalar_select %p221, %s222, %s223
      %p227 = pneg %p221
      %p228 = scmp.eq.s32.totalorder %s15, 1
      %p229 = por %p227, %p228
      %p230 = scmp.ne.s32.totalorder %s222, %s225
      %p231 = scmp.eq.s32.totalorder %s15, 0
      %p232 = por %p230, %p231
      %p233 = scmp.ne.s32.totalorder %s222, %s225
      %p234 = scmp.eq.s32.totalorder %s20, 1
      %p235 = por %p233, %p234
      %p236 = scmp.ne.s32.totalorder %s225, %s226
      %p237 = scmp.eq.s32.totalorder %s20, 0
      %p238 = por %p236, %p237
      %p239 = scmp.ne.s32.totalorder %s225, %s226
      %p240 = scmp.eq.s32.totalorder %s21, 1
      %p241 = por %p239, %p240
      %p243 = scmp.ne.s32.totalorder %s226, %s242
      %p244 = scmp.eq.s32.totalorder %s21, 0
      %p245 = por %p243, %p244
      %s246 = ssub.s32 %s23, %s30
      %s247 = ssub.s32 %s22, %s34
      %s248 = sor.u32 %s246, %s247
      %p249 = scmp.eq.s32.totalorder %s248, 0
      %s251 = sadd.s32 %s250, 1
      %s252 = scalar_select %p249, %s250, %s251
      %p255 = pneg %p249
      %p256 = scmp.eq.s32.totalorder %s15, 1
      %p257 = por %p255, %p256
      %p258 = scmp.ne.s32.totalorder %s250, %s253
      %p259 = scmp.eq.s32.totalorder %s15, 0
      %p260 = por %p258, %p259
      %p261 = scmp.ne.s32.totalorder %s250, %s253
      %p262 = scmp.eq.s32.totalorder %s20, 1
      %p263 = por %p261, %p262
      %p264 = scmp.ne.s32.totalorder %s253, %s254
      %p265 = scmp.eq.s32.totalorder %s20, 0
      %p266 = por %p264, %p265
      %p267 = scmp.ne.s32.totalorder %s253, %s254
      %p268 = scmp.eq.s32.totalorder %s21, 1
      %p269 = por %p267, %p268
      %p271 = scmp.ne.s32.totalorder %s254, %s270
      %p272 = scmp.eq.s32.totalorder %s21, 0
      %p273 = por %p271, %p272
      %p274 = scmp.le.s32.totalorder 1, %s15
      %p275 = scmp.lt.s32.totalorder %s15, 3
      %p276 = pnand %p274, %p275
      %p277 = pneg %p276
      // Predicated region
      $region9: #{quant_conv2d_forward.3} parent=5 // pred_check
        _
      $region10: #{quant_conv2d_forward.3} parent=5 // pred_check_branch
        %279 = sbr.rel (%p276) target = $region12
      $region11: #{quant_conv2d_forward.3} parent=5 // pred_region
        %s280 = ssub.s32 %s15, 1
        // Predicated region
        $region13: #{quant_conv2d_forward.3} parent=11 // pred_check
          %p281 = pneg %p48
        $region14: #{quant_conv2d_forward.3} parent=11 // pred_check_branch
          %283 = sbr.rel (%p281) target = $region16
        $region15: #{quant_conv2d_forward.3} parent=11 // pred_region
          %s285 = ssub.s32 16, 16
          %286 = vsyncadd [#allocation3], %s285
          %s288 = sshll.u32 %s0, 4
          %s289 = int_to_ptr.vmem [resolvable:$true] %s288
          %291 = dma.vmem_to_smem %s289, 16, [#allocation2], [#allocation3]
        $region16: #{quant_conv2d_forward.3} parent=11 // pred_fallthru
          _
        // Predicated region
        $region17: #{quant_conv2d_forward.3} parent=11 // pred_check
          %p292 = pneg %p186
        $region18: #{quant_conv2d_forward.3} parent=11 // pred_check_branch
          %294 = sbr.rel (%p292) target = $region20
        $region19: #{quant_conv2d_forward.3} parent=11 // pred_region
          %p295 = scmp.lt.s32.totalorder %s24, 0
          %s296 = scalar_select %p295, %s24, 0
          %s297 = smul.addr %s296, 4
          %s298 = scalar_lea.vmem %s5, %s297
        $region20: #{quant_conv2d_forward.3} parent=11 // pred_fallthru
          _
        // Predicated region
        $region21: #{quant_conv2d_forward.3} parent=11 // pred_check
          %p299 = pneg %p212
        $region22: #{quant_conv2d_forward.3} parent=11 // pred_check_branch
          %301 = sbr.rel (%p299) target = $region24
        $region23: #{quant_conv2d_forward.3} parent=11 // pred_region
          %p302 = scmp.lt.s32.totalorder %s24, 0
          %s303 = scalar_select %p302, %s24, 0
          %s304 = smul.addr %s303, 8
          %s305 = scalar_lea.vmem %s6, %s304
        $region24: #{quant_conv2d_forward.3} parent=11 // pred_fallthru
          _
        // Predicated region
        $region25: #{quant_conv2d_forward.3} parent=11 // pred_check
          %p306 = pneg %p238
        $region26: #{quant_conv2d_forward.3} parent=11 // pred_check_branch
          %308 = sbr.rel (%p306) target = $region28
        $region27: #{quant_conv2d_forward.3} parent=11 // pred_region
          %p309 = scmp.lt.s32.totalorder %s24, 0
          %s310 = scalar_select %p309, %s24, 0
          %s311 = scalar_lea.vmem %s7, %s310
        $region28: #{quant_conv2d_forward.3} parent=11 // pred_fallthru
          _
      $region12: #{quant_conv2d_forward.3} parent=5 // pred_fallthru
        _
      %p312 = scmp.lt.s32.totalorder %s15, 2
      // Predicated region
      $region29: #{quant_conv2d_forward.3} parent=5 // pred_check
        %p313 = pneg %p312
      $region30: #{quant_conv2d_forward.3} parent=5 // pred_check_branch
        %315 = sbr.rel (%p313) target = $region32
      $region31: #{quant_conv2d_forward.3} parent=5 // pred_region
        // Predicated region
        $region33: #{quant_conv2d_forward.3} parent=31 // pred_check
          %p316 = pneg %p68
        $region34: #{quant_conv2d_forward.3} parent=31 // pred_check_branch
          %318 = sbr.rel (%p316) target = $region36
        $region35: #{quant_conv2d_forward.3} parent=31 // pred_region
          %s319 = smul.u32 56, %s23
          %s320 = ssub.s32 119, %s319
          %p321 = scmp.lt.s32.totalorder %s320, 56
          %s322 = scalar_select %p321, %s320, 56
          %s323 = smul.u32 128, %s322
          %p324 = scmp.lt.s32.totalorder %s319, 118
          %s325 = scalar_select %p324, %s319, 118
          %s326 = smul.addr %s325, 8
          %s327 = scalar_lea.vmem %s1, %s326
          %s328 = smul.u32 56, %s23
          %s329 = ssub.s32 119, %s328
          %p330 = scmp.lt.s32.totalorder %s329, 56
          %s331 = scalar_select %p330, %s329, 56
          %s332 = smul.u32 128, %s331
        $region36: #{quant_conv2d_forward.3} parent=31 // pred_fallthru
          _
        // Predicated region
        $region37: #{quant_conv2d_forward.3} parent=31 // pred_check
          %p333 = pneg %p98
        $region38: #{quant_conv2d_forward.3} parent=31 // pred_check_branch
          %335 = sbr.rel (%p333) target = $region40
        $region39: #{quant_conv2d_forward.3} parent=31 // pred_region
          %s336 = sadd.s32 %s23, 1
          %s337 = smul.u32 %s336, 8
          %s338 = smul.u32 7, %s337
          %p339 = scmp.lt.s32.totalorder %s338, 118
          %s340 = scalar_select %p339, %s338, 118
          %s341 = smul.addr %s340, 8
          %s342 = scalar_lea.vmem %s2, %s341
          %s343 = sadd.s32 %s23, 1
          %s344 = smul.u32 %s343, 8
          %s345 = smul.u32 7, %s344
        $region40: #{quant_conv2d_forward.3} parent=31 // pred_fallthru
          _
        // Predicated region
        $region41: #{quant_conv2d_forward.3} parent=31 // pred_check
          %p346 = pneg %p124
        $region42: #{quant_conv2d_forward.3} parent=31 // pred_check_branch
          %348 = sbr.rel (%p346) target = $region44
        $region43: #{quant_conv2d_forward.3} parent=31 // pred_region
          %s349 = smul.u32 56, %s23
          %s350 = ssub.s32 119, %s349
          %p351 = scmp.lt.s32.totalorder %s350, 56
          %s352 = scalar_select %p351, %s350, 56
          %s353 = smul.u32 128, %s352
          %p354 = scmp.lt.s32.totalorder %s349, 118
          %s355 = scalar_select %p354, %s349, 118
          %s356 = smul.addr %s355, 8
          %s357 = scalar_lea.vmem %s3, %s356
          %s358 = smul.u32 56, %s23
          %s359 = ssub.s32 119, %s358
          %p360 = scmp.lt.s32.totalorder %s359, 56
          %s361 = scalar_select %p360, %s359, 56
          %s362 = smul.u32 128, %s361
        $region44: #{quant_conv2d_forward.3} parent=31 // pred_fallthru
          _
        // Predicated region
        $region45: #{quant_conv2d_forward.3} parent=31 // pred_check
          %p363 = pneg %p154
        $region46: #{quant_conv2d_forward.3} parent=31 // pred_check_branch
          %365 = sbr.rel (%p363) target = $region48
        $region47: #{quant_conv2d_forward.3} parent=31 // pred_region
          %s366 = sadd.s32 %s23, 1
          %s367 = smul.u32 %s366, 8
          %s368 = smul.u32 7, %s367
          %p369 = scmp.lt.s32.totalorder %s368, 118
          %s370 = scalar_select %p369, %s368, 118
          %s371 = smul.addr %s370, 8
          %s372 = scalar_lea.vmem %s4, %s371
          %s373 = sadd.s32 %s23, 1
          %s374 = smul.u32 %s373, 8
          %s375 = smul.u32 7, %s374
        $region48: #{quant_conv2d_forward.3} parent=31 // pred_fallthru
          _
      $region32: #{quant_conv2d_forward.3} parent=5 // pred_fallthru
        _
      %p376 = scmp.le.s32.totalorder 1, %s15
      %p377 = scmp.lt.s32.totalorder %s15, 3
      %p378 = pnand %p376, %p377
      %p379 = pneg %p378
      // Predicated region
      $region49: #{quant_conv2d_forward.3} parent=5 // pred_check
        _
      $region50: #{quant_conv2d_forward.3} parent=5 // pred_check_branch
        %381 = sbr.rel (%p378) target = $region52
      $region51: #{quant_conv2d_forward.3} parent=5 // pred_region
        %s382 = ssub.s32 %s15, 1
        // Predicated region
        $region53: #{quant_conv2d_forward.3} parent=51 // pred_check
          %p383 = pneg %p48
        $region54: #{quant_conv2d_forward.3} parent=51 // pred_check_branch
          %385 = sbr.rel (%p383) target = $region56
        $region55: #{quant_conv2d_forward.3} parent=51 // pred_region
          %386 = dma.done [#allocation3], 16
        $region56: #{quant_conv2d_forward.3} parent=51 // pred_fallthru
          _
        %387 = sfence
        %p388 = pneg %p48
        %p389 = pneg %p45
        %s390 = smul.u32 56, %s25
        %s391 = ssub.s32 119, %s390
        %p392 = scmp.lt.s32.totalorder %s391, 56
        %s393 = scalar_select %p392, %s391, 56
        %s394 = smul.u32 128, %s393
        %p395 = scmp.lt.s32.totalorder %s390, 118
        %s396 = scalar_select %p395, %s390, 118
        %s397 = smul.addr %s396, 8
        %s398 = scalar_lea.vmem %s1, %s397
        %p399 = pneg %p74
        %p400 = pneg %p71
        %s401 = sadd.s32 %s25, 1
        %s402 = smul.u32 %s401, 8
        %s403 = smul.u32 7, %s402
        %p404 = scmp.lt.s32.totalorder %s403, 118
        %s405 = scalar_select %p404, %s403, 118
        %s406 = smul.addr %s405, 8
        %s407 = scalar_lea.vmem %s2, %s406
        %p408 = pneg %p104
        %p409 = pneg %p101
        %s410 = smul.u32 56, %s25
        %s411 = ssub.s32 119, %s410
        %p412 = scmp.lt.s32.totalorder %s411, 56
        %s413 = scalar_select %p412, %s411, 56
        %s414 = smul.u32 128, %s413
        %p415 = scmp.lt.s32.totalorder %s410, 118
        %s416 = scalar_select %p415, %s410, 118
        %s417 = smul.addr %s416, 8
        %s418 = scalar_lea.vmem %s3, %s417
        %p419 = pneg %p130
        %p420 = pneg %p127
        %s421 = sadd.s32 %s25, 1
        %s422 = smul.u32 %s421, 8
        %s423 = smul.u32 7, %s422
        %p424 = scmp.lt.s32.totalorder %s423, 118
        %s425 = scalar_select %p424, %s423, 118
        %s426 = smul.addr %s425, 8
        %s427 = scalar_lea.vmem %s4, %s426
        %p428 = pneg %p160
        %p429 = pneg %p157
        %p430 = scmp.lt.s32.totalorder %s24, 0
        %s431 = scalar_select %p430, %s24, 0
        %s432 = smul.addr %s431, 4
        %s433 = scalar_lea.vmem %s5, %s432
        %p434 = pneg %p186
        %p435 = pneg %p183
        %p436 = scmp.lt.s32.totalorder %s24, 0
        %s437 = scalar_select %p436, %s24, 0
        %s438 = smul.addr %s437, 8
        %s439 = scalar_lea.vmem %s6, %s438
        %p440 = pneg %p212
        %p441 = pneg %p209
        %p442 = scmp.lt.s32.totalorder %s24, 0
        %s443 = scalar_select %p442, %s24, 0
        %s444 = scalar_lea.vmem %s7, %s443
        %p445 = pneg %p238
        %p446 = pneg %p235
        %p447 = pneg %p266
        %p448 = pneg %p263
        %s449 = smul.u32 56, %s25
        %p450 = scmp.lt.s32.totalorder %s449, 111
        %s451 = scalar_select %p450, %s449, 111
        %p452 = scmp.lt.s32.totalorder %s24, 0
        %s453 = scalar_select %p452, %s24, 0
        %s454 = sadd.s32 %s453, %s451
        %s455 = smul.addr %s454, 8
        %s456 = scalar_lea.vmem %s8, %s455
        %s457 = smul.u32 56, %s25
        %s458 = ssub.s32 119, %s457
        %p459 = scmp.lt.s32.totalorder %s458, 56
        %s460 = scalar_select %p459, %s458, 56
        %s461 = smul.u32 128, %s460
        %p462 = scmp.lt.s32.totalorder %s457, 118
        %s463 = scalar_select %p462, %s457, 118
        %s464 = smul.addr %s463, 8
        %s465 = scalar_lea.vmem %s1, %s464
        %s466 = smul.u32 56, %s25
        %s467 = ssub.s32 119, %s466
        %p468 = scmp.lt.s32.totalorder %s467, 56
        %s469 = scalar_select %p468, %s467, 56
        %s470 = smul.u32 128, %s469
        %s471 = sadd.s32 %s25, 1
        %s472 = smul.u32 %s471, 8
        %s473 = smul.u32 7, %s472
        %p474 = scmp.lt.s32.totalorder %s473, 118
        %s475 = scalar_select %p474, %s473, 118
        %s476 = smul.addr %s475, 8
        %s477 = scalar_lea.vmem %s2, %s476
        %s478 = sadd.s32 %s25, 1
        %s479 = smul.u32 %s478, 8
        %s480 = smul.u32 7, %s479
        %s481 = smul.u32 56, %s25
        %s482 = ssub.s32 119, %s481
        %p483 = scmp.lt.s32.totalorder %s482, 56
        %s484 = scalar_select %p483, %s482, 56
        %s485 = smul.u32 128, %s484
        %p486 = scmp.lt.s32.totalorder %s481, 118
        %s487 = scalar_select %p486, %s481, 118
        %s488 = smul.addr %s487, 8
        %s489 = scalar_lea.vmem %s3, %s488
        %s490 = smul.u32 56, %s25
        %s491 = ssub.s32 119, %s490
        %p492 = scmp.lt.s32.totalorder %s491, 56
        %s493 = scalar_select %p492, %s491, 56
        %s494 = smul.u32 128, %s493
        %s495 = sadd.s32 %s25, 1
        %s496 = smul.u32 %s495, 8
        %s497 = smul.u32 7, %s496
        %p498 = scmp.lt.s32.totalorder %s497, 118
        %s499 = scalar_select %p498, %s497, 118
        %s500 = smul.addr %s499, 8
        %s501 = scalar_lea.vmem %s4, %s500
        %s502 = sadd.s32 %s25, 1
        %s503 = smul.u32 %s502, 8
        %s504 = smul.u32 7, %s503
        %p505 = scmp.lt.s32.totalorder %s24, 0
        %s506 = scalar_select %p505, %s24, 0
        %s507 = smul.addr %s506, 4
        %s508 = scalar_lea.vmem %s5, %s507
        %p509 = scmp.lt.s32.totalorder %s24, 0
        %s510 = scalar_select %p509, %s24, 0
        %s511 = smul.addr %s510, 8
        %s512 = scalar_lea.vmem %s6, %s511
        %p513 = scmp.lt.s32.totalorder %s24, 0
        %s514 = scalar_select %p513, %s24, 0
        %s515 = scalar_lea.vmem %s7, %s514
        %s516 = smul.u32 56, %s25
        %p517 = scmp.lt.s32.totalorder %s516, 111
        %s518 = scalar_select %p517, %s516, 111
        %p519 = scmp.lt.s32.totalorder %s24, 0
        %s520 = scalar_select %p519, %s24, 0
        %s521 = sadd.s32 %s520, %s518
        %s522 = smul.addr %s521, 8
        %s523 = scalar_lea.vmem %s8, %s522
        %s524 = smul.u32 56, %s25
        %s526 = sld [smem:[#allocation2]]
        %s527 = sld [smem:[#allocation2 + $0x1]]
        %s528 = sld [smem:[#allocation2 + $0x2]]
        %s529 = sld [smem:[#allocation2 + $0x3]]
        %s530 = sld [smem:[#allocation2 + $0x4]]
        %v531 = vld [vmem:[%s465] sm:$0xff]
        %v532 = vld [vmem:[%s465 + $0x8] sm:$0xff]
        %v533 = vld [vmem:[%s465 + $0x10] sm:$0xff]
        %v534 = vld [vmem:[%s465 + $0x18] sm:$0xff]
        %v535 = vld [vmem:[%s465 + $0x20] sm:$0xff]
        %v536 = vld [vmem:[%s465 + $0x28] sm:$0xff]
        %v537 = vld [vmem:[%s465 + $0x30] sm:$0xff]
        %v538 = vld [vmem:[%s465 + $0x38] sm:$0xff]
        %v539 = vld [vmem:[%s465 + $0x40] sm:$0xff]
        %v540 = vld [vmem:[%s465 + $0x48] sm:$0xff]
        %v541 = vld [vmem:[%s465 + $0x50] sm:$0xff]
        %v542 = vld [vmem:[%s465 + $0x58] sm:$0xff]
        %v543 = vld [vmem:[%s465 + $0x60] sm:$0xff]
        %v544 = vld [vmem:[%s465 + $0x68] sm:$0xff]
        %v545 = vld [vmem:[%s465 + $0x70] sm:$0xff]
        %v546 = vld [vmem:[%s465 + $0x78] sm:$0xff]
        %v547 = vld [vmem:[%s465 + $0x80] sm:$0xff]
        %v548 = vld [vmem:[%s465 + $0x88] sm:$0xff]
        %v549 = vld [vmem:[%s465 + $0x90] sm:$0xff]
        %v550 = vld [vmem:[%s465 + $0x98] sm:$0xff]
        %v551 = vld [vmem:[%s465 + $0xa0] sm:$0xff]
        %v552 = vld [vmem:[%s465 + $0xa8] sm:$0xff]
        %v553 = vld [vmem:[%s465 + $0xb0] sm:$0xff]
        %v554 = vld [vmem:[%s465 + $0xb8] sm:$0xff]
        %v555 = vld [vmem:[%s465 + $0xc0] sm:$0xff]
        %v556 = vld [vmem:[%s465 + $0xc8] sm:$0xff]
        %v557 = vld [vmem:[%s465 + $0xd0] sm:$0xff]
        %v558 = vld [vmem:[%s465 + $0xd8] sm:$0xff]
        %v559 = vld [vmem:[%s465 + $0xe0] sm:$0xff]
        %v560 = vld [vmem:[%s465 + $0xe8] sm:$0xff]
        %v561 = vld [vmem:[%s465 + $0xf0] sm:$0xff]
        %v562 = vld [vmem:[%s465 + $0xf8] sm:$0xff]
        %v563 = vld [vmem:[%s465 + $0x100] sm:$0xff]
        %v564 = vld [vmem:[%s465 + $0x108] sm:$0xff]
        %v565 = vld [vmem:[%s465 + $0x110] sm:$0xff]
        %v566 = vld [vmem:[%s465 + $0x118] sm:$0xff]
        %v567 = vld [vmem:[%s465 + $0x120] sm:$0xff]
        %v568 = vld [vmem:[%s465 + $0x128] sm:$0xff]
        %v569 = vld [vmem:[%s465 + $0x130] sm:$0xff]
        %v570 = vld [vmem:[%s465 + $0x138] sm:$0xff]
        %v571 = vld [vmem:[%s465 + $0x140] sm:$0xff]
        %v572 = vld [vmem:[%s465 + $0x148] sm:$0xff]
        %v573 = vld [vmem:[%s465 + $0x150] sm:$0xff]
        %v574 = vld [vmem:[%s465 + $0x158] sm:$0xff]
        %v575 = vld [vmem:[%s465 + $0x160] sm:$0xff]
        %v576 = vld [vmem:[%s465 + $0x168] sm:$0xff]
        %v577 = vld [vmem:[%s465 + $0x170] sm:$0xff]
        %v578 = vld [vmem:[%s465 + $0x178] sm:$0xff]
        %v579 = vld [vmem:[%s465 + $0x180] sm:$0xff]
        %v580 = vld [vmem:[%s465 + $0x188] sm:$0xff]
        %v581 = vld [vmem:[%s465 + $0x190] sm:$0xff]
        %v582 = vld [vmem:[%s465 + $0x198] sm:$0xff]
        %v583 = vld [vmem:[%s465 + $0x1a0] sm:$0xff]
        %v584 = vld [vmem:[%s465 + $0x1a8] sm:$0xff]
        %v585 = vld [vmem:[%s465 + $0x1b0] sm:$0xff]
        %v586 = vld [vmem:[%s465 + $0x1b8] sm:$0xff]
        %v587 = vld [vmem:[%s477] sm:$0xff]
        %v588 = vld [vmem:[%s477 + $0x8] sm:$0xff]
        %v589 = vld [vmem:[%s477 + $0x10] sm:$0xff]
        %v590 = vld [vmem:[%s477 + $0x18] sm:$0xff]
        %v591 = vld [vmem:[%s477 + $0x20] sm:$0xff]
        %v592 = vld [vmem:[%s477 + $0x28] sm:$0xff]
        %v593 = vld [vmem:[%s477 + $0x30] sm:$0xff]
        %v594 = vld [vmem:[%s489] sm:$0xff]
        %v595 = vld [vmem:[%s489 + $0x8] sm:$0xff]
        %v596 = vld [vmem:[%s489 + $0x10] sm:$0xff]
        %v597 = vld [vmem:[%s489 + $0x18] sm:$0xff]
        %v598 = vld [vmem:[%s489 + $0x20] sm:$0xff]
        %v599 = vld [vmem:[%s489 + $0x28] sm:$0xff]
        %v600 = vld [vmem:[%s489 + $0x30] sm:$0xff]
        %v601 = vld [vmem:[%s489 + $0x38] sm:$0xff]
        %v602 = vld [vmem:[%s489 + $0x40] sm:$0xff]
        %v603 = vld [vmem:[%s489 + $0x48] sm:$0xff]
        %v604 = vld [vmem:[%s489 + $0x50] sm:$0xff]
        %v605 = vld [vmem:[%s489 + $0x58] sm:$0xff]
        %v606 = vld [vmem:[%s489 + $0x60] sm:$0xff]
        %v607 = vld [vmem:[%s489 + $0x68] sm:$0xff]
        %v608 = vld [vmem:[%s489 + $0x70] sm:$0xff]
        %v609 = vld [vmem:[%s489 + $0x78] sm:$0xff]
        %v610 = vld [vmem:[%s489 + $0x80] sm:$0xff]
        %v611 = vld [vmem:[%s489 + $0x88] sm:$0xff]
        %v612 = vld [vmem:[%s489 + $0x90] sm:$0xff]
        %v613 = vld [vmem:[%s489 + $0x98] sm:$0xff]
        %v614 = vld [vmem:[%s489 + $0xa0] sm:$0xff]
        %v615 = vld [vmem:[%s489 + $0xa8] sm:$0xff]
        %v616 = vld [vmem:[%s489 + $0xb0] sm:$0xff]
        %v617 = vld [vmem:[%s489 + $0xb8] sm:$0xff]
        %v618 = vld [vmem:[%s489 + $0xc0] sm:$0xff]
        %v619 = vld [vmem:[%s489 + $0xc8] sm:$0xff]
        %v620 = vld [vmem:[%s489 + $0xd0] sm:$0xff]
        %v621 = vld [vmem:[%s489 + $0xd8] sm:$0xff]
        %v622 = vld [vmem:[%s489 + $0xe0] sm:$0xff]
        %v623 = vld [vmem:[%s489 + $0xe8] sm:$0xff]
        %v624 = vld [vmem:[%s489 + $0xf0] sm:$0xff]
        %v625 = vld [vmem:[%s489 + $0xf8] sm:$0xff]
        %v626 = vld [vmem:[%s489 + $0x100] sm:$0xff]
        %v627 = vld [vmem:[%s489 + $0x108] sm:$0xff]
        %v628 = vld [vmem:[%s489 + $0x110] sm:$0xff]
        %v629 = vld [vmem:[%s489 + $0x118] sm:$0xff]
        %v630 = vld [vmem:[%s489 + $0x120] sm:$0xff]
        %v631 = vld [vmem:[%s489 + $0x128] sm:$0xff]
        %v632 = vld [vmem:[%s489 + $0x130] sm:$0xff]
        %v633 = vld [vmem:[%s489 + $0x138] sm:$0xff]
        %v634 = vld [vmem:[%s489 + $0x140] sm:$0xff]
        %v635 = vld [vmem:[%s489 + $0x148] sm:$0xff]
        %v636 = vld [vmem:[%s489 + $0x150] sm:$0xff]
        %v637 = vld [vmem:[%s489 + $0x158] sm:$0xff]
        %v638 = vld [vmem:[%s489 + $0x160] sm:$0xff]
        %v639 = vld [vmem:[%s489 + $0x168] sm:$0xff]
        %v640 = vld [vmem:[%s489 + $0x170] sm:$0xff]
        %v641 = vld [vmem:[%s489 + $0x178] sm:$0xff]
        %v642 = vld [vmem:[%s489 + $0x180] sm:$0xff]
        %v643 = vld [vmem:[%s489 + $0x188] sm:$0xff]
        %v644 = vld [vmem:[%s489 + $0x190] sm:$0xff]
        %v645 = vld [vmem:[%s489 + $0x198] sm:$0xff]
        %v646 = vld [vmem:[%s489 + $0x1a0] sm:$0xff]
        %v647 = vld [vmem:[%s489 + $0x1a8] sm:$0xff]
        %v648 = vld [vmem:[%s489 + $0x1b0] sm:$0xff]
        %v649 = vld [vmem:[%s489 + $0x1b8] sm:$0xff]
        %v650 = vld [vmem:[%s501] sm:$0xff]
        %v651 = vld [vmem:[%s501 + $0x8] sm:$0xff]
        %v652 = vld [vmem:[%s501 + $0x10] sm:$0xff]
        %v653 = vld [vmem:[%s501 + $0x18] sm:$0xff]
        %v654 = vld [vmem:[%s501 + $0x20] sm:$0xff]
        %v655 = vld [vmem:[%s501 + $0x28] sm:$0xff]
        %v656 = vld [vmem:[%s501 + $0x30] sm:$0xff]
        %v657 = vstv %s526
        %v658 = vmax.f32 %v657, %v531
        %v659 = vmax.f32 %v657, %v532
        %v660 = vmax.f32 %v657, %v533
        %v661 = vmax.f32 %v657, %v534
        %v662 = vmax.f32 %v657, %v535
        %v663 = vmax.f32 %v657, %v536
        %v664 = vmax.f32 %v657, %v537
        %v665 = vmax.f32 %v657, %v538
        %v666 = vmax.f32 %v657, %v539
        %v667 = vmax.f32 %v657, %v540
        %v668 = vmax.f32 %v657, %v541
        %v669 = vmax.f32 %v657, %v542
        %v670 = vmax.f32 %v657, %v543
        %v671 = vmax.f32 %v657, %v544
        %v672 = vmax.f32 %v657, %v545
        %v673 = vmax.f32 %v657, %v546
        %v674 = vmax.f32 %v657, %v547
        %v675 = vmax.f32 %v657, %v548
        %v676 = vmax.f32 %v657, %v549
        %v677 = vmax.f32 %v657, %v550
        %v678 = vmax.f32 %v657, %v551
        %v679 = vmax.f32 %v657, %v552
        %v680 = vmax.f32 %v657, %v553
        %v681 = vmax.f32 %v657, %v554
        %v682 = vmax.f32 %v657, %v555
        %v683 = vmax.f32 %v657, %v556
        %v684 = vmax.f32 %v657, %v557
        %v685 = vmax.f32 %v657, %v558
        %v686 = vmax.f32 %v657, %v559
        %v687 = vmax.f32 %v657, %v560
        %v688 = vmax.f32 %v657, %v561
        %v689 = vmax.f32 %v657, %v562
        %v690 = vmax.f32 %v657, %v563
        %v691 = vmax.f32 %v657, %v564
        %v692 = vmax.f32 %v657, %v565
        %v693 = vmax.f32 %v657, %v566
        %v694 = vmax.f32 %v657, %v567
        %v695 = vmax.f32 %v657, %v568
        %v696 = vmax.f32 %v657, %v569
        %v697 = vmax.f32 %v657, %v570
        %v698 = vmax.f32 %v657, %v571
        %v699 = vmax.f32 %v657, %v572
        %v700 = vmax.f32 %v657, %v573
        %v701 = vmax.f32 %v657, %v574
        %v702 = vmax.f32 %v657, %v575
        %v703 = vmax.f32 %v657, %v576
        %v704 = vmax.f32 %v657, %v577
        %v705 = vmax.f32 %v657, %v578
        %v706 = vmax.f32 %v657, %v579
        %v707 = vmax.f32 %v657, %v580
        %v708 = vmax.f32 %v657, %v581
        %v709 = vmax.f32 %v657, %v582
        %v710 = vmax.f32 %v657, %v583
        %v711 = vmax.f32 %v657, %v584
        %v712 = vmax.f32 %v657, %v585
        %v713 = vmax.f32 %v657, %v586
        %v714 = vmax.f32 %v657, %v587
        %v715 = vmax.f32 %v657, %v588
        %v716 = vmax.f32 %v657, %v589
        %v717 = vmax.f32 %v657, %v590
        %v718 = vmax.f32 %v657, %v591
        %v719 = vmax.f32 %v657, %v592
        %v720 = vmax.f32 %v657, %v593
        %v721 = vstv %s527
        %v722 = vmin.f32 %v721, %v658
        %v723 = vmin.f32 %v721, %v659
        %v724 = vmin.f32 %v721, %v660
        %v725 = vmin.f32 %v721, %v661
        %v726 = vmin.f32 %v721, %v662
        %v727 = vmin.f32 %v721, %v663
        %v728 = vmin.f32 %v721, %v664
        %v729 = vmin.f32 %v721, %v665
        %v730 = vmin.f32 %v721, %v666
        %v731 = vmin.f32 %v721, %v667
        %v732 = vmin.f32 %v721, %v668
        %v733 = vmin.f32 %v721, %v669
        %v734 = vmin.f32 %v721, %v670
        %v735 = vmin.f32 %v721, %v671
        %v736 = vmin.f32 %v721, %v672
        %v737 = vmin.f32 %v721, %v673
        %v738 = vmin.f32 %v721, %v674
        %v739 = vmin.f32 %v721, %v675
        %v740 = vmin.f32 %v721, %v676
        %v741 = vmin.f32 %v721, %v677
        %v742 = vmin.f32 %v721, %v678
        %v743 = vmin.f32 %v721, %v679
        %v744 = vmin.f32 %v721, %v680
        %v745 = vmin.f32 %v721, %v681
        %v746 = vmin.f32 %v721, %v682
        %v747 = vmin.f32 %v721, %v683
        %v748 = vmin.f32 %v721, %v684
        %v749 = vmin.f32 %v721, %v685
        %v750 = vmin.f32 %v721, %v686
        %v751 = vmin.f32 %v721, %v687
        %v752 = vmin.f32 %v721, %v688
        %v753 = vmin.f32 %v721, %v689
        %v754 = vmin.f32 %v721, %v690
        %v755 = vmin.f32 %v721, %v691
        %v756 = vmin.f32 %v721, %v692
        %v757 = vmin.f32 %v721, %v693
        %v758 = vmin.f32 %v721, %v694
        %v759 = vmin.f32 %v721, %v695
        %v760 = vmin.f32 %v721, %v696
        %v761 = vmin.f32 %v721, %v697
        %v762 = vmin.f32 %v721, %v698
        %v763 = vmin.f32 %v721, %v699
        %v764 = vmin.f32 %v721, %v700
        %v765 = vmin.f32 %v721, %v701
        %v766 = vmin.f32 %v721, %v702
        %v767 = vmin.f32 %v721, %v703
        %v768 = vmin.f32 %v721, %v704
        %v769 = vmin.f32 %v721, %v705
        %v770 = vmin.f32 %v721, %v706
        %v771 = vmin.f32 %v721, %v707
        %v772 = vmin.f32 %v721, %v708
        %v773 = vmin.f32 %v721, %v709
        %v774 = vmin.f32 %v721, %v710
        %v775 = vmin.f32 %v721, %v711
        %v776 = vmin.f32 %v721, %v712
        %v777 = vmin.f32 %v721, %v713
        %v778 = vmin.f32 %v721, %v714
        %v779 = vmin.f32 %v721, %v715
        %v780 = vmin.f32 %v721, %v716
        %v781 = vmin.f32 %v721, %v717
        %v782 = vmin.f32 %v721, %v718
        %v783 = vmin.f32 %v721, %v719
        %v784 = vmin.f32 %v721, %v720
        %v785 = vsub.f32 %v722, %v657
        %v786 = vsub.f32 %v723, %v657
        %v787 = vsub.f32 %v724, %v657
        %v788 = vsub.f32 %v725, %v657
        %v789 = vsub.f32 %v726, %v657
        %v790 = vsub.f32 %v727, %v657
        %v791 = vsub.f32 %v728, %v657
        %v792 = vsub.f32 %v729, %v657
        %v793 = vsub.f32 %v730, %v657
        %v794 = vsub.f32 %v731, %v657
        %v795 = vsub.f32 %v732, %v657
        %v796 = vsub.f32 %v733, %v657
        %v797 = vsub.f32 %v734, %v657
        %v798 = vsub.f32 %v735, %v657
        %v799 = vsub.f32 %v736, %v657
        %v800 = vsub.f32 %v737, %v657
        %v801 = vsub.f32 %v738, %v657
        %v802 = vsub.f32 %v739, %v657
        %v803 = vsub.f32 %v740, %v657
        %v804 = vsub.f32 %v741, %v657
        %v805 = vsub.f32 %v742, %v657
        %v806 = vsub.f32 %v743, %v657
        %v807 = vsub.f32 %v744, %v657
        %v808 = vsub.f32 %v745, %v657
        %v809 = vsub.f32 %v746, %v657
        %v810 = vsub.f32 %v747, %v657
        %v811 = vsub.f32 %v748, %v657
        %v812 = vsub.f32 %v749, %v657
        %v813 = vsub.f32 %v750, %v657
        %v814 = vsub.f32 %v751, %v657
        %v815 = vsub.f32 %v752, %v657
        %v816 = vsub.f32 %v753, %v657
        %v817 = vsub.f32 %v754, %v657
        %v818 = vsub.f32 %v755, %v657
        %v819 = vsub.f32 %v756, %v657
        %v820 = vsub.f32 %v757, %v657
        %v821 = vsub.f32 %v758, %v657
        %v822 = vsub.f32 %v759, %v657
        %v823 = vsub.f32 %v760, %v657
        %v824 = vsub.f32 %v761, %v657
        %v825 = vsub.f32 %v762, %v657
        %v826 = vsub.f32 %v763, %v657
        %v827 = vsub.f32 %v764, %v657
        %v828 = vsub.f32 %v765, %v657
        %v829 = vsub.f32 %v766, %v657
        %v830 = vsub.f32 %v767, %v657
        %v831 = vsub.f32 %v768, %v657
        %v832 = vsub.f32 %v769, %v657
        %v833 = vsub.f32 %v770, %v657
        %v834 = vsub.f32 %v771, %v657
        %v835 = vsub.f32 %v772, %v657
        %v836 = vsub.f32 %v773, %v657
        %v837 = vsub.f32 %v774, %v657
        %v838 = vsub.f32 %v775, %v657
        %v839 = vsub.f32 %v776, %v657
        %v840 = vsub.f32 %v777, %v657
        %v841 = vsub.f32 %v778, %v657
        %v842 = vsub.f32 %v779, %v657
        %v843 = vsub.f32 %v780, %v657
        %v844 = vsub.f32 %v781, %v657
        %v845 = vsub.f32 %v782, %v657
        %v846 = vsub.f32 %v783, %v657
        %v847 = vsub.f32 %v784, %v657
        %v848 = vstv %s528
        %v849 = vmul.f32 %v785, %v848
        %v850 = vmul.f32 %v786, %v848
        %v851 = vmul.f32 %v787, %v848
        %v852 = vmul.f32 %v788, %v848
        %v853 = vmul.f32 %v789, %v848
        %v854 = vmul.f32 %v790, %v848
        %v855 = vmul.f32 %v791, %v848
        %v856 = vmul.f32 %v792, %v848
        %v857 = vmul.f32 %v793, %v848
        %v858 = vmul.f32 %v794, %v848
        %v859 = vmul.f32 %v795, %v848
        %v860 = vmul.f32 %v796, %v848
        %v861 = vmul.f32 %v797, %v848
        %v862 = vmul.f32 %v798, %v848
        %v863 = vmul.f32 %v799, %v848
        %v864 = vmul.f32 %v800, %v848
        %v865 = vmul.f32 %v801, %v848
        %v866 = vmul.f32 %v802, %v848
        %v867 = vmul.f32 %v803, %v848
        %v868 = vmul.f32 %v804, %v848
        %v869 = vmul.f32 %v805, %v848
        %v870 = vmul.f32 %v806, %v848
        %v871 = vmul.f32 %v807, %v848
        %v872 = vmul.f32 %v808, %v848
        %v873 = vmul.f32 %v809, %v848
        %v874 = vmul.f32 %v810, %v848
        %v875 = vmul.f32 %v811, %v848
        %v876 = vmul.f32 %v812, %v848
        %v877 = vmul.f32 %v813, %v848
        %v878 = vmul.f32 %v814, %v848
        %v879 = vmul.f32 %v815, %v848
        %v880 = vmul.f32 %v816, %v848
        %v881 = vmul.f32 %v817, %v848
        %v882 = vmul.f32 %v818, %v848
        %v883 = vmul.f32 %v819, %v848
        %v884 = vmul.f32 %v820, %v848
        %v885 = vmul.f32 %v821, %v848
        %v886 = vmul.f32 %v822, %v848
        %v887 = vmul.f32 %v823, %v848
        %v888 = vmul.f32 %v824, %v848
        %v889 = vmul.f32 %v825, %v848
        %v890 = vmul.f32 %v826, %v848
        %v891 = vmul.f32 %v827, %v848
        %v892 = vmul.f32 %v828, %v848
        %v893 = vmul.f32 %v829, %v848
        %v894 = vmul.f32 %v830, %v848
        %v895 = vmul.f32 %v831, %v848
        %v896 = vmul.f32 %v832, %v848
        %v897 = vmul.f32 %v833, %v848
        %v898 = vmul.f32 %v834, %v848
        %v899 = vmul.f32 %v835, %v848
        %v900 = vmul.f32 %v836, %v848
        %v901 = vmul.f32 %v837, %v848
        %v902 = vmul.f32 %v838, %v848
        %v903 = vmul.f32 %v839, %v848
        %v904 = vmul.f32 %v840, %v848
        %v905 = vmul.f32 %v841, %v848
        %v906 = vmul.f32 %v842, %v848
        %v907 = vmul.f32 %v843, %v848
        %v908 = vmul.f32 %v844, %v848
        %v909 = vmul.f32 %v845, %v848
        %v910 = vmul.f32 %v846, %v848
        %v911 = vmul.f32 %v847, %v848
        %v912 = vround.ne.pseudo %v849
        %v913 = vround.ne.pseudo %v850
        %v914 = vround.ne.pseudo %v851
        %v915 = vround.ne.pseudo %v852
        %v916 = vround.ne.pseudo %v853
        %v917 = vround.ne.pseudo %v854
        %v918 = vround.ne.pseudo %v855
        %v919 = vround.ne.pseudo %v856
        %v920 = vround.ne.pseudo %v857
        %v921 = vround.ne.pseudo %v858
        %v922 = vround.ne.pseudo %v859
        %v923 = vround.ne.pseudo %v860
        %v924 = vround.ne.pseudo %v861
        %v925 = vround.ne.pseudo %v862
        %v926 = vround.ne.pseudo %v863
        %v927 = vround.ne.pseudo %v864
        %v928 = vround.ne.pseudo %v865
        %v929 = vround.ne.pseudo %v866
        %v930 = vround.ne.pseudo %v867
        %v931 = vround.ne.pseudo %v868
        %v932 = vround.ne.pseudo %v869
        %v933 = vround.ne.pseudo %v870
        %v934 = vround.ne.pseudo %v871
        %v935 = vround.ne.pseudo %v872
        %v936 = vround.ne.pseudo %v873
        %v937 = vround.ne.pseudo %v874
        %v938 = vround.ne.pseudo %v875
        %v939 = vround.ne.pseudo %v876
        %v940 = vround.ne.pseudo %v877
        %v941 = vround.ne.pseudo %v878
        %v942 = vround.ne.pseudo %v879
        %v943 = vround.ne.pseudo %v880
        %v944 = vround.ne.pseudo %v881
        %v945 = vround.ne.pseudo %v882
        %v946 = vround.ne.pseudo %v883
        %v947 = vround.ne.pseudo %v884
        %v948 = vround.ne.pseudo %v885
        %v949 = vround.ne.pseudo %v886
        %v950 = vround.ne.pseudo %v887
        %v951 = vround.ne.pseudo %v888
        %v952 = vround.ne.pseudo %v889
        %v953 = vround.ne.pseudo %v890
        %v954 = vround.ne.pseudo %v891
        %v955 = vround.ne.pseudo %v892
        %v956 = vround.ne.pseudo %v893
        %v957 = vround.ne.pseudo %v894
        %v958 = vround.ne.pseudo %v895
        %v959 = vround.ne.pseudo %v896
        %v960 = vround.ne.pseudo %v897
        %v961 = vround.ne.pseudo %v898
        %v962 = vround.ne.pseudo %v899
        %v963 = vround.ne.pseudo %v900
        %v964 = vround.ne.pseudo %v901
        %v965 = vround.ne.pseudo %v902
        %v966 = vround.ne.pseudo %v903
        %v967 = vround.ne.pseudo %v904
        %v968 = vround.ne.pseudo %v905
        %v969 = vround.ne.pseudo %v906
        %v970 = vround.ne.pseudo %v907
        %v971 = vround.ne.pseudo %v908
        %v972 = vround.ne.pseudo %v909
        %v973 = vround.ne.pseudo %v910
        %v974 = vround.ne.pseudo %v911
        %976 = vset.pattern.permute.xlu0 0
        %977 = vperm.xlu0 %976, %v594
        %v978 = vpop.permute.xlu0 %977
        %981 = vset.pattern.permute.xlu0 0
        %982 = vperm.xlu0 %981, %v595
        %v983 = vpop.permute.xlu0 %982
        %986 = vset.pattern.permute.xlu0 0
        %987 = vperm.xlu0 %986, %v596
        %v988 = vpop.permute.xlu0 %987
        %991 = vset.pattern.permute.xlu0 0
        %992 = vperm.xlu0 %991, %v597
        %v993 = vpop.permute.xlu0 %992
        %996 = vset.pattern.permute.xlu0 0
        %997 = vperm.xlu0 %996, %v598
        %v998 = vpop.permute.xlu0 %997
        %1001 = vset.pattern.permute.xlu0 0
        %1002 = vperm.xlu0 %1001, %v599
        %v1003 = vpop.permute.xlu0 %1002
        %1006 = vset.pattern.permute.xlu0 0
        %1007 = vperm.xlu0 %1006, %v600
        %v1008 = vpop.permute.xlu0 %1007
        %1011 = vset.pattern.permute.xlu0 0
        %1012 = vperm.xlu0 %1011, %v601
        %v1013 = vpop.permute.xlu0 %1012
        %1016 = vset.pattern.permute.xlu0 0
        %1017 = vperm.xlu0 %1016, %v602
        %v1018 = vpop.permute.xlu0 %1017
        %1021 = vset.pattern.permute.xlu0 0
        %1022 = vperm.xlu0 %1021, %v603
        %v1023 = vpop.permute.xlu0 %1022
        %1026 = vset.pattern.permute.xlu0 0
        %1027 = vperm.xlu0 %1026, %v604
        %v1028 = vpop.permute.xlu0 %1027
        %1031 = vset.pattern.permute.xlu0 0
        %1032 = vperm.xlu0 %1031, %v605
        %v1033 = vpop.permute.xlu0 %1032
        %1036 = vset.pattern.permute.xlu0 0
        %1037 = vperm.xlu0 %1036, %v606
        %v1038 = vpop.permute.xlu0 %1037
        %1041 = vset.pattern.permute.xlu0 0
        %1042 = vperm.xlu0 %1041, %v607
        %v1043 = vpop.permute.xlu0 %1042
        %1046 = vset.pattern.permute.xlu0 0
        %1047 = vperm.xlu0 %1046, %v608
        %v1048 = vpop.permute.xlu0 %1047
        %1051 = vset.pattern.permute.xlu0 0
        %1052 = vperm.xlu0 %1051, %v609
        %v1053 = vpop.permute.xlu0 %1052
        %1056 = vset.pattern.permute.xlu0 0
        %1057 = vperm.xlu0 %1056, %v610
        %v1058 = vpop.permute.xlu0 %1057
        %1061 = vset.pattern.permute.xlu0 0
        %1062 = vperm.xlu0 %1061, %v611
        %v1063 = vpop.permute.xlu0 %1062
        %1066 = vset.pattern.permute.xlu0 0
        %1067 = vperm.xlu0 %1066, %v612
        %v1068 = vpop.permute.xlu0 %1067
        %1071 = vset.pattern.permute.xlu0 0
        %1072 = vperm.xlu0 %1071, %v613
        %v1073 = vpop.permute.xlu0 %1072
        %1076 = vset.pattern.permute.xlu0 0
        %1077 = vperm.xlu0 %1076, %v614
        %v1078 = vpop.permute.xlu0 %1077
        %1081 = vset.pattern.permute.xlu0 0
        %1082 = vperm.xlu0 %1081, %v615
        %v1083 = vpop.permute.xlu0 %1082
        %1086 = vset.pattern.permute.xlu0 0
        %1087 = vperm.xlu0 %1086, %v616
        %v1088 = vpop.permute.xlu0 %1087
        %1091 = vset.pattern.permute.xlu0 0
        %1092 = vperm.xlu0 %1091, %v617
        %v1093 = vpop.permute.xlu0 %1092
        %1096 = vset.pattern.permute.xlu0 0
        %1097 = vperm.xlu0 %1096, %v618
        %v1098 = vpop.permute.xlu0 %1097
        %1101 = vset.pattern.permute.xlu0 0
        %1102 = vperm.xlu0 %1101, %v619
        %v1103 = vpop.permute.xlu0 %1102
        %1106 = vset.pattern.permute.xlu0 0
        %1107 = vperm.xlu0 %1106, %v620
        %v1108 = vpop.permute.xlu0 %1107
        %1111 = vset.pattern.permute.xlu0 0
        %1112 = vperm.xlu0 %1111, %v621
        %v1113 = vpop.permute.xlu0 %1112
        %1116 = vset.pattern.permute.xlu0 0
        %1117 = vperm.xlu0 %1116, %v622
        %v1118 = vpop.permute.xlu0 %1117
        %1121 = vset.pattern.permute.xlu0 0
        %1122 = vperm.xlu0 %1121, %v623
        %v1123 = vpop.permute.xlu0 %1122
        %1126 = vset.pattern.permute.xlu0 0
        %1127 = vperm.xlu0 %1126, %v624
        %v1128 = vpop.permute.xlu0 %1127
        %1131 = vset.pattern.permute.xlu0 0
        %1132 = vperm.xlu0 %1131, %v625
        %v1133 = vpop.permute.xlu0 %1132
        %1136 = vset.pattern.permute.xlu0 0
        %1137 = vperm.xlu0 %1136, %v626
        %v1138 = vpop.permute.xlu0 %1137
        %1141 = vset.pattern.permute.xlu0 0
        %1142 = vperm.xlu0 %1141, %v627
        %v1143 = vpop.permute.xlu0 %1142
        %1146 = vset.pattern.permute.xlu0 0
        %1147 = vperm.xlu0 %1146, %v628
        %v1148 = vpop.permute.xlu0 %1147
        %1151 = vset.pattern.permute.xlu0 0
        %1152 = vperm.xlu0 %1151, %v629
        %v1153 = vpop.permute.xlu0 %1152
        %1156 = vset.pattern.permute.xlu0 0
        %1157 = vperm.xlu0 %1156, %v630
        %v1158 = vpop.permute.xlu0 %1157
        %1161 = vset.pattern.permute.xlu0 0
        %1162 = vperm.xlu0 %1161, %v631
        %v1163 = vpop.permute.xlu0 %1162
        %1166 = vset.pattern.permute.xlu0 0
        %1167 = vperm.xlu0 %1166, %v632
        %v1168 = vpop.permute.xlu0 %1167
        %1171 = vset.pattern.permute.xlu0 0
        %1172 = vperm.xlu0 %1171, %v633
        %v1173 = vpop.permute.xlu0 %1172
        %1176 = vset.pattern.permute.xlu0 0
        %1177 = vperm.xlu0 %1176, %v634
        %v1178 = vpop.permute.xlu0 %1177
        %1181 = vset.pattern.permute.xlu0 0
        %1182 = vperm.xlu0 %1181, %v635
        %v1183 = vpop.permute.xlu0 %1182
        %1186 = vset.pattern.permute.xlu0 0
        %1187 = vperm.xlu0 %1186, %v636
        %v1188 = vpop.permute.xlu0 %1187
        %1191 = vset.pattern.permute.xlu0 0
        %1192 = vperm.xlu0 %1191, %v637
        %v1193 = vpop.permute.xlu0 %1192
        %1196 = vset.pattern.permute.xlu0 0
        %1197 = vperm.xlu0 %1196, %v638
        %v1198 = vpop.permute.xlu0 %1197
        %1201 = vset.pattern.permute.xlu0 0
        %1202 = vperm.xlu0 %1201, %v639
        %v1203 = vpop.permute.xlu0 %1202
        %1206 = vset.pattern.permute.xlu0 0
        %1207 = vperm.xlu0 %1206, %v640
        %v1208 = vpop.permute.xlu0 %1207
        %1211 = vset.pattern.permute.xlu0 0
        %1212 = vperm.xlu0 %1211, %v641
        %v1213 = vpop.permute.xlu0 %1212
        %1216 = vset.pattern.permute.xlu0 0
        %1217 = vperm.xlu0 %1216, %v642
        %v1218 = vpop.permute.xlu0 %1217
        %1221 = vset.pattern.permute.xlu0 0
        %1222 = vperm.xlu0 %1221, %v643
        %v1223 = vpop.permute.xlu0 %1222
        %1226 = vset.pattern.permute.xlu0 0
        %1227 = vperm.xlu0 %1226, %v644
        %v1228 = vpop.permute.xlu0 %1227
        %1231 = vset.pattern.permute.xlu0 0
        %1232 = vperm.xlu0 %1231, %v645
        %v1233 = vpop.permute.xlu0 %1232
        %1236 = vset.pattern.permute.xlu0 0
        %1237 = vperm.xlu0 %1236, %v646
        %v1238 = vpop.permute.xlu0 %1237
        %1241 = vset.pattern.permute.xlu0 0
        %1242 = vperm.xlu0 %1241, %v647
        %v1243 = vpop.permute.xlu0 %1242
        %1246 = vset.pattern.permute.xlu0 0
        %1247 = vperm.xlu0 %1246, %v648
        %v1248 = vpop.permute.xlu0 %1247
        %1251 = vset.pattern.permute.xlu0 0
        %1252 = vperm.xlu0 %1251, %v649
        %v1253 = vpop.permute.xlu0 %1252
        %1256 = vset.pattern.permute.xlu0 0
        %1257 = vperm.xlu0 %1256, %v650
        %v1258 = vpop.permute.xlu0 %1257
        %1261 = vset.pattern.permute.xlu0 0
        %1262 = vperm.xlu0 %1261, %v651
        %v1263 = vpop.permute.xlu0 %1262
        %1266 = vset.pattern.permute.xlu0 0
        %1267 = vperm.xlu0 %1266, %v652
        %v1268 = vpop.permute.xlu0 %1267
        %1271 = vset.pattern.permute.xlu0 0
        %1272 = vperm.xlu0 %1271, %v653
        %v1273 = vpop.permute.xlu0 %1272
        %1276 = vset.pattern.permute.xlu0 0
        %1277 = vperm.xlu0 %1276, %v654
        %v1278 = vpop.permute.xlu0 %1277
        %1281 = vset.pattern.permute.xlu0 0
        %1282 = vperm.xlu0 %1281, %v655
        %v1283 = vpop.permute.xlu0 %1282
        %1286 = vset.pattern.permute.xlu0 0
        %1287 = vperm.xlu0 %1286, %v656
        %v1288 = vpop.permute.xlu0 %1287
        %v1290 = vmul.f32 %v912, %v978
        %v1291 = vmul.f32 %v913, %v983
        %v1292 = vmul.f32 %v914, %v988
        %v1293 = vmul.f32 %v915, %v993
        %v1294 = vmul.f32 %v916, %v998
        %v1295 = vmul.f32 %v917, %v1003
        %v1296 = vmul.f32 %v918, %v1008
        %v1297 = vmul.f32 %v919, %v1013
        %v1298 = vmul.f32 %v920, %v1018
        %v1299 = vmul.f32 %v921, %v1023
        %v1300 = vmul.f32 %v922, %v1028
        %v1301 = vmul.f32 %v923, %v1033
        %v1302 = vmul.f32 %v924, %v1038
        %v1303 = vmul.f32 %v925, %v1043
        %v1304 = vmul.f32 %v926, %v1048
        %v1305 = vmul.f32 %v927, %v1053
        %v1306 = vmul.f32 %v928, %v1058
        %v1307 = vmul.f32 %v929, %v1063
        %v1308 = vmul.f32 %v930, %v1068
        %v1309 = vmul.f32 %v931, %v1073
        %v1310 = vmul.f32 %v932, %v1078
        %v1311 = vmul.f32 %v933, %v1083
        %v1312 = vmul.f32 %v934, %v1088
        %v1313 = vmul.f32 %v935, %v1093
        %v1314 = vmul.f32 %v936, %v1098
        %v1315 = vmul.f32 %v937, %v1103
        %v1316 = vmul.f32 %v938, %v1108
        %v1317 = vmul.f32 %v939, %v1113
        %v1318 = vmul.f32 %v940, %v1118
        %v1319 = vmul.f32 %v941, %v1123
        %v1320 = vmul.f32 %v942, %v1128
        %v1321 = vmul.f32 %v943, %v1133
        %v1322 = vmul.f32 %v944, %v1138
        %v1323 = vmul.f32 %v945, %v1143
        %v1324 = vmul.f32 %v946, %v1148
        %v1325 = vmul.f32 %v947, %v1153
        %v1326 = vmul.f32 %v948, %v1158
        %v1327 = vmul.f32 %v949, %v1163
        %v1328 = vmul.f32 %v950, %v1168
        %v1329 = vmul.f32 %v951, %v1173
        %v1330 = vmul.f32 %v952, %v1178
        %v1331 = vmul.f32 %v953, %v1183
        %v1332 = vmul.f32 %v954, %v1188
        %v1333 = vmul.f32 %v955, %v1193
        %v1334 = vmul.f32 %v956, %v1198
        %v1335 = vmul.f32 %v957, %v1203
        %v1336 = vmul.f32 %v958, %v1208
        %v1337 = vmul.f32 %v959, %v1213
        %v1338 = vmul.f32 %v960, %v1218
        %v1339 = vmul.f32 %v961, %v1223
        %v1340 = vmul.f32 %v962, %v1228
        %v1341 = vmul.f32 %v963, %v1233
        %v1342 = vmul.f32 %v964, %v1238
        %v1343 = vmul.f32 %v965, %v1243
        %v1344 = vmul.f32 %v966, %v1248
        %v1345 = vmul.f32 %v967, %v1253
        %v1346 = vmul.f32 %v968, %v1258
        %v1347 = vmul.f32 %v969, %v1263
        %v1348 = vmul.f32 %v970, %v1268
        %v1349 = vmul.f32 %v971, %v1273
        %v1350 = vmul.f32 %v972, %v1278
        %v1351 = vmul.f32 %v973, %v1283
        %v1352 = vmul.f32 %v974, %v1288
        %vm1353 = vcmask 31744
        %v1354 = vsel %vm1353, %v1290, 0.0
        %1355 = vadd.xlane.f32.xlu0 %v1354
        %v1356 = vpop.xlane.xlu0 %1355
        %v1357 = vsel %vm1353, %v1291, 0.0
        %1358 = vadd.xlane.f32.xlu0 %v1357
        %v1359 = vpop.xlane.xlu0 %1358
        %v1360 = vsel %vm1353, %v1292, 0.0
        %1361 = vadd.xlane.f32.xlu0 %v1360
        %v1362 = vpop.xlane.xlu0 %1361
        %v1363 = vsel %vm1353, %v1293, 0.0
        %1364 = vadd.xlane.f32.xlu0 %v1363
        %v1365 = vpop.xlane.xlu0 %1364
        %v1366 = vsel %vm1353, %v1294, 0.0
        %1367 = vadd.xlane.f32.xlu0 %v1366
        %v1368 = vpop.xlane.xlu0 %1367
        %v1369 = vsel %vm1353, %v1295, 0.0
        %1370 = vadd.xlane.f32.xlu0 %v1369
        %v1371 = vpop.xlane.xlu0 %1370
        %v1372 = vsel %vm1353, %v1296, 0.0
        %1373 = vadd.xlane.f32.xlu0 %v1372
        %v1374 = vpop.xlane.xlu0 %1373
        %v1375 = vsel %vm1353, %v1297, 0.0
        %1376 = vadd.xlane.f32.xlu0 %v1375
        %v1377 = vpop.xlane.xlu0 %1376
        %v1378 = vsel %vm1353, %v1298, 0.0
        %1379 = vadd.xlane.f32.xlu0 %v1378
        %v1380 = vpop.xlane.xlu0 %1379
        %v1381 = vsel %vm1353, %v1299, 0.0
        %1382 = vadd.xlane.f32.xlu0 %v1381
        %v1383 = vpop.xlane.xlu0 %1382
        %v1384 = vsel %vm1353, %v1300, 0.0
        %1385 = vadd.xlane.f32.xlu0 %v1384
        %v1386 = vpop.xlane.xlu0 %1385
        %v1387 = vsel %vm1353, %v1301, 0.0
        %1388 = vadd.xlane.f32.xlu0 %v1387
        %v1389 = vpop.xlane.xlu0 %1388
        %v1390 = vsel %vm1353, %v1302, 0.0
        %1391 = vadd.xlane.f32.xlu0 %v1390
        %v1392 = vpop.xlane.xlu0 %1391
        %v1393 = vsel %vm1353, %v1303, 0.0
        %1394 = vadd.xlane.f32.xlu0 %v1393
        %v1395 = vpop.xlane.xlu0 %1394
        %v1396 = vsel %vm1353, %v1304, 0.0
        %1397 = vadd.xlane.f32.xlu0 %v1396
        %v1398 = vpop.xlane.xlu0 %1397
        %v1399 = vsel %vm1353, %v1305, 0.0
        %1400 = vadd.xlane.f32.xlu0 %v1399
        %v1401 = vpop.xlane.xlu0 %1400
        %v1402 = vsel %vm1353, %v1306, 0.0
        %1403 = vadd.xlane.f32.xlu0 %v1402
        %v1404 = vpop.xlane.xlu0 %1403
        %v1405 = vsel %vm1353, %v1307, 0.0
        %1406 = vadd.xlane.f32.xlu0 %v1405
        %v1407 = vpop.xlane.xlu0 %1406
        %v1408 = vsel %vm1353, %v1308, 0.0
        %1409 = vadd.xlane.f32.xlu0 %v1408
        %v1410 = vpop.xlane.xlu0 %1409
        %v1411 = vsel %vm1353, %v1309, 0.0
        %1412 = vadd.xlane.f32.xlu0 %v1411
        %v1413 = vpop.xlane.xlu0 %1412
        %v1414 = vsel %vm1353, %v1310, 0.0
        %1415 = vadd.xlane.f32.xlu0 %v1414
        %v1416 = vpop.xlane.xlu0 %1415
        %v1417 = vsel %vm1353, %v1311, 0.0
        %1418 = vadd.xlane.f32.xlu0 %v1417
        %v1419 = vpop.xlane.xlu0 %1418
        %v1420 = vsel %vm1353, %v1312, 0.0
        %1421 = vadd.xlane.f32.xlu0 %v1420
        %v1422 = vpop.xlane.xlu0 %1421
        %v1423 = vsel %vm1353, %v1313, 0.0
        %1424 = vadd.xlane.f32.xlu0 %v1423
        %v1425 = vpop.xlane.xlu0 %1424
        %v1426 = vsel %vm1353, %v1314, 0.0
        %1427 = vadd.xlane.f32.xlu0 %v1426
        %v1428 = vpop.xlane.xlu0 %1427
        %v1429 = vsel %vm1353, %v1315, 0.0
        %1430 = vadd.xlane.f32.xlu0 %v1429
        %v1431 = vpop.xlane.xlu0 %1430
        %v1432 = vsel %vm1353, %v1316, 0.0
        %1433 = vadd.xlane.f32.xlu0 %v1432
        %v1434 = vpop.xlane.xlu0 %1433
        %v1435 = vsel %vm1353, %v1317, 0.0
        %1436 = vadd.xlane.f32.xlu0 %v1435
        %v1437 = vpop.xlane.xlu0 %1436
        %v1438 = vsel %vm1353, %v1318, 0.0
        %1439 = vadd.xlane.f32.xlu0 %v1438
        %v1440 = vpop.xlane.xlu0 %1439
        %v1441 = vsel %vm1353, %v1319, 0.0
        %1442 = vadd.xlane.f32.xlu0 %v1441
        %v1443 = vpop.xlane.xlu0 %1442
        %v1444 = vsel %vm1353, %v1320, 0.0
        %1445 = vadd.xlane.f32.xlu0 %v1444
        %v1446 = vpop.xlane.xlu0 %1445
        %v1447 = vsel %vm1353, %v1321, 0.0
        %1448 = vadd.xlane.f32.xlu0 %v1447
        %v1449 = vpop.xlane.xlu0 %1448
        %v1450 = vsel %vm1353, %v1322, 0.0
        %1451 = vadd.xlane.f32.xlu0 %v1450
        %v1452 = vpop.xlane.xlu0 %1451
        %v1453 = vsel %vm1353, %v1323, 0.0
        %1454 = vadd.xlane.f32.xlu0 %v1453
        %v1455 = vpop.xlane.xlu0 %1454
        %v1456 = vsel %vm1353, %v1324, 0.0
        %1457 = vadd.xlane.f32.xlu0 %v1456
        %v1458 = vpop.xlane.xlu0 %1457
        %v1459 = vsel %vm1353, %v1325, 0.0
        %1460 = vadd.xlane.f32.xlu0 %v1459
        %v1461 = vpop.xlane.xlu0 %1460
        %v1462 = vsel %vm1353, %v1326, 0.0
        %1463 = vadd.xlane.f32.xlu0 %v1462
        %v1464 = vpop.xlane.xlu0 %1463
        %v1465 = vsel %vm1353, %v1327, 0.0
        %1466 = vadd.xlane.f32.xlu0 %v1465
        %v1467 = vpop.xlane.xlu0 %1466
        %v1468 = vsel %vm1353, %v1328, 0.0
        %1469 = vadd.xlane.f32.xlu0 %v1468
        %v1470 = vpop.xlane.xlu0 %1469
        %v1471 = vsel %vm1353, %v1329, 0.0
        %1472 = vadd.xlane.f32.xlu0 %v1471
        %v1473 = vpop.xlane.xlu0 %1472
        %v1474 = vsel %vm1353, %v1330, 0.0
        %1475 = vadd.xlane.f32.xlu0 %v1474
        %v1476 = vpop.xlane.xlu0 %1475
        %v1477 = vsel %vm1353, %v1331, 0.0
        %1478 = vadd.xlane.f32.xlu0 %v1477
        %v1479 = vpop.xlane.xlu0 %1478
        %v1480 = vsel %vm1353, %v1332, 0.0
        %1481 = vadd.xlane.f32.xlu0 %v1480
        %v1482 = vpop.xlane.xlu0 %1481
        %v1483 = vsel %vm1353, %v1333, 0.0
        %1484 = vadd.xlane.f32.xlu0 %v1483
        %v1485 = vpop.xlane.xlu0 %1484
        %v1486 = vsel %vm1353, %v1334, 0.0
        %1487 = vadd.xlane.f32.xlu0 %v1486
        %v1488 = vpop.xlane.xlu0 %1487
        %v1489 = vsel %vm1353, %v1335, 0.0
        %1490 = vadd.xlane.f32.xlu0 %v1489
        %v1491 = vpop.xlane.xlu0 %1490
        %v1492 = vsel %vm1353, %v1336, 0.0
        %1493 = vadd.xlane.f32.xlu0 %v1492
        %v1494 = vpop.xlane.xlu0 %1493
        %v1495 = vsel %vm1353, %v1337, 0.0
        %1496 = vadd.xlane.f32.xlu0 %v1495
        %v1497 = vpop.xlane.xlu0 %1496
        %v1498 = vsel %vm1353, %v1338, 0.0
        %1499 = vadd.xlane.f32.xlu0 %v1498
        %v1500 = vpop.xlane.xlu0 %1499
        %v1501 = vsel %vm1353, %v1339, 0.0
        %1502 = vadd.xlane.f32.xlu0 %v1501
        %v1503 = vpop.xlane.xlu0 %1502
        %v1504 = vsel %vm1353, %v1340, 0.0
        %1505 = vadd.xlane.f32.xlu0 %v1504
        %v1506 = vpop.xlane.xlu0 %1505
        %v1507 = vsel %vm1353, %v1341, 0.0
        %1508 = vadd.xlane.f32.xlu0 %v1507
        %v1509 = vpop.xlane.xlu0 %1508
        %v1510 = vsel %vm1353, %v1342, 0.0
        %1511 = vadd.xlane.f32.xlu0 %v1510
        %v1512 = vpop.xlane.xlu0 %1511
        %v1513 = vsel %vm1353, %v1343, 0.0
        %1514 = vadd.xlane.f32.xlu0 %v1513
        %v1515 = vpop.xlane.xlu0 %1514
        %v1516 = vsel %vm1353, %v1344, 0.0
        %1517 = vadd.xlane.f32.xlu0 %v1516
        %v1518 = vpop.xlane.xlu0 %1517
        %v1519 = vsel %vm1353, %v1345, 0.0
        %1520 = vadd.xlane.f32.xlu0 %v1519
        %v1521 = vpop.xlane.xlu0 %1520
        %v1522 = vsel %vm1353, %v1346, 0.0
        %1523 = vadd.xlane.f32.xlu0 %v1522
        %v1524 = vpop.xlane.xlu0 %1523
        %v1525 = vsel %vm1353, %v1347, 0.0
        %1526 = vadd.xlane.f32.xlu0 %v1525
        %v1527 = vpop.xlane.xlu0 %1526
        %v1528 = vsel %vm1353, %v1348, 0.0
        %1529 = vadd.xlane.f32.xlu0 %v1528
        %v1530 = vpop.xlane.xlu0 %1529
        %v1531 = vsel %vm1353, %v1349, 0.0
        %1532 = vadd.xlane.f32.xlu0 %v1531
        %v1533 = vpop.xlane.xlu0 %1532
        %v1534 = vsel %vm1353, %v1350, 0.0
        %1535 = vadd.xlane.f32.xlu0 %v1534
        %v1536 = vpop.xlane.xlu0 %1535
        %v1537 = vsel %vm1353, %v1351, 0.0
        %1538 = vadd.xlane.f32.xlu0 %v1537
        %v1539 = vpop.xlane.xlu0 %1538
        %v1540 = vsel %vm1353, %v1352, 0.0
        %1541 = vadd.xlane.f32.xlu0 %v1540
        %v1542 = vpop.xlane.xlu0 %1541
        %v1543 = vpack.c.bf16 %v1291, %v1290
        %v1544 = vpack.c.bf16 %v1293, %v1292
        %v1545 = vpack.c.bf16 %v1295, %v1294
        %v1546 = vpack.c.bf16 %v1297, %v1296
        %v1547 = vpack.c.bf16 %v1299, %v1298
        %v1548 = vpack.c.bf16 %v1301, %v1300
        %v1549 = vpack.c.bf16 %v1303, %v1302
        %v1550 = vpack.c.bf16 %v1305, %v1304
        %v1551 = vpack.c.bf16 %v1307, %v1306
        %v1552 = vpack.c.bf16 %v1309, %v1308
        %v1553 = vpack.c.bf16 %v1311, %v1310
        %v1554 = vpack.c.bf16 %v1313, %v1312
        %v1555 = vpack.c.bf16 %v1315, %v1314
        %v1556 = vpack.c.bf16 %v1317, %v1316
        %v1557 = vpack.c.bf16 %v1319, %v1318
        %v1558 = vpack.c.bf16 %v1321, %v1320
        %v1559 = vpack.c.bf16 %v1323, %v1322
        %v1560 = vpack.c.bf16 %v1325, %v1324
        %v1561 = vpack.c.bf16 %v1327, %v1326
        %v1562 = vpack.c.bf16 %v1329, %v1328
        %v1563 = vpack.c.bf16 %v1331, %v1330
        %v1564 = vpack.c.bf16 %v1333, %v1332
        %v1565 = vpack.c.bf16 %v1335, %v1334
        %v1566 = vpack.c.bf16 %v1337, %v1336
        %v1567 = vpack.c.bf16 %v1339, %v1338
        %v1568 = vpack.c.bf16 %v1341, %v1340
        %v1569 = vpack.c.bf16 %v1343, %v1342
        %v1570 = vpack.c.bf16 %v1345, %v1344
        %v1571 = vpack.c.bf16 %v1347, %v1346
        %v1572 = vpack.c.bf16 %v1349, %v1348
        %v1573 = vpack.c.bf16 %v1351, %v1350
        %v1574 = vpack.c.bf16 %v1352, %v1352
        %vm1575 = vsmask.f32 7424
        %v1577 = vshrl.u32 %v1543, 16
        %v1579 = vshll.u32 %v1543, 16
        %v1581 = vrot.slane %v1579, 1
        %v1582 = vor.u32 %v1577, %v1581
        %v1584 = vshll.u32 %v1544, 16
        %v1586 = vrot.slane %v1584, 1
        %v1587 = vsel %vm1575, %v1582, %v1586
        %v1588 = vshrl.u32 %v1544, 16
        %v1590 = vor.u32 %v1588, %v1586
        %v1592 = vshll.u32 %v1545, 16
        %v1594 = vrot.slane %v1592, 1
        %v1595 = vsel %vm1575, %v1590, %v1594
        %v1596 = vshrl.u32 %v1545, 16
        %v1598 = vor.u32 %v1596, %v1594
        %v1600 = vshll.u32 %v1546, 16
        %v1602 = vrot.slane %v1600, 1
        %v1603 = vsel %vm1575, %v1598, %v1602
        %v1604 = vshrl.u32 %v1546, 16
        %v1606 = vor.u32 %v1604, %v1602
        %v1608 = vshll.u32 %v1547, 16
        %v1610 = vrot.slane %v1608, 1
        %v1611 = vsel %vm1575, %v1606, %v1610
        %v1612 = vshrl.u32 %v1547, 16
        %v1614 = vor.u32 %v1612, %v1610
        %v1616 = vshll.u32 %v1548, 16
        %v1618 = vrot.slane %v1616, 1
        %v1619 = vsel %vm1575, %v1614, %v1618
        %v1620 = vshrl.u32 %v1548, 16
        %v1622 = vor.u32 %v1620, %v1618
        %v1624 = vshll.u32 %v1549, 16
        %v1626 = vrot.slane %v1624, 1
        %v1627 = vsel %vm1575, %v1622, %v1626
        %v1628 = vshrl.u32 %v1549, 16
        %v1630 = vor.u32 %v1628, %v1626
        %v1632 = vshll.u32 %v1550, 16
        %v1634 = vrot.slane %v1632, 1
        %v1635 = vsel %vm1575, %v1630, %v1634
        %v1636 = vshrl.u32 %v1550, 16
        %v1638 = vor.u32 %v1636, %v1634
        %v1640 = vshll.u32 %v1551, 16
        %v1642 = vrot.slane %v1640, 1
        %v1643 = vsel %vm1575, %v1638, %v1642
        %v1644 = vshrl.u32 %v1551, 16
        %v1646 = vor.u32 %v1644, %v1642
        %v1648 = vshll.u32 %v1552, 16
        %v1650 = vrot.slane %v1648, 1
        %v1651 = vsel %vm1575, %v1646, %v1650
        %v1652 = vshrl.u32 %v1552, 16
        %v1654 = vor.u32 %v1652, %v1650
        %v1656 = vshll.u32 %v1553, 16
        %v1658 = vrot.slane %v1656, 1
        %v1659 = vsel %vm1575, %v1654, %v1658
        %v1660 = vshrl.u32 %v1553, 16
        %v1662 = vor.u32 %v1660, %v1658
        %v1664 = vshll.u32 %v1554, 16
        %v1666 = vrot.slane %v1664, 1
        %v1667 = vsel %vm1575, %v1662, %v1666
        %v1668 = vshrl.u32 %v1554, 16
        %v1670 = vor.u32 %v1668, %v1666
        %v1672 = vshll.u32 %v1555, 16
        %v1674 = vrot.slane %v1672, 1
        %v1675 = vsel %vm1575, %v1670, %v1674
        %v1676 = vshrl.u32 %v1555, 16
        %v1678 = vor.u32 %v1676, %v1674
        %v1680 = vshll.u32 %v1556, 16
        %v1682 = vrot.slane %v1680, 1
        %v1683 = vsel %vm1575, %v1678, %v1682
        %v1684 = vshrl.u32 %v1556, 16
        %v1686 = vor.u32 %v1684, %v1682
        %v1688 = vshll.u32 %v1557, 16
        %v1690 = vrot.slane %v1688, 1
        %v1691 = vsel %vm1575, %v1686, %v1690
        %v1692 = vshrl.u32 %v1557, 16
        %v1694 = vor.u32 %v1692, %v1690
        %v1696 = vshll.u32 %v1558, 16
        %v1698 = vrot.slane %v1696, 1
        %v1699 = vsel %vm1575, %v1694, %v1698
        %v1700 = vshrl.u32 %v1558, 16
        %v1702 = vor.u32 %v1700, %v1698
        %v1704 = vshll.u32 %v1559, 16
        %v1706 = vrot.slane %v1704, 1
        %v1707 = vsel %vm1575, %v1702, %v1706
        %v1708 = vshrl.u32 %v1559, 16
        %v1710 = vor.u32 %v1708, %v1706
        %v1712 = vshll.u32 %v1560, 16
        %v1714 = vrot.slane %v1712, 1
        %v1715 = vsel %vm1575, %v1710, %v1714
        %v1716 = vshrl.u32 %v1560, 16
        %v1718 = vor.u32 %v1716, %v1714
        %v1720 = vshll.u32 %v1561, 16
        %v1722 = vrot.slane %v1720, 1
        %v1723 = vsel %vm1575, %v1718, %v1722
        %v1724 = vshrl.u32 %v1561, 16
        %v1726 = vor.u32 %v1724, %v1722
        %v1728 = vshll.u32 %v1562, 16
        %v1730 = vrot.slane %v1728, 1
        %v1731 = vsel %vm1575, %v1726, %v1730
        %v1732 = vshrl.u32 %v1562, 16
        %v1734 = vor.u32 %v1732, %v1730
        %v1736 = vshll.u32 %v1563, 16
        %v1738 = vrot.slane %v1736, 1
        %v1739 = vsel %vm1575, %v1734, %v1738
        %v1740 = vshrl.u32 %v1563, 16
        %v1742 = vor.u32 %v1740, %v1738
        %v1744 = vshll.u32 %v1564, 16
        %v1746 = vrot.slane %v1744, 1
        %v1747 = vsel %vm1575, %v1742, %v1746
        %v1748 = vshrl.u32 %v1564, 16
        %v1750 = vor.u32 %v1748, %v1746
        %v1752 = vshll.u32 %v1565, 16
        %v1754 = vrot.slane %v1752, 1
        %v1755 = vsel %vm1575, %v1750, %v1754
        %v1756 = vshrl.u32 %v1565, 16
        %v1758 = vor.u32 %v1756, %v1754
        %v1760 = vshll.u32 %v1566, 16
        %v1762 = vrot.slane %v1760, 1
        %v1763 = vsel %vm1575, %v1758, %v1762
        %v1764 = vshrl.u32 %v1566, 16
        %v1766 = vor.u32 %v1764, %v1762
        %v1768 = vshll.u32 %v1567, 16
        %v1770 = vrot.slane %v1768, 1
        %v1771 = vsel %vm1575, %v1766, %v1770
        %v1772 = vshrl.u32 %v1567, 16
        %v1774 = vor.u32 %v1772, %v1770
        %v1776 = vshll.u32 %v1568, 16
        %v1778 = vrot.slane %v1776, 1
        %v1779 = vsel %vm1575, %v1774, %v1778
        %v1780 = vshrl.u32 %v1568, 16
        %v1782 = vor.u32 %v1780, %v1778
        %v1784 = vshll.u32 %v1569, 16
        %v1786 = vrot.slane %v1784, 1
        %v1787 = vsel %vm1575, %v1782, %v1786
        %v1788 = vshrl.u32 %v1569, 16
        %v1790 = vor.u32 %v1788, %v1786
        %v1792 = vshll.u32 %v1570, 16
        %v1794 = vrot.slane %v1792, 1
        %v1795 = vsel %vm1575, %v1790, %v1794
        %v1796 = vshrl.u32 %v1570, 16
        %v1798 = vor.u32 %v1796, %v1794
        %v1800 = vshll.u32 %v1571, 16
        %v1802 = vrot.slane %v1800, 1
        %v1803 = vsel %vm1575, %v1798, %v1802
        %1804 = vrot.lane.b32.xlu0 %v1587, 4
        %v1805 = vpop.permute.xlu0 %1804
        %1806 = vrot.lane.b32.xlu0 %v1595, 4
        %v1807 = vpop.permute.xlu0 %1806
        %1808 = vrot.lane.b32.xlu0 %v1603, 4
        %v1809 = vpop.permute.xlu0 %1808
        %1810 = vrot.lane.b32.xlu0 %v1611, 4
        %v1811 = vpop.permute.xlu0 %1810
        %1812 = vrot.lane.b32.xlu0 %v1619, 4
        %v1813 = vpop.permute.xlu0 %1812
        %1814 = vrot.lane.b32.xlu0 %v1627, 4
        %v1815 = vpop.permute.xlu0 %1814
        %1816 = vrot.lane.b32.xlu0 %v1635, 4
        %v1817 = vpop.permute.xlu0 %1816
        %1818 = vrot.lane.b32.xlu0 %v1643, 4
        %v1819 = vpop.permute.xlu0 %1818
        %1820 = vrot.lane.b32.xlu0 %v1651, 4
        %v1821 = vpop.permute.xlu0 %1820
        %1822 = vrot.lane.b32.xlu0 %v1659, 4
        %v1823 = vpop.permute.xlu0 %1822
        %1824 = vrot.lane.b32.xlu0 %v1667, 4
        %v1825 = vpop.permute.xlu0 %1824
        %1826 = vrot.lane.b32.xlu0 %v1675, 4
        %v1827 = vpop.permute.xlu0 %1826
        %1828 = vrot.lane.b32.xlu0 %v1683, 4
        %v1829 = vpop.permute.xlu0 %1828
        %1830 = vrot.lane.b32.xlu0 %v1691, 4
        %v1831 = vpop.permute.xlu0 %1830
        %1832 = vrot.lane.b32.xlu0 %v1699, 4
        %v1833 = vpop.permute.xlu0 %1832
        %1834 = vrot.lane.b32.xlu0 %v1707, 4
        %v1835 = vpop.permute.xlu0 %1834
        %1836 = vrot.lane.b32.xlu0 %v1715, 4
        %v1837 = vpop.permute.xlu0 %1836
        %1838 = vrot.lane.b32.xlu0 %v1723, 4
        %v1839 = vpop.permute.xlu0 %1838
        %1840 = vrot.lane.b32.xlu0 %v1731, 4
        %v1841 = vpop.permute.xlu0 %1840
        %1842 = vrot.lane.b32.xlu0 %v1739, 4
        %v1843 = vpop.permute.xlu0 %1842
        %1844 = vrot.lane.b32.xlu0 %v1747, 4
        %v1845 = vpop.permute.xlu0 %1844
        %1846 = vrot.lane.b32.xlu0 %v1755, 4
        %v1847 = vpop.permute.xlu0 %1846
        %1848 = vrot.lane.b32.xlu0 %v1763, 4
        %v1849 = vpop.permute.xlu0 %1848
        %1850 = vrot.lane.b32.xlu0 %v1771, 4
        %v1851 = vpop.permute.xlu0 %1850
        %1852 = vrot.lane.b32.xlu0 %v1779, 4
        %v1853 = vpop.permute.xlu0 %1852
        %1854 = vrot.lane.b32.xlu0 %v1787, 4
        %v1855 = vpop.permute.xlu0 %1854
        %1856 = vrot.lane.b32.xlu0 %v1795, 4
        %v1857 = vpop.permute.xlu0 %1856
        %1858 = vrot.lane.b32.xlu0 %v1803, 4
        %v1859 = vpop.permute.xlu0 %1858
        %vm1889 = vcmask 1046528
        %v1890 = vrot.slane %v1543, 1
        %v1891 = vrot.slane %v1544, 1
        %v1892 = vsel %vm1889, %v1890, %v1891
        %v1893 = vrot.slane %v1545, 1
        %v1894 = vsel %vm1889, %v1891, %v1893
        %v1895 = vrot.slane %v1546, 1
        %v1896 = vsel %vm1889, %v1893, %v1895
        %v1897 = vrot.slane %v1547, 1
        %v1898 = vsel %vm1889, %v1895, %v1897
        %v1899 = vrot.slane %v1548, 1
        %v1900 = vsel %vm1889, %v1897, %v1899
        %v1901 = vrot.slane %v1549, 1
        %v1902 = vsel %vm1889, %v1899, %v1901
        %v1903 = vrot.slane %v1550, 1
        %v1904 = vsel %vm1889, %v1901, %v1903
        %v1905 = vrot.slane %v1551, 1
        %v1906 = vsel %vm1889, %v1903, %v1905
        %v1907 = vrot.slane %v1552, 1
        %v1908 = vsel %vm1889, %v1905, %v1907
        %v1909 = vrot.slane %v1553, 1
        %v1910 = vsel %vm1889, %v1907, %v1909
        %v1911 = vrot.slane %v1554, 1
        %v1912 = vsel %vm1889, %v1909, %v1911
        %v1913 = vrot.slane %v1555, 1
        %v1914 = vsel %vm1889, %v1911, %v1913
        %v1915 = vrot.slane %v1556, 1
        %v1916 = vsel %vm1889, %v1913, %v1915
        %v1917 = vrot.slane %v1557, 1
        %v1918 = vsel %vm1889, %v1915, %v1917
        %v1919 = vrot.slane %v1558, 1
        %v1920 = vsel %vm1889, %v1917, %v1919
        %v1921 = vrot.slane %v1559, 1
        %v1922 = vsel %vm1889, %v1919, %v1921
        %v1923 = vrot.slane %v1560, 1
        %v1924 = vsel %vm1889, %v1921, %v1923
        %v1925 = vrot.slane %v1561, 1
        %v1926 = vsel %vm1889, %v1923, %v1925
        %v1927 = vrot.slane %v1562, 1
        %v1928 = vsel %vm1889, %v1925, %v1927
        %v1929 = vrot.slane %v1563, 1
        %v1930 = vsel %vm1889, %v1927, %v1929
        %v1931 = vrot.slane %v1564, 1
        %v1932 = vsel %vm1889, %v1929, %v1931
        %v1933 = vrot.slane %v1565, 1
        %v1934 = vsel %vm1889, %v1931, %v1933
        %v1935 = vrot.slane %v1566, 1
        %v1936 = vsel %vm1889, %v1933, %v1935
        %v1937 = vrot.slane %v1567, 1
        %v1938 = vsel %vm1889, %v1935, %v1937
        %v1939 = vrot.slane %v1568, 1
        %v1940 = vsel %vm1889, %v1937, %v1939
        %v1941 = vrot.slane %v1569, 1
        %v1942 = vsel %vm1889, %v1939, %v1941
        %v1943 = vrot.slane %v1570, 1
        %v1944 = vsel %vm1889, %v1941, %v1943
        %v1945 = vrot.slane %v1571, 1
        %v1946 = vsel %vm1889, %v1943, %v1945
        %1947 = vrot.lane.b32.xlu0 %v1892, 8
        %v1948 = vpop.permute.xlu0 %1947
        %1949 = vrot.lane.b32.xlu0 %v1894, 8
        %v1950 = vpop.permute.xlu0 %1949
        %1951 = vrot.lane.b32.xlu0 %v1896, 8
        %v1952 = vpop.permute.xlu0 %1951
        %1953 = vrot.lane.b32.xlu0 %v1898, 8
        %v1954 = vpop.permute.xlu0 %1953
        %1955 = vrot.lane.b32.xlu0 %v1900, 8
        %v1956 = vpop.permute.xlu0 %1955
        %1957 = vrot.lane.b32.xlu0 %v1902, 8
        %v1958 = vpop.permute.xlu0 %1957
        %1959 = vrot.lane.b32.xlu0 %v1904, 8
        %v1960 = vpop.permute.xlu0 %1959
        %1961 = vrot.lane.b32.xlu0 %v1906, 8
        %v1962 = vpop.permute.xlu0 %1961
        %1963 = vrot.lane.b32.xlu0 %v1908, 8
        %v1964 = vpop.permute.xlu0 %1963
        %1965 = vrot.lane.b32.xlu0 %v1910, 8
        %v1966 = vpop.permute.xlu0 %1965
        %1967 = vrot.lane.b32.xlu0 %v1912, 8
        %v1968 = vpop.permute.xlu0 %1967
        %1969 = vrot.lane.b32.xlu0 %v1914, 8
        %v1970 = vpop.permute.xlu0 %1969
        %1971 = vrot.lane.b32.xlu0 %v1916, 8
        %v1972 = vpop.permute.xlu0 %1971
        %1973 = vrot.lane.b32.xlu0 %v1918, 8
        %v1974 = vpop.permute.xlu0 %1973
        %1975 = vrot.lane.b32.xlu0 %v1920, 8
        %v1976 = vpop.permute.xlu0 %1975
        %1977 = vrot.lane.b32.xlu0 %v1922, 8
        %v1978 = vpop.permute.xlu0 %1977
        %1979 = vrot.lane.b32.xlu0 %v1924, 8
        %v1980 = vpop.permute.xlu0 %1979
        %1981 = vrot.lane.b32.xlu0 %v1926, 8
        %v1982 = vpop.permute.xlu0 %1981
        %1983 = vrot.lane.b32.xlu0 %v1928, 8
        %v1984 = vpop.permute.xlu0 %1983
        %1985 = vrot.lane.b32.xlu0 %v1930, 8
        %v1986 = vpop.permute.xlu0 %1985
        %1987 = vrot.lane.b32.xlu0 %v1932, 8
        %v1988 = vpop.permute.xlu0 %1987
        %1989 = vrot.lane.b32.xlu0 %v1934, 8
        %v1990 = vpop.permute.xlu0 %1989
        %1991 = vrot.lane.b32.xlu0 %v1936, 8
        %v1992 = vpop.permute.xlu0 %1991
        %1993 = vrot.lane.b32.xlu0 %v1938, 8
        %v1994 = vpop.permute.xlu0 %1993
        %1995 = vrot.lane.b32.xlu0 %v1940, 8
        %v1996 = vpop.permute.xlu0 %1995
        %1997 = vrot.lane.b32.xlu0 %v1942, 8
        %v1998 = vpop.permute.xlu0 %1997
        %1999 = vrot.lane.b32.xlu0 %v1944, 8
        %v2000 = vpop.permute.xlu0 %1999
        %2001 = vrot.lane.b32.xlu0 %v1946, 8
        %v2002 = vpop.permute.xlu0 %2001
        %vm2004 = vcmask 1043456
        %v2005 = vrot.slane %v1544, 4
        %v2006 = vrot.slane %v1545, 4
        %v2007 = vsel %vm2004, %v2005, %v2006
        %v2008 = vrot.slane %v1546, 4
        %v2009 = vsel %vm2004, %v2006, %v2008
        %v2010 = vrot.slane %v1547, 4
        %v2011 = vsel %vm2004, %v2008, %v2010
        %v2012 = vrot.slane %v1548, 4
        %v2013 = vsel %vm2004, %v2010, %v2012
        %v2014 = vrot.slane %v1549, 4
        %v2015 = vsel %vm2004, %v2012, %v2014
        %v2016 = vrot.slane %v1550, 4
        %v2017 = vsel %vm2004, %v2014, %v2016
        %v2018 = vrot.slane %v1551, 4
        %v2019 = vsel %vm2004, %v2016, %v2018
        %v2020 = vrot.slane %v1552, 4
        %v2021 = vsel %vm2004, %v2018, %v2020
        %v2022 = vrot.slane %v1553, 4
        %v2023 = vsel %vm2004, %v2020, %v2022
        %v2024 = vrot.slane %v1554, 4
        %v2025 = vsel %vm2004, %v2022, %v2024
        %v2026 = vrot.slane %v1555, 4
        %v2027 = vsel %vm2004, %v2024, %v2026
        %v2028 = vrot.slane %v1556, 4
        %v2029 = vsel %vm2004, %v2026, %v2028
        %v2030 = vrot.slane %v1557, 4
        %v2031 = vsel %vm2004, %v2028, %v2030
        %v2032 = vrot.slane %v1558, 4
        %v2033 = vsel %vm2004, %v2030, %v2032
        %v2034 = vrot.slane %v1559, 4
        %v2035 = vsel %vm2004, %v2032, %v2034
        %v2036 = vrot.slane %v1560, 4
        %v2037 = vsel %vm2004, %v2034, %v2036
        %v2038 = vrot.slane %v1561, 4
        %v2039 = vsel %vm2004, %v2036, %v2038
        %v2040 = vrot.slane %v1562, 4
        %v2041 = vsel %vm2004, %v2038, %v2040
        %v2042 = vrot.slane %v1563, 4
        %v2043 = vsel %vm2004, %v2040, %v2042
        %v2044 = vrot.slane %v1564, 4
        %v2045 = vsel %vm2004, %v2042, %v2044
        %v2046 = vrot.slane %v1565, 4
        %v2047 = vsel %vm2004, %v2044, %v2046
        %v2048 = vrot.slane %v1566, 4
        %v2049 = vsel %vm2004, %v2046, %v2048
        %v2050 = vrot.slane %v1567, 4
        %v2051 = vsel %vm2004, %v2048, %v2050
        %v2052 = vrot.slane %v1568, 4
        %v2053 = vsel %vm2004, %v2050, %v2052
        %v2054 = vrot.slane %v1569, 4
        %v2055 = vsel %vm2004, %v2052, %v2054
        %v2056 = vrot.slane %v1570, 4
        %v2057 = vsel %vm2004, %v2054, %v2056
        %v2058 = vrot.slane %v1571, 4
        %v2059 = vsel %vm2004, %v2056, %v2058
        %v2060 = vrot.slane %v1572, 4
        %v2061 = vsel %vm2004, %v2058, %v2060
        %2062 = vrot.lane.b32.xlu0 %v2007, 12
        %v2063 = vpop.permute.xlu0 %2062
        %2064 = vrot.lane.b32.xlu0 %v2009, 12
        %v2065 = vpop.permute.xlu0 %2064
        %2066 = vrot.lane.b32.xlu0 %v2011, 12
        %v2067 = vpop.permute.xlu0 %2066
        %2068 = vrot.lane.b32.xlu0 %v2013, 12
        %v2069 = vpop.permute.xlu0 %2068
        %2070 = vrot.lane.b32.xlu0 %v2015, 12
        %v2071 = vpop.permute.xlu0 %2070
        %2072 = vrot.lane.b32.xlu0 %v2017, 12
        %v2073 = vpop.permute.xlu0 %2072
        %2074 = vrot.lane.b32.xlu0 %v2019, 12
        %v2075 = vpop.permute.xlu0 %2074
        %2076 = vrot.lane.b32.xlu0 %v2021, 12
        %v2077 = vpop.permute.xlu0 %2076
        %2078 = vrot.lane.b32.xlu0 %v2023, 12
        %v2079 = vpop.permute.xlu0 %2078
        %2080 = vrot.lane.b32.xlu0 %v2025, 12
        %v2081 = vpop.permute.xlu0 %2080
        %2082 = vrot.lane.b32.xlu0 %v2027, 12
        %v2083 = vpop.permute.xlu0 %2082
        %2084 = vrot.lane.b32.xlu0 %v2029, 12
        %v2085 = vpop.permute.xlu0 %2084
        %2086 = vrot.lane.b32.xlu0 %v2031, 12
        %v2087 = vpop.permute.xlu0 %2086
        %2088 = vrot.lane.b32.xlu0 %v2033, 12
        %v2089 = vpop.permute.xlu0 %2088
        %2090 = vrot.lane.b32.xlu0 %v2035, 12
        %v2091 = vpop.permute.xlu0 %2090
        %2092 = vrot.lane.b32.xlu0 %v2037, 12
        %v2093 = vpop.permute.xlu0 %2092
        %2094 = vrot.lane.b32.xlu0 %v2039, 12
        %v2095 = vpop.permute.xlu0 %2094
        %2096 = vrot.lane.b32.xlu0 %v2041, 12
        %v2097 = vpop.permute.xlu0 %2096
        %2098 = vrot.lane.b32.xlu0 %v2043, 12
        %v2099 = vpop.permute.xlu0 %2098
        %2100 = vrot.lane.b32.xlu0 %v2045, 12
        %v2101 = vpop.permute.xlu0 %2100
        %2102 = vrot.lane.b32.xlu0 %v2047, 12
        %v2103 = vpop.permute.xlu0 %2102
        %2104 = vrot.lane.b32.xlu0 %v2049, 12
        %v2105 = vpop.permute.xlu0 %2104
        %2106 = vrot.lane.b32.xlu0 %v2051, 12
        %v2107 = vpop.permute.xlu0 %2106
        %2108 = vrot.lane.b32.xlu0 %v2053, 12
        %v2109 = vpop.permute.xlu0 %2108
        %2110 = vrot.lane.b32.xlu0 %v2055, 12
        %v2111 = vpop.permute.xlu0 %2110
        %2112 = vrot.lane.b32.xlu0 %v2057, 12
        %v2113 = vpop.permute.xlu0 %2112
        %2114 = vrot.lane.b32.xlu0 %v2059, 12
        %v2115 = vpop.permute.xlu0 %2114
        %2116 = vrot.lane.b32.xlu0 %v2061, 12
        %v2117 = vpop.permute.xlu0 %2116
        %vm2118 = vsmask.f32 3328
        %v2119 = vrot.slane %v1588, 4
        %v2120 = vrot.slane %v1584, 5
        %v2121 = vor.u32 %v2119, %v2120
        %v2122 = vrot.slane %v1596, 4
        %v2123 = vrot.slane %v1592, 5
        %v2124 = vor.u32 %v2122, %v2123
        %v2125 = vsel %vm2118, %v2121, %v2124
        %v2126 = vrot.slane %v1604, 4
        %v2127 = vrot.slane %v1600, 5
        %v2128 = vor.u32 %v2126, %v2127
        %v2129 = vsel %vm2118, %v2124, %v2128
        %v2130 = vrot.slane %v1612, 4
        %v2131 = vrot.slane %v1608, 5
        %v2132 = vor.u32 %v2130, %v2131
        %v2133 = vsel %vm2118, %v2128, %v2132
        %v2134 = vrot.slane %v1620, 4
        %v2135 = vrot.slane %v1616, 5
        %v2136 = vor.u32 %v2134, %v2135
        %v2137 = vsel %vm2118, %v2132, %v2136
        %v2138 = vrot.slane %v1628, 4
        %v2139 = vrot.slane %v1624, 5
        %v2140 = vor.u32 %v2138, %v2139
        %v2141 = vsel %vm2118, %v2136, %v2140
        %v2142 = vrot.slane %v1636, 4
        %v2143 = vrot.slane %v1632, 5
        %v2144 = vor.u32 %v2142, %v2143
        %v2145 = vsel %vm2118, %v2140, %v2144
        %v2146 = vrot.slane %v1644, 4
        %v2147 = vrot.slane %v1640, 5
        %v2148 = vor.u32 %v2146, %v2147
        %v2149 = vsel %vm2118, %v2144, %v2148
        %v2150 = vrot.slane %v1652, 4
        %v2151 = vrot.slane %v1648, 5
        %v2152 = vor.u32 %v2150, %v2151
        %v2153 = vsel %vm2118, %v2148, %v2152
        %v2154 = vrot.slane %v1660, 4
        %v2155 = vrot.slane %v1656, 5
        %v2156 = vor.u32 %v2154, %v2155
        %v2157 = vsel %vm2118, %v2152, %v2156
        %v2158 = vrot.slane %v1668, 4
        %v2159 = vrot.slane %v1664, 5
        %v2160 = vor.u32 %v2158, %v2159
        %v2161 = vsel %vm2118, %v2156, %v2160
        %v2162 = vrot.slane %v1676, 4
        %v2163 = vrot.slane %v1672, 5
        %v2164 = vor.u32 %v2162, %v2163
        %v2165 = vsel %vm2118, %v2160, %v2164
        %v2166 = vrot.slane %v1684, 4
        %v2167 = vrot.slane %v1680, 5
        %v2168 = vor.u32 %v2166, %v2167
        %v2169 = vsel %vm2118, %v2164, %v2168
        %v2170 = vrot.slane %v1692, 4
        %v2171 = vrot.slane %v1688, 5
        %v2172 = vor.u32 %v2170, %v2171
        %v2173 = vsel %vm2118, %v2168, %v2172
        %v2174 = vrot.slane %v1700, 4
        %v2175 = vrot.slane %v1696, 5
        %v2176 = vor.u32 %v2174, %v2175
        %v2177 = vsel %vm2118, %v2172, %v2176
        %v2178 = vrot.slane %v1708, 4
        %v2179 = vrot.slane %v1704, 5
        %v2180 = vor.u32 %v2178, %v2179
        %v2181 = vsel %vm2118, %v2176, %v2180
        %v2182 = vrot.slane %v1716, 4
        %v2183 = vrot.slane %v1712, 5
        %v2184 = vor.u32 %v2182, %v2183
        %v2185 = vsel %vm2118, %v2180, %v2184
        %v2186 = vrot.slane %v1724, 4
        %v2187 = vrot.slane %v1720, 5
        %v2188 = vor.u32 %v2186, %v2187
        %v2189 = vsel %vm2118, %v2184, %v2188
        %v2190 = vrot.slane %v1732, 4
        %v2191 = vrot.slane %v1728, 5
        %v2192 = vor.u32 %v2190, %v2191
        %v2193 = vsel %vm2118, %v2188, %v2192
        %v2194 = vrot.slane %v1740, 4
        %v2195 = vrot.slane %v1736, 5
        %v2196 = vor.u32 %v2194, %v2195
        %v2197 = vsel %vm2118, %v2192, %v2196
        %v2198 = vrot.slane %v1748, 4
        %v2199 = vrot.slane %v1744, 5
        %v2200 = vor.u32 %v2198, %v2199
        %v2201 = vsel %vm2118, %v2196, %v2200
        %v2202 = vrot.slane %v1756, 4
        %v2203 = vrot.slane %v1752, 5
        %v2204 = vor.u32 %v2202, %v2203
        %v2205 = vsel %vm2118, %v2200, %v2204
        %v2206 = vrot.slane %v1764, 4
        %v2207 = vrot.slane %v1760, 5
        %v2208 = vor.u32 %v2206, %v2207
        %v2209 = vsel %vm2118, %v2204, %v2208
        %v2210 = vrot.slane %v1772, 4
        %v2211 = vrot.slane %v1768, 5
        %v2212 = vor.u32 %v2210, %v2211
        %v2213 = vsel %vm2118, %v2208, %v2212
        %v2214 = vrot.slane %v1780, 4
        %v2215 = vrot.slane %v1776, 5
        %v2216 = vor.u32 %v2214, %v2215
        %v2217 = vsel %vm2118, %v2212, %v2216
        %v2218 = vrot.slane %v1788, 4
        %v2219 = vrot.slane %v1784, 5
        %v2220 = vor.u32 %v2218, %v2219
        %v2221 = vsel %vm2118, %v2216, %v2220
        %v2222 = vrot.slane %v1796, 4
        %v2223 = vrot.slane %v1792, 5
        %v2224 = vor.u32 %v2222, %v2223
        %v2225 = vsel %vm2118, %v2220, %v2224
        %v2226 = vshrl.u32 %v1571, 16
        %v2228 = vrot.slane %v2226, 4
        %v2229 = vrot.slane %v1800, 5
        %v2230 = vor.u32 %v2228, %v2229
        %v2231 = vsel %vm2118, %v2224, %v2230
        %v2233 = vshrl.u32 %v1572, 16
        %v2235 = vrot.slane %v2233, 4
        %v2236 = vshll.u32 %v1572, 16
        %v2238 = vrot.slane %v2236, 5
        %v2239 = vor.u32 %v2235, %v2238
        %v2240 = vsel %vm2118, %v2230, %v2239
        %2241 = vrot.lane.b32.xlu0 %v2125, 16
        %v2242 = vpop.permute.xlu0 %2241
        %2243 = vrot.lane.b32.xlu0 %v2129, 16
        %v2244 = vpop.permute.xlu0 %2243
        %2245 = vrot.lane.b32.xlu0 %v2133, 16
        %v2246 = vpop.permute.xlu0 %2245
        %2247 = vrot.lane.b32.xlu0 %v2137, 16
        %v2248 = vpop.permute.xlu0 %2247
        %2249 = vrot.lane.b32.xlu0 %v2141, 16
        %v2250 = vpop.permute.xlu0 %2249
        %2251 = vrot.lane.b32.xlu0 %v2145, 16
        %v2252 = vpop.permute.xlu0 %2251
        %2253 = vrot.lane.b32.xlu0 %v2149, 16
        %v2254 = vpop.permute.xlu0 %2253
        %2255 = vrot.lane.b32.xlu0 %v2153, 16
        %v2256 = vpop.permute.xlu0 %2255
        %2257 = vrot.lane.b32.xlu0 %v2157, 16
        %v2258 = vpop.permute.xlu0 %2257
        %2259 = vrot.lane.b32.xlu0 %v2161, 16
        %v2260 = vpop.permute.xlu0 %2259
        %2261 = vrot.lane.b32.xlu0 %v2165, 16
        %v2262 = vpop.permute.xlu0 %2261
        %2263 = vrot.lane.b32.xlu0 %v2169, 16
        %v2264 = vpop.permute.xlu0 %2263
        %2265 = vrot.lane.b32.xlu0 %v2173, 16
        %v2266 = vpop.permute.xlu0 %2265
        %2267 = vrot.lane.b32.xlu0 %v2177, 16
        %v2268 = vpop.permute.xlu0 %2267
        %2269 = vrot.lane.b32.xlu0 %v2181, 16
        %v2270 = vpop.permute.xlu0 %2269
        %2271 = vrot.lane.b32.xlu0 %v2185, 16
        %v2272 = vpop.permute.xlu0 %2271
        %2273 = vrot.lane.b32.xlu0 %v2189, 16
        %v2274 = vpop.permute.xlu0 %2273
        %2275 = vrot.lane.b32.xlu0 %v2193, 16
        %v2276 = vpop.permute.xlu0 %2275
        %2277 = vrot.lane.b32.xlu0 %v2197, 16
        %v2278 = vpop.permute.xlu0 %2277
        %2279 = vrot.lane.b32.xlu0 %v2201, 16
        %v2280 = vpop.permute.xlu0 %2279
        %2281 = vrot.lane.b32.xlu0 %v2205, 16
        %v2282 = vpop.permute.xlu0 %2281
        %2283 = vrot.lane.b32.xlu0 %v2209, 16
        %v2284 = vpop.permute.xlu0 %2283
        %2285 = vrot.lane.b32.xlu0 %v2213, 16
        %v2286 = vpop.permute.xlu0 %2285
        %2287 = vrot.lane.b32.xlu0 %v2217, 16
        %v2288 = vpop.permute.xlu0 %2287
        %2289 = vrot.lane.b32.xlu0 %v2221, 16
        %v2290 = vpop.permute.xlu0 %2289
        %2291 = vrot.lane.b32.xlu0 %v2225, 16
        %v2292 = vpop.permute.xlu0 %2291
        %2293 = vrot.lane.b32.xlu0 %v2231, 16
        %v2294 = vpop.permute.xlu0 %2293
        %2295 = vrot.lane.b32.xlu0 %v2240, 16
        %v2296 = vpop.permute.xlu0 %2295
        %vm2297 = vcmask 1042432
        %v2298 = vrot.slane %v1544, 5
        %v2299 = vrot.slane %v1545, 5
        %v2300 = vsel %vm2297, %v2298, %v2299
        %v2301 = vrot.slane %v1546, 5
        %v2302 = vsel %vm2297, %v2299, %v2301
        %v2303 = vrot.slane %v1547, 5
        %v2304 = vsel %vm2297, %v2301, %v2303
        %v2305 = vrot.slane %v1548, 5
        %v2306 = vsel %vm2297, %v2303, %v2305
        %v2307 = vrot.slane %v1549, 5
        %v2308 = vsel %vm2297, %v2305, %v2307
        %v2309 = vrot.slane %v1550, 5
        %v2310 = vsel %vm2297, %v2307, %v2309
        %v2311 = vrot.slane %v1551, 5
        %v2312 = vsel %vm2297, %v2309, %v2311
        %v2313 = vrot.slane %v1552, 5
        %v2314 = vsel %vm2297, %v2311, %v2313
        %v2315 = vrot.slane %v1553, 5
        %v2316 = vsel %vm2297, %v2313, %v2315
        %v2317 = vrot.slane %v1554, 5
        %v2318 = vsel %vm2297, %v2315, %v2317
        %v2319 = vrot.slane %v1555, 5
        %v2320 = vsel %vm2297, %v2317, %v2319
        %v2321 = vrot.slane %v1556, 5
        %v2322 = vsel %vm2297, %v2319, %v2321
        %v2323 = vrot.slane %v1557, 5
        %v2324 = vsel %vm2297, %v2321, %v2323
        %v2325 = vrot.slane %v1558, 5
        %v2326 = vsel %vm2297, %v2323, %v2325
        %v2327 = vrot.slane %v1559, 5
        %v2328 = vsel %vm2297, %v2325, %v2327
        %v2329 = vrot.slane %v1560, 5
        %v2330 = vsel %vm2297, %v2327, %v2329
        %v2331 = vrot.slane %v1561, 5
        %v2332 = vsel %vm2297, %v2329, %v2331
        %v2333 = vrot.slane %v1562, 5
        %v2334 = vsel %vm2297, %v2331, %v2333
        %v2335 = vrot.slane %v1563, 5
        %v2336 = vsel %vm2297, %v2333, %v2335
        %v2337 = vrot.slane %v1564, 5
        %v2338 = vsel %vm2297, %v2335, %v2337
        %v2339 = vrot.slane %v1565, 5
        %v2340 = vsel %vm2297, %v2337, %v2339
        %v2341 = vrot.slane %v1566, 5
        %v2342 = vsel %vm2297, %v2339, %v2341
        %v2343 = vrot.slane %v1567, 5
        %v2344 = vsel %vm2297, %v2341, %v2343
        %v2345 = vrot.slane %v1568, 5
        %v2346 = vsel %vm2297, %v2343, %v2345
        %v2347 = vrot.slane %v1569, 5
        %v2348 = vsel %vm2297, %v2345, %v2347
        %v2349 = vrot.slane %v1570, 5
        %v2350 = vsel %vm2297, %v2347, %v2349
        %v2351 = vrot.slane %v1571, 5
        %v2352 = vsel %vm2297, %v2349, %v2351
        %v2353 = vrot.slane %v1572, 5
        %v2354 = vsel %vm2297, %v2351, %v2353
        %2355 = vrot.lane.b32.xlu0 %v2300, 20
        %v2356 = vpop.permute.xlu0 %2355
        %2357 = vrot.lane.b32.xlu0 %v2302, 20
        %v2358 = vpop.permute.xlu0 %2357
        %2359 = vrot.lane.b32.xlu0 %v2304, 20
        %v2360 = vpop.permute.xlu0 %2359
        %2361 = vrot.lane.b32.xlu0 %v2306, 20
        %v2362 = vpop.permute.xlu0 %2361
        %2363 = vrot.lane.b32.xlu0 %v2308, 20
        %v2364 = vpop.permute.xlu0 %2363
        %2365 = vrot.lane.b32.xlu0 %v2310, 20
        %v2366 = vpop.permute.xlu0 %2365
        %2367 = vrot.lane.b32.xlu0 %v2312, 20
        %v2368 = vpop.permute.xlu0 %2367
        %2369 = vrot.lane.b32.xlu0 %v2314, 20
        %v2370 = vpop.permute.xlu0 %2369
        %2371 = vrot.lane.b32.xlu0 %v2316, 20
        %v2372 = vpop.permute.xlu0 %2371
        %2373 = vrot.lane.b32.xlu0 %v2318, 20
        %v2374 = vpop.permute.xlu0 %2373
        %2375 = vrot.lane.b32.xlu0 %v2320, 20
        %v2376 = vpop.permute.xlu0 %2375
        %2377 = vrot.lane.b32.xlu0 %v2322, 20
        %v2378 = vpop.permute.xlu0 %2377
        %2379 = vrot.lane.b32.xlu0 %v2324, 20
        %v2380 = vpop.permute.xlu0 %2379
        %2381 = vrot.lane.b32.xlu0 %v2326, 20
        %v2382 = vpop.permute.xlu0 %2381
        %2383 = vrot.lane.b32.xlu0 %v2328, 20
        %v2384 = vpop.permute.xlu0 %2383
        %2385 = vrot.lane.b32.xlu0 %v2330, 20
        %v2386 = vpop.permute.xlu0 %2385
        %2387 = vrot.lane.b32.xlu0 %v2332, 20
        %v2388 = vpop.permute.xlu0 %2387
        %2389 = vrot.lane.b32.xlu0 %v2334, 20
        %v2390 = vpop.permute.xlu0 %2389
        %2391 = vrot.lane.b32.xlu0 %v2336, 20
        %v2392 = vpop.permute.xlu0 %2391
        %2393 = vrot.lane.b32.xlu0 %v2338, 20
        %v2394 = vpop.permute.xlu0 %2393
        %2395 = vrot.lane.b32.xlu0 %v2340, 20
        %v2396 = vpop.permute.xlu0 %2395
        %2397 = vrot.lane.b32.xlu0 %v2342, 20
        %v2398 = vpop.permute.xlu0 %2397
        %2399 = vrot.lane.b32.xlu0 %v2344, 20
        %v2400 = vpop.permute.xlu0 %2399
        %2401 = vrot.lane.b32.xlu0 %v2346, 20
        %v2402 = vpop.permute.xlu0 %2401
        %2403 = vrot.lane.b32.xlu0 %v2348, 20
        %v2404 = vpop.permute.xlu0 %2403
        %2405 = vrot.lane.b32.xlu0 %v2350, 20
        %v2406 = vpop.permute.xlu0 %2405
        %2407 = vrot.lane.b32.xlu0 %v2352, 20
        %v2408 = vpop.permute.xlu0 %2407
        %2409 = vrot.lane.b32.xlu0 %v2354, 20
        %v2410 = vpop.permute.xlu0 %2409
        %2412 = vrot.lane.b32.xlu0 %v1546, 24
        %v2413 = vpop.permute.xlu0 %2412
        %2414 = vrot.lane.b32.xlu0 %v1547, 24
        %v2415 = vpop.permute.xlu0 %2414
        %2416 = vrot.lane.b32.xlu0 %v1548, 24
        %v2417 = vpop.permute.xlu0 %2416
        %2418 = vrot.lane.b32.xlu0 %v1549, 24
        %v2419 = vpop.permute.xlu0 %2418
        %2420 = vrot.lane.b32.xlu0 %v1550, 24
        %v2421 = vpop.permute.xlu0 %2420
        %2422 = vrot.lane.b32.xlu0 %v1551, 24
        %v2423 = vpop.permute.xlu0 %2422
        %2424 = vrot.lane.b32.xlu0 %v1552, 24
        %v2425 = vpop.permute.xlu0 %2424
        %2426 = vrot.lane.b32.xlu0 %v1553, 24
        %v2427 = vpop.permute.xlu0 %2426
        %2428 = vrot.lane.b32.xlu0 %v1554, 24
        %v2429 = vpop.permute.xlu0 %2428
        %2430 = vrot.lane.b32.xlu0 %v1555, 24
        %v2431 = vpop.permute.xlu0 %2430
        %2432 = vrot.lane.b32.xlu0 %v1556, 24
        %v2433 = vpop.permute.xlu0 %2432
        %2434 = vrot.lane.b32.xlu0 %v1557, 24
        %v2435 = vpop.permute.xlu0 %2434
        %2436 = vrot.lane.b32.xlu0 %v1558, 24
        %v2437 = vpop.permute.xlu0 %2436
        %2438 = vrot.lane.b32.xlu0 %v1559, 24
        %v2439 = vpop.permute.xlu0 %2438
        %2440 = vrot.lane.b32.xlu0 %v1560, 24
        %v2441 = vpop.permute.xlu0 %2440
        %2442 = vrot.lane.b32.xlu0 %v1561, 24
        %v2443 = vpop.permute.xlu0 %2442
        %2444 = vrot.lane.b32.xlu0 %v1562, 24
        %v2445 = vpop.permute.xlu0 %2444
        %2446 = vrot.lane.b32.xlu0 %v1563, 24
        %v2447 = vpop.permute.xlu0 %2446
        %2448 = vrot.lane.b32.xlu0 %v1564, 24
        %v2449 = vpop.permute.xlu0 %2448
        %2450 = vrot.lane.b32.xlu0 %v1565, 24
        %v2451 = vpop.permute.xlu0 %2450
        %2452 = vrot.lane.b32.xlu0 %v1566, 24
        %v2453 = vpop.permute.xlu0 %2452
        %2454 = vrot.lane.b32.xlu0 %v1567, 24
        %v2455 = vpop.permute.xlu0 %2454
        %2456 = vrot.lane.b32.xlu0 %v1568, 24
        %v2457 = vpop.permute.xlu0 %2456
        %2458 = vrot.lane.b32.xlu0 %v1569, 24
        %v2459 = vpop.permute.xlu0 %2458
        %2460 = vrot.lane.b32.xlu0 %v1570, 24
        %v2461 = vpop.permute.xlu0 %2460
        %2462 = vrot.lane.b32.xlu0 %v1571, 24
        %v2463 = vpop.permute.xlu0 %2462
        %2464 = vrot.lane.b32.xlu0 %v1572, 24
        %v2465 = vpop.permute.xlu0 %2464
        %2466 = vrot.lane.b32.xlu0 %v1573, 24
        %v2467 = vpop.permute.xlu0 %2466
        %v2468 = vor.u32 %v2226, %v1802
        %v2469 = vrot.slane %v2236, 1
        %v2470 = vsel %vm1575, %v2468, %v2469
        %v2471 = vor.u32 %v2233, %v2469
        %v2473 = vshll.u32 %v1573, 16
        %v2475 = vrot.slane %v2473, 1
        %v2476 = vsel %vm1575, %v2471, %v2475
        %v2477 = vshrl.u32 %v1573, 16
        %v2479 = vor.u32 %v2477, %v2475
        %v2481 = vshll.u32 %v1574, 16
        %v2483 = vrot.slane %v2481, 1
        %v2484 = vsel %vm1575, %v2479, %v2483
        %2485 = vrot.lane.b32.xlu0 %v1611, 28
        %v2486 = vpop.permute.xlu0 %2485
        %2487 = vrot.lane.b32.xlu0 %v1619, 28
        %v2488 = vpop.permute.xlu0 %2487
        %2489 = vrot.lane.b32.xlu0 %v1627, 28
        %v2490 = vpop.permute.xlu0 %2489
        %2491 = vrot.lane.b32.xlu0 %v1635, 28
        %v2492 = vpop.permute.xlu0 %2491
        %2493 = vrot.lane.b32.xlu0 %v1643, 28
        %v2494 = vpop.permute.xlu0 %2493
        %2495 = vrot.lane.b32.xlu0 %v1651, 28
        %v2496 = vpop.permute.xlu0 %2495
        %2497 = vrot.lane.b32.xlu0 %v1659, 28
        %v2498 = vpop.permute.xlu0 %2497
        %2499 = vrot.lane.b32.xlu0 %v1667, 28
        %v2500 = vpop.permute.xlu0 %2499
        %2501 = vrot.lane.b32.xlu0 %v1675, 28
        %v2502 = vpop.permute.xlu0 %2501
        %2503 = vrot.lane.b32.xlu0 %v1683, 28
        %v2504 = vpop.permute.xlu0 %2503
        %2505 = vrot.lane.b32.xlu0 %v1691, 28
        %v2506 = vpop.permute.xlu0 %2505
        %2507 = vrot.lane.b32.xlu0 %v1699, 28
        %v2508 = vpop.permute.xlu0 %2507
        %2509 = vrot.lane.b32.xlu0 %v1707, 28
        %v2510 = vpop.permute.xlu0 %2509
        %2511 = vrot.lane.b32.xlu0 %v1715, 28
        %v2512 = vpop.permute.xlu0 %2511
        %2513 = vrot.lane.b32.xlu0 %v1723, 28
        %v2514 = vpop.permute.xlu0 %2513
        %2515 = vrot.lane.b32.xlu0 %v1731, 28
        %v2516 = vpop.permute.xlu0 %2515
        %2517 = vrot.lane.b32.xlu0 %v1739, 28
        %v2518 = vpop.permute.xlu0 %2517
        %2519 = vrot.lane.b32.xlu0 %v1747, 28
        %v2520 = vpop.permute.xlu0 %2519
        %2521 = vrot.lane.b32.xlu0 %v1755, 28
        %v2522 = vpop.permute.xlu0 %2521
        %2523 = vrot.lane.b32.xlu0 %v1763, 28
        %v2524 = vpop.permute.xlu0 %2523
        %2525 = vrot.lane.b32.xlu0 %v1771, 28
        %v2526 = vpop.permute.xlu0 %2525
        %2527 = vrot.lane.b32.xlu0 %v1779, 28
        %v2528 = vpop.permute.xlu0 %2527
        %2529 = vrot.lane.b32.xlu0 %v1787, 28
        %v2530 = vpop.permute.xlu0 %2529
        %2531 = vrot.lane.b32.xlu0 %v1795, 28
        %v2532 = vpop.permute.xlu0 %2531
        %2533 = vrot.lane.b32.xlu0 %v1803, 28
        %v2534 = vpop.permute.xlu0 %2533
        %2535 = vrot.lane.b32.xlu0 %v2470, 28
        %v2536 = vpop.permute.xlu0 %2535
        %2537 = vrot.lane.b32.xlu0 %v2476, 28
        %v2538 = vpop.permute.xlu0 %2537
        %2539 = vrot.lane.b32.xlu0 %v2484, 28
        %v2540 = vpop.permute.xlu0 %2539
        %v2542 = vrot.slane %v1572, 1
        %v2543 = vsel %vm1889, %v1945, %v2542
        %v2544 = vrot.slane %v1573, 1
        %v2545 = vsel %vm1889, %v2542, %v2544
        %v2546 = vrot.slane %v1574, 1
        %v2547 = vsel %vm1889, %v2544, %v2546
        %2548 = vrot.lane.b32.xlu0 %v1898, 32
        %v2549 = vpop.permute.xlu0 %2548
        %2550 = vrot.lane.b32.xlu0 %v1900, 32
        %v2551 = vpop.permute.xlu0 %2550
        %2552 = vrot.lane.b32.xlu0 %v1902, 32
        %v2553 = vpop.permute.xlu0 %2552
        %2554 = vrot.lane.b32.xlu0 %v1904, 32
        %v2555 = vpop.permute.xlu0 %2554
        %2556 = vrot.lane.b32.xlu0 %v1906, 32
        %v2557 = vpop.permute.xlu0 %2556
        %2558 = vrot.lane.b32.xlu0 %v1908, 32
        %v2559 = vpop.permute.xlu0 %2558
        %2560 = vrot.lane.b32.xlu0 %v1910, 32
        %v2561 = vpop.permute.xlu0 %2560
        %2562 = vrot.lane.b32.xlu0 %v1912, 32
        %v2563 = vpop.permute.xlu0 %2562
        %2564 = vrot.lane.b32.xlu0 %v1914, 32
        %v2565 = vpop.permute.xlu0 %2564
        %2566 = vrot.lane.b32.xlu0 %v1916, 32
        %v2567 = vpop.permute.xlu0 %2566
        %2568 = vrot.lane.b32.xlu0 %v1918, 32
        %v2569 = vpop.permute.xlu0 %2568
        %2570 = vrot.lane.b32.xlu0 %v1920, 32
        %v2571 = vpop.permute.xlu0 %2570
        %2572 = vrot.lane.b32.xlu0 %v1922, 32
        %v2573 = vpop.permute.xlu0 %2572
        %2574 = vrot.lane.b32.xlu0 %v1924, 32
        %v2575 = vpop.permute.xlu0 %2574
        %2576 = vrot.lane.b32.xlu0 %v1926, 32
        %v2577 = vpop.permute.xlu0 %2576
        %2578 = vrot.lane.b32.xlu0 %v1928, 32
        %v2579 = vpop.permute.xlu0 %2578
        %2580 = vrot.lane.b32.xlu0 %v1930, 32
        %v2581 = vpop.permute.xlu0 %2580
        %2582 = vrot.lane.b32.xlu0 %v1932, 32
        %v2583 = vpop.permute.xlu0 %2582
        %2584 = vrot.lane.b32.xlu0 %v1934, 32
        %v2585 = vpop.permute.xlu0 %2584
        %2586 = vrot.lane.b32.xlu0 %v1936, 32
        %v2587 = vpop.permute.xlu0 %2586
        %2588 = vrot.lane.b32.xlu0 %v1938, 32
        %v2589 = vpop.permute.xlu0 %2588
        %2590 = vrot.lane.b32.xlu0 %v1940, 32
        %v2591 = vpop.permute.xlu0 %2590
        %2592 = vrot.lane.b32.xlu0 %v1942, 32
        %v2593 = vpop.permute.xlu0 %2592
        %2594 = vrot.lane.b32.xlu0 %v1944, 32
        %v2595 = vpop.permute.xlu0 %2594
        %2596 = vrot.lane.b32.xlu0 %v1946, 32
        %v2597 = vpop.permute.xlu0 %2596
        %2598 = vrot.lane.b32.xlu0 %v2543, 32
        %v2599 = vpop.permute.xlu0 %2598
        %2600 = vrot.lane.b32.xlu0 %v2545, 32
        %v2601 = vpop.permute.xlu0 %2600
        %2602 = vrot.lane.b32.xlu0 %v2547, 32
        %v2603 = vpop.permute.xlu0 %2602
        %v2605 = vsel %vm1353, %v1543, %v1805
        %v2607 = vsel %vm1353, %v1544, %v1807
        %v2609 = vsel %vm1353, %v1545, %v1809
        %v2611 = vsel %vm1353, %v1546, %v1811
        %v2613 = vsel %vm1353, %v1547, %v1813
        %v2615 = vsel %vm1353, %v1548, %v1815
        %v2617 = vsel %vm1353, %v1549, %v1817
        %v2619 = vsel %vm1353, %v1550, %v1819
        %v2621 = vsel %vm1353, %v1551, %v1821
        %v2623 = vsel %vm1353, %v1552, %v1823
        %v2625 = vsel %vm1353, %v1553, %v1825
        %v2627 = vsel %vm1353, %v1554, %v1827
        %v2629 = vsel %vm1353, %v1555, %v1829
        %v2631 = vsel %vm1353, %v1556, %v1831
        %v2633 = vsel %vm1353, %v1557, %v1833
        %v2635 = vsel %vm1353, %v1558, %v1835
        %v2637 = vsel %vm1353, %v1559, %v1837
        %v2639 = vsel %vm1353, %v1560, %v1839
        %v2641 = vsel %vm1353, %v1561, %v1841
        %v2643 = vsel %vm1353, %v1562, %v1843
        %v2645 = vsel %vm1353, %v1563, %v1845
        %v2647 = vsel %vm1353, %v1564, %v1847
        %v2649 = vsel %vm1353, %v1565, %v1849
        %v2651 = vsel %vm1353, %v1566, %v1851
        %v2653 = vsel %vm1353, %v1567, %v1853
        %v2655 = vsel %vm1353, %v1568, %v1855
        %v2657 = vsel %vm1353, %v1569, %v1857
        %v2659 = vsel %vm1353, %v1570, %v1859
        %vm2660 = vcmask 64512
        %v2662 = vsel %vm2660, %v2605, %v1948
        %v2664 = vsel %vm2660, %v2607, %v1950
        %v2666 = vsel %vm2660, %v2609, %v1952
        %v2668 = vsel %vm2660, %v2611, %v1954
        %v2670 = vsel %vm2660, %v2613, %v1956
        %v2672 = vsel %vm2660, %v2615, %v1958
        %v2674 = vsel %vm2660, %v2617, %v1960
        %v2676 = vsel %vm2660, %v2619, %v1962
        %v2678 = vsel %vm2660, %v2621, %v1964
        %v2680 = vsel %vm2660, %v2623, %v1966
        %v2682 = vsel %vm2660, %v2625, %v1968
        %v2684 = vsel %vm2660, %v2627, %v1970
        %v2686 = vsel %vm2660, %v2629, %v1972
        %v2688 = vsel %vm2660, %v2631, %v1974
        %v2690 = vsel %vm2660, %v2633, %v1976
        %v2692 = vsel %vm2660, %v2635, %v1978
        %v2694 = vsel %vm2660, %v2637, %v1980
        %v2696 = vsel %vm2660, %v2639, %v1982
        %v2698 = vsel %vm2660, %v2641, %v1984
        %v2700 = vsel %vm2660, %v2643, %v1986
        %v2702 = vsel %vm2660, %v2645, %v1988
        %v2704 = vsel %vm2660, %v2647, %v1990
        %v2706 = vsel %vm2660, %v2649, %v1992
        %v2708 = vsel %vm2660, %v2651, %v1994
        %v2710 = vsel %vm2660, %v2653, %v1996
        %v2712 = vsel %vm2660, %v2655, %v1998
        %v2714 = vsel %vm2660, %v2657, %v2000
        %v2716 = vsel %vm2660, %v2659, %v2002
        %vm2717 = vcmask 97280
        %v2719 = vsel %vm2717, %v2662, %v2063
        %v2721 = vsel %vm2717, %v2664, %v2065
        %v2723 = vsel %vm2717, %v2666, %v2067
        %v2725 = vsel %vm2717, %v2668, %v2069
        %v2727 = vsel %vm2717, %v2670, %v2071
        %v2729 = vsel %vm2717, %v2672, %v2073
        %v2731 = vsel %vm2717, %v2674, %v2075
        %v2733 = vsel %vm2717, %v2676, %v2077
        %v2735 = vsel %vm2717, %v2678, %v2079
        %v2737 = vsel %vm2717, %v2680, %v2081
        %v2739 = vsel %vm2717, %v2682, %v2083
        %v2741 = vsel %vm2717, %v2684, %v2085
        %v2743 = vsel %vm2717, %v2686, %v2087
        %v2745 = vsel %vm2717, %v2688, %v2089
        %v2747 = vsel %vm2717, %v2690, %v2091
        %v2749 = vsel %vm2717, %v2692, %v2093
        %v2751 = vsel %vm2717, %v2694, %v2095
        %v2753 = vsel %vm2717, %v2696, %v2097
        %v2755 = vsel %vm2717, %v2698, %v2099
        %v2757 = vsel %vm2717, %v2700, %v2101
        %v2759 = vsel %vm2717, %v2702, %v2103
        %v2761 = vsel %vm2717, %v2704, %v2105
        %v2763 = vsel %vm2717, %v2706, %v2107
        %v2765 = vsel %vm2717, %v2708, %v2109
        %v2767 = vsel %vm2717, %v2710, %v2111
        %v2769 = vsel %vm2717, %v2712, %v2113
        %v2771 = vsel %vm2717, %v2714, %v2115
        %v2773 = vsel %vm2717, %v2716, %v2117
        %vm2774 = vcmask 130048
        %v2776 = vsel %vm2774, %v2719, %v2242
        %v2778 = vsel %vm2774, %v2721, %v2244
        %v2780 = vsel %vm2774, %v2723, %v2246
        %v2782 = vsel %vm2774, %v2725, %v2248
        %v2784 = vsel %vm2774, %v2727, %v2250
        %v2786 = vsel %vm2774, %v2729, %v2252
        %v2788 = vsel %vm2774, %v2731, %v2254
        %v2790 = vsel %vm2774, %v2733, %v2256
        %v2792 = vsel %vm2774, %v2735, %v2258
        %v2794 = vsel %vm2774, %v2737, %v2260
        %v2796 = vsel %vm2774, %v2739, %v2262
        %v2798 = vsel %vm2774, %v2741, %v2264
        %v2800 = vsel %vm2774, %v2743, %v2266
        %v2802 = vsel %vm2774, %v2745, %v2268
        %v2804 = vsel %vm2774, %v2747, %v2270
        %v2806 = vsel %vm2774, %v2749, %v2272
        %v2808 = vsel %vm2774, %v2751, %v2274
        %v2810 = vsel %vm2774, %v2753, %v2276
        %v2812 = vsel %vm2774, %v2755, %v2278
        %v2814 = vsel %vm2774, %v2757, %v2280
        %v2816 = vsel %vm2774, %v2759, %v2282
        %v2818 = vsel %vm2774, %v2761, %v2284
        %v2820 = vsel %vm2774, %v2763, %v2286
        %v2822 = vsel %vm2774, %v2765, %v2288
        %v2824 = vsel %vm2774, %v2767, %v2290
        %v2826 = vsel %vm2774, %v2769, %v2292
        %v2828 = vsel %vm2774, %v2771, %v2294
        %v2830 = vsel %vm2774, %v2773, %v2296
        %vm2831 = vcmask 162816
        %v2833 = vsel %vm2831, %v2776, %v2356
        %v2835 = vsel %vm2831, %v2778, %v2358
        %v2837 = vsel %vm2831, %v2780, %v2360
        %v2839 = vsel %vm2831, %v2782, %v2362
        %v2841 = vsel %vm2831, %v2784, %v2364
        %v2843 = vsel %vm2831, %v2786, %v2366
        %v2845 = vsel %vm2831, %v2788, %v2368
        %v2847 = vsel %vm2831, %v2790, %v2370
        %v2849 = vsel %vm2831, %v2792, %v2372
        %v2851 = vsel %vm2831, %v2794, %v2374
        %v2853 = vsel %vm2831, %v2796, %v2376
        %v2855 = vsel %vm2831, %v2798, %v2378
        %v2857 = vsel %vm2831, %v2800, %v2380
        %v2859 = vsel %vm2831, %v2802, %v2382
        %v2861 = vsel %vm2831, %v2804, %v2384
        %v2863 = vsel %vm2831, %v2806, %v2386
        %v2865 = vsel %vm2831, %v2808, %v2388
        %v2867 = vsel %vm2831, %v2810, %v2390
        %v2869 = vsel %vm2831, %v2812, %v2392
        %v2871 = vsel %vm2831, %v2814, %v2394
        %v2873 = vsel %vm2831, %v2816, %v2396
        %v2875 = vsel %vm2831, %v2818, %v2398
        %v2877 = vsel %vm2831, %v2820, %v2400
        %v2879 = vsel %vm2831, %v2822, %v2402
        %v2881 = vsel %vm2831, %v2824, %v2404
        %v2883 = vsel %vm2831, %v2826, %v2406
        %v2885 = vsel %vm2831, %v2828, %v2408
        %v2887 = vsel %vm2831, %v2830, %v2410
        %vm2888 = vcmask 195584
        %v2890 = vsel %vm2888, %v2833, %v2413
        %v2892 = vsel %vm2888, %v2835, %v2415
        %v2894 = vsel %vm2888, %v2837, %v2417
        %v2896 = vsel %vm2888, %v2839, %v2419
        %v2898 = vsel %vm2888, %v2841, %v2421
        %v2900 = vsel %vm2888, %v2843, %v2423
        %v2902 = vsel %vm2888, %v2845, %v2425
        %v2904 = vsel %vm2888, %v2847, %v2427
        %v2906 = vsel %vm2888, %v2849, %v2429
        %v2908 = vsel %vm2888, %v2851, %v2431
        %v2910 = vsel %vm2888, %v2853, %v2433
        %v2912 = vsel %vm2888, %v2855, %v2435
        %v2914 = vsel %vm2888, %v2857, %v2437
        %v2916 = vsel %vm2888, %v2859, %v2439
        %v2918 = vsel %vm2888, %v2861, %v2441
        %v2920 = vsel %vm2888, %v2863, %v2443
        %v2922 = vsel %vm2888, %v2865, %v2445
        %v2924 = vsel %vm2888, %v2867, %v2447
        %v2926 = vsel %vm2888, %v2869, %v2449
        %v2928 = vsel %vm2888, %v2871, %v2451
        %v2930 = vsel %vm2888, %v2873, %v2453
        %v2932 = vsel %vm2888, %v2875, %v2455
        %v2934 = vsel %vm2888, %v2877, %v2457
        %v2936 = vsel %vm2888, %v2879, %v2459
        %v2938 = vsel %vm2888, %v2881, %v2461
        %v2940 = vsel %vm2888, %v2883, %v2463
        %v2942 = vsel %vm2888, %v2885, %v2465
        %v2944 = vsel %vm2888, %v2887, %v2467
        %vm2945 = vcmask 228352
        %v2947 = vsel %vm2945, %v2890, %v2486
        %v2949 = vsel %vm2945, %v2892, %v2488
        %v2951 = vsel %vm2945, %v2894, %v2490
        %v2953 = vsel %vm2945, %v2896, %v2492
        %v2955 = vsel %vm2945, %v2898, %v2494
        %v2957 = vsel %vm2945, %v2900, %v2496
        %v2959 = vsel %vm2945, %v2902, %v2498
        %v2961 = vsel %vm2945, %v2904, %v2500
        %v2963 = vsel %vm2945, %v2906, %v2502
        %v2965 = vsel %vm2945, %v2908, %v2504
        %v2967 = vsel %vm2945, %v2910, %v2506
        %v2969 = vsel %vm2945, %v2912, %v2508
        %v2971 = vsel %vm2945, %v2914, %v2510
        %v2973 = vsel %vm2945, %v2916, %v2512
        %v2975 = vsel %vm2945, %v2918, %v2514
        %v2977 = vsel %vm2945, %v2920, %v2516
        %v2979 = vsel %vm2945, %v2922, %v2518
        %v2981 = vsel %vm2945, %v2924, %v2520
        %v2983 = vsel %vm2945, %v2926, %v2522
        %v2985 = vsel %vm2945, %v2928, %v2524
        %v2987 = vsel %vm2945, %v2930, %v2526
        %v2989 = vsel %vm2945, %v2932, %v2528
        %v2991 = vsel %vm2945, %v2934, %v2530
        %v2993 = vsel %vm2945, %v2936, %v2532
        %v2995 = vsel %vm2945, %v2938, %v2534
        %v2997 = vsel %vm2945, %v2940, %v2536
        %v2999 = vsel %vm2945, %v2942, %v2538
        %v3001 = vsel %vm2945, %v2944, %v2540
        %vm3002 = vcmask 261120
        %v3004 = vsel %vm3002, %v2947, %v2549
        %v3006 = vsel %vm3002, %v2949, %v2551
        %v3008 = vsel %vm3002, %v2951, %v2553
        %v3010 = vsel %vm3002, %v2953, %v2555
        %v3012 = vsel %vm3002, %v2955, %v2557
        %v3014 = vsel %vm3002, %v2957, %v2559
        %v3016 = vsel %vm3002, %v2959, %v2561
        %v3018 = vsel %vm3002, %v2961, %v2563
        %v3020 = vsel %vm3002, %v2963, %v2565
        %v3022 = vsel %vm3002, %v2965, %v2567
        %v3024 = vsel %vm3002, %v2967, %v2569
        %v3026 = vsel %vm3002, %v2969, %v2571
        %v3028 = vsel %vm3002, %v2971, %v2573
        %v3030 = vsel %vm3002, %v2973, %v2575
        %v3032 = vsel %vm3002, %v2975, %v2577
        %v3034 = vsel %vm3002, %v2977, %v2579
        %v3036 = vsel %vm3002, %v2979, %v2581
        %v3038 = vsel %vm3002, %v2981, %v2583
        %v3040 = vsel %vm3002, %v2983, %v2585
        %v3042 = vsel %vm3002, %v2985, %v2587
        %v3044 = vsel %vm3002, %v2987, %v2589
        %v3046 = vsel %vm3002, %v2989, %v2591
        %v3048 = vsel %vm3002, %v2991, %v2593
        %v3050 = vsel %vm3002, %v2993, %v2595
        %v3052 = vsel %vm3002, %v2995, %v2597
        %v3054 = vsel %vm3002, %v2997, %v2599
        %v3056 = vsel %vm3002, %v2999, %v2601
        %v3058 = vsel %vm3002, %v3001, %v2603
        %vm3059 = vcmask 1046528
        %v3060 = vrot.slane %v594, 1
        %v3061 = vrot.slane %v595, 1
        %v3062 = vsel %vm3059, %v3060, %v3061
        %v3063 = vrot.slane %v596, 1
        %v3064 = vsel %vm3059, %v3061, %v3063
        %v3065 = vrot.slane %v597, 1
        %v3066 = vsel %vm3059, %v3063, %v3065
        %v3067 = vrot.slane %v598, 1
        %v3068 = vsel %vm3059, %v3065, %v3067
        %v3069 = vrot.slane %v599, 1
        %v3070 = vsel %vm3059, %v3067, %v3069
        %v3071 = vrot.slane %v600, 1
        %v3072 = vsel %vm3059, %v3069, %v3071
        %v3073 = vrot.slane %v601, 1
        %v3074 = vsel %vm3059, %v3071, %v3073
        %v3075 = vrot.slane %v602, 1
        %v3076 = vsel %vm3059, %v3073, %v3075
        %v3077 = vrot.slane %v603, 1
        %v3078 = vsel %vm3059, %v3075, %v3077
        %v3079 = vrot.slane %v604, 1
        %v3080 = vsel %vm3059, %v3077, %v3079
        %v3081 = vrot.slane %v605, 1
        %v3082 = vsel %vm3059, %v3079, %v3081
        %v3083 = vrot.slane %v606, 1
        %v3084 = vsel %vm3059, %v3081, %v3083
        %v3085 = vrot.slane %v607, 1
        %v3086 = vsel %vm3059, %v3083, %v3085
        %v3087 = vrot.slane %v608, 1
        %v3088 = vsel %vm3059, %v3085, %v3087
        %v3089 = vrot.slane %v609, 1
        %v3090 = vsel %vm3059, %v3087, %v3089
        %v3091 = vrot.slane %v610, 1
        %v3092 = vsel %vm3059, %v3089, %v3091
        %v3093 = vrot.slane %v611, 1
        %v3094 = vsel %vm3059, %v3091, %v3093
        %v3095 = vrot.slane %v612, 1
        %v3096 = vsel %vm3059, %v3093, %v3095
        %v3097 = vrot.slane %v613, 1
        %v3098 = vsel %vm3059, %v3095, %v3097
        %v3099 = vrot.slane %v614, 1
        %v3100 = vsel %vm3059, %v3097, %v3099
        %v3101 = vrot.slane %v615, 1
        %v3102 = vsel %vm3059, %v3099, %v3101
        %v3103 = vrot.slane %v616, 1
        %v3104 = vsel %vm3059, %v3101, %v3103
        %v3105 = vrot.slane %v617, 1
        %v3106 = vsel %vm3059, %v3103, %v3105
        %v3107 = vrot.slane %v618, 1
        %v3108 = vsel %vm3059, %v3105, %v3107
        %v3109 = vrot.slane %v619, 1
        %v3110 = vsel %vm3059, %v3107, %v3109
        %v3111 = vrot.slane %v620, 1
        %v3112 = vsel %vm3059, %v3109, %v3111
        %v3113 = vrot.slane %v621, 1
        %v3114 = vsel %vm3059, %v3111, %v3113
        %v3115 = vrot.slane %v622, 1
        %v3116 = vsel %vm3059, %v3113, %v3115
        %v3117 = vrot.slane %v623, 1
        %v3118 = vsel %vm3059, %v3115, %v3117
        %v3119 = vrot.slane %v624, 1
        %v3120 = vsel %vm3059, %v3117, %v3119
        %v3121 = vrot.slane %v625, 1
        %v3122 = vsel %vm3059, %v3119, %v3121
        %v3123 = vrot.slane %v626, 1
        %v3124 = vsel %vm3059, %v3121, %v3123
        %v3125 = vrot.slane %v627, 1
        %v3126 = vsel %vm3059, %v3123, %v3125
        %v3127 = vrot.slane %v628, 1
        %v3128 = vsel %vm3059, %v3125, %v3127
        %v3129 = vrot.slane %v629, 1
        %v3130 = vsel %vm3059, %v3127, %v3129
        %v3131 = vrot.slane %v630, 1
        %v3132 = vsel %vm3059, %v3129, %v3131
        %v3133 = vrot.slane %v631, 1
        %v3134 = vsel %vm3059, %v3131, %v3133
        %v3135 = vrot.slane %v632, 1
        %v3136 = vsel %vm3059, %v3133, %v3135
        %v3137 = vrot.slane %v633, 1
        %v3138 = vsel %vm3059, %v3135, %v3137
        %v3139 = vrot.slane %v634, 1
        %v3140 = vsel %vm3059, %v3137, %v3139
        %v3141 = vrot.slane %v635, 1
        %v3142 = vsel %vm3059, %v3139, %v3141
        %v3143 = vrot.slane %v636, 1
        %v3144 = vsel %vm3059, %v3141, %v3143
        %v3145 = vrot.slane %v637, 1
        %v3146 = vsel %vm3059, %v3143, %v3145
        %v3147 = vrot.slane %v638, 1
        %v3148 = vsel %vm3059, %v3145, %v3147
        %v3149 = vrot.slane %v639, 1
        %v3150 = vsel %vm3059, %v3147, %v3149
        %v3151 = vrot.slane %v640, 1
        %v3152 = vsel %vm3059, %v3149, %v3151
        %v3153 = vrot.slane %v641, 1
        %v3154 = vsel %vm3059, %v3151, %v3153
        %v3155 = vrot.slane %v642, 1
        %v3156 = vsel %vm3059, %v3153, %v3155
        %v3157 = vrot.slane %v643, 1
        %v3158 = vsel %vm3059, %v3155, %v3157
        %v3159 = vrot.slane %v644, 1
        %v3160 = vsel %vm3059, %v3157, %v3159
        %v3161 = vrot.slane %v645, 1
        %v3162 = vsel %vm3059, %v3159, %v3161
        %v3163 = vrot.slane %v646, 1
        %v3164 = vsel %vm3059, %v3161, %v3163
        %v3165 = vrot.slane %v647, 1
        %v3166 = vsel %vm3059, %v3163, %v3165
        %v3167 = vrot.slane %v648, 1
        %v3168 = vsel %vm3059, %v3165, %v3167
        %v3169 = vrot.slane %v649, 1
        %v3170 = vsel %vm3059, %v3167, %v3169
        %v3171 = vrot.slane %v650, 1
        %v3172 = vsel %vm3059, %v3169, %v3171
        %3173 = vrot.lane.b32.xlu0 %v3062, 1
        %v3174 = vpop.permute.xlu0 %3173
        %3175 = vrot.lane.b32.xlu0 %v3064, 1
        %v3176 = vpop.permute.xlu0 %3175
        %3177 = vrot.lane.b32.xlu0 %v3066, 1
        %v3178 = vpop.permute.xlu0 %3177
        %3179 = vrot.lane.b32.xlu0 %v3068, 1
        %v3180 = vpop.permute.xlu0 %3179
        %3181 = vrot.lane.b32.xlu0 %v3070, 1
        %v3182 = vpop.permute.xlu0 %3181
        %3183 = vrot.lane.b32.xlu0 %v3072, 1
        %v3184 = vpop.permute.xlu0 %3183
        %3185 = vrot.lane.b32.xlu0 %v3074, 1
        %v3186 = vpop.permute.xlu0 %3185
        %3187 = vrot.lane.b32.xlu0 %v3076, 1
        %v3188 = vpop.permute.xlu0 %3187
        %3189 = vrot.lane.b32.xlu0 %v3078, 1
        %v3190 = vpop.permute.xlu0 %3189
        %3191 = vrot.lane.b32.xlu0 %v3080, 1
        %v3192 = vpop.permute.xlu0 %3191
        %3193 = vrot.lane.b32.xlu0 %v3082, 1
        %v3194 = vpop.permute.xlu0 %3193
        %3195 = vrot.lane.b32.xlu0 %v3084, 1
        %v3196 = vpop.permute.xlu0 %3195
        %3197 = vrot.lane.b32.xlu0 %v3086, 1
        %v3198 = vpop.permute.xlu0 %3197
        %3199 = vrot.lane.b32.xlu0 %v3088, 1
        %v3200 = vpop.permute.xlu0 %3199
        %3201 = vrot.lane.b32.xlu0 %v3090, 1
        %v3202 = vpop.permute.xlu0 %3201
        %3203 = vrot.lane.b32.xlu0 %v3092, 1
        %v3204 = vpop.permute.xlu0 %3203
        %3205 = vrot.lane.b32.xlu0 %v3094, 1
        %v3206 = vpop.permute.xlu0 %3205
        %3207 = vrot.lane.b32.xlu0 %v3096, 1
        %v3208 = vpop.permute.xlu0 %3207
        %3209 = vrot.lane.b32.xlu0 %v3098, 1
        %v3210 = vpop.permute.xlu0 %3209
        %3211 = vrot.lane.b32.xlu0 %v3100, 1
        %v3212 = vpop.permute.xlu0 %3211
        %3213 = vrot.lane.b32.xlu0 %v3102, 1
        %v3214 = vpop.permute.xlu0 %3213
        %3215 = vrot.lane.b32.xlu0 %v3104, 1
        %v3216 = vpop.permute.xlu0 %3215
        %3217 = vrot.lane.b32.xlu0 %v3106, 1
        %v3218 = vpop.permute.xlu0 %3217
        %3219 = vrot.lane.b32.xlu0 %v3108, 1
        %v3220 = vpop.permute.xlu0 %3219
        %3221 = vrot.lane.b32.xlu0 %v3110, 1
        %v3222 = vpop.permute.xlu0 %3221
        %3223 = vrot.lane.b32.xlu0 %v3112, 1
        %v3224 = vpop.permute.xlu0 %3223
        %3225 = vrot.lane.b32.xlu0 %v3114, 1
        %v3226 = vpop.permute.xlu0 %3225
        %3227 = vrot.lane.b32.xlu0 %v3116, 1
        %v3228 = vpop.permute.xlu0 %3227
        %3229 = vrot.lane.b32.xlu0 %v3118, 1
        %v3230 = vpop.permute.xlu0 %3229
        %3231 = vrot.lane.b32.xlu0 %v3120, 1
        %v3232 = vpop.permute.xlu0 %3231
        %3233 = vrot.lane.b32.xlu0 %v3122, 1
        %v3234 = vpop.permute.xlu0 %3233
        %3235 = vrot.lane.b32.xlu0 %v3124, 1
        %v3236 = vpop.permute.xlu0 %3235
        %3237 = vrot.lane.b32.xlu0 %v3126, 1
        %v3238 = vpop.permute.xlu0 %3237
        %3239 = vrot.lane.b32.xlu0 %v3128, 1
        %v3240 = vpop.permute.xlu0 %3239
        %3241 = vrot.lane.b32.xlu0 %v3130, 1
        %v3242 = vpop.permute.xlu0 %3241
        %3243 = vrot.lane.b32.xlu0 %v3132, 1
        %v3244 = vpop.permute.xlu0 %3243
        %3245 = vrot.lane.b32.xlu0 %v3134, 1
        %v3246 = vpop.permute.xlu0 %3245
        %3247 = vrot.lane.b32.xlu0 %v3136, 1
        %v3248 = vpop.permute.xlu0 %3247
        %3249 = vrot.lane.b32.xlu0 %v3138, 1
        %v3250 = vpop.permute.xlu0 %3249
        %3251 = vrot.lane.b32.xlu0 %v3140, 1
        %v3252 = vpop.permute.xlu0 %3251
        %3253 = vrot.lane.b32.xlu0 %v3142, 1
        %v3254 = vpop.permute.xlu0 %3253
        %3255 = vrot.lane.b32.xlu0 %v3144, 1
        %v3256 = vpop.permute.xlu0 %3255
        %3257 = vrot.lane.b32.xlu0 %v3146, 1
        %v3258 = vpop.permute.xlu0 %3257
        %3259 = vrot.lane.b32.xlu0 %v3148, 1
        %v3260 = vpop.permute.xlu0 %3259
        %3261 = vrot.lane.b32.xlu0 %v3150, 1
        %v3262 = vpop.permute.xlu0 %3261
        %3263 = vrot.lane.b32.xlu0 %v3152, 1
        %v3264 = vpop.permute.xlu0 %3263
        %3265 = vrot.lane.b32.xlu0 %v3154, 1
        %v3266 = vpop.permute.xlu0 %3265
        %3267 = vrot.lane.b32.xlu0 %v3156, 1
        %v3268 = vpop.permute.xlu0 %3267
        %3269 = vrot.lane.b32.xlu0 %v3158, 1
        %v3270 = vpop.permute.xlu0 %3269
        %3271 = vrot.lane.b32.xlu0 %v3160, 1
        %v3272 = vpop.permute.xlu0 %3271
        %3273 = vrot.lane.b32.xlu0 %v3162, 1
        %v3274 = vpop.permute.xlu0 %3273
        %3275 = vrot.lane.b32.xlu0 %v3164, 1
        %v3276 = vpop.permute.xlu0 %3275
        %3277 = vrot.lane.b32.xlu0 %v3166, 1
        %v3278 = vpop.permute.xlu0 %3277
        %3279 = vrot.lane.b32.xlu0 %v3168, 1
        %v3280 = vpop.permute.xlu0 %3279
        %3281 = vrot.lane.b32.xlu0 %v3170, 1
        %v3282 = vpop.permute.xlu0 %3281
        %3283 = vrot.lane.b32.xlu0 %v3172, 1
        %v3284 = vpop.permute.xlu0 %3283
        %vm3341 = vcmask 1045504
        %v3342 = vrot.slane %v594, 2
        %v3343 = vrot.slane %v595, 2
        %v3344 = vsel %vm3341, %v3342, %v3343
        %v3345 = vrot.slane %v596, 2
        %v3346 = vsel %vm3341, %v3343, %v3345
        %v3347 = vrot.slane %v597, 2
        %v3348 = vsel %vm3341, %v3345, %v3347
        %v3349 = vrot.slane %v598, 2
        %v3350 = vsel %vm3341, %v3347, %v3349
        %v3351 = vrot.slane %v599, 2
        %v3352 = vsel %vm3341, %v3349, %v3351
        %v3353 = vrot.slane %v600, 2
        %v3354 = vsel %vm3341, %v3351, %v3353
        %v3355 = vrot.slane %v601, 2
        %v3356 = vsel %vm3341, %v3353, %v3355
        %v3357 = vrot.slane %v602, 2
        %v3358 = vsel %vm3341, %v3355, %v3357
        %v3359 = vrot.slane %v603, 2
        %v3360 = vsel %vm3341, %v3357, %v3359
        %v3361 = vrot.slane %v604, 2
        %v3362 = vsel %vm3341, %v3359, %v3361
        %v3363 = vrot.slane %v605, 2
        %v3364 = vsel %vm3341, %v3361, %v3363
        %v3365 = vrot.slane %v606, 2
        %v3366 = vsel %vm3341, %v3363, %v3365
        %v3367 = vrot.slane %v607, 2
        %v3368 = vsel %vm3341, %v3365, %v3367
        %v3369 = vrot.slane %v608, 2
        %v3370 = vsel %vm3341, %v3367, %v3369
        %v3371 = vrot.slane %v609, 2
        %v3372 = vsel %vm3341, %v3369, %v3371
        %v3373 = vrot.slane %v610, 2
        %v3374 = vsel %vm3341, %v3371, %v3373
        %v3375 = vrot.slane %v611, 2
        %v3376 = vsel %vm3341, %v3373, %v3375
        %v3377 = vrot.slane %v612, 2
        %v3378 = vsel %vm3341, %v3375, %v3377
        %v3379 = vrot.slane %v613, 2
        %v3380 = vsel %vm3341, %v3377, %v3379
        %v3381 = vrot.slane %v614, 2
        %v3382 = vsel %vm3341, %v3379, %v3381
        %v3383 = vrot.slane %v615, 2
        %v3384 = vsel %vm3341, %v3381, %v3383
        %v3385 = vrot.slane %v616, 2
        %v3386 = vsel %vm3341, %v3383, %v3385
        %v3387 = vrot.slane %v617, 2
        %v3388 = vsel %vm3341, %v3385, %v3387
        %v3389 = vrot.slane %v618, 2
        %v3390 = vsel %vm3341, %v3387, %v3389
        %v3391 = vrot.slane %v619, 2
        %v3392 = vsel %vm3341, %v3389, %v3391
        %v3393 = vrot.slane %v620, 2
        %v3394 = vsel %vm3341, %v3391, %v3393
        %v3395 = vrot.slane %v621, 2
        %v3396 = vsel %vm3341, %v3393, %v3395
        %v3397 = vrot.slane %v622, 2
        %v3398 = vsel %vm3341, %v3395, %v3397
        %v3399 = vrot.slane %v623, 2
        %v3400 = vsel %vm3341, %v3397, %v3399
        %v3401 = vrot.slane %v624, 2
        %v3402 = vsel %vm3341, %v3399, %v3401
        %v3403 = vrot.slane %v625, 2
        %v3404 = vsel %vm3341, %v3401, %v3403
        %v3405 = vrot.slane %v626, 2
        %v3406 = vsel %vm3341, %v3403, %v3405
        %v3407 = vrot.slane %v627, 2
        %v3408 = vsel %vm3341, %v3405, %v3407
        %v3409 = vrot.slane %v628, 2
        %v3410 = vsel %vm3341, %v3407, %v3409
        %v3411 = vrot.slane %v629, 2
        %v3412 = vsel %vm3341, %v3409, %v3411
        %v3413 = vrot.slane %v630, 2
        %v3414 = vsel %vm3341, %v3411, %v3413
        %v3415 = vrot.slane %v631, 2
        %v3416 = vsel %vm3341, %v3413, %v3415
        %v3417 = vrot.slane %v632, 2
        %v3418 = vsel %vm3341, %v3415, %v3417
        %v3419 = vrot.slane %v633, 2
        %v3420 = vsel %vm3341, %v3417, %v3419
        %v3421 = vrot.slane %v634, 2
        %v3422 = vsel %vm3341, %v3419, %v3421
        %v3423 = vrot.slane %v635, 2
        %v3424 = vsel %vm3341, %v3421, %v3423
        %v3425 = vrot.slane %v636, 2
        %v3426 = vsel %vm3341, %v3423, %v3425
        %v3427 = vrot.slane %v637, 2
        %v3428 = vsel %vm3341, %v3425, %v3427
        %v3429 = vrot.slane %v638, 2
        %v3430 = vsel %vm3341, %v3427, %v3429
        %v3431 = vrot.slane %v639, 2
        %v3432 = vsel %vm3341, %v3429, %v3431
        %v3433 = vrot.slane %v640, 2
        %v3434 = vsel %vm3341, %v3431, %v3433
        %v3435 = vrot.slane %v641, 2
        %v3436 = vsel %vm3341, %v3433, %v3435
        %v3437 = vrot.slane %v642, 2
        %v3438 = vsel %vm3341, %v3435, %v3437
        %v3439 = vrot.slane %v643, 2
        %v3440 = vsel %vm3341, %v3437, %v3439
        %v3441 = vrot.slane %v644, 2
        %v3442 = vsel %vm3341, %v3439, %v3441
        %v3443 = vrot.slane %v645, 2
        %v3444 = vsel %vm3341, %v3441, %v3443
        %v3445 = vrot.slane %v646, 2
        %v3446 = vsel %vm3341, %v3443, %v3445
        %v3447 = vrot.slane %v647, 2
        %v3448 = vsel %vm3341, %v3445, %v3447
        %v3449 = vrot.slane %v648, 2
        %v3450 = vsel %vm3341, %v3447, %v3449
        %v3451 = vrot.slane %v649, 2
        %v3452 = vsel %vm3341, %v3449, %v3451
        %v3453 = vrot.slane %v650, 2
        %v3454 = vsel %vm3341, %v3451, %v3453
        %3455 = vrot.lane.b32.xlu0 %v3344, 2
        %v3456 = vpop.permute.xlu0 %3455
        %3457 = vrot.lane.b32.xlu0 %v3346, 2
        %v3458 = vpop.permute.xlu0 %3457
        %3459 = vrot.lane.b32.xlu0 %v3348, 2
        %v3460 = vpop.permute.xlu0 %3459
        %3461 = vrot.lane.b32.xlu0 %v3350, 2
        %v3462 = vpop.permute.xlu0 %3461
        %3463 = vrot.lane.b32.xlu0 %v3352, 2
        %v3464 = vpop.permute.xlu0 %3463
        %3465 = vrot.lane.b32.xlu0 %v3354, 2
        %v3466 = vpop.permute.xlu0 %3465
        %3467 = vrot.lane.b32.xlu0 %v3356, 2
        %v3468 = vpop.permute.xlu0 %3467
        %3469 = vrot.lane.b32.xlu0 %v3358, 2
        %v3470 = vpop.permute.xlu0 %3469
        %3471 = vrot.lane.b32.xlu0 %v3360, 2
        %v3472 = vpop.permute.xlu0 %3471
        %3473 = vrot.lane.b32.xlu0 %v3362, 2
        %v3474 = vpop.permute.xlu0 %3473
        %3475 = vrot.lane.b32.xlu0 %v3364, 2
        %v3476 = vpop.permute.xlu0 %3475
        %3477 = vrot.lane.b32.xlu0 %v3366, 2
        %v3478 = vpop.permute.xlu0 %3477
        %3479 = vrot.lane.b32.xlu0 %v3368, 2
        %v3480 = vpop.permute.xlu0 %3479
        %3481 = vrot.lane.b32.xlu0 %v3370, 2
        %v3482 = vpop.permute.xlu0 %3481
        %3483 = vrot.lane.b32.xlu0 %v3372, 2
        %v3484 = vpop.permute.xlu0 %3483
        %3485 = vrot.lane.b32.xlu0 %v3374, 2
        %v3486 = vpop.permute.xlu0 %3485
        %3487 = vrot.lane.b32.xlu0 %v3376, 2
        %v3488 = vpop.permute.xlu0 %3487
        %3489 = vrot.lane.b32.xlu0 %v3378, 2
        %v3490 = vpop.permute.xlu0 %3489
        %3491 = vrot.lane.b32.xlu0 %v3380, 2
        %v3492 = vpop.permute.xlu0 %3491
        %3493 = vrot.lane.b32.xlu0 %v3382, 2
        %v3494 = vpop.permute.xlu0 %3493
        %3495 = vrot.lane.b32.xlu0 %v3384, 2
        %v3496 = vpop.permute.xlu0 %3495
        %3497 = vrot.lane.b32.xlu0 %v3386, 2
        %v3498 = vpop.permute.xlu0 %3497
        %3499 = vrot.lane.b32.xlu0 %v3388, 2
        %v3500 = vpop.permute.xlu0 %3499
        %3501 = vrot.lane.b32.xlu0 %v3390, 2
        %v3502 = vpop.permute.xlu0 %3501
        %3503 = vrot.lane.b32.xlu0 %v3392, 2
        %v3504 = vpop.permute.xlu0 %3503
        %3505 = vrot.lane.b32.xlu0 %v3394, 2
        %v3506 = vpop.permute.xlu0 %3505
        %3507 = vrot.lane.b32.xlu0 %v3396, 2
        %v3508 = vpop.permute.xlu0 %3507
        %3509 = vrot.lane.b32.xlu0 %v3398, 2
        %v3510 = vpop.permute.xlu0 %3509
        %3511 = vrot.lane.b32.xlu0 %v3400, 2
        %v3512 = vpop.permute.xlu0 %3511
        %3513 = vrot.lane.b32.xlu0 %v3402, 2
        %v3514 = vpop.permute.xlu0 %3513
        %3515 = vrot.lane.b32.xlu0 %v3404, 2
        %v3516 = vpop.permute.xlu0 %3515
        %3517 = vrot.lane.b32.xlu0 %v3406, 2
        %v3518 = vpop.permute.xlu0 %3517
        %3519 = vrot.lane.b32.xlu0 %v3408, 2
        %v3520 = vpop.permute.xlu0 %3519
        %3521 = vrot.lane.b32.xlu0 %v3410, 2
        %v3522 = vpop.permute.xlu0 %3521
        %3523 = vrot.lane.b32.xlu0 %v3412, 2
        %v3524 = vpop.permute.xlu0 %3523
        %3525 = vrot.lane.b32.xlu0 %v3414, 2
        %v3526 = vpop.permute.xlu0 %3525
        %3527 = vrot.lane.b32.xlu0 %v3416, 2
        %v3528 = vpop.permute.xlu0 %3527
        %3529 = vrot.lane.b32.xlu0 %v3418, 2
        %v3530 = vpop.permute.xlu0 %3529
        %3531 = vrot.lane.b32.xlu0 %v3420, 2
        %v3532 = vpop.permute.xlu0 %3531
        %3533 = vrot.lane.b32.xlu0 %v3422, 2
        %v3534 = vpop.permute.xlu0 %3533
        %3535 = vrot.lane.b32.xlu0 %v3424, 2
        %v3536 = vpop.permute.xlu0 %3535
        %3537 = vrot.lane.b32.xlu0 %v3426, 2
        %v3538 = vpop.permute.xlu0 %3537
        %3539 = vrot.lane.b32.xlu0 %v3428, 2
        %v3540 = vpop.permute.xlu0 %3539
        %3541 = vrot.lane.b32.xlu0 %v3430, 2
        %v3542 = vpop.permute.xlu0 %3541
        %3543 = vrot.lane.b32.xlu0 %v3432, 2
        %v3544 = vpop.permute.xlu0 %3543
        %3545 = vrot.lane.b32.xlu0 %v3434, 2
        %v3546 = vpop.permute.xlu0 %3545
        %3547 = vrot.lane.b32.xlu0 %v3436, 2
        %v3548 = vpop.permute.xlu0 %3547
        %3549 = vrot.lane.b32.xlu0 %v3438, 2
        %v3550 = vpop.permute.xlu0 %3549
        %3551 = vrot.lane.b32.xlu0 %v3440, 2
        %v3552 = vpop.permute.xlu0 %3551
        %3553 = vrot.lane.b32.xlu0 %v3442, 2
        %v3554 = vpop.permute.xlu0 %3553
        %3555 = vrot.lane.b32.xlu0 %v3444, 2
        %v3556 = vpop.permute.xlu0 %3555
        %3557 = vrot.lane.b32.xlu0 %v3446, 2
        %v3558 = vpop.permute.xlu0 %3557
        %3559 = vrot.lane.b32.xlu0 %v3448, 2
        %v3560 = vpop.permute.xlu0 %3559
        %3561 = vrot.lane.b32.xlu0 %v3450, 2
        %v3562 = vpop.permute.xlu0 %3561
        %3563 = vrot.lane.b32.xlu0 %v3452, 2
        %v3564 = vpop.permute.xlu0 %3563
        %3565 = vrot.lane.b32.xlu0 %v3454, 2
        %v3566 = vpop.permute.xlu0 %3565
        %3623 = vrot.lane.b32.xlu0 %v597, 3
        %v3624 = vpop.permute.xlu0 %3623
        %3625 = vrot.lane.b32.xlu0 %v598, 3
        %v3626 = vpop.permute.xlu0 %3625
        %3627 = vrot.lane.b32.xlu0 %v599, 3
        %v3628 = vpop.permute.xlu0 %3627
        %3629 = vrot.lane.b32.xlu0 %v600, 3
        %v3630 = vpop.permute.xlu0 %3629
        %3631 = vrot.lane.b32.xlu0 %v601, 3
        %v3632 = vpop.permute.xlu0 %3631
        %3633 = vrot.lane.b32.xlu0 %v602, 3
        %v3634 = vpop.permute.xlu0 %3633
        %3635 = vrot.lane.b32.xlu0 %v603, 3
        %v3636 = vpop.permute.xlu0 %3635
        %3637 = vrot.lane.b32.xlu0 %v604, 3
        %v3638 = vpop.permute.xlu0 %3637
        %3639 = vrot.lane.b32.xlu0 %v605, 3
        %v3640 = vpop.permute.xlu0 %3639
        %3641 = vrot.lane.b32.xlu0 %v606, 3
        %v3642 = vpop.permute.xlu0 %3641
        %3643 = vrot.lane.b32.xlu0 %v607, 3
        %v3644 = vpop.permute.xlu0 %3643
        %3645 = vrot.lane.b32.xlu0 %v608, 3
        %v3646 = vpop.permute.xlu0 %3645
        %3647 = vrot.lane.b32.xlu0 %v609, 3
        %v3648 = vpop.permute.xlu0 %3647
        %3649 = vrot.lane.b32.xlu0 %v610, 3
        %v3650 = vpop.permute.xlu0 %3649
        %3651 = vrot.lane.b32.xlu0 %v611, 3
        %v3652 = vpop.permute.xlu0 %3651
        %3653 = vrot.lane.b32.xlu0 %v612, 3
        %v3654 = vpop.permute.xlu0 %3653
        %3655 = vrot.lane.b32.xlu0 %v613, 3
        %v3656 = vpop.permute.xlu0 %3655
        %3657 = vrot.lane.b32.xlu0 %v614, 3
        %v3658 = vpop.permute.xlu0 %3657
        %3659 = vrot.lane.b32.xlu0 %v615, 3
        %v3660 = vpop.permute.xlu0 %3659
        %3661 = vrot.lane.b32.xlu0 %v616, 3
        %v3662 = vpop.permute.xlu0 %3661
        %3663 = vrot.lane.b32.xlu0 %v617, 3
        %v3664 = vpop.permute.xlu0 %3663
        %3665 = vrot.lane.b32.xlu0 %v618, 3
        %v3666 = vpop.permute.xlu0 %3665
        %3667 = vrot.lane.b32.xlu0 %v619, 3
        %v3668 = vpop.permute.xlu0 %3667
        %3669 = vrot.lane.b32.xlu0 %v620, 3
        %v3670 = vpop.permute.xlu0 %3669
        %3671 = vrot.lane.b32.xlu0 %v621, 3
        %v3672 = vpop.permute.xlu0 %3671
        %3673 = vrot.lane.b32.xlu0 %v622, 3
        %v3674 = vpop.permute.xlu0 %3673
        %3675 = vrot.lane.b32.xlu0 %v623, 3
        %v3676 = vpop.permute.xlu0 %3675
        %3677 = vrot.lane.b32.xlu0 %v624, 3
        %v3678 = vpop.permute.xlu0 %3677
        %3679 = vrot.lane.b32.xlu0 %v625, 3
        %v3680 = vpop.permute.xlu0 %3679
        %3681 = vrot.lane.b32.xlu0 %v626, 3
        %v3682 = vpop.permute.xlu0 %3681
        %3683 = vrot.lane.b32.xlu0 %v627, 3
        %v3684 = vpop.permute.xlu0 %3683
        %3685 = vrot.lane.b32.xlu0 %v628, 3
        %v3686 = vpop.permute.xlu0 %3685
        %3687 = vrot.lane.b32.xlu0 %v629, 3
        %v3688 = vpop.permute.xlu0 %3687
        %3689 = vrot.lane.b32.xlu0 %v630, 3
        %v3690 = vpop.permute.xlu0 %3689
        %3691 = vrot.lane.b32.xlu0 %v631, 3
        %v3692 = vpop.permute.xlu0 %3691
        %3693 = vrot.lane.b32.xlu0 %v632, 3
        %v3694 = vpop.permute.xlu0 %3693
        %3695 = vrot.lane.b32.xlu0 %v633, 3
        %v3696 = vpop.permute.xlu0 %3695
        %3697 = vrot.lane.b32.xlu0 %v634, 3
        %v3698 = vpop.permute.xlu0 %3697
        %3699 = vrot.lane.b32.xlu0 %v635, 3
        %v3700 = vpop.permute.xlu0 %3699
        %3701 = vrot.lane.b32.xlu0 %v636, 3
        %v3702 = vpop.permute.xlu0 %3701
        %3703 = vrot.lane.b32.xlu0 %v637, 3
        %v3704 = vpop.permute.xlu0 %3703
        %3705 = vrot.lane.b32.xlu0 %v638, 3
        %v3706 = vpop.permute.xlu0 %3705
        %3707 = vrot.lane.b32.xlu0 %v639, 3
        %v3708 = vpop.permute.xlu0 %3707
        %3709 = vrot.lane.b32.xlu0 %v640, 3
        %v3710 = vpop.permute.xlu0 %3709
        %3711 = vrot.lane.b32.xlu0 %v641, 3
        %v3712 = vpop.permute.xlu0 %3711
        %3713 = vrot.lane.b32.xlu0 %v642, 3
        %v3714 = vpop.permute.xlu0 %3713
        %3715 = vrot.lane.b32.xlu0 %v643, 3
        %v3716 = vpop.permute.xlu0 %3715
        %3717 = vrot.lane.b32.xlu0 %v644, 3
        %v3718 = vpop.permute.xlu0 %3717
        %3719 = vrot.lane.b32.xlu0 %v645, 3
        %v3720 = vpop.permute.xlu0 %3719
        %3721 = vrot.lane.b32.xlu0 %v646, 3
        %v3722 = vpop.permute.xlu0 %3721
        %3723 = vrot.lane.b32.xlu0 %v647, 3
        %v3724 = vpop.permute.xlu0 %3723
        %3725 = vrot.lane.b32.xlu0 %v648, 3
        %v3726 = vpop.permute.xlu0 %3725
        %3727 = vrot.lane.b32.xlu0 %v649, 3
        %v3728 = vpop.permute.xlu0 %3727
        %3729 = vrot.lane.b32.xlu0 %v650, 3
        %v3730 = vpop.permute.xlu0 %3729
        %3731 = vrot.lane.b32.xlu0 %v651, 3
        %v3732 = vpop.permute.xlu0 %3731
        %3733 = vrot.lane.b32.xlu0 %v652, 3
        %v3734 = vpop.permute.xlu0 %3733
        %v3791 = vrot.slane %v651, 1
        %v3792 = vsel %vm3059, %v3171, %v3791
        %v3793 = vrot.slane %v652, 1
        %v3794 = vsel %vm3059, %v3791, %v3793
        %v3795 = vrot.slane %v653, 1
        %v3796 = vsel %vm3059, %v3793, %v3795
        %3797 = vrot.lane.b32.xlu0 %v3068, 4
        %v3798 = vpop.permute.xlu0 %3797
        %3799 = vrot.lane.b32.xlu0 %v3070, 4
        %v3800 = vpop.permute.xlu0 %3799
        %3801 = vrot.lane.b32.xlu0 %v3072, 4
        %v3802 = vpop.permute.xlu0 %3801
        %3803 = vrot.lane.b32.xlu0 %v3074, 4
        %v3804 = vpop.permute.xlu0 %3803
        %3805 = vrot.lane.b32.xlu0 %v3076, 4
        %v3806 = vpop.permute.xlu0 %3805
        %3807 = vrot.lane.b32.xlu0 %v3078, 4
        %v3808 = vpop.permute.xlu0 %3807
        %3809 = vrot.lane.b32.xlu0 %v3080, 4
        %v3810 = vpop.permute.xlu0 %3809
        %3811 = vrot.lane.b32.xlu0 %v3082, 4
        %v3812 = vpop.permute.xlu0 %3811
        %3813 = vrot.lane.b32.xlu0 %v3084, 4
        %v3814 = vpop.permute.xlu0 %3813
        %3815 = vrot.lane.b32.xlu0 %v3086, 4
        %v3816 = vpop.permute.xlu0 %3815
        %3817 = vrot.lane.b32.xlu0 %v3088, 4
        %v3818 = vpop.permute.xlu0 %3817
        %3819 = vrot.lane.b32.xlu0 %v3090, 4
        %v3820 = vpop.permute.xlu0 %3819
        %3821 = vrot.lane.b32.xlu0 %v3092, 4
        %v3822 = vpop.permute.xlu0 %3821
        %3823 = vrot.lane.b32.xlu0 %v3094, 4
        %v3824 = vpop.permute.xlu0 %3823
        %3825 = vrot.lane.b32.xlu0 %v3096, 4
        %v3826 = vpop.permute.xlu0 %3825
        %3827 = vrot.lane.b32.xlu0 %v3098, 4
        %v3828 = vpop.permute.xlu0 %3827
        %3829 = vrot.lane.b32.xlu0 %v3100, 4
        %v3830 = vpop.permute.xlu0 %3829
        %3831 = vrot.lane.b32.xlu0 %v3102, 4
        %v3832 = vpop.permute.xlu0 %3831
        %3833 = vrot.lane.b32.xlu0 %v3104, 4
        %v3834 = vpop.permute.xlu0 %3833
        %3835 = vrot.lane.b32.xlu0 %v3106, 4
        %v3836 = vpop.permute.xlu0 %3835
        %3837 = vrot.lane.b32.xlu0 %v3108, 4
        %v3838 = vpop.permute.xlu0 %3837
        %3839 = vrot.lane.b32.xlu0 %v3110, 4
        %v3840 = vpop.permute.xlu0 %3839
        %3841 = vrot.lane.b32.xlu0 %v3112, 4
        %v3842 = vpop.permute.xlu0 %3841
        %3843 = vrot.lane.b32.xlu0 %v3114, 4
        %v3844 = vpop.permute.xlu0 %3843
        %3845 = vrot.lane.b32.xlu0 %v3116, 4
        %v3846 = vpop.permute.xlu0 %3845
        %3847 = vrot.lane.b32.xlu0 %v3118, 4
        %v3848 = vpop.permute.xlu0 %3847
        %3849 = vrot.lane.b32.xlu0 %v3120, 4
        %v3850 = vpop.permute.xlu0 %3849
        %3851 = vrot.lane.b32.xlu0 %v3122, 4
        %v3852 = vpop.permute.xlu0 %3851
        %3853 = vrot.lane.b32.xlu0 %v3124, 4
        %v3854 = vpop.permute.xlu0 %3853
        %3855 = vrot.lane.b32.xlu0 %v3126, 4
        %v3856 = vpop.permute.xlu0 %3855
        %3857 = vrot.lane.b32.xlu0 %v3128, 4
        %v3858 = vpop.permute.xlu0 %3857
        %3859 = vrot.lane.b32.xlu0 %v3130, 4
        %v3860 = vpop.permute.xlu0 %3859
        %3861 = vrot.lane.b32.xlu0 %v3132, 4
        %v3862 = vpop.permute.xlu0 %3861
        %3863 = vrot.lane.b32.xlu0 %v3134, 4
        %v3864 = vpop.permute.xlu0 %3863
        %3865 = vrot.lane.b32.xlu0 %v3136, 4
        %v3866 = vpop.permute.xlu0 %3865
        %3867 = vrot.lane.b32.xlu0 %v3138, 4
        %v3868 = vpop.permute.xlu0 %3867
        %3869 = vrot.lane.b32.xlu0 %v3140, 4
        %v3870 = vpop.permute.xlu0 %3869
        %3871 = vrot.lane.b32.xlu0 %v3142, 4
        %v3872 = vpop.permute.xlu0 %3871
        %3873 = vrot.lane.b32.xlu0 %v3144, 4
        %v3874 = vpop.permute.xlu0 %3873
        %3875 = vrot.lane.b32.xlu0 %v3146, 4
        %v3876 = vpop.permute.xlu0 %3875
        %3877 = vrot.lane.b32.xlu0 %v3148, 4
        %v3878 = vpop.permute.xlu0 %3877
        %3879 = vrot.lane.b32.xlu0 %v3150, 4
        %v3880 = vpop.permute.xlu0 %3879
        %3881 = vrot.lane.b32.xlu0 %v3152, 4
        %v3882 = vpop.permute.xlu0 %3881
        %3883 = vrot.lane.b32.xlu0 %v3154, 4
        %v3884 = vpop.permute.xlu0 %3883
        %3885 = vrot.lane.b32.xlu0 %v3156, 4
        %v3886 = vpop.permute.xlu0 %3885
        %3887 = vrot.lane.b32.xlu0 %v3158, 4
        %v3888 = vpop.permute.xlu0 %3887
        %3889 = vrot.lane.b32.xlu0 %v3160, 4
        %v3890 = vpop.permute.xlu0 %3889
        %3891 = vrot.lane.b32.xlu0 %v3162, 4
        %v3892 = vpop.permute.xlu0 %3891
        %3893 = vrot.lane.b32.xlu0 %v3164, 4
        %v3894 = vpop.permute.xlu0 %3893
        %3895 = vrot.lane.b32.xlu0 %v3166, 4
        %v3896 = vpop.permute.xlu0 %3895
        %3897 = vrot.lane.b32.xlu0 %v3168, 4
        %v3898 = vpop.permute.xlu0 %3897
        %3899 = vrot.lane.b32.xlu0 %v3170, 4
        %v3900 = vpop.permute.xlu0 %3899
        %3901 = vrot.lane.b32.xlu0 %v3172, 4
        %v3902 = vpop.permute.xlu0 %3901
        %3903 = vrot.lane.b32.xlu0 %v3792, 4
        %v3904 = vpop.permute.xlu0 %3903
        %3905 = vrot.lane.b32.xlu0 %v3794, 4
        %v3906 = vpop.permute.xlu0 %3905
        %3907 = vrot.lane.b32.xlu0 %v3796, 4
        %v3908 = vpop.permute.xlu0 %3907
        %v3965 = vrot.slane %v651, 2
        %v3966 = vsel %vm3341, %v3453, %v3965
        %v3967 = vrot.slane %v652, 2
        %v3968 = vsel %vm3341, %v3965, %v3967
        %v3969 = vrot.slane %v653, 2
        %v3970 = vsel %vm3341, %v3967, %v3969
        %3971 = vrot.lane.b32.xlu0 %v3350, 5
        %v3972 = vpop.permute.xlu0 %3971
        %3973 = vrot.lane.b32.xlu0 %v3352, 5
        %v3974 = vpop.permute.xlu0 %3973
        %3975 = vrot.lane.b32.xlu0 %v3354, 5
        %v3976 = vpop.permute.xlu0 %3975
        %3977 = vrot.lane.b32.xlu0 %v3356, 5
        %v3978 = vpop.permute.xlu0 %3977
        %3979 = vrot.lane.b32.xlu0 %v3358, 5
        %v3980 = vpop.permute.xlu0 %3979
        %3981 = vrot.lane.b32.xlu0 %v3360, 5
        %v3982 = vpop.permute.xlu0 %3981
        %3983 = vrot.lane.b32.xlu0 %v3362, 5
        %v3984 = vpop.permute.xlu0 %3983
        %3985 = vrot.lane.b32.xlu0 %v3364, 5
        %v3986 = vpop.permute.xlu0 %3985
        %3987 = vrot.lane.b32.xlu0 %v3366, 5
        %v3988 = vpop.permute.xlu0 %3987
        %3989 = vrot.lane.b32.xlu0 %v3368, 5
        %v3990 = vpop.permute.xlu0 %3989
        %3991 = vrot.lane.b32.xlu0 %v3370, 5
        %v3992 = vpop.permute.xlu0 %3991
        %3993 = vrot.lane.b32.xlu0 %v3372, 5
        %v3994 = vpop.permute.xlu0 %3993
        %3995 = vrot.lane.b32.xlu0 %v3374, 5
        %v3996 = vpop.permute.xlu0 %3995
        %3997 = vrot.lane.b32.xlu0 %v3376, 5
        %v3998 = vpop.permute.xlu0 %3997
        %3999 = vrot.lane.b32.xlu0 %v3378, 5
        %v4000 = vpop.permute.xlu0 %3999
        %4001 = vrot.lane.b32.xlu0 %v3380, 5
        %v4002 = vpop.permute.xlu0 %4001
        %4003 = vrot.lane.b32.xlu0 %v3382, 5
        %v4004 = vpop.permute.xlu0 %4003
        %4005 = vrot.lane.b32.xlu0 %v3384, 5
        %v4006 = vpop.permute.xlu0 %4005
        %4007 = vrot.lane.b32.xlu0 %v3386, 5
        %v4008 = vpop.permute.xlu0 %4007
        %4009 = vrot.lane.b32.xlu0 %v3388, 5
        %v4010 = vpop.permute.xlu0 %4009
        %4011 = vrot.lane.b32.xlu0 %v3390, 5
        %v4012 = vpop.permute.xlu0 %4011
        %4013 = vrot.lane.b32.xlu0 %v3392, 5
        %v4014 = vpop.permute.xlu0 %4013
        %4015 = vrot.lane.b32.xlu0 %v3394, 5
        %v4016 = vpop.permute.xlu0 %4015
        %4017 = vrot.lane.b32.xlu0 %v3396, 5
        %v4018 = vpop.permute.xlu0 %4017
        %4019 = vrot.lane.b32.xlu0 %v3398, 5
        %v4020 = vpop.permute.xlu0 %4019
        %4021 = vrot.lane.b32.xlu0 %v3400, 5
        %v4022 = vpop.permute.xlu0 %4021
        %4023 = vrot.lane.b32.xlu0 %v3402, 5
        %v4024 = vpop.permute.xlu0 %4023
        %4025 = vrot.lane.b32.xlu0 %v3404, 5
        %v4026 = vpop.permute.xlu0 %4025
        %4027 = vrot.lane.b32.xlu0 %v3406, 5
        %v4028 = vpop.permute.xlu0 %4027
        %4029 = vrot.lane.b32.xlu0 %v3408, 5
        %v4030 = vpop.permute.xlu0 %4029
        %4031 = vrot.lane.b32.xlu0 %v3410, 5
        %v4032 = vpop.permute.xlu0 %4031
        %4033 = vrot.lane.b32.xlu0 %v3412, 5
        %v4034 = vpop.permute.xlu0 %4033
        %4035 = vrot.lane.b32.xlu0 %v3414, 5
        %v4036 = vpop.permute.xlu0 %4035
        %4037 = vrot.lane.b32.xlu0 %v3416, 5
        %v4038 = vpop.permute.xlu0 %4037
        %4039 = vrot.lane.b32.xlu0 %v3418, 5
        %v4040 = vpop.permute.xlu0 %4039
        %4041 = vrot.lane.b32.xlu0 %v3420, 5
        %v4042 = vpop.permute.xlu0 %4041
        %4043 = vrot.lane.b32.xlu0 %v3422, 5
        %v4044 = vpop.permute.xlu0 %4043
        %4045 = vrot.lane.b32.xlu0 %v3424, 5
        %v4046 = vpop.permute.xlu0 %4045
        %4047 = vrot.lane.b32.xlu0 %v3426, 5
        %v4048 = vpop.permute.xlu0 %4047
        %4049 = vrot.lane.b32.xlu0 %v3428, 5
        %v4050 = vpop.permute.xlu0 %4049
        %4051 = vrot.lane.b32.xlu0 %v3430, 5
        %v4052 = vpop.permute.xlu0 %4051
        %4053 = vrot.lane.b32.xlu0 %v3432, 5
        %v4054 = vpop.permute.xlu0 %4053
        %4055 = vrot.lane.b32.xlu0 %v3434, 5
        %v4056 = vpop.permute.xlu0 %4055
        %4057 = vrot.lane.b32.xlu0 %v3436, 5
        %v4058 = vpop.permute.xlu0 %4057
        %4059 = vrot.lane.b32.xlu0 %v3438, 5
        %v4060 = vpop.permute.xlu0 %4059
        %4061 = vrot.lane.b32.xlu0 %v3440, 5
        %v4062 = vpop.permute.xlu0 %4061
        %4063 = vrot.lane.b32.xlu0 %v3442, 5
        %v4064 = vpop.permute.xlu0 %4063
        %4065 = vrot.lane.b32.xlu0 %v3444, 5
        %v4066 = vpop.permute.xlu0 %4065
        %4067 = vrot.lane.b32.xlu0 %v3446, 5
        %v4068 = vpop.permute.xlu0 %4067
        %4069 = vrot.lane.b32.xlu0 %v3448, 5
        %v4070 = vpop.permute.xlu0 %4069
        %4071 = vrot.lane.b32.xlu0 %v3450, 5
        %v4072 = vpop.permute.xlu0 %4071
        %4073 = vrot.lane.b32.xlu0 %v3452, 5
        %v4074 = vpop.permute.xlu0 %4073
        %4075 = vrot.lane.b32.xlu0 %v3454, 5
        %v4076 = vpop.permute.xlu0 %4075
        %4077 = vrot.lane.b32.xlu0 %v3966, 5
        %v4078 = vpop.permute.xlu0 %4077
        %4079 = vrot.lane.b32.xlu0 %v3968, 5
        %v4080 = vpop.permute.xlu0 %4079
        %4081 = vrot.lane.b32.xlu0 %v3970, 5
        %v4082 = vpop.permute.xlu0 %4081
        %4139 = vrot.lane.b32.xlu0 %v600, 6
        %v4140 = vpop.permute.xlu0 %4139
        %4141 = vrot.lane.b32.xlu0 %v601, 6
        %v4142 = vpop.permute.xlu0 %4141
        %4143 = vrot.lane.b32.xlu0 %v602, 6
        %v4144 = vpop.permute.xlu0 %4143
        %4145 = vrot.lane.b32.xlu0 %v603, 6
        %v4146 = vpop.permute.xlu0 %4145
        %4147 = vrot.lane.b32.xlu0 %v604, 6
        %v4148 = vpop.permute.xlu0 %4147
        %4149 = vrot.lane.b32.xlu0 %v605, 6
        %v4150 = vpop.permute.xlu0 %4149
        %4151 = vrot.lane.b32.xlu0 %v606, 6
        %v4152 = vpop.permute.xlu0 %4151
        %4153 = vrot.lane.b32.xlu0 %v607, 6
        %v4154 = vpop.permute.xlu0 %4153
        %4155 = vrot.lane.b32.xlu0 %v608, 6
        %v4156 = vpop.permute.xlu0 %4155
        %4157 = vrot.lane.b32.xlu0 %v609, 6
        %v4158 = vpop.permute.xlu0 %4157
        %4159 = vrot.lane.b32.xlu0 %v610, 6
        %v4160 = vpop.permute.xlu0 %4159
        %4161 = vrot.lane.b32.xlu0 %v611, 6
        %v4162 = vpop.permute.xlu0 %4161
        %4163 = vrot.lane.b32.xlu0 %v612, 6
        %v4164 = vpop.permute.xlu0 %4163
        %4165 = vrot.lane.b32.xlu0 %v613, 6
        %v4166 = vpop.permute.xlu0 %4165
        %4167 = vrot.lane.b32.xlu0 %v614, 6
        %v4168 = vpop.permute.xlu0 %4167
        %4169 = vrot.lane.b32.xlu0 %v615, 6
        %v4170 = vpop.permute.xlu0 %4169
        %4171 = vrot.lane.b32.xlu0 %v616, 6
        %v4172 = vpop.permute.xlu0 %4171
        %4173 = vrot.lane.b32.xlu0 %v617, 6
        %v4174 = vpop.permute.xlu0 %4173
        %4175 = vrot.lane.b32.xlu0 %v618, 6
        %v4176 = vpop.permute.xlu0 %4175
        %4177 = vrot.lane.b32.xlu0 %v619, 6
        %v4178 = vpop.permute.xlu0 %4177
        %4179 = vrot.lane.b32.xlu0 %v620, 6
        %v4180 = vpop.permute.xlu0 %4179
        %4181 = vrot.lane.b32.xlu0 %v621, 6
        %v4182 = vpop.permute.xlu0 %4181
        %4183 = vrot.lane.b32.xlu0 %v622, 6
        %v4184 = vpop.permute.xlu0 %4183
        %4185 = vrot.lane.b32.xlu0 %v623, 6
        %v4186 = vpop.permute.xlu0 %4185
        %4187 = vrot.lane.b32.xlu0 %v624, 6
        %v4188 = vpop.permute.xlu0 %4187
        %4189 = vrot.lane.b32.xlu0 %v625, 6
        %v4190 = vpop.permute.xlu0 %4189
        %4191 = vrot.lane.b32.xlu0 %v626, 6
        %v4192 = vpop.permute.xlu0 %4191
        %4193 = vrot.lane.b32.xlu0 %v627, 6
        %v4194 = vpop.permute.xlu0 %4193
        %4195 = vrot.lane.b32.xlu0 %v628, 6
        %v4196 = vpop.permute.xlu0 %4195
        %4197 = vrot.lane.b32.xlu0 %v629, 6
        %v4198 = vpop.permute.xlu0 %4197
        %4199 = vrot.lane.b32.xlu0 %v630, 6
        %v4200 = vpop.permute.xlu0 %4199
        %4201 = vrot.lane.b32.xlu0 %v631, 6
        %v4202 = vpop.permute.xlu0 %4201
        %4203 = vrot.lane.b32.xlu0 %v632, 6
        %v4204 = vpop.permute.xlu0 %4203
        %4205 = vrot.lane.b32.xlu0 %v633, 6
        %v4206 = vpop.permute.xlu0 %4205
        %4207 = vrot.lane.b32.xlu0 %v634, 6
        %v4208 = vpop.permute.xlu0 %4207
        %4209 = vrot.lane.b32.xlu0 %v635, 6
        %v4210 = vpop.permute.xlu0 %4209
        %4211 = vrot.lane.b32.xlu0 %v636, 6
        %v4212 = vpop.permute.xlu0 %4211
        %4213 = vrot.lane.b32.xlu0 %v637, 6
        %v4214 = vpop.permute.xlu0 %4213
        %4215 = vrot.lane.b32.xlu0 %v638, 6
        %v4216 = vpop.permute.xlu0 %4215
        %4217 = vrot.lane.b32.xlu0 %v639, 6
        %v4218 = vpop.permute.xlu0 %4217
        %4219 = vrot.lane.b32.xlu0 %v640, 6
        %v4220 = vpop.permute.xlu0 %4219
        %4221 = vrot.lane.b32.xlu0 %v641, 6
        %v4222 = vpop.permute.xlu0 %4221
        %4223 = vrot.lane.b32.xlu0 %v642, 6
        %v4224 = vpop.permute.xlu0 %4223
        %4225 = vrot.lane.b32.xlu0 %v643, 6
        %v4226 = vpop.permute.xlu0 %4225
        %4227 = vrot.lane.b32.xlu0 %v644, 6
        %v4228 = vpop.permute.xlu0 %4227
        %4229 = vrot.lane.b32.xlu0 %v645, 6
        %v4230 = vpop.permute.xlu0 %4229
        %4231 = vrot.lane.b32.xlu0 %v646, 6
        %v4232 = vpop.permute.xlu0 %4231
        %4233 = vrot.lane.b32.xlu0 %v647, 6
        %v4234 = vpop.permute.xlu0 %4233
        %4235 = vrot.lane.b32.xlu0 %v648, 6
        %v4236 = vpop.permute.xlu0 %4235
        %4237 = vrot.lane.b32.xlu0 %v649, 6
        %v4238 = vpop.permute.xlu0 %4237
        %4239 = vrot.lane.b32.xlu0 %v650, 6
        %v4240 = vpop.permute.xlu0 %4239
        %4241 = vrot.lane.b32.xlu0 %v651, 6
        %v4242 = vpop.permute.xlu0 %4241
        %4243 = vrot.lane.b32.xlu0 %v652, 6
        %v4244 = vpop.permute.xlu0 %4243
        %4245 = vrot.lane.b32.xlu0 %v653, 6
        %v4246 = vpop.permute.xlu0 %4245
        %4247 = vrot.lane.b32.xlu0 %v654, 6
        %v4248 = vpop.permute.xlu0 %4247
        %4249 = vrot.lane.b32.xlu0 %v655, 6
        %v4250 = vpop.permute.xlu0 %4249
        %v4307 = vrot.slane %v654, 1
        %v4308 = vsel %vm3059, %v3795, %v4307
        %v4309 = vrot.slane %v655, 1
        %v4310 = vsel %vm3059, %v4307, %v4309
        %v4311 = vrot.slane %v656, 1
        %v4312 = vsel %vm3059, %v4309, %v4311
        %4313 = vrot.lane.b32.xlu0 %v3074, 7
        %v4314 = vpop.permute.xlu0 %4313
        %4315 = vrot.lane.b32.xlu0 %v3076, 7
        %v4316 = vpop.permute.xlu0 %4315
        %4317 = vrot.lane.b32.xlu0 %v3078, 7
        %v4318 = vpop.permute.xlu0 %4317
        %4319 = vrot.lane.b32.xlu0 %v3080, 7
        %v4320 = vpop.permute.xlu0 %4319
        %4321 = vrot.lane.b32.xlu0 %v3082, 7
        %v4322 = vpop.permute.xlu0 %4321
        %4323 = vrot.lane.b32.xlu0 %v3084, 7
        %v4324 = vpop.permute.xlu0 %4323
        %4325 = vrot.lane.b32.xlu0 %v3086, 7
        %v4326 = vpop.permute.xlu0 %4325
        %4327 = vrot.lane.b32.xlu0 %v3088, 7
        %v4328 = vpop.permute.xlu0 %4327
        %4329 = vrot.lane.b32.xlu0 %v3090, 7
        %v4330 = vpop.permute.xlu0 %4329
        %4331 = vrot.lane.b32.xlu0 %v3092, 7
        %v4332 = vpop.permute.xlu0 %4331
        %4333 = vrot.lane.b32.xlu0 %v3094, 7
        %v4334 = vpop.permute.xlu0 %4333
        %4335 = vrot.lane.b32.xlu0 %v3096, 7
        %v4336 = vpop.permute.xlu0 %4335
        %4337 = vrot.lane.b32.xlu0 %v3098, 7
        %v4338 = vpop.permute.xlu0 %4337
        %4339 = vrot.lane.b32.xlu0 %v3100, 7
        %v4340 = vpop.permute.xlu0 %4339
        %4341 = vrot.lane.b32.xlu0 %v3102, 7
        %v4342 = vpop.permute.xlu0 %4341
        %4343 = vrot.lane.b32.xlu0 %v3104, 7
        %v4344 = vpop.permute.xlu0 %4343
        %4345 = vrot.lane.b32.xlu0 %v3106, 7
        %v4346 = vpop.permute.xlu0 %4345
        %4347 = vrot.lane.b32.xlu0 %v3108, 7
        %v4348 = vpop.permute.xlu0 %4347
        %4349 = vrot.lane.b32.xlu0 %v3110, 7
        %v4350 = vpop.permute.xlu0 %4349
        %4351 = vrot.lane.b32.xlu0 %v3112, 7
        %v4352 = vpop.permute.xlu0 %4351
        %4353 = vrot.lane.b32.xlu0 %v3114, 7
        %v4354 = vpop.permute.xlu0 %4353
        %4355 = vrot.lane.b32.xlu0 %v3116, 7
        %v4356 = vpop.permute.xlu0 %4355
        %4357 = vrot.lane.b32.xlu0 %v3118, 7
        %v4358 = vpop.permute.xlu0 %4357
        %4359 = vrot.lane.b32.xlu0 %v3120, 7
        %v4360 = vpop.permute.xlu0 %4359
        %4361 = vrot.lane.b32.xlu0 %v3122, 7
        %v4362 = vpop.permute.xlu0 %4361
        %4363 = vrot.lane.b32.xlu0 %v3124, 7
        %v4364 = vpop.permute.xlu0 %4363
        %4365 = vrot.lane.b32.xlu0 %v3126, 7
        %v4366 = vpop.permute.xlu0 %4365
        %4367 = vrot.lane.b32.xlu0 %v3128, 7
        %v4368 = vpop.permute.xlu0 %4367
        %4369 = vrot.lane.b32.xlu0 %v3130, 7
        %v4370 = vpop.permute.xlu0 %4369
        %4371 = vrot.lane.b32.xlu0 %v3132, 7
        %v4372 = vpop.permute.xlu0 %4371
        %4373 = vrot.lane.b32.xlu0 %v3134, 7
        %v4374 = vpop.permute.xlu0 %4373
        %4375 = vrot.lane.b32.xlu0 %v3136, 7
        %v4376 = vpop.permute.xlu0 %4375
        %4377 = vrot.lane.b32.xlu0 %v3138, 7
        %v4378 = vpop.permute.xlu0 %4377
        %4379 = vrot.lane.b32.xlu0 %v3140, 7
        %v4380 = vpop.permute.xlu0 %4379
        %4381 = vrot.lane.b32.xlu0 %v3142, 7
        %v4382 = vpop.permute.xlu0 %4381
        %4383 = vrot.lane.b32.xlu0 %v3144, 7
        %v4384 = vpop.permute.xlu0 %4383
        %4385 = vrot.lane.b32.xlu0 %v3146, 7
        %v4386 = vpop.permute.xlu0 %4385
        %4387 = vrot.lane.b32.xlu0 %v3148, 7
        %v4388 = vpop.permute.xlu0 %4387
        %4389 = vrot.lane.b32.xlu0 %v3150, 7
        %v4390 = vpop.permute.xlu0 %4389
        %4391 = vrot.lane.b32.xlu0 %v3152, 7
        %v4392 = vpop.permute.xlu0 %4391
        %4393 = vrot.lane.b32.xlu0 %v3154, 7
        %v4394 = vpop.permute.xlu0 %4393
        %4395 = vrot.lane.b32.xlu0 %v3156, 7
        %v4396 = vpop.permute.xlu0 %4395
        %4397 = vrot.lane.b32.xlu0 %v3158, 7
        %v4398 = vpop.permute.xlu0 %4397
        %4399 = vrot.lane.b32.xlu0 %v3160, 7
        %v4400 = vpop.permute.xlu0 %4399
        %4401 = vrot.lane.b32.xlu0 %v3162, 7
        %v4402 = vpop.permute.xlu0 %4401
        %4403 = vrot.lane.b32.xlu0 %v3164, 7
        %v4404 = vpop.permute.xlu0 %4403
        %4405 = vrot.lane.b32.xlu0 %v3166, 7
        %v4406 = vpop.permute.xlu0 %4405
        %4407 = vrot.lane.b32.xlu0 %v3168, 7
        %v4408 = vpop.permute.xlu0 %4407
        %4409 = vrot.lane.b32.xlu0 %v3170, 7
        %v4410 = vpop.permute.xlu0 %4409
        %4411 = vrot.lane.b32.xlu0 %v3172, 7
        %v4412 = vpop.permute.xlu0 %4411
        %4413 = vrot.lane.b32.xlu0 %v3792, 7
        %v4414 = vpop.permute.xlu0 %4413
        %4415 = vrot.lane.b32.xlu0 %v3794, 7
        %v4416 = vpop.permute.xlu0 %4415
        %4417 = vrot.lane.b32.xlu0 %v3796, 7
        %v4418 = vpop.permute.xlu0 %4417
        %4419 = vrot.lane.b32.xlu0 %v4308, 7
        %v4420 = vpop.permute.xlu0 %4419
        %4421 = vrot.lane.b32.xlu0 %v4310, 7
        %v4422 = vpop.permute.xlu0 %4421
        %4423 = vrot.lane.b32.xlu0 %v4312, 7
        %v4424 = vpop.permute.xlu0 %4423
        %v4481 = vrot.slane %v654, 2
        %v4482 = vsel %vm3341, %v3969, %v4481
        %v4483 = vrot.slane %v655, 2
        %v4484 = vsel %vm3341, %v4481, %v4483
        %v4485 = vrot.slane %v656, 2
        %v4486 = vsel %vm3341, %v4483, %v4485
        %4487 = vrot.lane.b32.xlu0 %v3356, 8
        %v4488 = vpop.permute.xlu0 %4487
        %4489 = vrot.lane.b32.xlu0 %v3358, 8
        %v4490 = vpop.permute.xlu0 %4489
        %4491 = vrot.lane.b32.xlu0 %v3360, 8
        %v4492 = vpop.permute.xlu0 %4491
        %4493 = vrot.lane.b32.xlu0 %v3362, 8
        %v4494 = vpop.permute.xlu0 %4493
        %4495 = vrot.lane.b32.xlu0 %v3364, 8
        %v4496 = vpop.permute.xlu0 %4495
        %4497 = vrot.lane.b32.xlu0 %v3366, 8
        %v4498 = vpop.permute.xlu0 %4497
        %4499 = vrot.lane.b32.xlu0 %v3368, 8
        %v4500 = vpop.permute.xlu0 %4499
        %4501 = vrot.lane.b32.xlu0 %v3370, 8
        %v4502 = vpop.permute.xlu0 %4501
        %4503 = vrot.lane.b32.xlu0 %v3372, 8
        %v4504 = vpop.permute.xlu0 %4503
        %4505 = vrot.lane.b32.xlu0 %v3374, 8
        %v4506 = vpop.permute.xlu0 %4505
        %4507 = vrot.lane.b32.xlu0 %v3376, 8
        %v4508 = vpop.permute.xlu0 %4507
        %4509 = vrot.lane.b32.xlu0 %v3378, 8
        %v4510 = vpop.permute.xlu0 %4509
        %4511 = vrot.lane.b32.xlu0 %v3380, 8
        %v4512 = vpop.permute.xlu0 %4511
        %4513 = vrot.lane.b32.xlu0 %v3382, 8
        %v4514 = vpop.permute.xlu0 %4513
        %4515 = vrot.lane.b32.xlu0 %v3384, 8
        %v4516 = vpop.permute.xlu0 %4515
        %4517 = vrot.lane.b32.xlu0 %v3386, 8
        %v4518 = vpop.permute.xlu0 %4517
        %4519 = vrot.lane.b32.xlu0 %v3388, 8
        %v4520 = vpop.permute.xlu0 %4519
        %4521 = vrot.lane.b32.xlu0 %v3390, 8
        %v4522 = vpop.permute.xlu0 %4521
        %4523 = vrot.lane.b32.xlu0 %v3392, 8
        %v4524 = vpop.permute.xlu0 %4523
        %4525 = vrot.lane.b32.xlu0 %v3394, 8
        %v4526 = vpop.permute.xlu0 %4525
        %4527 = vrot.lane.b32.xlu0 %v3396, 8
        %v4528 = vpop.permute.xlu0 %4527
        %4529 = vrot.lane.b32.xlu0 %v3398, 8
        %v4530 = vpop.permute.xlu0 %4529
        %4531 = vrot.lane.b32.xlu0 %v3400, 8
        %v4532 = vpop.permute.xlu0 %4531
        %4533 = vrot.lane.b32.xlu0 %v3402, 8
        %v4534 = vpop.permute.xlu0 %4533
        %4535 = vrot.lane.b32.xlu0 %v3404, 8
        %v4536 = vpop.permute.xlu0 %4535
        %4537 = vrot.lane.b32.xlu0 %v3406, 8
        %v4538 = vpop.permute.xlu0 %4537
        %4539 = vrot.lane.b32.xlu0 %v3408, 8
        %v4540 = vpop.permute.xlu0 %4539
        %4541 = vrot.lane.b32.xlu0 %v3410, 8
        %v4542 = vpop.permute.xlu0 %4541
        %4543 = vrot.lane.b32.xlu0 %v3412, 8
        %v4544 = vpop.permute.xlu0 %4543
        %4545 = vrot.lane.b32.xlu0 %v3414, 8
        %v4546 = vpop.permute.xlu0 %4545
        %4547 = vrot.lane.b32.xlu0 %v3416, 8
        %v4548 = vpop.permute.xlu0 %4547
        %4549 = vrot.lane.b32.xlu0 %v3418, 8
        %v4550 = vpop.permute.xlu0 %4549
        %4551 = vrot.lane.b32.xlu0 %v3420, 8
        %v4552 = vpop.permute.xlu0 %4551
        %4553 = vrot.lane.b32.xlu0 %v3422, 8
        %v4554 = vpop.permute.xlu0 %4553
        %4555 = vrot.lane.b32.xlu0 %v3424, 8
        %v4556 = vpop.permute.xlu0 %4555
        %4557 = vrot.lane.b32.xlu0 %v3426, 8
        %v4558 = vpop.permute.xlu0 %4557
        %4559 = vrot.lane.b32.xlu0 %v3428, 8
        %v4560 = vpop.permute.xlu0 %4559
        %4561 = vrot.lane.b32.xlu0 %v3430, 8
        %v4562 = vpop.permute.xlu0 %4561
        %4563 = vrot.lane.b32.xlu0 %v3432, 8
        %v4564 = vpop.permute.xlu0 %4563
        %4565 = vrot.lane.b32.xlu0 %v3434, 8
        %v4566 = vpop.permute.xlu0 %4565
        %4567 = vrot.lane.b32.xlu0 %v3436, 8
        %v4568 = vpop.permute.xlu0 %4567
        %4569 = vrot.lane.b32.xlu0 %v3438, 8
        %v4570 = vpop.permute.xlu0 %4569
        %4571 = vrot.lane.b32.xlu0 %v3440, 8
        %v4572 = vpop.permute.xlu0 %4571
        %4573 = vrot.lane.b32.xlu0 %v3442, 8
        %v4574 = vpop.permute.xlu0 %4573
        %4575 = vrot.lane.b32.xlu0 %v3444, 8
        %v4576 = vpop.permute.xlu0 %4575
        %4577 = vrot.lane.b32.xlu0 %v3446, 8
        %v4578 = vpop.permute.xlu0 %4577
        %4579 = vrot.lane.b32.xlu0 %v3448, 8
        %v4580 = vpop.permute.xlu0 %4579
        %4581 = vrot.lane.b32.xlu0 %v3450, 8
        %v4582 = vpop.permute.xlu0 %4581
        %4583 = vrot.lane.b32.xlu0 %v3452, 8
        %v4584 = vpop.permute.xlu0 %4583
        %4585 = vrot.lane.b32.xlu0 %v3454, 8
        %v4586 = vpop.permute.xlu0 %4585
        %4587 = vrot.lane.b32.xlu0 %v3966, 8
        %v4588 = vpop.permute.xlu0 %4587
        %4589 = vrot.lane.b32.xlu0 %v3968, 8
        %v4590 = vpop.permute.xlu0 %4589
        %4591 = vrot.lane.b32.xlu0 %v3970, 8
        %v4592 = vpop.permute.xlu0 %4591
        %4593 = vrot.lane.b32.xlu0 %v4482, 8
        %v4594 = vpop.permute.xlu0 %4593
        %4595 = vrot.lane.b32.xlu0 %v4484, 8
        %v4596 = vpop.permute.xlu0 %4595
        %4597 = vrot.lane.b32.xlu0 %v4486, 8
        %v4598 = vpop.permute.xlu0 %4597
        %vm4655 = vcmask 7168
        %v4656 = vsel %vm4655, %v594, %v3174
        %v4657 = vsel %vm4655, %v595, %v3176
        %v4658 = vsel %vm4655, %v596, %v3178
        %v4659 = vsel %vm4655, %v597, %v3180
        %v4660 = vsel %vm4655, %v598, %v3182
        %v4661 = vsel %vm4655, %v599, %v3184
        %v4662 = vsel %vm4655, %v600, %v3186
        %v4663 = vsel %vm4655, %v601, %v3188
        %v4664 = vsel %vm4655, %v602, %v3190
        %v4665 = vsel %vm4655, %v603, %v3192
        %v4666 = vsel %vm4655, %v604, %v3194
        %v4667 = vsel %vm4655, %v605, %v3196
        %v4668 = vsel %vm4655, %v606, %v3198
        %v4669 = vsel %vm4655, %v607, %v3200
        %v4670 = vsel %vm4655, %v608, %v3202
        %v4671 = vsel %vm4655, %v609, %v3204
        %v4672 = vsel %vm4655, %v610, %v3206
        %v4673 = vsel %vm4655, %v611, %v3208
        %v4674 = vsel %vm4655, %v612, %v3210
        %v4675 = vsel %vm4655, %v613, %v3212
        %v4676 = vsel %vm4655, %v614, %v3214
        %v4677 = vsel %vm4655, %v615, %v3216
        %v4678 = vsel %vm4655, %v616, %v3218
        %v4679 = vsel %vm4655, %v617, %v3220
        %v4680 = vsel %vm4655, %v618, %v3222
        %v4681 = vsel %vm4655, %v619, %v3224
        %v4682 = vsel %vm4655, %v620, %v3226
        %v4683 = vsel %vm4655, %v621, %v3228
        %v4684 = vsel %vm4655, %v622, %v3230
        %v4685 = vsel %vm4655, %v623, %v3232
        %v4686 = vsel %vm4655, %v624, %v3234
        %v4687 = vsel %vm4655, %v625, %v3236
        %v4688 = vsel %vm4655, %v626, %v3238
        %v4689 = vsel %vm4655, %v627, %v3240
        %v4690 = vsel %vm4655, %v628, %v3242
        %v4691 = vsel %vm4655, %v629, %v3244
        %v4692 = vsel %vm4655, %v630, %v3246
        %v4693 = vsel %vm4655, %v631, %v3248
        %v4694 = vsel %vm4655, %v632, %v3250
        %v4695 = vsel %vm4655, %v633, %v3252
        %v4696 = vsel %vm4655, %v634, %v3254
        %v4697 = vsel %vm4655, %v635, %v3256
        %v4698 = vsel %vm4655, %v636, %v3258
        %v4699 = vsel %vm4655, %v637, %v3260
        %v4700 = vsel %vm4655, %v638, %v3262
        %v4701 = vsel %vm4655, %v639, %v3264
        %v4702 = vsel %vm4655, %v640, %v3266
        %v4703 = vsel %vm4655, %v641, %v3268
        %v4704 = vsel %vm4655, %v642, %v3270
        %v4705 = vsel %vm4655, %v643, %v3272
        %v4706 = vsel %vm4655, %v644, %v3274
        %v4707 = vsel %vm4655, %v645, %v3276
        %v4708 = vsel %vm4655, %v646, %v3278
        %v4709 = vsel %vm4655, %v647, %v3280
        %v4710 = vsel %vm4655, %v648, %v3282
        %v4711 = vsel %vm4655, %v649, %v3284
        %vm4712 = vcmask 15360
        %v4713 = vsel %vm4712, %v4656, %v3456
        %v4714 = vsel %vm4712, %v4657, %v3458
        %v4715 = vsel %vm4712, %v4658, %v3460
        %v4716 = vsel %vm4712, %v4659, %v3462
        %v4717 = vsel %vm4712, %v4660, %v3464
        %v4718 = vsel %vm4712, %v4661, %v3466
        %v4719 = vsel %vm4712, %v4662, %v3468
        %v4720 = vsel %vm4712, %v4663, %v3470
        %v4721 = vsel %vm4712, %v4664, %v3472
        %v4722 = vsel %vm4712, %v4665, %v3474
        %v4723 = vsel %vm4712, %v4666, %v3476
        %v4724 = vsel %vm4712, %v4667, %v3478
        %v4725 = vsel %vm4712, %v4668, %v3480
        %v4726 = vsel %vm4712, %v4669, %v3482
        %v4727 = vsel %vm4712, %v4670, %v3484
        %v4728 = vsel %vm4712, %v4671, %v3486
        %v4729 = vsel %vm4712, %v4672, %v3488
        %v4730 = vsel %vm4712, %v4673, %v3490
        %v4731 = vsel %vm4712, %v4674, %v3492
        %v4732 = vsel %vm4712, %v4675, %v3494
        %v4733 = vsel %vm4712, %v4676, %v3496
        %v4734 = vsel %vm4712, %v4677, %v3498
        %v4735 = vsel %vm4712, %v4678, %v3500
        %v4736 = vsel %vm4712, %v4679, %v3502
        %v4737 = vsel %vm4712, %v4680, %v3504
        %v4738 = vsel %vm4712, %v4681, %v3506
        %v4739 = vsel %vm4712, %v4682, %v3508
        %v4740 = vsel %vm4712, %v4683, %v3510
        %v4741 = vsel %vm4712, %v4684, %v3512
        %v4742 = vsel %vm4712, %v4685, %v3514
        %v4743 = vsel %vm4712, %v4686, %v3516
        %v4744 = vsel %vm4712, %v4687, %v3518
        %v4745 = vsel %vm4712, %v4688, %v3520
        %v4746 = vsel %vm4712, %v4689, %v3522
        %v4747 = vsel %vm4712, %v4690, %v3524
        %v4748 = vsel %vm4712, %v4691, %v3526
        %v4749 = vsel %vm4712, %v4692, %v3528
        %v4750 = vsel %vm4712, %v4693, %v3530
        %v4751 = vsel %vm4712, %v4694, %v3532
        %v4752 = vsel %vm4712, %v4695, %v3534
        %v4753 = vsel %vm4712, %v4696, %v3536
        %v4754 = vsel %vm4712, %v4697, %v3538
        %v4755 = vsel %vm4712, %v4698, %v3540
        %v4756 = vsel %vm4712, %v4699, %v3542
        %v4757 = vsel %vm4712, %v4700, %v3544
        %v4758 = vsel %vm4712, %v4701, %v3546
        %v4759 = vsel %vm4712, %v4702, %v3548
        %v4760 = vsel %vm4712, %v4703, %v3550
        %v4761 = vsel %vm4712, %v4704, %v3552
        %v4762 = vsel %vm4712, %v4705, %v3554
        %v4763 = vsel %vm4712, %v4706, %v3556
        %v4764 = vsel %vm4712, %v4707, %v3558
        %v4765 = vsel %vm4712, %v4708, %v3560
        %v4766 = vsel %vm4712, %v4709, %v3562
        %v4767 = vsel %vm4712, %v4710, %v3564
        %v4768 = vsel %vm4712, %v4711, %v3566
        %vm4769 = vcmask 23552
        %v4770 = vsel %vm4769, %v4713, %v3624
        %v4771 = vsel %vm4769, %v4714, %v3626
        %v4772 = vsel %vm4769, %v4715, %v3628
        %v4773 = vsel %vm4769, %v4716, %v3630
        %v4774 = vsel %vm4769, %v4717, %v3632
        %v4775 = vsel %vm4769, %v4718, %v3634
        %v4776 = vsel %vm4769, %v4719, %v3636
        %v4777 = vsel %vm4769, %v4720, %v3638
        %v4778 = vsel %vm4769, %v4721, %v3640
        %v4779 = vsel %vm4769, %v4722, %v3642
        %v4780 = vsel %vm4769, %v4723, %v3644
        %v4781 = vsel %vm4769, %v4724, %v3646
        %v4782 = vsel %vm4769, %v4725, %v3648
        %v4783 = vsel %vm4769, %v4726, %v3650
        %v4784 = vsel %vm4769, %v4727, %v3652
        %v4785 = vsel %vm4769, %v4728, %v3654
        %v4786 = vsel %vm4769, %v4729, %v3656
        %v4787 = vsel %vm4769, %v4730, %v3658
        %v4788 = vsel %vm4769, %v4731, %v3660
        %v4789 = vsel %vm4769, %v4732, %v3662
        %v4790 = vsel %vm4769, %v4733, %v3664
        %v4791 = vsel %vm4769, %v4734, %v3666
        %v4792 = vsel %vm4769, %v4735, %v3668
        %v4793 = vsel %vm4769, %v4736, %v3670
        %v4794 = vsel %vm4769, %v4737, %v3672
        %v4795 = vsel %vm4769, %v4738, %v3674
        %v4796 = vsel %vm4769, %v4739, %v3676
        %v4797 = vsel %vm4769, %v4740, %v3678
        %v4798 = vsel %vm4769, %v4741, %v3680
        %v4799 = vsel %vm4769, %v4742, %v3682
        %v4800 = vsel %vm4769, %v4743, %v3684
        %v4801 = vsel %vm4769, %v4744, %v3686
        %v4802 = vsel %vm4769, %v4745, %v3688
        %v4803 = vsel %vm4769, %v4746, %v3690
        %v4804 = vsel %vm4769, %v4747, %v3692
        %v4805 = vsel %vm4769, %v4748, %v3694
        %v4806 = vsel %vm4769, %v4749, %v3696
        %v4807 = vsel %vm4769, %v4750, %v3698
        %v4808 = vsel %vm4769, %v4751, %v3700
        %v4809 = vsel %vm4769, %v4752, %v3702
        %v4810 = vsel %vm4769, %v4753, %v3704
        %v4811 = vsel %vm4769, %v4754, %v3706
        %v4812 = vsel %vm4769, %v4755, %v3708
        %v4813 = vsel %vm4769, %v4756, %v3710
        %v4814 = vsel %vm4769, %v4757, %v3712
        %v4815 = vsel %vm4769, %v4758, %v3714
        %v4816 = vsel %vm4769, %v4759, %v3716
        %v4817 = vsel %vm4769, %v4760, %v3718
        %v4818 = vsel %vm4769, %v4761, %v3720
        %v4819 = vsel %vm4769, %v4762, %v3722
        %v4820 = vsel %vm4769, %v4763, %v3724
        %v4821 = vsel %vm4769, %v4764, %v3726
        %v4822 = vsel %vm4769, %v4765, %v3728
        %v4823 = vsel %vm4769, %v4766, %v3730
        %v4824 = vsel %vm4769, %v4767, %v3732
        %v4825 = vsel %vm4769, %v4768, %v3734
        %v4826 = vsel %vm1353, %v4770, %v3798
        %v4827 = vsel %vm1353, %v4771, %v3800
        %v4828 = vsel %vm1353, %v4772, %v3802
        %v4829 = vsel %vm1353, %v4773, %v3804
        %v4830 = vsel %vm1353, %v4774, %v3806
        %v4831 = vsel %vm1353, %v4775, %v3808
        %v4832 = vsel %vm1353, %v4776, %v3810
        %v4833 = vsel %vm1353, %v4777, %v3812
        %v4834 = vsel %vm1353, %v4778, %v3814
        %v4835 = vsel %vm1353, %v4779, %v3816
        %v4836 = vsel %vm1353, %v4780, %v3818
        %v4837 = vsel %vm1353, %v4781, %v3820
        %v4838 = vsel %vm1353, %v4782, %v3822
        %v4839 = vsel %vm1353, %v4783, %v3824
        %v4840 = vsel %vm1353, %v4784, %v3826
        %v4841 = vsel %vm1353, %v4785, %v3828
        %v4842 = vsel %vm1353, %v4786, %v3830
        %v4843 = vsel %vm1353, %v4787, %v3832
        %v4844 = vsel %vm1353, %v4788, %v3834
        %v4845 = vsel %vm1353, %v4789, %v3836
        %v4846 = vsel %vm1353, %v4790, %v3838
        %v4847 = vsel %vm1353, %v4791, %v3840
        %v4848 = vsel %vm1353, %v4792, %v3842
        %v4849 = vsel %vm1353, %v4793, %v3844
        %v4850 = vsel %vm1353, %v4794, %v3846
        %v4851 = vsel %vm1353, %v4795, %v3848
        %v4852 = vsel %vm1353, %v4796, %v3850
        %v4853 = vsel %vm1353, %v4797, %v3852
        %v4854 = vsel %vm1353, %v4798, %v3854
        %v4855 = vsel %vm1353, %v4799, %v3856
        %v4856 = vsel %vm1353, %v4800, %v3858
        %v4857 = vsel %vm1353, %v4801, %v3860
        %v4858 = vsel %vm1353, %v4802, %v3862
        %v4859 = vsel %vm1353, %v4803, %v3864
        %v4860 = vsel %vm1353, %v4804, %v3866
        %v4861 = vsel %vm1353, %v4805, %v3868
        %v4862 = vsel %vm1353, %v4806, %v3870
        %v4863 = vsel %vm1353, %v4807, %v3872
        %v4864 = vsel %vm1353, %v4808, %v3874
        %v4865 = vsel %vm1353, %v4809, %v3876
        %v4866 = vsel %vm1353, %v4810, %v3878
        %v4867 = vsel %vm1353, %v4811, %v3880
        %v4868 = vsel %vm1353, %v4812, %v3882
        %v4869 = vsel %vm1353, %v4813, %v3884
        %v4870 = vsel %vm1353, %v4814, %v3886
        %v4871 = vsel %vm1353, %v4815, %v3888
        %v4872 = vsel %vm1353, %v4816, %v3890
        %v4873 = vsel %vm1353, %v4817, %v3892
        %v4874 = vsel %vm1353, %v4818, %v3894
        %v4875 = vsel %vm1353, %v4819, %v3896
        %v4876 = vsel %vm1353, %v4820, %v3898
        %v4877 = vsel %vm1353, %v4821, %v3900
        %v4878 = vsel %vm1353, %v4822, %v3902
        %v4879 = vsel %vm1353, %v4823, %v3904
        %v4880 = vsel %vm1353, %v4824, %v3906
        %v4881 = vsel %vm1353, %v4825, %v3908
        %vm4882 = vcmask 39936
        %v4883 = vsel %vm4882, %v4826, %v3972
        %v4884 = vsel %vm4882, %v4827, %v3974
        %v4885 = vsel %vm4882, %v4828, %v3976
        %v4886 = vsel %vm4882, %v4829, %v3978
        %v4887 = vsel %vm4882, %v4830, %v3980
        %v4888 = vsel %vm4882, %v4831, %v3982
        %v4889 = vsel %vm4882, %v4832, %v3984
        %v4890 = vsel %vm4882, %v4833, %v3986
        %v4891 = vsel %vm4882, %v4834, %v3988
        %v4892 = vsel %vm4882, %v4835, %v3990
        %v4893 = vsel %vm4882, %v4836, %v3992
        %v4894 = vsel %vm4882, %v4837, %v3994
        %v4895 = vsel %vm4882, %v4838, %v3996
        %v4896 = vsel %vm4882, %v4839, %v3998
        %v4897 = vsel %vm4882, %v4840, %v4000
        %v4898 = vsel %vm4882, %v4841, %v4002
        %v4899 = vsel %vm4882, %v4842, %v4004
        %v4900 = vsel %vm4882, %v4843, %v4006
        %v4901 = vsel %vm4882, %v4844, %v4008
        %v4902 = vsel %vm4882, %v4845, %v4010
        %v4903 = vsel %vm4882, %v4846, %v4012
        %v4904 = vsel %vm4882, %v4847, %v4014
        %v4905 = vsel %vm4882, %v4848, %v4016
        %v4906 = vsel %vm4882, %v4849, %v4018
        %v4907 = vsel %vm4882, %v4850, %v4020
        %v4908 = vsel %vm4882, %v4851, %v4022
        %v4909 = vsel %vm4882, %v4852, %v4024
        %v4910 = vsel %vm4882, %v4853, %v4026
        %v4911 = vsel %vm4882, %v4854, %v4028
        %v4912 = vsel %vm4882, %v4855, %v4030
        %v4913 = vsel %vm4882, %v4856, %v4032
        %v4914 = vsel %vm4882, %v4857, %v4034
        %v4915 = vsel %vm4882, %v4858, %v4036
        %v4916 = vsel %vm4882, %v4859, %v4038
        %v4917 = vsel %vm4882, %v4860, %v4040
        %v4918 = vsel %vm4882, %v4861, %v4042
        %v4919 = vsel %vm4882, %v4862, %v4044
        %v4920 = vsel %vm4882, %v4863, %v4046
        %v4921 = vsel %vm4882, %v4864, %v4048
        %v4922 = vsel %vm4882, %v4865, %v4050
        %v4923 = vsel %vm4882, %v4866, %v4052
        %v4924 = vsel %vm4882, %v4867, %v4054
        %v4925 = vsel %vm4882, %v4868, %v4056
        %v4926 = vsel %vm4882, %v4869, %v4058
        %v4927 = vsel %vm4882, %v4870, %v4060
        %v4928 = vsel %vm4882, %v4871, %v4062
        %v4929 = vsel %vm4882, %v4872, %v4064
        %v4930 = vsel %vm4882, %v4873, %v4066
        %v4931 = vsel %vm4882, %v4874, %v4068
        %v4932 = vsel %vm4882, %v4875, %v4070
        %v4933 = vsel %vm4882, %v4876, %v4072
        %v4934 = vsel %vm4882, %v4877, %v4074
        %v4935 = vsel %vm4882, %v4878, %v4076
        %v4936 = vsel %vm4882, %v4879, %v4078
        %v4937 = vsel %vm4882, %v4880, %v4080
        %v4938 = vsel %vm4882, %v4881, %v4082
        %vm4939 = vcmask 48128
        %v4940 = vsel %vm4939, %v4883, %v4140
        %v4941 = vsel %vm4939, %v4884, %v4142
        %v4942 = vsel %vm4939, %v4885, %v4144
        %v4943 = vsel %vm4939, %v4886, %v4146
        %v4944 = vsel %vm4939, %v4887, %v4148
        %v4945 = vsel %vm4939, %v4888, %v4150
        %v4946 = vsel %vm4939, %v4889, %v4152
        %v4947 = vsel %vm4939, %v4890, %v4154
        %v4948 = vsel %vm4939, %v4891, %v4156
        %v4949 = vsel %vm4939, %v4892, %v4158
        %v4950 = vsel %vm4939, %v4893, %v4160
        %v4951 = vsel %vm4939, %v4894, %v4162
        %v4952 = vsel %vm4939, %v4895, %v4164
        %v4953 = vsel %vm4939, %v4896, %v4166
        %v4954 = vsel %vm4939, %v4897, %v4168
        %v4955 = vsel %vm4939, %v4898, %v4170
        %v4956 = vsel %vm4939, %v4899, %v4172
        %v4957 = vsel %vm4939, %v4900, %v4174
        %v4958 = vsel %vm4939, %v4901, %v4176
        %v4959 = vsel %vm4939, %v4902, %v4178
        %v4960 = vsel %vm4939, %v4903, %v4180
        %v4961 = vsel %vm4939, %v4904, %v4182
        %v4962 = vsel %vm4939, %v4905, %v4184
        %v4963 = vsel %vm4939, %v4906, %v4186
        %v4964 = vsel %vm4939, %v4907, %v4188
        %v4965 = vsel %vm4939, %v4908, %v4190
        %v4966 = vsel %vm4939, %v4909, %v4192
        %v4967 = vsel %vm4939, %v4910, %v4194
        %v4968 = vsel %vm4939, %v4911, %v4196
        %v4969 = vsel %vm4939, %v4912, %v4198
        %v4970 = vsel %vm4939, %v4913, %v4200
        %v4971 = vsel %vm4939, %v4914, %v4202
        %v4972 = vsel %vm4939, %v4915, %v4204
        %v4973 = vsel %vm4939, %v4916, %v4206
        %v4974 = vsel %vm4939, %v4917, %v4208
        %v4975 = vsel %vm4939, %v4918, %v4210
        %v4976 = vsel %vm4939, %v4919, %v4212
        %v4977 = vsel %vm4939, %v4920, %v4214
        %v4978 = vsel %vm4939, %v4921, %v4216
        %v4979 = vsel %vm4939, %v4922, %v4218
        %v4980 = vsel %vm4939, %v4923, %v4220
        %v4981 = vsel %vm4939, %v4924, %v4222
        %v4982 = vsel %vm4939, %v4925, %v4224
        %v4983 = vsel %vm4939, %v4926, %v4226
        %v4984 = vsel %vm4939, %v4927, %v4228
        %v4985 = vsel %vm4939, %v4928, %v4230
        %v4986 = vsel %vm4939, %v4929, %v4232
        %v4987 = vsel %vm4939, %v4930, %v4234
        %v4988 = vsel %vm4939, %v4931, %v4236
        %v4989 = vsel %vm4939, %v4932, %v4238
        %v4990 = vsel %vm4939, %v4933, %v4240
        %v4991 = vsel %vm4939, %v4934, %v4242
        %v4992 = vsel %vm4939, %v4935, %v4244
        %v4993 = vsel %vm4939, %v4936, %v4246
        %v4994 = vsel %vm4939, %v4937, %v4248
        %v4995 = vsel %vm4939, %v4938, %v4250
        %vm4996 = vcmask 56320
        %v4997 = vsel %vm4996, %v4940, %v4314
        %v4998 = vsel %vm4996, %v4941, %v4316
        %v4999 = vsel %vm4996, %v4942, %v4318
        %v5000 = vsel %vm4996, %v4943, %v4320
        %v5001 = vsel %vm4996, %v4944, %v4322
        %v5002 = vsel %vm4996, %v4945, %v4324
        %v5003 = vsel %vm4996, %v4946, %v4326
        %v5004 = vsel %vm4996, %v4947, %v4328
        %v5005 = vsel %vm4996, %v4948, %v4330
        %v5006 = vsel %vm4996, %v4949, %v4332
        %v5007 = vsel %vm4996, %v4950, %v4334
        %v5008 = vsel %vm4996, %v4951, %v4336
        %v5009 = vsel %vm4996, %v4952, %v4338
        %v5010 = vsel %vm4996, %v4953, %v4340
        %v5011 = vsel %vm4996, %v4954, %v4342
        %v5012 = vsel %vm4996, %v4955, %v4344
        %v5013 = vsel %vm4996, %v4956, %v4346
        %v5014 = vsel %vm4996, %v4957, %v4348
        %v5015 = vsel %vm4996, %v4958, %v4350
        %v5016 = vsel %vm4996, %v4959, %v4352
        %v5017 = vsel %vm4996, %v4960, %v4354
        %v5018 = vsel %vm4996, %v4961, %v4356
        %v5019 = vsel %vm4996, %v4962, %v4358
        %v5020 = vsel %vm4996, %v4963, %v4360
        %v5021 = vsel %vm4996, %v4964, %v4362
        %v5022 = vsel %vm4996, %v4965, %v4364
        %v5023 = vsel %vm4996, %v4966, %v4366
        %v5024 = vsel %vm4996, %v4967, %v4368
        %v5025 = vsel %vm4996, %v4968, %v4370
        %v5026 = vsel %vm4996, %v4969, %v4372
        %v5027 = vsel %vm4996, %v4970, %v4374
        %v5028 = vsel %vm4996, %v4971, %v4376
        %v5029 = vsel %vm4996, %v4972, %v4378
        %v5030 = vsel %vm4996, %v4973, %v4380
        %v5031 = vsel %vm4996, %v4974, %v4382
        %v5032 = vsel %vm4996, %v4975, %v4384
        %v5033 = vsel %vm4996, %v4976, %v4386
        %v5034 = vsel %vm4996, %v4977, %v4388
        %v5035 = vsel %vm4996, %v4978, %v4390
        %v5036 = vsel %vm4996, %v4979, %v4392
        %v5037 = vsel %vm4996, %v4980, %v4394
        %v5038 = vsel %vm4996, %v4981, %v4396
        %v5039 = vsel %vm4996, %v4982, %v4398
        %v5040 = vsel %vm4996, %v4983, %v4400
        %v5041 = vsel %vm4996, %v4984, %v4402
        %v5042 = vsel %vm4996, %v4985, %v4404
        %v5043 = vsel %vm4996, %v4986, %v4406
        %v5044 = vsel %vm4996, %v4987, %v4408
        %v5045 = vsel %vm4996, %v4988, %v4410
        %v5046 = vsel %vm4996, %v4989, %v4412
        %v5047 = vsel %vm4996, %v4990, %v4414
        %v5048 = vsel %vm4996, %v4991, %v4416
        %v5049 = vsel %vm4996, %v4992, %v4418
        %v5050 = vsel %vm4996, %v4993, %v4420
        %v5051 = vsel %vm4996, %v4994, %v4422
        %v5052 = vsel %vm4996, %v4995, %v4424
        %v5053 = vsel %vm2660, %v4997, %v4488
        %v5054 = vsel %vm2660, %v4998, %v4490
        %v5055 = vsel %vm2660, %v4999, %v4492
        %v5056 = vsel %vm2660, %v5000, %v4494
        %v5057 = vsel %vm2660, %v5001, %v4496
        %v5058 = vsel %vm2660, %v5002, %v4498
        %v5059 = vsel %vm2660, %v5003, %v4500
        %v5060 = vsel %vm2660, %v5004, %v4502
        %v5061 = vsel %vm2660, %v5005, %v4504
        %v5062 = vsel %vm2660, %v5006, %v4506
        %v5063 = vsel %vm2660, %v5007, %v4508
        %v5064 = vsel %vm2660, %v5008, %v4510
        %v5065 = vsel %vm2660, %v5009, %v4512
        %v5066 = vsel %vm2660, %v5010, %v4514
        %v5067 = vsel %vm2660, %v5011, %v4516
        %v5068 = vsel %vm2660, %v5012, %v4518
        %v5069 = vsel %vm2660, %v5013, %v4520
        %v5070 = vsel %vm2660, %v5014, %v4522
        %v5071 = vsel %vm2660, %v5015, %v4524
        %v5072 = vsel %vm2660, %v5016, %v4526
        %v5073 = vsel %vm2660, %v5017, %v4528
        %v5074 = vsel %vm2660, %v5018, %v4530
        %v5075 = vsel %vm2660, %v5019, %v4532
        %v5076 = vsel %vm2660, %v5020, %v4534
        %v5077 = vsel %vm2660, %v5021, %v4536
        %v5078 = vsel %vm2660, %v5022, %v4538
        %v5079 = vsel %vm2660, %v5023, %v4540
        %v5080 = vsel %vm2660, %v5024, %v4542
        %v5081 = vsel %vm2660, %v5025, %v4544
        %v5082 = vsel %vm2660, %v5026, %v4546
        %v5083 = vsel %vm2660, %v5027, %v4548
        %v5084 = vsel %vm2660, %v5028, %v4550
        %v5085 = vsel %vm2660, %v5029, %v4552
        %v5086 = vsel %vm2660, %v5030, %v4554
        %v5087 = vsel %vm2660, %v5031, %v4556
        %v5088 = vsel %vm2660, %v5032, %v4558
        %v5089 = vsel %vm2660, %v5033, %v4560
        %v5090 = vsel %vm2660, %v5034, %v4562
        %v5091 = vsel %vm2660, %v5035, %v4564
        %v5092 = vsel %vm2660, %v5036, %v4566
        %v5093 = vsel %vm2660, %v5037, %v4568
        %v5094 = vsel %vm2660, %v5038, %v4570
        %v5095 = vsel %vm2660, %v5039, %v4572
        %v5096 = vsel %vm2660, %v5040, %v4574
        %v5097 = vsel %vm2660, %v5041, %v4576
        %v5098 = vsel %vm2660, %v5042, %v4578
        %v5099 = vsel %vm2660, %v5043, %v4580
        %v5100 = vsel %vm2660, %v5044, %v4582
        %v5101 = vsel %vm2660, %v5045, %v4584
        %v5102 = vsel %vm2660, %v5046, %v4586
        %v5103 = vsel %vm2660, %v5047, %v4588
        %v5104 = vsel %vm2660, %v5048, %v4590
        %v5105 = vsel %vm2660, %v5049, %v4592
        %v5106 = vsel %vm2660, %v5050, %v4594
        %v5107 = vsel %vm2660, %v5051, %v4596
        %v5108 = vsel %vm2660, %v5052, %v4598
        %v5166 = vrot.slane %v1356, 1
        %v5167 = vrot.slane %v1359, 1
        %v5168 = vsel %vm3059, %v5166, %v5167
        %v5169 = vrot.slane %v1362, 1
        %v5170 = vsel %vm3059, %v5167, %v5169
        %v5171 = vrot.slane %v1365, 1
        %v5172 = vsel %vm3059, %v5169, %v5171
        %v5173 = vrot.slane %v1368, 1
        %v5174 = vsel %vm3059, %v5171, %v5173
        %v5175 = vrot.slane %v1371, 1
        %v5176 = vsel %vm3059, %v5173, %v5175
        %v5177 = vrot.slane %v1374, 1
        %v5178 = vsel %vm3059, %v5175, %v5177
        %v5179 = vrot.slane %v1377, 1
        %v5180 = vsel %vm3059, %v5177, %v5179
        %v5181 = vrot.slane %v1380, 1
        %v5182 = vsel %vm3059, %v5179, %v5181
        %v5183 = vrot.slane %v1383, 1
        %v5184 = vsel %vm3059, %v5181, %v5183
        %v5185 = vrot.slane %v1386, 1
        %v5186 = vsel %vm3059, %v5183, %v5185
        %v5187 = vrot.slane %v1389, 1
        %v5188 = vsel %vm3059, %v5185, %v5187
        %v5189 = vrot.slane %v1392, 1
        %v5190 = vsel %vm3059, %v5187, %v5189
        %v5191 = vrot.slane %v1395, 1
        %v5192 = vsel %vm3059, %v5189, %v5191
        %v5193 = vrot.slane %v1398, 1
        %v5194 = vsel %vm3059, %v5191, %v5193
        %v5195 = vrot.slane %v1401, 1
        %v5196 = vsel %vm3059, %v5193, %v5195
        %v5197 = vrot.slane %v1404, 1
        %v5198 = vsel %vm3059, %v5195, %v5197
        %v5199 = vrot.slane %v1407, 1
        %v5200 = vsel %vm3059, %v5197, %v5199
        %v5201 = vrot.slane %v1410, 1
        %v5202 = vsel %vm3059, %v5199, %v5201
        %v5203 = vrot.slane %v1413, 1
        %v5204 = vsel %vm3059, %v5201, %v5203
        %v5205 = vrot.slane %v1416, 1
        %v5206 = vsel %vm3059, %v5203, %v5205
        %v5207 = vrot.slane %v1419, 1
        %v5208 = vsel %vm3059, %v5205, %v5207
        %v5209 = vrot.slane %v1422, 1
        %v5210 = vsel %vm3059, %v5207, %v5209
        %v5211 = vrot.slane %v1425, 1
        %v5212 = vsel %vm3059, %v5209, %v5211
        %v5213 = vrot.slane %v1428, 1
        %v5214 = vsel %vm3059, %v5211, %v5213
        %v5215 = vrot.slane %v1431, 1
        %v5216 = vsel %vm3059, %v5213, %v5215
        %v5217 = vrot.slane %v1434, 1
        %v5218 = vsel %vm3059, %v5215, %v5217
        %v5219 = vrot.slane %v1437, 1
        %v5220 = vsel %vm3059, %v5217, %v5219
        %v5221 = vrot.slane %v1440, 1
        %v5222 = vsel %vm3059, %v5219, %v5221
        %v5223 = vrot.slane %v1443, 1
        %v5224 = vsel %vm3059, %v5221, %v5223
        %v5225 = vrot.slane %v1446, 1
        %v5226 = vsel %vm3059, %v5223, %v5225
        %v5227 = vrot.slane %v1449, 1
        %v5228 = vsel %vm3059, %v5225, %v5227
        %v5229 = vrot.slane %v1452, 1
        %v5230 = vsel %vm3059, %v5227, %v5229
        %v5231 = vrot.slane %v1455, 1
        %v5232 = vsel %vm3059, %v5229, %v5231
        %v5233 = vrot.slane %v1458, 1
        %v5234 = vsel %vm3059, %v5231, %v5233
        %v5235 = vrot.slane %v1461, 1
        %v5236 = vsel %vm3059, %v5233, %v5235
        %v5237 = vrot.slane %v1464, 1
        %v5238 = vsel %vm3059, %v5235, %v5237
        %v5239 = vrot.slane %v1467, 1
        %v5240 = vsel %vm3059, %v5237, %v5239
        %v5241 = vrot.slane %v1470, 1
        %v5242 = vsel %vm3059, %v5239, %v5241
        %v5243 = vrot.slane %v1473, 1
        %v5244 = vsel %vm3059, %v5241, %v5243
        %v5245 = vrot.slane %v1476, 1
        %v5246 = vsel %vm3059, %v5243, %v5245
        %v5247 = vrot.slane %v1479, 1
        %v5248 = vsel %vm3059, %v5245, %v5247
        %v5249 = vrot.slane %v1482, 1
        %v5250 = vsel %vm3059, %v5247, %v5249
        %v5251 = vrot.slane %v1485, 1
        %v5252 = vsel %vm3059, %v5249, %v5251
        %v5253 = vrot.slane %v1488, 1
        %v5254 = vsel %vm3059, %v5251, %v5253
        %v5255 = vrot.slane %v1491, 1
        %v5256 = vsel %vm3059, %v5253, %v5255
        %v5257 = vrot.slane %v1494, 1
        %v5258 = vsel %vm3059, %v5255, %v5257
        %v5259 = vrot.slane %v1497, 1
        %v5260 = vsel %vm3059, %v5257, %v5259
        %v5261 = vrot.slane %v1500, 1
        %v5262 = vsel %vm3059, %v5259, %v5261
        %v5263 = vrot.slane %v1503, 1
        %v5264 = vsel %vm3059, %v5261, %v5263
        %v5265 = vrot.slane %v1506, 1
        %v5266 = vsel %vm3059, %v5263, %v5265
        %v5267 = vrot.slane %v1509, 1
        %v5268 = vsel %vm3059, %v5265, %v5267
        %v5269 = vrot.slane %v1512, 1
        %v5270 = vsel %vm3059, %v5267, %v5269
        %v5271 = vrot.slane %v1515, 1
        %v5272 = vsel %vm3059, %v5269, %v5271
        %v5273 = vrot.slane %v1518, 1
        %v5274 = vsel %vm3059, %v5271, %v5273
        %v5275 = vrot.slane %v1521, 1
        %v5276 = vsel %vm3059, %v5273, %v5275
        %v5277 = vrot.slane %v1524, 1
        %v5278 = vsel %vm3059, %v5275, %v5277
        %v5335 = vadd.f32 %v1356, %v5168
        %v5336 = vadd.f32 %v1359, %v5170
        %v5337 = vadd.f32 %v1362, %v5172
        %v5338 = vadd.f32 %v1365, %v5174
        %v5339 = vadd.f32 %v1368, %v5176
        %v5340 = vadd.f32 %v1371, %v5178
        %v5341 = vadd.f32 %v1374, %v5180
        %v5342 = vadd.f32 %v1377, %v5182
        %v5343 = vadd.f32 %v1380, %v5184
        %v5344 = vadd.f32 %v1383, %v5186
        %v5345 = vadd.f32 %v1386, %v5188
        %v5346 = vadd.f32 %v1389, %v5190
        %v5347 = vadd.f32 %v1392, %v5192
        %v5348 = vadd.f32 %v1395, %v5194
        %v5349 = vadd.f32 %v1398, %v5196
        %v5350 = vadd.f32 %v1401, %v5198
        %v5351 = vadd.f32 %v1404, %v5200
        %v5352 = vadd.f32 %v1407, %v5202
        %v5353 = vadd.f32 %v1410, %v5204
        %v5354 = vadd.f32 %v1413, %v5206
        %v5355 = vadd.f32 %v1416, %v5208
        %v5356 = vadd.f32 %v1419, %v5210
        %v5357 = vadd.f32 %v1422, %v5212
        %v5358 = vadd.f32 %v1425, %v5214
        %v5359 = vadd.f32 %v1428, %v5216
        %v5360 = vadd.f32 %v1431, %v5218
        %v5361 = vadd.f32 %v1434, %v5220
        %v5362 = vadd.f32 %v1437, %v5222
        %v5363 = vadd.f32 %v1440, %v5224
        %v5364 = vadd.f32 %v1443, %v5226
        %v5365 = vadd.f32 %v1446, %v5228
        %v5366 = vadd.f32 %v1449, %v5230
        %v5367 = vadd.f32 %v1452, %v5232
        %v5368 = vadd.f32 %v1455, %v5234
        %v5369 = vadd.f32 %v1458, %v5236
        %v5370 = vadd.f32 %v1461, %v5238
        %v5371 = vadd.f32 %v1464, %v5240
        %v5372 = vadd.f32 %v1467, %v5242
        %v5373 = vadd.f32 %v1470, %v5244
        %v5374 = vadd.f32 %v1473, %v5246
        %v5375 = vadd.f32 %v1476, %v5248
        %v5376 = vadd.f32 %v1479, %v5250
        %v5377 = vadd.f32 %v1482, %v5252
        %v5378 = vadd.f32 %v1485, %v5254
        %v5379 = vadd.f32 %v1488, %v5256
        %v5380 = vadd.f32 %v1491, %v5258
        %v5381 = vadd.f32 %v1494, %v5260
        %v5382 = vadd.f32 %v1497, %v5262
        %v5383 = vadd.f32 %v1500, %v5264
        %v5384 = vadd.f32 %v1503, %v5266
        %v5385 = vadd.f32 %v1506, %v5268
        %v5386 = vadd.f32 %v1509, %v5270
        %v5387 = vadd.f32 %v1512, %v5272
        %v5388 = vadd.f32 %v1515, %v5274
        %v5389 = vadd.f32 %v1518, %v5276
        %v5390 = vadd.f32 %v1521, %v5278
        %v5391 = vrot.slane %v1356, 2
        %v5392 = vrot.slane %v1359, 2
        %v5393 = vsel %vm3341, %v5391, %v5392
        %v5394 = vrot.slane %v1362, 2
        %v5395 = vsel %vm3341, %v5392, %v5394
        %v5396 = vrot.slane %v1365, 2
        %v5397 = vsel %vm3341, %v5394, %v5396
        %v5398 = vrot.slane %v1368, 2
        %v5399 = vsel %vm3341, %v5396, %v5398
        %v5400 = vrot.slane %v1371, 2
        %v5401 = vsel %vm3341, %v5398, %v5400
        %v5402 = vrot.slane %v1374, 2
        %v5403 = vsel %vm3341, %v5400, %v5402
        %v5404 = vrot.slane %v1377, 2
        %v5405 = vsel %vm3341, %v5402, %v5404
        %v5406 = vrot.slane %v1380, 2
        %v5407 = vsel %vm3341, %v5404, %v5406
        %v5408 = vrot.slane %v1383, 2
        %v5409 = vsel %vm3341, %v5406, %v5408
        %v5410 = vrot.slane %v1386, 2
        %v5411 = vsel %vm3341, %v5408, %v5410
        %v5412 = vrot.slane %v1389, 2
        %v5413 = vsel %vm3341, %v5410, %v5412
        %v5414 = vrot.slane %v1392, 2
        %v5415 = vsel %vm3341, %v5412, %v5414
        %v5416 = vrot.slane %v1395, 2
        %v5417 = vsel %vm3341, %v5414, %v5416
        %v5418 = vrot.slane %v1398, 2
        %v5419 = vsel %vm3341, %v5416, %v5418
        %v5420 = vrot.slane %v1401, 2
        %v5421 = vsel %vm3341, %v5418, %v5420
        %v5422 = vrot.slane %v1404, 2
        %v5423 = vsel %vm3341, %v5420, %v5422
        %v5424 = vrot.slane %v1407, 2
        %v5425 = vsel %vm3341, %v5422, %v5424
        %v5426 = vrot.slane %v1410, 2
        %v5427 = vsel %vm3341, %v5424, %v5426
        %v5428 = vrot.slane %v1413, 2
        %v5429 = vsel %vm3341, %v5426, %v5428
        %v5430 = vrot.slane %v1416, 2
        %v5431 = vsel %vm3341, %v5428, %v5430
        %v5432 = vrot.slane %v1419, 2
        %v5433 = vsel %vm3341, %v5430, %v5432
        %v5434 = vrot.slane %v1422, 2
        %v5435 = vsel %vm3341, %v5432, %v5434
        %v5436 = vrot.slane %v1425, 2
        %v5437 = vsel %vm3341, %v5434, %v5436
        %v5438 = vrot.slane %v1428, 2
        %v5439 = vsel %vm3341, %v5436, %v5438
        %v5440 = vrot.slane %v1431, 2
        %v5441 = vsel %vm3341, %v5438, %v5440
        %v5442 = vrot.slane %v1434, 2
        %v5443 = vsel %vm3341, %v5440, %v5442
        %v5444 = vrot.slane %v1437, 2
        %v5445 = vsel %vm3341, %v5442, %v5444
        %v5446 = vrot.slane %v1440, 2
        %v5447 = vsel %vm3341, %v5444, %v5446
        %v5448 = vrot.slane %v1443, 2
        %v5449 = vsel %vm3341, %v5446, %v5448
        %v5450 = vrot.slane %v1446, 2
        %v5451 = vsel %vm3341, %v5448, %v5450
        %v5452 = vrot.slane %v1449, 2
        %v5453 = vsel %vm3341, %v5450, %v5452
        %v5454 = vrot.slane %v1452, 2
        %v5455 = vsel %vm3341, %v5452, %v5454
        %v5456 = vrot.slane %v1455, 2
        %v5457 = vsel %vm3341, %v5454, %v5456
        %v5458 = vrot.slane %v1458, 2
        %v5459 = vsel %vm3341, %v5456, %v5458
        %v5460 = vrot.slane %v1461, 2
        %v5461 = vsel %vm3341, %v5458, %v5460
        %v5462 = vrot.slane %v1464, 2
        %v5463 = vsel %vm3341, %v5460, %v5462
        %v5464 = vrot.slane %v1467, 2
        %v5465 = vsel %vm3341, %v5462, %v5464
        %v5466 = vrot.slane %v1470, 2
        %v5467 = vsel %vm3341, %v5464, %v5466
        %v5468 = vrot.slane %v1473, 2
        %v5469 = vsel %vm3341, %v5466, %v5468
        %v5470 = vrot.slane %v1476, 2
        %v5471 = vsel %vm3341, %v5468, %v5470
        %v5472 = vrot.slane %v1479, 2
        %v5473 = vsel %vm3341, %v5470, %v5472
        %v5474 = vrot.slane %v1482, 2
        %v5475 = vsel %vm3341, %v5472, %v5474
        %v5476 = vrot.slane %v1485, 2
        %v5477 = vsel %vm3341, %v5474, %v5476
        %v5478 = vrot.slane %v1488, 2
        %v5479 = vsel %vm3341, %v5476, %v5478
        %v5480 = vrot.slane %v1491, 2
        %v5481 = vsel %vm3341, %v5478, %v5480
        %v5482 = vrot.slane %v1494, 2
        %v5483 = vsel %vm3341, %v5480, %v5482
        %v5484 = vrot.slane %v1497, 2
        %v5485 = vsel %vm3341, %v5482, %v5484
        %v5486 = vrot.slane %v1500, 2
        %v5487 = vsel %vm3341, %v5484, %v5486
        %v5488 = vrot.slane %v1503, 2
        %v5489 = vsel %vm3341, %v5486, %v5488
        %v5490 = vrot.slane %v1506, 2
        %v5491 = vsel %vm3341, %v5488, %v5490
        %v5492 = vrot.slane %v1509, 2
        %v5493 = vsel %vm3341, %v5490, %v5492
        %v5494 = vrot.slane %v1512, 2
        %v5495 = vsel %vm3341, %v5492, %v5494
        %v5496 = vrot.slane %v1515, 2
        %v5497 = vsel %vm3341, %v5494, %v5496
        %v5498 = vrot.slane %v1518, 2
        %v5499 = vsel %vm3341, %v5496, %v5498
        %v5500 = vrot.slane %v1521, 2
        %v5501 = vsel %vm3341, %v5498, %v5500
        %v5502 = vrot.slane %v1524, 2
        %v5503 = vsel %vm3341, %v5500, %v5502
        %v5560 = vadd.f32 %v5335, %v5393
        %v5561 = vadd.f32 %v5336, %v5395
        %v5562 = vadd.f32 %v5337, %v5397
        %v5563 = vadd.f32 %v5338, %v5399
        %v5564 = vadd.f32 %v5339, %v5401
        %v5565 = vadd.f32 %v5340, %v5403
        %v5566 = vadd.f32 %v5341, %v5405
        %v5567 = vadd.f32 %v5342, %v5407
        %v5568 = vadd.f32 %v5343, %v5409
        %v5569 = vadd.f32 %v5344, %v5411
        %v5570 = vadd.f32 %v5345, %v5413
        %v5571 = vadd.f32 %v5346, %v5415
        %v5572 = vadd.f32 %v5347, %v5417
        %v5573 = vadd.f32 %v5348, %v5419
        %v5574 = vadd.f32 %v5349, %v5421
        %v5575 = vadd.f32 %v5350, %v5423
        %v5576 = vadd.f32 %v5351, %v5425
        %v5577 = vadd.f32 %v5352, %v5427
        %v5578 = vadd.f32 %v5353, %v5429
        %v5579 = vadd.f32 %v5354, %v5431
        %v5580 = vadd.f32 %v5355, %v5433
        %v5581 = vadd.f32 %v5356, %v5435
        %v5582 = vadd.f32 %v5357, %v5437
        %v5583 = vadd.f32 %v5358, %v5439
        %v5584 = vadd.f32 %v5359, %v5441
        %v5585 = vadd.f32 %v5360, %v5443
        %v5586 = vadd.f32 %v5361, %v5445
        %v5587 = vadd.f32 %v5362, %v5447
        %v5588 = vadd.f32 %v5363, %v5449
        %v5589 = vadd.f32 %v5364, %v5451
        %v5590 = vadd.f32 %v5365, %v5453
        %v5591 = vadd.f32 %v5366, %v5455
        %v5592 = vadd.f32 %v5367, %v5457
        %v5593 = vadd.f32 %v5368, %v5459
        %v5594 = vadd.f32 %v5369, %v5461
        %v5595 = vadd.f32 %v5370, %v5463
        %v5596 = vadd.f32 %v5371, %v5465
        %v5597 = vadd.f32 %v5372, %v5467
        %v5598 = vadd.f32 %v5373, %v5469
        %v5599 = vadd.f32 %v5374, %v5471
        %v5600 = vadd.f32 %v5375, %v5473
        %v5601 = vadd.f32 %v5376, %v5475
        %v5602 = vadd.f32 %v5377, %v5477
        %v5603 = vadd.f32 %v5378, %v5479
        %v5604 = vadd.f32 %v5379, %v5481
        %v5605 = vadd.f32 %v5380, %v5483
        %v5606 = vadd.f32 %v5381, %v5485
        %v5607 = vadd.f32 %v5382, %v5487
        %v5608 = vadd.f32 %v5383, %v5489
        %v5609 = vadd.f32 %v5384, %v5491
        %v5610 = vadd.f32 %v5385, %v5493
        %v5611 = vadd.f32 %v5386, %v5495
        %v5612 = vadd.f32 %v5387, %v5497
        %v5613 = vadd.f32 %v5388, %v5499
        %v5614 = vadd.f32 %v5389, %v5501
        %v5615 = vadd.f32 %v5390, %v5503
        %v5616 = vadd.f32 %v5560, %v1365
        %v5617 = vadd.f32 %v5561, %v1368
        %v5618 = vadd.f32 %v5562, %v1371
        %v5619 = vadd.f32 %v5563, %v1374
        %v5620 = vadd.f32 %v5564, %v1377
        %v5621 = vadd.f32 %v5565, %v1380
        %v5622 = vadd.f32 %v5566, %v1383
        %v5623 = vadd.f32 %v5567, %v1386
        %v5624 = vadd.f32 %v5568, %v1389
        %v5625 = vadd.f32 %v5569, %v1392
        %v5626 = vadd.f32 %v5570, %v1395
        %v5627 = vadd.f32 %v5571, %v1398
        %v5628 = vadd.f32 %v5572, %v1401
        %v5629 = vadd.f32 %v5573, %v1404
        %v5630 = vadd.f32 %v5574, %v1407
        %v5631 = vadd.f32 %v5575, %v1410
        %v5632 = vadd.f32 %v5576, %v1413
        %v5633 = vadd.f32 %v5577, %v1416
        %v5634 = vadd.f32 %v5578, %v1419
        %v5635 = vadd.f32 %v5579, %v1422
        %v5636 = vadd.f32 %v5580, %v1425
        %v5637 = vadd.f32 %v5581, %v1428
        %v5638 = vadd.f32 %v5582, %v1431
        %v5639 = vadd.f32 %v5583, %v1434
        %v5640 = vadd.f32 %v5584, %v1437
        %v5641 = vadd.f32 %v5585, %v1440
        %v5642 = vadd.f32 %v5586, %v1443
        %v5643 = vadd.f32 %v5587, %v1446
        %v5644 = vadd.f32 %v5588, %v1449
        %v5645 = vadd.f32 %v5589, %v1452
        %v5646 = vadd.f32 %v5590, %v1455
        %v5647 = vadd.f32 %v5591, %v1458
        %v5648 = vadd.f32 %v5592, %v1461
        %v5649 = vadd.f32 %v5593, %v1464
        %v5650 = vadd.f32 %v5594, %v1467
        %v5651 = vadd.f32 %v5595, %v1470
        %v5652 = vadd.f32 %v5596, %v1473
        %v5653 = vadd.f32 %v5597, %v1476
        %v5654 = vadd.f32 %v5598, %v1479
        %v5655 = vadd.f32 %v5599, %v1482
        %v5656 = vadd.f32 %v5600, %v1485
        %v5657 = vadd.f32 %v5601, %v1488
        %v5658 = vadd.f32 %v5602, %v1491
        %v5659 = vadd.f32 %v5603, %v1494
        %v5660 = vadd.f32 %v5604, %v1497
        %v5661 = vadd.f32 %v5605, %v1500
        %v5662 = vadd.f32 %v5606, %v1503
        %v5663 = vadd.f32 %v5607, %v1506
        %v5664 = vadd.f32 %v5608, %v1509
        %v5665 = vadd.f32 %v5609, %v1512
        %v5666 = vadd.f32 %v5610, %v1515
        %v5667 = vadd.f32 %v5611, %v1518
        %v5668 = vadd.f32 %v5612, %v1521
        %v5669 = vadd.f32 %v5613, %v1524
        %v5670 = vadd.f32 %v5614, %v1527
        %v5671 = vadd.f32 %v5615, %v1530
        %v5675 = vrot.slane %v1527, 1
        %v5676 = vsel %vm3059, %v5277, %v5675
        %v5677 = vrot.slane %v1530, 1
        %v5678 = vsel %vm3059, %v5675, %v5677
        %v5679 = vrot.slane %v1533, 1
        %v5680 = vsel %vm3059, %v5677, %v5679
        %v5684 = vadd.f32 %v5616, %v5174
        %v5685 = vadd.f32 %v5617, %v5176
        %v5686 = vadd.f32 %v5618, %v5178
        %v5687 = vadd.f32 %v5619, %v5180
        %v5688 = vadd.f32 %v5620, %v5182
        %v5689 = vadd.f32 %v5621, %v5184
        %v5690 = vadd.f32 %v5622, %v5186
        %v5691 = vadd.f32 %v5623, %v5188
        %v5692 = vadd.f32 %v5624, %v5190
        %v5693 = vadd.f32 %v5625, %v5192
        %v5694 = vadd.f32 %v5626, %v5194
        %v5695 = vadd.f32 %v5627, %v5196
        %v5696 = vadd.f32 %v5628, %v5198
        %v5697 = vadd.f32 %v5629, %v5200
        %v5698 = vadd.f32 %v5630, %v5202
        %v5699 = vadd.f32 %v5631, %v5204
        %v5700 = vadd.f32 %v5632, %v5206
        %v5701 = vadd.f32 %v5633, %v5208
        %v5702 = vadd.f32 %v5634, %v5210
        %v5703 = vadd.f32 %v5635, %v5212
        %v5704 = vadd.f32 %v5636, %v5214
        %v5705 = vadd.f32 %v5637, %v5216
        %v5706 = vadd.f32 %v5638, %v5218
        %v5707 = vadd.f32 %v5639, %v5220
        %v5708 = vadd.f32 %v5640, %v5222
        %v5709 = vadd.f32 %v5641, %v5224
        %v5710 = vadd.f32 %v5642, %v5226
        %v5711 = vadd.f32 %v5643, %v5228
        %v5712 = vadd.f32 %v5644, %v5230
        %v5713 = vadd.f32 %v5645, %v5232
        %v5714 = vadd.f32 %v5646, %v5234
        %v5715 = vadd.f32 %v5647, %v5236
        %v5716 = vadd.f32 %v5648, %v5238
        %v5717 = vadd.f32 %v5649, %v5240
        %v5718 = vadd.f32 %v5650, %v5242
        %v5719 = vadd.f32 %v5651, %v5244
        %v5720 = vadd.f32 %v5652, %v5246
        %v5721 = vadd.f32 %v5653, %v5248
        %v5722 = vadd.f32 %v5654, %v5250
        %v5723 = vadd.f32 %v5655, %v5252
        %v5724 = vadd.f32 %v5656, %v5254
        %v5725 = vadd.f32 %v5657, %v5256
        %v5726 = vadd.f32 %v5658, %v5258
        %v5727 = vadd.f32 %v5659, %v5260
        %v5728 = vadd.f32 %v5660, %v5262
        %v5729 = vadd.f32 %v5661, %v5264
        %v5730 = vadd.f32 %v5662, %v5266
        %v5731 = vadd.f32 %v5663, %v5268
        %v5732 = vadd.f32 %v5664, %v5270
        %v5733 = vadd.f32 %v5665, %v5272
        %v5734 = vadd.f32 %v5666, %v5274
        %v5735 = vadd.f32 %v5667, %v5276
        %v5736 = vadd.f32 %v5668, %v5278
        %v5737 = vadd.f32 %v5669, %v5676
        %v5738 = vadd.f32 %v5670, %v5678
        %v5739 = vadd.f32 %v5671, %v5680
        %v5740 = vrot.slane %v1527, 2
        %v5741 = vsel %vm3341, %v5502, %v5740
        %v5742 = vrot.slane %v1530, 2
        %v5743 = vsel %vm3341, %v5740, %v5742
        %v5744 = vrot.slane %v1533, 2
        %v5745 = vsel %vm3341, %v5742, %v5744
        %v5749 = vadd.f32 %v5684, %v5399
        %v5750 = vadd.f32 %v5685, %v5401
        %v5751 = vadd.f32 %v5686, %v5403
        %v5752 = vadd.f32 %v5687, %v5405
        %v5753 = vadd.f32 %v5688, %v5407
        %v5754 = vadd.f32 %v5689, %v5409
        %v5755 = vadd.f32 %v5690, %v5411
        %v5756 = vadd.f32 %v5691, %v5413
        %v5757 = vadd.f32 %v5692, %v5415
        %v5758 = vadd.f32 %v5693, %v5417
        %v5759 = vadd.f32 %v5694, %v5419
        %v5760 = vadd.f32 %v5695, %v5421
        %v5761 = vadd.f32 %v5696, %v5423
        %v5762 = vadd.f32 %v5697, %v5425
        %v5763 = vadd.f32 %v5698, %v5427
        %v5764 = vadd.f32 %v5699, %v5429
        %v5765 = vadd.f32 %v5700, %v5431
        %v5766 = vadd.f32 %v5701, %v5433
        %v5767 = vadd.f32 %v5702, %v5435
        %v5768 = vadd.f32 %v5703, %v5437
        %v5769 = vadd.f32 %v5704, %v5439
        %v5770 = vadd.f32 %v5705, %v5441
        %v5771 = vadd.f32 %v5706, %v5443
        %v5772 = vadd.f32 %v5707, %v5445
        %v5773 = vadd.f32 %v5708, %v5447
        %v5774 = vadd.f32 %v5709, %v5449
        %v5775 = vadd.f32 %v5710, %v5451
        %v5776 = vadd.f32 %v5711, %v5453
        %v5777 = vadd.f32 %v5712, %v5455
        %v5778 = vadd.f32 %v5713, %v5457
        %v5779 = vadd.f32 %v5714, %v5459
        %v5780 = vadd.f32 %v5715, %v5461
        %v5781 = vadd.f32 %v5716, %v5463
        %v5782 = vadd.f32 %v5717, %v5465
        %v5783 = vadd.f32 %v5718, %v5467
        %v5784 = vadd.f32 %v5719, %v5469
        %v5785 = vadd.f32 %v5720, %v5471
        %v5786 = vadd.f32 %v5721, %v5473
        %v5787 = vadd.f32 %v5722, %v5475
        %v5788 = vadd.f32 %v5723, %v5477
        %v5789 = vadd.f32 %v5724, %v5479
        %v5790 = vadd.f32 %v5725, %v5481
        %v5791 = vadd.f32 %v5726, %v5483
        %v5792 = vadd.f32 %v5727, %v5485
        %v5793 = vadd.f32 %v5728, %v5487
        %v5794 = vadd.f32 %v5729, %v5489
        %v5795 = vadd.f32 %v5730, %v5491
        %v5796 = vadd.f32 %v5731, %v5493
        %v5797 = vadd.f32 %v5732, %v5495
        %v5798 = vadd.f32 %v5733, %v5497
        %v5799 = vadd.f32 %v5734, %v5499
        %v5800 = vadd.f32 %v5735, %v5501
        %v5801 = vadd.f32 %v5736, %v5503
        %v5802 = vadd.f32 %v5737, %v5741
        %v5803 = vadd.f32 %v5738, %v5743
        %v5804 = vadd.f32 %v5739, %v5745
        %v5805 = vadd.f32 %v5749, %v1374
        %v5806 = vadd.f32 %v5750, %v1377
        %v5807 = vadd.f32 %v5751, %v1380
        %v5808 = vadd.f32 %v5752, %v1383
        %v5809 = vadd.f32 %v5753, %v1386
        %v5810 = vadd.f32 %v5754, %v1389
        %v5811 = vadd.f32 %v5755, %v1392
        %v5812 = vadd.f32 %v5756, %v1395
        %v5813 = vadd.f32 %v5757, %v1398
        %v5814 = vadd.f32 %v5758, %v1401
        %v5815 = vadd.f32 %v5759, %v1404
        %v5816 = vadd.f32 %v5760, %v1407
        %v5817 = vadd.f32 %v5761, %v1410
        %v5818 = vadd.f32 %v5762, %v1413
        %v5819 = vadd.f32 %v5763, %v1416
        %v5820 = vadd.f32 %v5764, %v1419
        %v5821 = vadd.f32 %v5765, %v1422
        %v5822 = vadd.f32 %v5766, %v1425
        %v5823 = vadd.f32 %v5767, %v1428
        %v5824 = vadd.f32 %v5768, %v1431
        %v5825 = vadd.f32 %v5769, %v1434
        %v5826 = vadd.f32 %v5770, %v1437
        %v5827 = vadd.f32 %v5771, %v1440
        %v5828 = vadd.f32 %v5772, %v1443
        %v5829 = vadd.f32 %v5773, %v1446
        %v5830 = vadd.f32 %v5774, %v1449
        %v5831 = vadd.f32 %v5775, %v1452
        %v5832 = vadd.f32 %v5776, %v1455
        %v5833 = vadd.f32 %v5777, %v1458
        %v5834 = vadd.f32 %v5778, %v1461
        %v5835 = vadd.f32 %v5779, %v1464
        %v5836 = vadd.f32 %v5780, %v1467
        %v5837 = vadd.f32 %v5781, %v1470
        %v5838 = vadd.f32 %v5782, %v1473
        %v5839 = vadd.f32 %v5783, %v1476
        %v5840 = vadd.f32 %v5784, %v1479
        %v5841 = vadd.f32 %v5785, %v1482
        %v5842 = vadd.f32 %v5786, %v1485
        %v5843 = vadd.f32 %v5787, %v1488
        %v5844 = vadd.f32 %v5788, %v1491
        %v5845 = vadd.f32 %v5789, %v1494
        %v5846 = vadd.f32 %v5790, %v1497
        %v5847 = vadd.f32 %v5791, %v1500
        %v5848 = vadd.f32 %v5792, %v1503
        %v5849 = vadd.f32 %v5793, %v1506
        %v5850 = vadd.f32 %v5794, %v1509
        %v5851 = vadd.f32 %v5795, %v1512
        %v5852 = vadd.f32 %v5796, %v1515
        %v5853 = vadd.f32 %v5797, %v1518
        %v5854 = vadd.f32 %v5798, %v1521
        %v5855 = vadd.f32 %v5799, %v1524
        %v5856 = vadd.f32 %v5800, %v1527
        %v5857 = vadd.f32 %v5801, %v1530
        %v5858 = vadd.f32 %v5802, %v1533
        %v5859 = vadd.f32 %v5803, %v1536
        %v5860 = vadd.f32 %v5804, %v1539
        %v5864 = vrot.slane %v1536, 1
        %v5865 = vsel %vm3059, %v5679, %v5864
        %v5866 = vrot.slane %v1539, 1
        %v5867 = vsel %vm3059, %v5864, %v5866
        %v5868 = vrot.slane %v1542, 1
        %v5869 = vsel %vm3059, %v5866, %v5868
        %v5873 = vadd.f32 %v5805, %v5180
        %v5874 = vadd.f32 %v5806, %v5182
        %v5875 = vadd.f32 %v5807, %v5184
        %v5876 = vadd.f32 %v5808, %v5186
        %v5877 = vadd.f32 %v5809, %v5188
        %v5878 = vadd.f32 %v5810, %v5190
        %v5879 = vadd.f32 %v5811, %v5192
        %v5880 = vadd.f32 %v5812, %v5194
        %v5881 = vadd.f32 %v5813, %v5196
        %v5882 = vadd.f32 %v5814, %v5198
        %v5883 = vadd.f32 %v5815, %v5200
        %v5884 = vadd.f32 %v5816, %v5202
        %v5885 = vadd.f32 %v5817, %v5204
        %v5886 = vadd.f32 %v5818, %v5206
        %v5887 = vadd.f32 %v5819, %v5208
        %v5888 = vadd.f32 %v5820, %v5210
        %v5889 = vadd.f32 %v5821, %v5212
        %v5890 = vadd.f32 %v5822, %v5214
        %v5891 = vadd.f32 %v5823, %v5216
        %v5892 = vadd.f32 %v5824, %v5218
        %v5893 = vadd.f32 %v5825, %v5220
        %v5894 = vadd.f32 %v5826, %v5222
        %v5895 = vadd.f32 %v5827, %v5224
        %v5896 = vadd.f32 %v5828, %v5226
        %v5897 = vadd.f32 %v5829, %v5228
        %v5898 = vadd.f32 %v5830, %v5230
        %v5899 = vadd.f32 %v5831, %v5232
        %v5900 = vadd.f32 %v5832, %v5234
        %v5901 = vadd.f32 %v5833, %v5236
        %v5902 = vadd.f32 %v5834, %v5238
        %v5903 = vadd.f32 %v5835, %v5240
        %v5904 = vadd.f32 %v5836, %v5242
        %v5905 = vadd.f32 %v5837, %v5244
        %v5906 = vadd.f32 %v5838, %v5246
        %v5907 = vadd.f32 %v5839, %v5248
        %v5908 = vadd.f32 %v5840, %v5250
        %v5909 = vadd.f32 %v5841, %v5252
        %v5910 = vadd.f32 %v5842, %v5254
        %v5911 = vadd.f32 %v5843, %v5256
        %v5912 = vadd.f32 %v5844, %v5258
        %v5913 = vadd.f32 %v5845, %v5260
        %v5914 = vadd.f32 %v5846, %v5262
        %v5915 = vadd.f32 %v5847, %v5264
        %v5916 = vadd.f32 %v5848, %v5266
        %v5917 = vadd.f32 %v5849, %v5268
        %v5918 = vadd.f32 %v5850, %v5270
        %v5919 = vadd.f32 %v5851, %v5272
        %v5920 = vadd.f32 %v5852, %v5274
        %v5921 = vadd.f32 %v5853, %v5276
        %v5922 = vadd.f32 %v5854, %v5278
        %v5923 = vadd.f32 %v5855, %v5676
        %v5924 = vadd.f32 %v5856, %v5678
        %v5925 = vadd.f32 %v5857, %v5680
        %v5926 = vadd.f32 %v5858, %v5865
        %v5927 = vadd.f32 %v5859, %v5867
        %v5928 = vadd.f32 %v5860, %v5869
        %v5929 = vrot.slane %v1536, 2
        %v5930 = vsel %vm3341, %v5744, %v5929
        %v5931 = vrot.slane %v1539, 2
        %v5932 = vsel %vm3341, %v5929, %v5931
        %v5933 = vrot.slane %v1542, 2
        %v5934 = vsel %vm3341, %v5931, %v5933
        %v5938 = vadd.f32 %v5873, %v5405
        %v5939 = vadd.f32 %v5874, %v5407
        %v5940 = vadd.f32 %v5875, %v5409
        %v5941 = vadd.f32 %v5876, %v5411
        %v5942 = vadd.f32 %v5877, %v5413
        %v5943 = vadd.f32 %v5878, %v5415
        %v5944 = vadd.f32 %v5879, %v5417
        %v5945 = vadd.f32 %v5880, %v5419
        %v5946 = vadd.f32 %v5881, %v5421
        %v5947 = vadd.f32 %v5882, %v5423
        %v5948 = vadd.f32 %v5883, %v5425
        %v5949 = vadd.f32 %v5884, %v5427
        %v5950 = vadd.f32 %v5885, %v5429
        %v5951 = vadd.f32 %v5886, %v5431
        %v5952 = vadd.f32 %v5887, %v5433
        %v5953 = vadd.f32 %v5888, %v5435
        %v5954 = vadd.f32 %v5889, %v5437
        %v5955 = vadd.f32 %v5890, %v5439
        %v5956 = vadd.f32 %v5891, %v5441
        %v5957 = vadd.f32 %v5892, %v5443
        %v5958 = vadd.f32 %v5893, %v5445
        %v5959 = vadd.f32 %v5894, %v5447
        %v5960 = vadd.f32 %v5895, %v5449
        %v5961 = vadd.f32 %v5896, %v5451
        %v5962 = vadd.f32 %v5897, %v5453
        %v5963 = vadd.f32 %v5898, %v5455
        %v5964 = vadd.f32 %v5899, %v5457
        %v5965 = vadd.f32 %v5900, %v5459
        %v5966 = vadd.f32 %v5901, %v5461
        %v5967 = vadd.f32 %v5902, %v5463
        %v5968 = vadd.f32 %v5903, %v5465
        %v5969 = vadd.f32 %v5904, %v5467
        %v5970 = vadd.f32 %v5905, %v5469
        %v5971 = vadd.f32 %v5906, %v5471
        %v5972 = vadd.f32 %v5907, %v5473
        %v5973 = vadd.f32 %v5908, %v5475
        %v5974 = vadd.f32 %v5909, %v5477
        %v5975 = vadd.f32 %v5910, %v5479
        %v5976 = vadd.f32 %v5911, %v5481
        %v5977 = vadd.f32 %v5912, %v5483
        %v5978 = vadd.f32 %v5913, %v5485
        %v5979 = vadd.f32 %v5914, %v5487
        %v5980 = vadd.f32 %v5915, %v5489
        %v5981 = vadd.f32 %v5916, %v5491
        %v5982 = vadd.f32 %v5917, %v5493
        %v5983 = vadd.f32 %v5918, %v5495
        %v5984 = vadd.f32 %v5919, %v5497
        %v5985 = vadd.f32 %v5920, %v5499
        %v5986 = vadd.f32 %v5921, %v5501
        %v5987 = vadd.f32 %v5922, %v5503
        %v5988 = vadd.f32 %v5923, %v5741
        %v5989 = vadd.f32 %v5924, %v5743
        %v5990 = vadd.f32 %v5925, %v5745
        %v5991 = vadd.f32 %v5926, %v5930
        %v5992 = vadd.f32 %v5927, %v5932
        %v5993 = vadd.f32 %v5928, %v5934
        %v5994 = vld [vmem:[%s508] sm:$0xf]
        %v5995 = vld [vmem:[%s508 + $0x4] sm:$0xf]
        %v5996 = vld [vmem:[%s508 + $0x8] sm:$0xf]
        %v5997 = vld [vmem:[%s508 + $0xc] sm:$0xf]
        %v5998 = vld [vmem:[%s508 + $0x10] sm:$0x3]
        %v6004 = vunpack.c.l.b16 %v5994
        %v6005 = vunpack.c.l.b16 %v5995
        %v6006 = vunpack.c.l.b16 %v5996
        %v6007 = vunpack.c.l.b16 %v5997
        %v6008 = vunpack.c.l.b16 %v5998
        %v6009 = vpack.c.b16 %v6005, %v6004
        %v6010 = vpack.c.b16 %v6007, %v6006
        %v6011 = vpack.c.b16 %v6008, %v6008
        %vm6014 = vcmask 293888
        %v6015 = vsel %vm6014, %v3004, 0
        %v6017 = vsel %vm6014, %v3006, 0
        %v6019 = vsel %vm6014, %v3008, 0
        %v6021 = vsel %vm6014, %v3010, 0
        %v6023 = vsel %vm6014, %v3012, 0
        %v6025 = vsel %vm6014, %v3014, 0
        %v6027 = vsel %vm6014, %v3016, 0
        %v6029 = vsel %vm6014, %v3018, 0
        %v6031 = vsel %vm6014, %v3020, 0
        %v6033 = vsel %vm6014, %v3022, 0
        %v6035 = vsel %vm6014, %v3024, 0
        %v6037 = vsel %vm6014, %v3026, 0
        %v6039 = vsel %vm6014, %v3028, 0
        %v6041 = vsel %vm6014, %v3030, 0
        %v6043 = vsel %vm6014, %v3032, 0
        %v6045 = vsel %vm6014, %v3034, 0
        %v6047 = vsel %vm6014, %v3036, 0
        %v6049 = vsel %vm6014, %v3038, 0
        %v6051 = vsel %vm6014, %v3040, 0
        %v6053 = vsel %vm6014, %v3042, 0
        %v6055 = vsel %vm6014, %v3044, 0
        %v6057 = vsel %vm6014, %v3046, 0
        %v6059 = vsel %vm6014, %v3048, 0
        %v6061 = vsel %vm6014, %v3050, 0
        %v6063 = vsel %vm6014, %v3052, 0
        %v6065 = vsel %vm6014, %v3054, 0
        %v6067 = vsel %vm6014, %v3056, 0
        %v6069 = vsel %vm6014, %v3058, 0
        %vm6071 = vcmask 1041408
        %v6073 = vsel %vm6071, %v6011, 0
        %6075 = vmatprep.subr.bf16.mxu0 0
        %6076 = vmatpush1.bf16.msra.mxu0 0
        %6077 = vmatprep.subr.bf16.mxu0 0
        %6078 = vmatpush1.bf16.msra.mxu0 0
        %6079 = vmatprep.subr.bf16.mxu0 0
        %6080 = vmatpush1.bf16.msra.mxu0 0
        %6081 = vmatprep.subr.bf16.mxu0 0
        %6082 = vmatpush1.bf16.msra.mxu0 0
        %6083 = vmatprep.subr.bf16.mxu0 0
        %6084 = vmatpush1.bf16.msra.mxu0 0
        %6085 = vmatprep.subr.bf16.mxu0 0
        %6086 = vmatpush1.bf16.msra.mxu0 %v6073
        %6087 = vmatprep.subr.bf16.mxu0 0
        %6088 = vmatpush1.bf16.msra.mxu0 %v6010
        %6089 = vmatprep.subr.bf16.mxu0 0
        %6090 = vmatpush1.bf16.msra.mxu0 %v6009
        %6091 = vmatprep.subr.bf16.mxu0 0
        %6092 = vmatpush2.bf16.msra.mxu0 0
        %6093 = vmatprep.subr.bf16.mxu0 0
        %6094 = vmatpush2.bf16.msra.mxu0 0
        %6095 = vmatprep.subr.bf16.mxu0 0
        %6096 = vmatpush2.bf16.msra.mxu0 0
        %6097 = vmatprep.subr.bf16.mxu0 0
        %6098 = vmatpush2.bf16.msra.mxu0 0
        %6099 = vmatprep.subr.bf16.mxu0 0
        %6100 = vmatpush2.bf16.msra.mxu0 0
        %6101 = vmatprep.subr.bf16.mxu0 0
        %6102 = vmatpush2.bf16.msra.mxu0 0
        %6103 = vmatprep.subr.bf16.mxu0 0
        %6104 = vmatpush2.bf16.msra.mxu0 0
        %6105 = vmatprep.subr.bf16.mxu0 0
        %6106 = vmatpush2.bf16.msra.mxu0 0
        %6107 = vmatprep.mubr.bf16.mxu0 0
        %6108 = vmatmul.mubr.bf16.gmra.mxu0 %v6015
        %v6109 = vpop.f32.mrf.mxu0
        %v6110 = vadd.f32 0.0, %v6109
        %v6111 = vpop.f32.mrf.mxu0
        %v6112 = vpop.f32.mrf.mxu0
        %v6113 = vadd.f32 0.0, %v6112
        %v6114 = vpop.f32.mrf.mxu0
        %6115 = vmatprep.mubr.bf16.mxu0 0
        %6116 = vmatmul.mubr.bf16.gmra.mxu0 %v6017
        %v6117 = vpop.f32.mrf.mxu0
        %v6118 = vadd.f32 0.0, %v6117
        %v6119 = vpop.f32.mrf.mxu0
        %v6120 = vpop.f32.mrf.mxu0
        %v6121 = vadd.f32 0.0, %v6120
        %v6122 = vpop.f32.mrf.mxu0
        %6123 = vmatprep.mubr.bf16.mxu0 0
        %6124 = vmatmul.mubr.bf16.gmra.mxu0 %v6019
        %v6125 = vpop.f32.mrf.mxu0
        %v6126 = vadd.f32 0.0, %v6125
        %v6127 = vpop.f32.mrf.mxu0
        %v6128 = vpop.f32.mrf.mxu0
        %v6129 = vadd.f32 0.0, %v6128
        %v6130 = vpop.f32.mrf.mxu0
        %6131 = vmatprep.mubr.bf16.mxu0 0
        %6132 = vmatmul.mubr.bf16.gmra.mxu0 %v6021
        %v6133 = vpop.f32.mrf.mxu0
        %v6134 = vadd.f32 0.0, %v6133
        %v6135 = vpop.f32.mrf.mxu0
        %v6136 = vpop.f32.mrf.mxu0
        %v6137 = vadd.f32 0.0, %v6136
        %v6138 = vpop.f32.mrf.mxu0
        %6139 = vmatprep.mubr.bf16.mxu0 0
        %6140 = vmatmul.mubr.bf16.gmra.mxu0 %v6023
        %v6141 = vpop.f32.mrf.mxu0
        %v6142 = vadd.f32 0.0, %v6141
        %v6143 = vpop.f32.mrf.mxu0
        %v6144 = vpop.f32.mrf.mxu0
        %v6145 = vadd.f32 0.0, %v6144
        %v6146 = vpop.f32.mrf.mxu0
        %6147 = vmatprep.mubr.bf16.mxu0 0
        %6148 = vmatmul.mubr.bf16.gmra.mxu0 %v6025
        %v6149 = vpop.f32.mrf.mxu0
        %v6150 = vadd.f32 0.0, %v6149
        %v6151 = vpop.f32.mrf.mxu0
        %v6152 = vpop.f32.mrf.mxu0
        %v6153 = vadd.f32 0.0, %v6152
        %v6154 = vpop.f32.mrf.mxu0
        %6155 = vmatprep.mubr.bf16.mxu0 0
        %6156 = vmatmul.mubr.bf16.gmra.mxu0 %v6027
        %v6157 = vpop.f32.mrf.mxu0
        %v6158 = vadd.f32 0.0, %v6157
        %v6159 = vpop.f32.mrf.mxu0
        %v6160 = vpop.f32.mrf.mxu0
        %v6161 = vadd.f32 0.0, %v6160
        %v6162 = vpop.f32.mrf.mxu0
        %6163 = vmatprep.mubr.bf16.mxu0 0
        %6164 = vmatmul.mubr.bf16.gmra.mxu0 %v6029
        %v6165 = vpop.f32.mrf.mxu0
        %v6166 = vadd.f32 0.0, %v6165
        %v6167 = vpop.f32.mrf.mxu0
        %v6168 = vpop.f32.mrf.mxu0
        %v6169 = vadd.f32 0.0, %v6168
        %v6170 = vpop.f32.mrf.mxu0
        %6171 = vmatprep.mubr.bf16.mxu0 0
        %6172 = vmatmul.mubr.bf16.gmra.mxu0 %v6031
        %v6173 = vpop.f32.mrf.mxu0
        %v6174 = vadd.f32 0.0, %v6173
        %v6175 = vpop.f32.mrf.mxu0
        %v6176 = vpop.f32.mrf.mxu0
        %v6177 = vadd.f32 0.0, %v6176
        %v6178 = vpop.f32.mrf.mxu0
        %6179 = vmatprep.mubr.bf16.mxu0 0
        %6180 = vmatmul.mubr.bf16.gmra.mxu0 %v6033
        %v6181 = vpop.f32.mrf.mxu0
        %v6182 = vadd.f32 0.0, %v6181
        %v6183 = vpop.f32.mrf.mxu0
        %v6184 = vpop.f32.mrf.mxu0
        %v6185 = vadd.f32 0.0, %v6184
        %v6186 = vpop.f32.mrf.mxu0
        %6187 = vmatprep.mubr.bf16.mxu0 0
        %6188 = vmatmul.mubr.bf16.gmra.mxu0 %v6035
        %v6189 = vpop.f32.mrf.mxu0
        %v6190 = vadd.f32 0.0, %v6189
        %v6191 = vpop.f32.mrf.mxu0
        %v6192 = vpop.f32.mrf.mxu0
        %v6193 = vadd.f32 0.0, %v6192
        %v6194 = vpop.f32.mrf.mxu0
        %6195 = vmatprep.mubr.bf16.mxu0 0
        %6196 = vmatmul.mubr.bf16.gmra.mxu0 %v6037
        %v6197 = vpop.f32.mrf.mxu0
        %v6198 = vadd.f32 0.0, %v6197
        %v6199 = vpop.f32.mrf.mxu0
        %v6200 = vpop.f32.mrf.mxu0
        %v6201 = vadd.f32 0.0, %v6200
        %v6202 = vpop.f32.mrf.mxu0
        %6203 = vmatprep.mubr.bf16.mxu0 0
        %6204 = vmatmul.mubr.bf16.gmra.mxu0 %v6039
        %v6205 = vpop.f32.mrf.mxu0
        %v6206 = vadd.f32 0.0, %v6205
        %v6207 = vpop.f32.mrf.mxu0
        %v6208 = vpop.f32.mrf.mxu0
        %v6209 = vadd.f32 0.0, %v6208
        %v6210 = vpop.f32.mrf.mxu0
        %6211 = vmatprep.mubr.bf16.mxu0 0
        %6212 = vmatmul.mubr.bf16.gmra.mxu0 %v6041
        %v6213 = vpop.f32.mrf.mxu0
        %v6214 = vadd.f32 0.0, %v6213
        %v6215 = vpop.f32.mrf.mxu0
        %v6216 = vpop.f32.mrf.mxu0
        %v6217 = vadd.f32 0.0, %v6216
        %v6218 = vpop.f32.mrf.mxu0
        %6219 = vmatprep.mubr.bf16.mxu0 0
        %6220 = vmatmul.mubr.bf16.gmra.mxu0 %v6043
        %v6221 = vpop.f32.mrf.mxu0
        %v6222 = vadd.f32 0.0, %v6221
        %v6223 = vpop.f32.mrf.mxu0
        %v6224 = vpop.f32.mrf.mxu0
        %v6225 = vadd.f32 0.0, %v6224
        %v6226 = vpop.f32.mrf.mxu0
        %6227 = vmatprep.mubr.bf16.mxu0 0
        %6228 = vmatmul.mubr.bf16.gmra.mxu0 %v6045
        %v6229 = vpop.f32.mrf.mxu0
        %v6230 = vadd.f32 0.0, %v6229
        %v6231 = vpop.f32.mrf.mxu0
        %v6232 = vpop.f32.mrf.mxu0
        %v6233 = vadd.f32 0.0, %v6232
        %v6234 = vpop.f32.mrf.mxu0
        %6235 = vmatprep.mubr.bf16.mxu0 0
        %6236 = vmatmul.mubr.bf16.gmra.mxu0 %v6047
        %v6237 = vpop.f32.mrf.mxu0
        %v6238 = vadd.f32 0.0, %v6237
        %v6239 = vpop.f32.mrf.mxu0
        %v6240 = vpop.f32.mrf.mxu0
        %v6241 = vadd.f32 0.0, %v6240
        %v6242 = vpop.f32.mrf.mxu0
        %6243 = vmatprep.mubr.bf16.mxu0 0
        %6244 = vmatmul.mubr.bf16.gmra.mxu0 %v6049
        %v6245 = vpop.f32.mrf.mxu0
        %v6246 = vadd.f32 0.0, %v6245
        %v6247 = vpop.f32.mrf.mxu0
        %v6248 = vpop.f32.mrf.mxu0
        %v6249 = vadd.f32 0.0, %v6248
        %v6250 = vpop.f32.mrf.mxu0
        %6251 = vmatprep.mubr.bf16.mxu0 0
        %6252 = vmatmul.mubr.bf16.gmra.mxu0 %v6051
        %v6253 = vpop.f32.mrf.mxu0
        %v6254 = vadd.f32 0.0, %v6253
        %v6255 = vpop.f32.mrf.mxu0
        %v6256 = vpop.f32.mrf.mxu0
        %v6257 = vadd.f32 0.0, %v6256
        %v6258 = vpop.f32.mrf.mxu0
        %6259 = vmatprep.mubr.bf16.mxu0 0
        %6260 = vmatmul.mubr.bf16.gmra.mxu0 %v6053
        %v6261 = vpop.f32.mrf.mxu0
        %v6262 = vadd.f32 0.0, %v6261
        %v6263 = vpop.f32.mrf.mxu0
        %v6264 = vpop.f32.mrf.mxu0
        %v6265 = vadd.f32 0.0, %v6264
        %v6266 = vpop.f32.mrf.mxu0
        %6267 = vmatprep.mubr.bf16.mxu0 0
        %6268 = vmatmul.mubr.bf16.gmra.mxu0 %v6055
        %v6269 = vpop.f32.mrf.mxu0
        %v6270 = vadd.f32 0.0, %v6269
        %v6271 = vpop.f32.mrf.mxu0
        %v6272 = vpop.f32.mrf.mxu0
        %v6273 = vadd.f32 0.0, %v6272
        %v6274 = vpop.f32.mrf.mxu0
        %6275 = vmatprep.mubr.bf16.mxu0 0
        %6276 = vmatmul.mubr.bf16.gmra.mxu0 %v6057
        %v6277 = vpop.f32.mrf.mxu0
        %v6278 = vadd.f32 0.0, %v6277
        %v6279 = vpop.f32.mrf.mxu0
        %v6280 = vpop.f32.mrf.mxu0
        %v6281 = vadd.f32 0.0, %v6280
        %v6282 = vpop.f32.mrf.mxu0
        %6283 = vmatprep.mubr.bf16.mxu0 0
        %6284 = vmatmul.mubr.bf16.gmra.mxu0 %v6059
        %v6285 = vpop.f32.mrf.mxu0
        %v6286 = vadd.f32 0.0, %v6285
        %v6287 = vpop.f32.mrf.mxu0
        %v6288 = vpop.f32.mrf.mxu0
        %v6289 = vadd.f32 0.0, %v6288
        %v6290 = vpop.f32.mrf.mxu0
        %6291 = vmatprep.mubr.bf16.mxu0 0
        %6292 = vmatmul.mubr.bf16.gmra.mxu0 %v6061
        %v6293 = vpop.f32.mrf.mxu0
        %v6294 = vadd.f32 0.0, %v6293
        %v6295 = vpop.f32.mrf.mxu0
        %v6296 = vpop.f32.mrf.mxu0
        %v6297 = vadd.f32 0.0, %v6296
        %v6298 = vpop.f32.mrf.mxu0
        %6299 = vmatprep.mubr.bf16.mxu0 0
        %6300 = vmatmul.mubr.bf16.gmra.mxu0 %v6063
        %v6301 = vpop.f32.mrf.mxu0
        %v6302 = vadd.f32 0.0, %v6301
        %v6303 = vpop.f32.mrf.mxu0
        %v6304 = vpop.f32.mrf.mxu0
        %v6305 = vadd.f32 0.0, %v6304
        %v6306 = vpop.f32.mrf.mxu0
        %6307 = vmatprep.mubr.bf16.mxu0 0
        %6308 = vmatmul.mubr.bf16.gmra.mxu0 %v6065
        %v6309 = vpop.f32.mrf.mxu0
        %v6310 = vadd.f32 0.0, %v6309
        %v6311 = vpop.f32.mrf.mxu0
        %v6312 = vpop.f32.mrf.mxu0
        %v6313 = vadd.f32 0.0, %v6312
        %v6314 = vpop.f32.mrf.mxu0
        %6315 = vmatprep.mubr.bf16.mxu0 0
        %6316 = vmatmul.mubr.bf16.gmra.mxu0 %v6067
        %v6317 = vpop.f32.mrf.mxu0
        %v6318 = vadd.f32 0.0, %v6317
        %v6319 = vpop.f32.mrf.mxu0
        %v6320 = vpop.f32.mrf.mxu0
        %v6321 = vadd.f32 0.0, %v6320
        %v6322 = vpop.f32.mrf.mxu0
        %6323 = vmatprep.mubr.bf16.mxu0 0
        %6324 = vmatmul.mubr.bf16.gmra.mxu0 %v6069
        %v6325 = vpop.f32.mrf.mxu0
        %v6326 = vadd.f32 0.0, %v6325
        %v6327 = vpop.f32.mrf.mxu0
        %v6328 = vpop.f32.mrf.mxu0
        %v6329 = vadd.f32 0.0, %v6328
        %v6330 = vpop.f32.mrf.mxu0
        %6331 = vdwg.mxu0
        %v6332 = vld [vmem:[%s512] sm:$0xff]
        %v6333 = vld [vmem:[%s512 + $0x8] sm:$0x1]
        %vm6334 = vcmask 72704
        %v6336 = vsel %vm6334, %v5053, 0
        %v6339 = vsel %vm6334, %v5054, 0
        %v6342 = vsel %vm6334, %v5055, 0
        %v6345 = vsel %vm6334, %v5056, 0
        %v6348 = vsel %vm6334, %v5057, 0
        %v6351 = vsel %vm6334, %v5058, 0
        %v6354 = vsel %vm6334, %v5059, 0
        %v6357 = vsel %vm6334, %v5060, 0
        %v6360 = vsel %vm6334, %v5061, 0
        %v6363 = vsel %vm6334, %v5062, 0
        %v6366 = vsel %vm6334, %v5063, 0
        %v6369 = vsel %vm6334, %v5064, 0
        %v6372 = vsel %vm6334, %v5065, 0
        %v6375 = vsel %vm6334, %v5066, 0
        %v6378 = vsel %vm6334, %v5067, 0
        %v6381 = vsel %vm6334, %v5068, 0
        %v6384 = vsel %vm6334, %v5069, 0
        %v6387 = vsel %vm6334, %v5070, 0
        %v6390 = vsel %vm6334, %v5071, 0
        %v6393 = vsel %vm6334, %v5072, 0
        %v6396 = vsel %vm6334, %v5073, 0
        %v6399 = vsel %vm6334, %v5074, 0
        %v6402 = vsel %vm6334, %v5075, 0
        %v6405 = vsel %vm6334, %v5076, 0
        %v6408 = vsel %vm6334, %v5077, 0
        %v6411 = vsel %vm6334, %v5078, 0
        %v6414 = vsel %vm6334, %v5079, 0
        %v6417 = vsel %vm6334, %v5080, 0
        %v6420 = vsel %vm6334, %v5081, 0
        %v6423 = vsel %vm6334, %v5082, 0
        %v6426 = vsel %vm6334, %v5083, 0
        %v6429 = vsel %vm6334, %v5084, 0
        %v6432 = vsel %vm6334, %v5085, 0
        %v6435 = vsel %vm6334, %v5086, 0
        %v6438 = vsel %vm6334, %v5087, 0
        %v6441 = vsel %vm6334, %v5088, 0
        %v6444 = vsel %vm6334, %v5089, 0
        %v6447 = vsel %vm6334, %v5090, 0
        %v6450 = vsel %vm6334, %v5091, 0
        %v6453 = vsel %vm6334, %v5092, 0
        %v6456 = vsel %vm6334, %v5093, 0
        %v6459 = vsel %vm6334, %v5094, 0
        %v6462 = vsel %vm6334, %v5095, 0
        %v6465 = vsel %vm6334, %v5096, 0
        %v6468 = vsel %vm6334, %v5097, 0
        %v6471 = vsel %vm6334, %v5098, 0
        %v6474 = vsel %vm6334, %v5099, 0
        %v6477 = vsel %vm6334, %v5100, 0
        %v6480 = vsel %vm6334, %v5101, 0
        %v6483 = vsel %vm6334, %v5102, 0
        %v6486 = vsel %vm6334, %v5103, 0
        %v6489 = vsel %vm6334, %v5104, 0
        %v6492 = vsel %vm6334, %v5105, 0
        %v6495 = vsel %vm6334, %v5106, 0
        %v6498 = vsel %vm6334, %v5107, 0
        %v6501 = vsel %vm6334, %v5108, 0
        %vm6503 = vcmask 1040384
        %v6505 = vsel %vm6503, %v6333, 0
        %6507 = vmatprep.subr.mxu0 0.0
        %6508 = vmatpush1.msra.mxu0 0.0
        %6509 = vmatprep.subr.mxu0 0.0
        %6510 = vmatpush1.msra.mxu0 0.0
        %6511 = vmatprep.subr.mxu0 0.0
        %6512 = vmatpush1.msra.mxu0 0.0
        %6513 = vmatprep.subr.mxu0 0.0
        %6514 = vmatpush1.msra.mxu0 0.0
        %6515 = vmatprep.subr.mxu0 0.0
        %6516 = vmatpush1.msra.mxu0 0.0
        %6517 = vmatprep.subr.mxu0 0.0
        %6518 = vmatpush1.msra.mxu0 0.0
        %6519 = vmatprep.subr.mxu0 0.0
        %6520 = vmatpush1.msra.mxu0 0.0
        %6521 = vmatprep.subr.mxu0 0.0
        %6522 = vmatpush1.msra.mxu0 0.0
        %6523 = vmatprep.subr.mxu0 0.0
        %6524 = vmatpush1.msra.mxu0 0.0
        %6525 = vmatprep.subr.mxu0 0.0
        %6526 = vmatpush1.msra.mxu0 0.0
        %6527 = vmatprep.subr.mxu0 0.0
        %6528 = vmatpush1.msra.mxu0 0.0
        %6529 = vmatprep.subr.mxu0 0.0
        %6530 = vmatpush1.msra.mxu0 0.0
        %6531 = vmatprep.subr.mxu0 0.0
        %6532 = vmatpush1.msra.mxu0 0.0
        %6533 = vmatprep.subr.mxu0 0.0
        %6534 = vmatpush1.msra.mxu0 0.0
        %6535 = vmatprep.subr.mxu0 0.0
        %6536 = vmatpush1.msra.mxu0 %v6505
        %6537 = vmatprep.subr.mxu0 0.0
        %6538 = vmatpush1.msra.mxu0 %v6332
        %6539 = vmatprep.subr.mxu0 0.0
        %6540 = vmatpush2.msra.mxu0 0.0
        %6541 = vmatprep.subr.mxu0 0.0
        %6542 = vmatpush2.msra.mxu0 0.0
        %6543 = vmatprep.subr.mxu0 0.0
        %6544 = vmatpush2.msra.mxu0 0.0
        %6545 = vmatprep.subr.mxu0 0.0
        %6546 = vmatpush2.msra.mxu0 0.0
        %6547 = vmatprep.subr.mxu0 0.0
        %6548 = vmatpush2.msra.mxu0 0.0
        %6549 = vmatprep.subr.mxu0 0.0
        %6550 = vmatpush2.msra.mxu0 0.0
        %6551 = vmatprep.subr.mxu0 0.0
        %6552 = vmatpush2.msra.mxu0 0.0
        %6553 = vmatprep.subr.mxu0 0.0
        %6554 = vmatpush2.msra.mxu0 0.0
        %6555 = vmatprep.subr.mxu0 0.0
        %6556 = vmatpush2.msra.mxu0 0.0
        %6557 = vmatprep.subr.mxu0 0.0
        %6558 = vmatpush2.msra.mxu0 0.0
        %6559 = vmatprep.subr.mxu0 0.0
        %6560 = vmatpush2.msra.mxu0 0.0
        %6561 = vmatprep.subr.mxu0 0.0
        %6562 = vmatpush2.msra.mxu0 0.0
        %6563 = vmatprep.subr.mxu0 0.0
        %6564 = vmatpush2.msra.mxu0 0.0
        %6565 = vmatprep.subr.mxu0 0.0
        %6566 = vmatpush2.msra.mxu0 0.0
        %6567 = vmatprep.subr.mxu0 0.0
        %6568 = vmatpush2.msra.mxu0 0.0
        %6569 = vmatprep.subr.mxu0 0.0
        %6570 = vmatpush2.msra.mxu0 0.0
        %6571 = vmatprep.mubr.f32.mxu0 0.0
        %6572 = vmatmul.mubr.f32.gmra.mxu0 %v6336
        %v6573 = vpop.f32.mrf.mxu0
        %v6574 = vadd.f32 0.0, %v6573
        %v6575 = vpop.f32.mrf.mxu0
        %6576 = vmatprep.mubr.f32.mxu0 0.0
        %6577 = vmatmul.mubr.f32.gmra.mxu0 %v6339
        %v6578 = vpop.f32.mrf.mxu0
        %v6579 = vadd.f32 0.0, %v6578
        %v6580 = vpop.f32.mrf.mxu0
        %6581 = vmatprep.mubr.f32.mxu0 0.0
        %6582 = vmatmul.mubr.f32.gmra.mxu0 %v6342
        %v6583 = vpop.f32.mrf.mxu0
        %v6584 = vadd.f32 0.0, %v6583
        %v6585 = vpop.f32.mrf.mxu0
        %6586 = vmatprep.mubr.f32.mxu0 0.0
        %6587 = vmatmul.mubr.f32.gmra.mxu0 %v6345
        %v6588 = vpop.f32.mrf.mxu0
        %v6589 = vadd.f32 0.0, %v6588
        %v6590 = vpop.f32.mrf.mxu0
        %6591 = vmatprep.mubr.f32.mxu0 0.0
        %6592 = vmatmul.mubr.f32.gmra.mxu0 %v6348
        %v6593 = vpop.f32.mrf.mxu0
        %v6594 = vadd.f32 0.0, %v6593
        %v6595 = vpop.f32.mrf.mxu0
        %6596 = vmatprep.mubr.f32.mxu0 0.0
        %6597 = vmatmul.mubr.f32.gmra.mxu0 %v6351
        %v6598 = vpop.f32.mrf.mxu0
        %v6599 = vadd.f32 0.0, %v6598
        %v6600 = vpop.f32.mrf.mxu0
        %6601 = vmatprep.mubr.f32.mxu0 0.0
        %6602 = vmatmul.mubr.f32.gmra.mxu0 %v6354
        %v6603 = vpop.f32.mrf.mxu0
        %v6604 = vadd.f32 0.0, %v6603
        %v6605 = vpop.f32.mrf.mxu0
        %6606 = vmatprep.mubr.f32.mxu0 0.0
        %6607 = vmatmul.mubr.f32.gmra.mxu0 %v6357
        %v6608 = vpop.f32.mrf.mxu0
        %v6609 = vadd.f32 0.0, %v6608
        %v6610 = vpop.f32.mrf.mxu0
        %6611 = vmatprep.mubr.f32.mxu0 0.0
        %6612 = vmatmul.mubr.f32.gmra.mxu0 %v6360
        %v6613 = vpop.f32.mrf.mxu0
        %v6614 = vadd.f32 0.0, %v6613
        %v6615 = vpop.f32.mrf.mxu0
        %6616 = vmatprep.mubr.f32.mxu0 0.0
        %6617 = vmatmul.mubr.f32.gmra.mxu0 %v6363
        %v6618 = vpop.f32.mrf.mxu0
        %v6619 = vadd.f32 0.0, %v6618
        %v6620 = vpop.f32.mrf.mxu0
        %6621 = vmatprep.mubr.f32.mxu0 0.0
        %6622 = vmatmul.mubr.f32.gmra.mxu0 %v6366
        %v6623 = vpop.f32.mrf.mxu0
        %v6624 = vadd.f32 0.0, %v6623
        %v6625 = vpop.f32.mrf.mxu0
        %6626 = vmatprep.mubr.f32.mxu0 0.0
        %6627 = vmatmul.mubr.f32.gmra.mxu0 %v6369
        %v6628 = vpop.f32.mrf.mxu0
        %v6629 = vadd.f32 0.0, %v6628
        %v6630 = vpop.f32.mrf.mxu0
        %6631 = vmatprep.mubr.f32.mxu0 0.0
        %6632 = vmatmul.mubr.f32.gmra.mxu0 %v6372
        %v6633 = vpop.f32.mrf.mxu0
        %v6634 = vadd.f32 0.0, %v6633
        %v6635 = vpop.f32.mrf.mxu0
        %6636 = vmatprep.mubr.f32.mxu0 0.0
        %6637 = vmatmul.mubr.f32.gmra.mxu0 %v6375
        %v6638 = vpop.f32.mrf.mxu0
        %v6639 = vadd.f32 0.0, %v6638
        %v6640 = vpop.f32.mrf.mxu0
        %6641 = vmatprep.mubr.f32.mxu0 0.0
        %6642 = vmatmul.mubr.f32.gmra.mxu0 %v6378
        %v6643 = vpop.f32.mrf.mxu0
        %v6644 = vadd.f32 0.0, %v6643
        %v6645 = vpop.f32.mrf.mxu0
        %6646 = vmatprep.mubr.f32.mxu0 0.0
        %6647 = vmatmul.mubr.f32.gmra.mxu0 %v6381
        %v6648 = vpop.f32.mrf.mxu0
        %v6649 = vadd.f32 0.0, %v6648
        %v6650 = vpop.f32.mrf.mxu0
        %6651 = vmatprep.mubr.f32.mxu0 0.0
        %6652 = vmatmul.mubr.f32.gmra.mxu0 %v6384
        %v6653 = vpop.f32.mrf.mxu0
        %v6654 = vadd.f32 0.0, %v6653
        %v6655 = vpop.f32.mrf.mxu0
        %6656 = vmatprep.mubr.f32.mxu0 0.0
        %6657 = vmatmul.mubr.f32.gmra.mxu0 %v6387
        %v6658 = vpop.f32.mrf.mxu0
        %v6659 = vadd.f32 0.0, %v6658
        %v6660 = vpop.f32.mrf.mxu0
        %6661 = vmatprep.mubr.f32.mxu0 0.0
        %6662 = vmatmul.mubr.f32.gmra.mxu0 %v6390
        %v6663 = vpop.f32.mrf.mxu0
        %v6664 = vadd.f32 0.0, %v6663
        %v6665 = vpop.f32.mrf.mxu0
        %6666 = vmatprep.mubr.f32.mxu0 0.0
        %6667 = vmatmul.mubr.f32.gmra.mxu0 %v6393
        %v6668 = vpop.f32.mrf.mxu0
        %v6669 = vadd.f32 0.0, %v6668
        %v6670 = vpop.f32.mrf.mxu0
        %6671 = vmatprep.mubr.f32.mxu0 0.0
        %6672 = vmatmul.mubr.f32.gmra.mxu0 %v6396
        %v6673 = vpop.f32.mrf.mxu0
        %v6674 = vadd.f32 0.0, %v6673
        %v6675 = vpop.f32.mrf.mxu0
        %6676 = vmatprep.mubr.f32.mxu0 0.0
        %6677 = vmatmul.mubr.f32.gmra.mxu0 %v6399
        %v6678 = vpop.f32.mrf.mxu0
        %v6679 = vadd.f32 0.0, %v6678
        %v6680 = vpop.f32.mrf.mxu0
        %6681 = vmatprep.mubr.f32.mxu0 0.0
        %6682 = vmatmul.mubr.f32.gmra.mxu0 %v6402
        %v6683 = vpop.f32.mrf.mxu0
        %v6684 = vadd.f32 0.0, %v6683
        %v6685 = vpop.f32.mrf.mxu0
        %6686 = vmatprep.mubr.f32.mxu0 0.0
        %6687 = vmatmul.mubr.f32.gmra.mxu0 %v6405
        %v6688 = vpop.f32.mrf.mxu0
        %v6689 = vadd.f32 0.0, %v6688
        %v6690 = vpop.f32.mrf.mxu0
        %6691 = vmatprep.mubr.f32.mxu0 0.0
        %6692 = vmatmul.mubr.f32.gmra.mxu0 %v6408
        %v6693 = vpop.f32.mrf.mxu0
        %v6694 = vadd.f32 0.0, %v6693
        %v6695 = vpop.f32.mrf.mxu0
        %6696 = vmatprep.mubr.f32.mxu0 0.0
        %6697 = vmatmul.mubr.f32.gmra.mxu0 %v6411
        %v6698 = vpop.f32.mrf.mxu0
        %v6699 = vadd.f32 0.0, %v6698
        %v6700 = vpop.f32.mrf.mxu0
        %6701 = vmatprep.mubr.f32.mxu0 0.0
        %6702 = vmatmul.mubr.f32.gmra.mxu0 %v6414
        %v6703 = vpop.f32.mrf.mxu0
        %v6704 = vadd.f32 0.0, %v6703
        %v6705 = vpop.f32.mrf.mxu0
        %6706 = vmatprep.mubr.f32.mxu0 0.0
        %6707 = vmatmul.mubr.f32.gmra.mxu0 %v6417
        %v6708 = vpop.f32.mrf.mxu0
        %v6709 = vadd.f32 0.0, %v6708
        %v6710 = vpop.f32.mrf.mxu0
        %6711 = vmatprep.mubr.f32.mxu0 0.0
        %6712 = vmatmul.mubr.f32.gmra.mxu0 %v6420
        %v6713 = vpop.f32.mrf.mxu0
        %v6714 = vadd.f32 0.0, %v6713
        %v6715 = vpop.f32.mrf.mxu0
        %6716 = vmatprep.mubr.f32.mxu0 0.0
        %6717 = vmatmul.mubr.f32.gmra.mxu0 %v6423
        %v6718 = vpop.f32.mrf.mxu0
        %v6719 = vadd.f32 0.0, %v6718
        %v6720 = vpop.f32.mrf.mxu0
        %6721 = vmatprep.mubr.f32.mxu0 0.0
        %6722 = vmatmul.mubr.f32.gmra.mxu0 %v6426
        %v6723 = vpop.f32.mrf.mxu0
        %v6724 = vadd.f32 0.0, %v6723
        %v6725 = vpop.f32.mrf.mxu0
        %6726 = vmatprep.mubr.f32.mxu0 0.0
        %6727 = vmatmul.mubr.f32.gmra.mxu0 %v6429
        %v6728 = vpop.f32.mrf.mxu0
        %v6729 = vadd.f32 0.0, %v6728
        %v6730 = vpop.f32.mrf.mxu0
        %6731 = vmatprep.mubr.f32.mxu0 0.0
        %6732 = vmatmul.mubr.f32.gmra.mxu0 %v6432
        %v6733 = vpop.f32.mrf.mxu0
        %v6734 = vadd.f32 0.0, %v6733
        %v6735 = vpop.f32.mrf.mxu0
        %6736 = vmatprep.mubr.f32.mxu0 0.0
        %6737 = vmatmul.mubr.f32.gmra.mxu0 %v6435
        %v6738 = vpop.f32.mrf.mxu0
        %v6739 = vadd.f32 0.0, %v6738
        %v6740 = vpop.f32.mrf.mxu0
        %6741 = vmatprep.mubr.f32.mxu0 0.0
        %6742 = vmatmul.mubr.f32.gmra.mxu0 %v6438
        %v6743 = vpop.f32.mrf.mxu0
        %v6744 = vadd.f32 0.0, %v6743
        %v6745 = vpop.f32.mrf.mxu0
        %6746 = vmatprep.mubr.f32.mxu0 0.0
        %6747 = vmatmul.mubr.f32.gmra.mxu0 %v6441
        %v6748 = vpop.f32.mrf.mxu0
        %v6749 = vadd.f32 0.0, %v6748
        %v6750 = vpop.f32.mrf.mxu0
        %6751 = vmatprep.mubr.f32.mxu0 0.0
        %6752 = vmatmul.mubr.f32.gmra.mxu0 %v6444
        %v6753 = vpop.f32.mrf.mxu0
        %v6754 = vadd.f32 0.0, %v6753
        %v6755 = vpop.f32.mrf.mxu0
        %6756 = vmatprep.mubr.f32.mxu0 0.0
        %6757 = vmatmul.mubr.f32.gmra.mxu0 %v6447
        %v6758 = vpop.f32.mrf.mxu0
        %v6759 = vadd.f32 0.0, %v6758
        %v6760 = vpop.f32.mrf.mxu0
        %6761 = vmatprep.mubr.f32.mxu0 0.0
        %6762 = vmatmul.mubr.f32.gmra.mxu0 %v6450
        %v6763 = vpop.f32.mrf.mxu0
        %v6764 = vadd.f32 0.0, %v6763
        %v6765 = vpop.f32.mrf.mxu0
        %6766 = vmatprep.mubr.f32.mxu0 0.0
        %6767 = vmatmul.mubr.f32.gmra.mxu0 %v6453
        %v6768 = vpop.f32.mrf.mxu0
        %v6769 = vadd.f32 0.0, %v6768
        %v6770 = vpop.f32.mrf.mxu0
        %6771 = vmatprep.mubr.f32.mxu0 0.0
        %6772 = vmatmul.mubr.f32.gmra.mxu0 %v6456
        %v6773 = vpop.f32.mrf.mxu0
        %v6774 = vadd.f32 0.0, %v6773
        %v6775 = vpop.f32.mrf.mxu0
        %6776 = vmatprep.mubr.f32.mxu0 0.0
        %6777 = vmatmul.mubr.f32.gmra.mxu0 %v6459
        %v6778 = vpop.f32.mrf.mxu0
        %v6779 = vadd.f32 0.0, %v6778
        %v6780 = vpop.f32.mrf.mxu0
        %6781 = vmatprep.mubr.f32.mxu0 0.0
        %6782 = vmatmul.mubr.f32.gmra.mxu0 %v6462
        %v6783 = vpop.f32.mrf.mxu0
        %v6784 = vadd.f32 0.0, %v6783
        %v6785 = vpop.f32.mrf.mxu0
        %6786 = vmatprep.mubr.f32.mxu0 0.0
        %6787 = vmatmul.mubr.f32.gmra.mxu0 %v6465
        %v6788 = vpop.f32.mrf.mxu0
        %v6789 = vadd.f32 0.0, %v6788
        %v6790 = vpop.f32.mrf.mxu0
        %6791 = vmatprep.mubr.f32.mxu0 0.0
        %6792 = vmatmul.mubr.f32.gmra.mxu0 %v6468
        %v6793 = vpop.f32.mrf.mxu0
        %v6794 = vadd.f32 0.0, %v6793
        %v6795 = vpop.f32.mrf.mxu0
        %6796 = vmatprep.mubr.f32.mxu0 0.0
        %6797 = vmatmul.mubr.f32.gmra.mxu0 %v6471
        %v6798 = vpop.f32.mrf.mxu0
        %v6799 = vadd.f32 0.0, %v6798
        %v6800 = vpop.f32.mrf.mxu0
        %6801 = vmatprep.mubr.f32.mxu0 0.0
        %6802 = vmatmul.mubr.f32.gmra.mxu0 %v6474
        %v6803 = vpop.f32.mrf.mxu0
        %v6804 = vadd.f32 0.0, %v6803
        %v6805 = vpop.f32.mrf.mxu0
        %6806 = vmatprep.mubr.f32.mxu0 0.0
        %6807 = vmatmul.mubr.f32.gmra.mxu0 %v6477
        %v6808 = vpop.f32.mrf.mxu0
        %v6809 = vadd.f32 0.0, %v6808
        %v6810 = vpop.f32.mrf.mxu0
        %6811 = vmatprep.mubr.f32.mxu0 0.0
        %6812 = vmatmul.mubr.f32.gmra.mxu0 %v6480
        %v6813 = vpop.f32.mrf.mxu0
        %v6814 = vadd.f32 0.0, %v6813
        %v6815 = vpop.f32.mrf.mxu0
        %6816 = vmatprep.mubr.f32.mxu0 0.0
        %6817 = vmatmul.mubr.f32.gmra.mxu0 %v6483
        %v6818 = vpop.f32.mrf.mxu0
        %v6819 = vadd.f32 0.0, %v6818
        %v6820 = vpop.f32.mrf.mxu0
        %6821 = vmatprep.mubr.f32.mxu0 0.0
        %6822 = vmatmul.mubr.f32.gmra.mxu0 %v6486
        %v6823 = vpop.f32.mrf.mxu0
        %v6824 = vadd.f32 0.0, %v6823
        %v6825 = vpop.f32.mrf.mxu0
        %6826 = vmatprep.mubr.f32.mxu0 0.0
        %6827 = vmatmul.mubr.f32.gmra.mxu0 %v6489
        %v6828 = vpop.f32.mrf.mxu0
        %v6829 = vadd.f32 0.0, %v6828
        %v6830 = vpop.f32.mrf.mxu0
        %6831 = vmatprep.mubr.f32.mxu0 0.0
        %6832 = vmatmul.mubr.f32.gmra.mxu0 %v6492
        %v6833 = vpop.f32.mrf.mxu0
        %v6834 = vadd.f32 0.0, %v6833
        %v6835 = vpop.f32.mrf.mxu0
        %6836 = vmatprep.mubr.f32.mxu0 0.0
        %6837 = vmatmul.mubr.f32.gmra.mxu0 %v6495
        %v6838 = vpop.f32.mrf.mxu0
        %v6839 = vadd.f32 0.0, %v6838
        %v6840 = vpop.f32.mrf.mxu0
        %6841 = vmatprep.mubr.f32.mxu0 0.0
        %6842 = vmatmul.mubr.f32.gmra.mxu0 %v6498
        %v6843 = vpop.f32.mrf.mxu0
        %v6844 = vadd.f32 0.0, %v6843
        %v6845 = vpop.f32.mrf.mxu0
        %6846 = vmatprep.mubr.f32.mxu0 0.0
        %6847 = vmatmul.mubr.f32.gmra.mxu0 %v6501
        %v6848 = vpop.f32.mrf.mxu0
        %v6849 = vadd.f32 0.0, %v6848
        %v6850 = vpop.f32.mrf.mxu0
        %6851 = vdwg.mxu0
        %v6852 = vstv %s529
        %v6853 = vmul.f32 %v6852, %v6110
        %v6854 = vmul.f32 %v6852, %v6113
        %v6855 = vmul.f32 %v6852, %v6118
        %v6856 = vmul.f32 %v6852, %v6121
        %v6857 = vmul.f32 %v6852, %v6126
        %v6858 = vmul.f32 %v6852, %v6129
        %v6859 = vmul.f32 %v6852, %v6134
        %v6860 = vmul.f32 %v6852, %v6137
        %v6861 = vmul.f32 %v6852, %v6142
        %v6862 = vmul.f32 %v6852, %v6145
        %v6863 = vmul.f32 %v6852, %v6150
        %v6864 = vmul.f32 %v6852, %v6153
        %v6865 = vmul.f32 %v6852, %v6158
        %v6866 = vmul.f32 %v6852, %v6161
        %v6867 = vmul.f32 %v6852, %v6166
        %v6868 = vmul.f32 %v6852, %v6169
        %v6869 = vmul.f32 %v6852, %v6174
        %v6870 = vmul.f32 %v6852, %v6177
        %v6871 = vmul.f32 %v6852, %v6182
        %v6872 = vmul.f32 %v6852, %v6185
        %v6873 = vmul.f32 %v6852, %v6190
        %v6874 = vmul.f32 %v6852, %v6193
        %v6875 = vmul.f32 %v6852, %v6198
        %v6876 = vmul.f32 %v6852, %v6201
        %v6877 = vmul.f32 %v6852, %v6206
        %v6878 = vmul.f32 %v6852, %v6209
        %v6879 = vmul.f32 %v6852, %v6214
        %v6880 = vmul.f32 %v6852, %v6217
        %v6881 = vmul.f32 %v6852, %v6222
        %v6882 = vmul.f32 %v6852, %v6225
        %v6883 = vmul.f32 %v6852, %v6230
        %v6884 = vmul.f32 %v6852, %v6233
        %v6885 = vmul.f32 %v6852, %v6238
        %v6886 = vmul.f32 %v6852, %v6241
        %v6887 = vmul.f32 %v6852, %v6246
        %v6888 = vmul.f32 %v6852, %v6249
        %v6889 = vmul.f32 %v6852, %v6254
        %v6890 = vmul.f32 %v6852, %v6257
        %v6891 = vmul.f32 %v6852, %v6262
        %v6892 = vmul.f32 %v6852, %v6265
        %v6893 = vmul.f32 %v6852, %v6270
        %v6894 = vmul.f32 %v6852, %v6273
        %v6895 = vmul.f32 %v6852, %v6278
        %v6896 = vmul.f32 %v6852, %v6281
        %v6897 = vmul.f32 %v6852, %v6286
        %v6898 = vmul.f32 %v6852, %v6289
        %v6899 = vmul.f32 %v6852, %v6294
        %v6900 = vmul.f32 %v6852, %v6297
        %v6901 = vmul.f32 %v6852, %v6302
        %v6902 = vmul.f32 %v6852, %v6305
        %v6903 = vmul.f32 %v6852, %v6310
        %v6904 = vmul.f32 %v6852, %v6313
        %v6905 = vmul.f32 %v6852, %v6318
        %v6906 = vmul.f32 %v6852, %v6321
        %v6907 = vmul.f32 %v6852, %v6326
        %v6908 = vmul.f32 %v6852, %v6329
        %v6909 = vstv %s530
        %v6910 = vmul.f32 %v6909, %v5938
        %v6911 = vmul.f32 %v6909, %v5939
        %v6912 = vmul.f32 %v6909, %v5940
        %v6913 = vmul.f32 %v6909, %v5941
        %v6914 = vmul.f32 %v6909, %v5942
        %v6915 = vmul.f32 %v6909, %v5943
        %v6916 = vmul.f32 %v6909, %v5944
        %v6917 = vmul.f32 %v6909, %v5945
        %v6918 = vmul.f32 %v6909, %v5946
        %v6919 = vmul.f32 %v6909, %v5947
        %v6920 = vmul.f32 %v6909, %v5948
        %v6921 = vmul.f32 %v6909, %v5949
        %v6922 = vmul.f32 %v6909, %v5950
        %v6923 = vmul.f32 %v6909, %v5951
        %v6924 = vmul.f32 %v6909, %v5952
        %v6925 = vmul.f32 %v6909, %v5953
        %v6926 = vmul.f32 %v6909, %v5954
        %v6927 = vmul.f32 %v6909, %v5955
        %v6928 = vmul.f32 %v6909, %v5956
        %v6929 = vmul.f32 %v6909, %v5957
        %v6930 = vmul.f32 %v6909, %v5958
        %v6931 = vmul.f32 %v6909, %v5959
        %v6932 = vmul.f32 %v6909, %v5960
        %v6933 = vmul.f32 %v6909, %v5961
        %v6934 = vmul.f32 %v6909, %v5962
        %v6935 = vmul.f32 %v6909, %v5963
        %v6936 = vmul.f32 %v6909, %v5964
        %v6937 = vmul.f32 %v6909, %v5965
        %v6938 = vmul.f32 %v6909, %v5966
        %v6939 = vmul.f32 %v6909, %v5967
        %v6940 = vmul.f32 %v6909, %v5968
        %v6941 = vmul.f32 %v6909, %v5969
        %v6942 = vmul.f32 %v6909, %v5970
        %v6943 = vmul.f32 %v6909, %v5971
        %v6944 = vmul.f32 %v6909, %v5972
        %v6945 = vmul.f32 %v6909, %v5973
        %v6946 = vmul.f32 %v6909, %v5974
        %v6947 = vmul.f32 %v6909, %v5975
        %v6948 = vmul.f32 %v6909, %v5976
        %v6949 = vmul.f32 %v6909, %v5977
        %v6950 = vmul.f32 %v6909, %v5978
        %v6951 = vmul.f32 %v6909, %v5979
        %v6952 = vmul.f32 %v6909, %v5980
        %v6953 = vmul.f32 %v6909, %v5981
        %v6954 = vmul.f32 %v6909, %v5982
        %v6955 = vmul.f32 %v6909, %v5983
        %v6956 = vmul.f32 %v6909, %v5984
        %v6957 = vmul.f32 %v6909, %v5985
        %v6958 = vmul.f32 %v6909, %v5986
        %v6959 = vmul.f32 %v6909, %v5987
        %v6960 = vmul.f32 %v6909, %v5988
        %v6961 = vmul.f32 %v6909, %v5989
        %v6962 = vmul.f32 %v6909, %v5990
        %v6963 = vmul.f32 %v6909, %v5991
        %v6964 = vmul.f32 %v6909, %v5992
        %v6965 = vmul.f32 %v6909, %v5993
        %6967 = vset.pattern.permute.xlu0 0
        %6968 = vperm.xlu0 %6967, %v6910
        %v6969 = vpop.permute.xlu0 %6968
        %6972 = vset.pattern.permute.xlu0 0
        %6973 = vperm.xlu0 %6972, %v6911
        %v6974 = vpop.permute.xlu0 %6973
        %6977 = vset.pattern.permute.xlu0 0
        %6978 = vperm.xlu0 %6977, %v6912
        %v6979 = vpop.permute.xlu0 %6978
        %6982 = vset.pattern.permute.xlu0 0
        %6983 = vperm.xlu0 %6982, %v6913
        %v6984 = vpop.permute.xlu0 %6983
        %6987 = vset.pattern.permute.xlu0 0
        %6988 = vperm.xlu0 %6987, %v6914
        %v6989 = vpop.permute.xlu0 %6988
        %6992 = vset.pattern.permute.xlu0 0
        %6993 = vperm.xlu0 %6992, %v6915
        %v6994 = vpop.permute.xlu0 %6993
        %6997 = vset.pattern.permute.xlu0 0
        %6998 = vperm.xlu0 %6997, %v6916
        %v6999 = vpop.permute.xlu0 %6998
        %7002 = vset.pattern.permute.xlu0 0
        %7003 = vperm.xlu0 %7002, %v6917
        %v7004 = vpop.permute.xlu0 %7003
        %7007 = vset.pattern.permute.xlu0 0
        %7008 = vperm.xlu0 %7007, %v6918
        %v7009 = vpop.permute.xlu0 %7008
        %7012 = vset.pattern.permute.xlu0 0
        %7013 = vperm.xlu0 %7012, %v6919
        %v7014 = vpop.permute.xlu0 %7013
        %7017 = vset.pattern.permute.xlu0 0
        %7018 = vperm.xlu0 %7017, %v6920
        %v7019 = vpop.permute.xlu0 %7018
        %7022 = vset.pattern.permute.xlu0 0
        %7023 = vperm.xlu0 %7022, %v6921
        %v7024 = vpop.permute.xlu0 %7023
        %7027 = vset.pattern.permute.xlu0 0
        %7028 = vperm.xlu0 %7027, %v6922
        %v7029 = vpop.permute.xlu0 %7028
        %7032 = vset.pattern.permute.xlu0 0
        %7033 = vperm.xlu0 %7032, %v6923
        %v7034 = vpop.permute.xlu0 %7033
        %7037 = vset.pattern.permute.xlu0 0
        %7038 = vperm.xlu0 %7037, %v6924
        %v7039 = vpop.permute.xlu0 %7038
        %7042 = vset.pattern.permute.xlu0 0
        %7043 = vperm.xlu0 %7042, %v6925
        %v7044 = vpop.permute.xlu0 %7043
        %7047 = vset.pattern.permute.xlu0 0
        %7048 = vperm.xlu0 %7047, %v6926
        %v7049 = vpop.permute.xlu0 %7048
        %7052 = vset.pattern.permute.xlu0 0
        %7053 = vperm.xlu0 %7052, %v6927
        %v7054 = vpop.permute.xlu0 %7053
        %7057 = vset.pattern.permute.xlu0 0
        %7058 = vperm.xlu0 %7057, %v6928
        %v7059 = vpop.permute.xlu0 %7058
        %7062 = vset.pattern.permute.xlu0 0
        %7063 = vperm.xlu0 %7062, %v6929
        %v7064 = vpop.permute.xlu0 %7063
        %7067 = vset.pattern.permute.xlu0 0
        %7068 = vperm.xlu0 %7067, %v6930
        %v7069 = vpop.permute.xlu0 %7068
        %7072 = vset.pattern.permute.xlu0 0
        %7073 = vperm.xlu0 %7072, %v6931
        %v7074 = vpop.permute.xlu0 %7073
        %7077 = vset.pattern.permute.xlu0 0
        %7078 = vperm.xlu0 %7077, %v6932
        %v7079 = vpop.permute.xlu0 %7078
        %7082 = vset.pattern.permute.xlu0 0
        %7083 = vperm.xlu0 %7082, %v6933
        %v7084 = vpop.permute.xlu0 %7083
        %7087 = vset.pattern.permute.xlu0 0
        %7088 = vperm.xlu0 %7087, %v6934
        %v7089 = vpop.permute.xlu0 %7088
        %7092 = vset.pattern.permute.xlu0 0
        %7093 = vperm.xlu0 %7092, %v6935
        %v7094 = vpop.permute.xlu0 %7093
        %7097 = vset.pattern.permute.xlu0 0
        %7098 = vperm.xlu0 %7097, %v6936
        %v7099 = vpop.permute.xlu0 %7098
        %7102 = vset.pattern.permute.xlu0 0
        %7103 = vperm.xlu0 %7102, %v6937
        %v7104 = vpop.permute.xlu0 %7103
        %7107 = vset.pattern.permute.xlu0 0
        %7108 = vperm.xlu0 %7107, %v6938
        %v7109 = vpop.permute.xlu0 %7108
        %7112 = vset.pattern.permute.xlu0 0
        %7113 = vperm.xlu0 %7112, %v6939
        %v7114 = vpop.permute.xlu0 %7113
        %7117 = vset.pattern.permute.xlu0 0
        %7118 = vperm.xlu0 %7117, %v6940
        %v7119 = vpop.permute.xlu0 %7118
        %7122 = vset.pattern.permute.xlu0 0
        %7123 = vperm.xlu0 %7122, %v6941
        %v7124 = vpop.permute.xlu0 %7123
        %7127 = vset.pattern.permute.xlu0 0
        %7128 = vperm.xlu0 %7127, %v6942
        %v7129 = vpop.permute.xlu0 %7128
        %7132 = vset.pattern.permute.xlu0 0
        %7133 = vperm.xlu0 %7132, %v6943
        %v7134 = vpop.permute.xlu0 %7133
        %7137 = vset.pattern.permute.xlu0 0
        %7138 = vperm.xlu0 %7137, %v6944
        %v7139 = vpop.permute.xlu0 %7138
        %7142 = vset.pattern.permute.xlu0 0
        %7143 = vperm.xlu0 %7142, %v6945
        %v7144 = vpop.permute.xlu0 %7143
        %7147 = vset.pattern.permute.xlu0 0
        %7148 = vperm.xlu0 %7147, %v6946
        %v7149 = vpop.permute.xlu0 %7148
        %7152 = vset.pattern.permute.xlu0 0
        %7153 = vperm.xlu0 %7152, %v6947
        %v7154 = vpop.permute.xlu0 %7153
        %7157 = vset.pattern.permute.xlu0 0
        %7158 = vperm.xlu0 %7157, %v6948
        %v7159 = vpop.permute.xlu0 %7158
        %7162 = vset.pattern.permute.xlu0 0
        %7163 = vperm.xlu0 %7162, %v6949
        %v7164 = vpop.permute.xlu0 %7163
        %7167 = vset.pattern.permute.xlu0 0
        %7168 = vperm.xlu0 %7167, %v6950
        %v7169 = vpop.permute.xlu0 %7168
        %7172 = vset.pattern.permute.xlu0 0
        %7173 = vperm.xlu0 %7172, %v6951
        %v7174 = vpop.permute.xlu0 %7173
        %7177 = vset.pattern.permute.xlu0 0
        %7178 = vperm.xlu0 %7177, %v6952
        %v7179 = vpop.permute.xlu0 %7178
        %7182 = vset.pattern.permute.xlu0 0
        %7183 = vperm.xlu0 %7182, %v6953
        %v7184 = vpop.permute.xlu0 %7183
        %7187 = vset.pattern.permute.xlu0 0
        %7188 = vperm.xlu0 %7187, %v6954
        %v7189 = vpop.permute.xlu0 %7188
        %7192 = vset.pattern.permute.xlu0 0
        %7193 = vperm.xlu0 %7192, %v6955
        %v7194 = vpop.permute.xlu0 %7193
        %7197 = vset.pattern.permute.xlu0 0
        %7198 = vperm.xlu0 %7197, %v6956
        %v7199 = vpop.permute.xlu0 %7198
        %7202 = vset.pattern.permute.xlu0 0
        %7203 = vperm.xlu0 %7202, %v6957
        %v7204 = vpop.permute.xlu0 %7203
        %7207 = vset.pattern.permute.xlu0 0
        %7208 = vperm.xlu0 %7207, %v6958
        %v7209 = vpop.permute.xlu0 %7208
        %7212 = vset.pattern.permute.xlu0 0
        %7213 = vperm.xlu0 %7212, %v6959
        %v7214 = vpop.permute.xlu0 %7213
        %7217 = vset.pattern.permute.xlu0 0
        %7218 = vperm.xlu0 %7217, %v6960
        %v7219 = vpop.permute.xlu0 %7218
        %7222 = vset.pattern.permute.xlu0 0
        %7223 = vperm.xlu0 %7222, %v6961
        %v7224 = vpop.permute.xlu0 %7223
        %7227 = vset.pattern.permute.xlu0 0
        %7228 = vperm.xlu0 %7227, %v6962
        %v7229 = vpop.permute.xlu0 %7228
        %7232 = vset.pattern.permute.xlu0 0
        %7233 = vperm.xlu0 %7232, %v6963
        %v7234 = vpop.permute.xlu0 %7233
        %7237 = vset.pattern.permute.xlu0 0
        %7238 = vperm.xlu0 %7237, %v6964
        %v7239 = vpop.permute.xlu0 %7238
        %7242 = vset.pattern.permute.xlu0 0
        %7243 = vperm.xlu0 %7242, %v6965
        %v7244 = vpop.permute.xlu0 %7243
        %v7246 = vadd.f32 %v6853, %v6969
        %v7247 = vadd.f32 %v6854, %v6974
        %v7248 = vadd.f32 %v6855, %v6979
        %v7249 = vadd.f32 %v6856, %v6984
        %v7250 = vadd.f32 %v6857, %v6989
        %v7251 = vadd.f32 %v6858, %v6994
        %v7252 = vadd.f32 %v6859, %v6999
        %v7253 = vadd.f32 %v6860, %v7004
        %v7254 = vadd.f32 %v6861, %v7009
        %v7255 = vadd.f32 %v6862, %v7014
        %v7256 = vadd.f32 %v6863, %v7019
        %v7257 = vadd.f32 %v6864, %v7024
        %v7258 = vadd.f32 %v6865, %v7029
        %v7259 = vadd.f32 %v6866, %v7034
        %v7260 = vadd.f32 %v6867, %v7039
        %v7261 = vadd.f32 %v6868, %v7044
        %v7262 = vadd.f32 %v6869, %v7049
        %v7263 = vadd.f32 %v6870, %v7054
        %v7264 = vadd.f32 %v6871, %v7059
        %v7265 = vadd.f32 %v6872, %v7064
        %v7266 = vadd.f32 %v6873, %v7069
        %v7267 = vadd.f32 %v6874, %v7074
        %v7268 = vadd.f32 %v6875, %v7079
        %v7269 = vadd.f32 %v6876, %v7084
        %v7270 = vadd.f32 %v6877, %v7089
        %v7271 = vadd.f32 %v6878, %v7094
        %v7272 = vadd.f32 %v6879, %v7099
        %v7273 = vadd.f32 %v6880, %v7104
        %v7274 = vadd.f32 %v6881, %v7109
        %v7275 = vadd.f32 %v6882, %v7114
        %v7276 = vadd.f32 %v6883, %v7119
        %v7277 = vadd.f32 %v6884, %v7124
        %v7278 = vadd.f32 %v6885, %v7129
        %v7279 = vadd.f32 %v6886, %v7134
        %v7280 = vadd.f32 %v6887, %v7139
        %v7281 = vadd.f32 %v6888, %v7144
        %v7282 = vadd.f32 %v6889, %v7149
        %v7283 = vadd.f32 %v6890, %v7154
        %v7284 = vadd.f32 %v6891, %v7159
        %v7285 = vadd.f32 %v6892, %v7164
        %v7286 = vadd.f32 %v6893, %v7169
        %v7287 = vadd.f32 %v6894, %v7174
        %v7288 = vadd.f32 %v6895, %v7179
        %v7289 = vadd.f32 %v6896, %v7184
        %v7290 = vadd.f32 %v6897, %v7189
        %v7291 = vadd.f32 %v6898, %v7194
        %v7292 = vadd.f32 %v6899, %v7199
        %v7293 = vadd.f32 %v6900, %v7204
        %v7294 = vadd.f32 %v6901, %v7209
        %v7295 = vadd.f32 %v6902, %v7214
        %v7296 = vadd.f32 %v6903, %v7219
        %v7297 = vadd.f32 %v6904, %v7224
        %v7298 = vadd.f32 %v6905, %v7229
        %v7299 = vadd.f32 %v6906, %v7234
        %v7300 = vadd.f32 %v6907, %v7239
        %v7301 = vadd.f32 %v6908, %v7244
        %v7302 = vadd.f32 %v7246, %v6574
        %v7303 = vadd.f32 %v7247, %v6579
        %v7304 = vadd.f32 %v7248, %v6584
        %v7305 = vadd.f32 %v7249, %v6589
        %v7306 = vadd.f32 %v7250, %v6594
        %v7307 = vadd.f32 %v7251, %v6599
        %v7308 = vadd.f32 %v7252, %v6604
        %v7309 = vadd.f32 %v7253, %v6609
        %v7310 = vadd.f32 %v7254, %v6614
        %v7311 = vadd.f32 %v7255, %v6619
        %v7312 = vadd.f32 %v7256, %v6624
        %v7313 = vadd.f32 %v7257, %v6629
        %v7314 = vadd.f32 %v7258, %v6634
        %v7315 = vadd.f32 %v7259, %v6639
        %v7316 = vadd.f32 %v7260, %v6644
        %v7317 = vadd.f32 %v7261, %v6649
        %v7318 = vadd.f32 %v7262, %v6654
        %v7319 = vadd.f32 %v7263, %v6659
        %v7320 = vadd.f32 %v7264, %v6664
        %v7321 = vadd.f32 %v7265, %v6669
        %v7322 = vadd.f32 %v7266, %v6674
        %v7323 = vadd.f32 %v7267, %v6679
        %v7324 = vadd.f32 %v7268, %v6684
        %v7325 = vadd.f32 %v7269, %v6689
        %v7326 = vadd.f32 %v7270, %v6694
        %v7327 = vadd.f32 %v7271, %v6699
        %v7328 = vadd.f32 %v7272, %v6704
        %v7329 = vadd.f32 %v7273, %v6709
        %v7330 = vadd.f32 %v7274, %v6714
        %v7331 = vadd.f32 %v7275, %v6719
        %v7332 = vadd.f32 %v7276, %v6724
        %v7333 = vadd.f32 %v7277, %v6729
        %v7334 = vadd.f32 %v7278, %v6734
        %v7335 = vadd.f32 %v7279, %v6739
        %v7336 = vadd.f32 %v7280, %v6744
        %v7337 = vadd.f32 %v7281, %v6749
        %v7338 = vadd.f32 %v7282, %v6754
        %v7339 = vadd.f32 %v7283, %v6759
        %v7340 = vadd.f32 %v7284, %v6764
        %v7341 = vadd.f32 %v7285, %v6769
        %v7342 = vadd.f32 %v7286, %v6774
        %v7343 = vadd.f32 %v7287, %v6779
        %v7344 = vadd.f32 %v7288, %v6784
        %v7345 = vadd.f32 %v7289, %v6789
        %v7346 = vadd.f32 %v7290, %v6794
        %v7347 = vadd.f32 %v7291, %v6799
        %v7348 = vadd.f32 %v7292, %v6804
        %v7349 = vadd.f32 %v7293, %v6809
        %v7350 = vadd.f32 %v7294, %v6814
        %v7351 = vadd.f32 %v7295, %v6819
        %v7352 = vadd.f32 %v7296, %v6824
        %v7353 = vadd.f32 %v7297, %v6829
        %v7354 = vadd.f32 %v7298, %v6834
        %v7355 = vadd.f32 %v7299, %v6839
        %v7356 = vadd.f32 %v7300, %v6844
        %v7357 = vadd.f32 %v7301, %v6849
        %v7358 = vld [vmem:[%s515] sm:$0x1]
        %v7360 = vlaneseq
        %v7361 = vshrl.u32 %v7360, 7
        %v7362 = vsub.s32 0, %v7361
        %v7363 = vrot.slane %v7358, %v7362
        %v7365 = vadd.f32 %v7302, %v7363
        %v7366 = vadd.f32 %v7303, %v7363
        %v7367 = vadd.f32 %v7304, %v7363
        %v7368 = vadd.f32 %v7305, %v7363
        %v7369 = vadd.f32 %v7306, %v7363
        %v7370 = vadd.f32 %v7307, %v7363
        %v7371 = vadd.f32 %v7308, %v7363
        %v7372 = vadd.f32 %v7309, %v7363
        %v7373 = vadd.f32 %v7310, %v7363
        %v7374 = vadd.f32 %v7311, %v7363
        %v7375 = vadd.f32 %v7312, %v7363
        %v7376 = vadd.f32 %v7313, %v7363
        %v7377 = vadd.f32 %v7314, %v7363
        %v7378 = vadd.f32 %v7315, %v7363
        %v7379 = vadd.f32 %v7316, %v7363
        %v7380 = vadd.f32 %v7317, %v7363
        %v7381 = vadd.f32 %v7318, %v7363
        %v7382 = vadd.f32 %v7319, %v7363
        %v7383 = vadd.f32 %v7320, %v7363
        %v7384 = vadd.f32 %v7321, %v7363
        %v7385 = vadd.f32 %v7322, %v7363
        %v7386 = vadd.f32 %v7323, %v7363
        %v7387 = vadd.f32 %v7324, %v7363
        %v7388 = vadd.f32 %v7325, %v7363
        %v7389 = vadd.f32 %v7326, %v7363
        %v7390 = vadd.f32 %v7327, %v7363
        %v7391 = vadd.f32 %v7328, %v7363
        %v7392 = vadd.f32 %v7329, %v7363
        %v7393 = vadd.f32 %v7330, %v7363
        %v7394 = vadd.f32 %v7331, %v7363
        %v7395 = vadd.f32 %v7332, %v7363
        %v7396 = vadd.f32 %v7333, %v7363
        %v7397 = vadd.f32 %v7334, %v7363
        %v7398 = vadd.f32 %v7335, %v7363
        %v7399 = vadd.f32 %v7336, %v7363
        %v7400 = vadd.f32 %v7337, %v7363
        %v7401 = vadd.f32 %v7338, %v7363
        %v7402 = vadd.f32 %v7339, %v7363
        %v7403 = vadd.f32 %v7340, %v7363
        %v7404 = vadd.f32 %v7341, %v7363
        %v7405 = vadd.f32 %v7342, %v7363
        %v7406 = vadd.f32 %v7343, %v7363
        %v7407 = vadd.f32 %v7344, %v7363
        %v7408 = vadd.f32 %v7345, %v7363
        %v7409 = vadd.f32 %v7346, %v7363
        %v7410 = vadd.f32 %v7347, %v7363
        %v7411 = vadd.f32 %v7348, %v7363
        %v7412 = vadd.f32 %v7349, %v7363
        %v7413 = vadd.f32 %v7350, %v7363
        %v7414 = vadd.f32 %v7351, %v7363
        %v7415 = vadd.f32 %v7352, %v7363
        %v7416 = vadd.f32 %v7353, %v7363
        %v7417 = vadd.f32 %v7354, %v7363
        %v7418 = vadd.f32 %v7355, %v7363
        %v7419 = vadd.f32 %v7356, %v7363
        %v7420 = vadd.f32 %v7357, %v7363
        %7421 = vst [vmem:[%s523] sm:$0xff] %v7365
        %7422 = vst [vmem:[%s523 + $0x8] sm:$0xff] %v7366
        %7423 = vst [vmem:[%s523 + $0x10] sm:$0xff] %v7367
        %7424 = vst [vmem:[%s523 + $0x18] sm:$0xff] %v7368
        %7425 = vst [vmem:[%s523 + $0x20] sm:$0xff] %v7369
        %7426 = vst [vmem:[%s523 + $0x28] sm:$0xff] %v7370
        %7427 = vst [vmem:[%s523 + $0x30] sm:$0xff] %v7371
        %7428 = vst [vmem:[%s523 + $0x38] sm:$0xff] %v7372
        %7429 = vst [vmem:[%s523 + $0x40] sm:$0xff] %v7373
        %7430 = vst [vmem:[%s523 + $0x48] sm:$0xff] %v7374
        %7431 = vst [vmem:[%s523 + $0x50] sm:$0xff] %v7375
        %7432 = vst [vmem:[%s523 + $0x58] sm:$0xff] %v7376
        %7433 = vst [vmem:[%s523 + $0x60] sm:$0xff] %v7377
        %7434 = vst [vmem:[%s523 + $0x68] sm:$0xff] %v7378
        %7435 = vst [vmem:[%s523 + $0x70] sm:$0xff] %v7379
        %7436 = vst [vmem:[%s523 + $0x78] sm:$0xff] %v7380
        %7437 = vst [vmem:[%s523 + $0x80] sm:$0xff] %v7381
        %7438 = vst [vmem:[%s523 + $0x88] sm:$0xff] %v7382
        %7439 = vst [vmem:[%s523 + $0x90] sm:$0xff] %v7383
        %7440 = vst [vmem:[%s523 + $0x98] sm:$0xff] %v7384
        %7441 = vst [vmem:[%s523 + $0xa0] sm:$0xff] %v7385
        %7442 = vst [vmem:[%s523 + $0xa8] sm:$0xff] %v7386
        %7443 = vst [vmem:[%s523 + $0xb0] sm:$0xff] %v7387
        %7444 = vst [vmem:[%s523 + $0xb8] sm:$0xff] %v7388
        %7445 = vst [vmem:[%s523 + $0xc0] sm:$0xff] %v7389
        %7446 = vst [vmem:[%s523 + $0xc8] sm:$0xff] %v7390
        %7447 = vst [vmem:[%s523 + $0xd0] sm:$0xff] %v7391
        %7448 = vst [vmem:[%s523 + $0xd8] sm:$0xff] %v7392
        %7449 = vst [vmem:[%s523 + $0xe0] sm:$0xff] %v7393
        %7450 = vst [vmem:[%s523 + $0xe8] sm:$0xff] %v7394
        %7451 = vst [vmem:[%s523 + $0xf0] sm:$0xff] %v7395
        %7452 = vst [vmem:[%s523 + $0xf8] sm:$0xff] %v7396
        %7453 = vst [vmem:[%s523 + $0x100] sm:$0xff] %v7397
        %7454 = vst [vmem:[%s523 + $0x108] sm:$0xff] %v7398
        %7455 = vst [vmem:[%s523 + $0x110] sm:$0xff] %v7399
        %7456 = vst [vmem:[%s523 + $0x118] sm:$0xff] %v7400
        %7457 = vst [vmem:[%s523 + $0x120] sm:$0xff] %v7401
        %7458 = vst [vmem:[%s523 + $0x128] sm:$0xff] %v7402
        %7459 = vst [vmem:[%s523 + $0x130] sm:$0xff] %v7403
        %7460 = vst [vmem:[%s523 + $0x138] sm:$0xff] %v7404
        %7461 = vst [vmem:[%s523 + $0x140] sm:$0xff] %v7405
        %7462 = vst [vmem:[%s523 + $0x148] sm:$0xff] %v7406
        %7463 = vst [vmem:[%s523 + $0x150] sm:$0xff] %v7407
        %7464 = vst [vmem:[%s523 + $0x158] sm:$0xff] %v7408
        %7465 = vst [vmem:[%s523 + $0x160] sm:$0xff] %v7409
        %7466 = vst [vmem:[%s523 + $0x168] sm:$0xff] %v7410
        %7467 = vst [vmem:[%s523 + $0x170] sm:$0xff] %v7411
        %7468 = vst [vmem:[%s523 + $0x178] sm:$0xff] %v7412
        %7469 = vst [vmem:[%s523 + $0x180] sm:$0xff] %v7413
        %7470 = vst [vmem:[%s523 + $0x188] sm:$0xff] %v7414
        %7471 = vst [vmem:[%s523 + $0x190] sm:$0xff] %v7415
        %7472 = vst [vmem:[%s523 + $0x198] sm:$0xff] %v7416
        %7473 = vst [vmem:[%s523 + $0x1a0] sm:$0xff] %v7417
        %7474 = vst [vmem:[%s523 + $0x1a8] sm:$0xff] %v7418
        %7475 = vst [vmem:[%s523 + $0x1b0] sm:$0xff] %v7419
        %7476 = vst [vmem:[%s523 + $0x1b8] sm:$0xff] %v7420
        %s7477 = smul.u32 56, %s25
        %p7478 = scmp.lt.s32.totalorder %s7477, 111
        %s7479 = scalar_select %p7478, %s7477, 111
        %p7480 = scmp.lt.s32.totalorder %s24, 0
        %s7481 = scalar_select %p7480, %s24, 0
        %s7482 = sadd.s32 %s7481, %s7479
        %s7483 = smul.addr %s7482, 8
        %s7484 = scalar_lea.vmem %s8, %s7483
        // Predicated region
        $region57: #{quant_conv2d_forward.3} parent=51 // pred_check
          %p7485 = pneg %p263
        $region58: #{quant_conv2d_forward.3} parent=51 // pred_check_branch
          %7487 = sbr.rel (%p7485) target = $region60
        $region59: #{quant_conv2d_forward.3} parent=51 // pred_region
          %s7488 = smul.u32 56, %s25
        $region60: #{quant_conv2d_forward.3} parent=51 // pred_fallthru
          _
      $region52: #{quant_conv2d_forward.3} parent=5 // pred_fallthru
        _
      %p7489 = scmp.le.s32.totalorder 2, %s15
      // Predicated region
      $region61: #{quant_conv2d_forward.3} parent=5 // pred_check
        %p7490 = pneg %p7489
      $region62: #{quant_conv2d_forward.3} parent=5 // pred_check_branch
        %7492 = sbr.rel (%p7490) target = $region64
      $region63: #{quant_conv2d_forward.3} parent=5 // pred_region
        %s7493 = ssub.s32 %s15, 2
        // Predicated region
        $region65: #{quant_conv2d_forward.3} parent=63 // pred_check
          %p7494 = pneg %p269
        $region66: #{quant_conv2d_forward.3} parent=63 // pred_check_branch
          %7496 = sbr.rel (%p7494) target = $region68
        $region67: #{quant_conv2d_forward.3} parent=63 // pred_region
          %s7497 = smul.u32 56, %s27
          %p7498 = scmp.lt.s32.totalorder %s7497, 111
          %s7499 = scalar_select %p7498, %s7497, 111
          %p7500 = scmp.lt.s32.totalorder %s26, 0
          %s7501 = scalar_select %p7500, %s26, 0
          %s7502 = sadd.s32 %s7501, %s7499
          %s7503 = smul.addr %s7502, 8
          %s7504 = scalar_lea.vmem %s8, %s7503
        $region68: #{quant_conv2d_forward.3} parent=63 // pred_fallthru
          _
      $region64: #{quant_conv2d_forward.3} parent=5 // pred_fallthru
        _
    $region6: #{quant_conv2d_forward.3} parent=1 // loop_footer
      %s19 = sadd.s32 1, %s15
    $region7: #{quant_conv2d_forward.3} parent=1 // loop_footer_branch
      %14 = sbr.rel target = $region3
    $region8: #{quant_conv2d_forward.3} parent=1 // loop_exit
      _
    %7505 = vsyncpa [#allocation3], 1
    %s7506 = scalar_lea.sflag [#allocation3], 1
    %7507 = vsyncpa %s7506, 1

</llo_original>
